<compile_context>
chip_gen: v7x
topology: tpu7x:2x2x1
jax: 0.10.0
libtpu: 0.0.40
codegen_flags: <defaults>
</compile_context>

<pallas_src>
import functools

import jax
import jax.numpy as jnp
from jax.experimental import pallas as pl
from jax.experimental.pallas import tpu as pltpu


# ----------------------------------------------------------------------------
# Fused whole-network kernel (one grid step = block_batch batch elements)
# ----------------------------------------------------------------------------
def _rbpnet_kernel(scal_ref, x_in_ref, w_first_ref, w_body_ref, b_body_ref,
                   w_head_ref, w_mix_ref, dmask_ref, out_ref,
                   *, k_first, k_body, k_head, dilations, block_batch):
    L = x_in_ref.shape[-1]
    lane = jax.lax.broadcasted_iota(jnp.int32, (1, L), 1)   # built once per step

    # ---- static-shift helpers: XLU roll + cached VPU validity mask ----------
    valid_cache = {}

    def valid_mask(s):
        # 1.0 where source index i+s lies in [0, L); 0.0 where the roll wrapped.
        if s not in valid_cache:
            if s > 0:
                m = (lane < (L - s)).astype(jnp.float32)
            else:
                m = (lane >= (-s)).astype(jnp.float32)
            valid_cache[s] = m
        return valid_cache[s]

    def shift_lanes(v, s):
        # t[:, i] = v[:, i + s] if 0 <= i + s < L else 0   (static s)
        if s == 0:
            return v
        return pltpu.roll(v, (-s) % L, axis=1) * valid_mask(s)

    def conv_same(x, w, b, K, dilation, relu, residual):
        # PyTorch Conv1d(padding='same') as one im2col MXU matmul.
        # w: (C_out, K*C_in), column j*C_in + ci = weight[co, ci, j] (BN scale folded).
        left = (dilation * (K - 1)) // 2        # PyTorch: extra pad goes on the right
        xk = jnp.concatenate(
            [shift_lanes(x, j * dilation - left) for j in range(K)], axis=0)
        y = jnp.dot(w, xk, preferred_element_type=jnp.float32)
        if b is not None:
            y = y + b                           # folded conv bias + BN shift, (C_out,1)
        if relu:
            y = jnp.maximum(y, 0.0)
        if residual:
            y = y + x
        return y

    w_first = w_first_ref[...]                  # (F, k_first*C_in)
    w_mix = w_mix_ref[...]                      # (F, 1)
    dmask = dmask_ref[...]                      # (1, L)
    mix_b = scal_ref[0]
    dlo_scale = scal_ref[1]
    dlo_shift = scal_ref[2]
    hb_sig = scal_ref[3]
    hb_ctl = scal_ref[4]
    head_left = (k_head - 1) // 2
    inv_l = 1.0 / L

    for bi in range(block_batch):
        x = x_in_ref[bi]                        # (C_in, L)

        # FirstLayerConv: Conv1d(4 -> F, K=k_first, bias=False) + ReLU
        x = conv_same(x, w_first, None, k_first, 1, True, False)           # (F, L)

        # BodyConv blocks: Conv1d + folded eval-BatchNorm + ReLU + residual
        for i, d in enumerate(dilations):
            x = conv_same(x, w_body_ref[i], b_body_ref[i], k_body, d, True, True)

        # SequenceAdditiveMixingCoefficient: global avg pool + dense(F -> 1), VPU/XLU
        ml = jnp.sum(w_mix * x, axis=1, keepdims=True)                     # (F, 1)
        a = jnp.sum(ml, axis=0, keepdims=True) * inv_l + mix_b             # (1, 1)

        # Both ProfileHeads (ConvTranspose1d, stride=1, pad=K//2) fused (C_out=2):
        # matmul-then-shift, rolling (2, L) partials instead of a (K*F, L) im2col.
        heads = jnp.zeros((2, L), jnp.float32)
        for j in range(k_head):
            p = jnp.dot(w_head_ref[j], x, preferred_element_type=jnp.float32)  # (2, L)
            heads = heads + shift_lanes(p, j - head_left)
        s_row = heads[0:1, :] + hb_sig          # signal logits (1, L)
        c_row = heads[1:2, :] + hb_ctl          # control logits (1, L)

        # AdditiveTargetBias: log-softmax over L + stable logsumexp mix
        ms = jnp.max(s_row, axis=1, keepdims=True)
        lse_s = ms + jnp.log(jnp.sum(jnp.exp(s_row - ms), axis=1, keepdims=True))
        mc = jnp.max(c_row, axis=1, keepdims=True)
        lse_c = mc + jnp.log(jnp.sum(jnp.exp(c_row - mc), axis=1, keepdims=True))
        xv = a + (s_row - lse_s)                # a + log_p
        yv = c_row - lse_c                      # log_q
        total = jnp.maximum(xv, yv) + jnp.log1p(jnp.exp(-jnp.abs(xv - yv)))

        # d_log_odds: masked sum of x_signal[:, mask:-mask-1] -> BatchNorm1d(1) eval
        dsum = jnp.sum(dmask * s_row, axis=1, keepdims=True)               # (1, 1)
        dlo = dsum * dlo_scale + dlo_shift

        # One packed, fully (8,128)-aligned store per element.
        packed = jnp.concatenate([
            total, s_row, c_row,
            jnp.broadcast_to(a, (1, L)),
            jnp.broadcast_to(dlo, (1, L)),
            jnp.zeros((3, L), jnp.float32),
        ], axis=0)                              # (8, L)
        out_ref[bi] = packed


def rbpnet_forward(params, x_in, *, mask, block_batch=2):
    B, C_in, L = x_in.shape
    assert B % block_batch == 0, "batch must be divisible by block_batch"

    w_first = params["first_w"]                 # (F, k_first*C_in)
    w_body = params["body_w"]                   # (nb, F, k_body*F)
    b_body = params["body_b"]                   # (nb, F, 1)
    w_head = params["head_w"]                   # (k_head, 2, F)
    w_mix = params["mix_w"]                     # (F, 1)
    scalars = params["scalars"]                 # (5,)

    F_ = w_first.shape[0]
    k_first = w_first.shape[1] // C_in
    k_body = w_body.shape[2] // F_
    k_head = w_head.shape[0]

    # Precomputed d_log_odds lane mask (hoisted out of the kernel).
    lane_idx = jnp.arange(L)
    dmask = ((lane_idx >= mask) & (lane_idx < L - mask - 1)).astype(jnp.float32)
    dmask = dmask.reshape(1, L)

    kernel = functools.partial(
        _rbpnet_kernel, k_first=k_first, k_body=k_body, k_head=k_head,
        dilations=tuple(params["dilations"]), block_batch=block_batch)

    packed = pl.pallas_call(
        kernel,
        out_shape=jax.ShapeDtypeStruct((B, 8, L), jnp.float32),
        grid=(B // block_batch,),
        in_specs=[
            pl.BlockSpec(memory_space=pltpu.MemorySpace.SMEM),          # scalars
            pl.BlockSpec((block_batch, C_in, L), lambda b: (b, 0, 0)),  # x_in
            pl.BlockSpec(w_first.shape, lambda b: (0, 0)),              # first conv
            pl.BlockSpec(w_body.shape, lambda b: (0, 0, 0)),            # body convs
            pl.BlockSpec(b_body.shape, lambda b: (0, 0, 0)),            # body shifts
            pl.BlockSpec(w_head.shape, lambda b: (0, 0, 0)),            # fused heads
            pl.BlockSpec(w_mix.shape, lambda b: (0, 0)),                # mixing dense
            pl.BlockSpec(dmask.shape, lambda b: (0, 0)),                # dlogodds mask
        ],
        out_specs=pl.BlockSpec((block_batch, 8, L), lambda b: (b, 0, 0)),
        compiler_params=pltpu.CompilerParams(
            dimension_semantics=("parallel",)),
    )(scalars, x_in, w_first, w_body, b_body, w_head, w_mix, dmask)

    x_total = packed[:, 0, :]        # (B, L)
    x_signal = packed[:, 1, :]       # (B, L)
    x_ctl = packed[:, 2, :]          # (B, L)
    x_mix = packed[:, 3, 0:1]        # (B, 1)
    d_log_odds = packed[:, 4, 0]     # (B,)  (torch .squeeze())
    return x_total, x_signal, x_ctl, x_mix, d_log_odds


# ----------------------------------------------------------------------------
# Parameter construction (deterministic, synthetic), with BN/bias folding and
# im2col / per-tap weight layouts done once at init.
# ----------------------------------------------------------------------------
def init_params(key, *, filters=32, residual_blocks=3, kernel_first=12,
                kernel_body=6, kernel_head=21, dilation=True):
    eps = 1e-5
    keys = iter(jax.random.split(key, 32))
    p = {}

    def _flatten(w):  # (C_out, C_in, K) -> (C_out, K*C_in), col = j*C_in + ci
        c_out, c_in, k = w.shape
        return jnp.transpose(w, (0, 2, 1)).reshape(c_out, k * c_in)

    # FirstLayerConv: Conv1d(4 -> filters, K=12, bias=False) + ReLU
    w = jax.random.normal(next(keys), (filters, 4, kernel_first), jnp.float32) * 0.1
    p["first_w"] = _flatten(w).astype(jnp.float32)

    # BodyConv blocks: Conv1d(+bias) + BatchNorm (eval, folded) + ReLU + residual
    body_w, body_b, dilations = [], [], []
    for i in range(1, residual_blocks + 1):
        w = jax.random.normal(next(keys), (filters, filters, kernel_body)) * 0.05
        bias = jax.random.normal(next(keys), (filters,)) * 0.05
        gamma = 1.0 + 0.05 * jax.random.normal(next(keys), (filters,))
        beta = 0.05 * jax.random.normal(next(keys), (filters,))
        rmean = 0.05 * jax.random.normal(next(keys), (filters,))
        rvar = 1.0 + 0.1 * jnp.abs(jax.random.normal(next(keys), (filters,)))
        scale = gamma / jnp.sqrt(rvar + eps)
        shift = beta + (bias - rmean) * scale
        body_w.append((_flatten(w) * scale[:, None]).astype(jnp.float32))
        body_b.append(shift[:, None].astype(jnp.float32))
        dilations.append((2 ** i) if dilation else 1)
    p["body_w"] = jnp.stack(body_w, axis=0)            # (nb, F, K*F)
    p["body_b"] = jnp.stack(body_b, axis=0)            # (nb, F, 1)
    p["dilations"] = tuple(dilations)

    # SequenceAdditiveMixingCoefficient: Linear(filters -> 1)
    p["mix_w"] = (jax.random.normal(next(keys), (1, filters)) * 0.1).T.astype(jnp.float32)
    mix_b = jax.random.normal(next(keys), ()) * 0.1

    # ProfileHeads: ConvTranspose1d(F -> 1, K=21, padding=10, bias=True) == 'same'
    # Conv1d with flipped/transposed weights; signal + ctl fused (C_out=2).
    # Layout (K, 2, F) so the kernel matmuls per tap and rolls 2-row partials.
    def head_taps(wt):                                  # wt: (F, 1, K)
        return jnp.transpose(jnp.flip(wt, axis=-1), (2, 1, 0))[:, 0, :]    # (K, F)
    w_sig = jax.random.normal(next(keys), (filters, 1, kernel_head)) * 0.05
    b_sig = jax.random.normal(next(keys), ()) * 0.05
    w_ctl = jax.random.normal(next(keys), (filters, 1, kernel_head)) * 0.05
    b_ctl = jax.random.normal(next(keys), ()) * 0.05
    p["head_w"] = jnp.stack([head_taps(w_sig), head_taps(w_ctl)],
                            axis=1).astype(jnp.float32)                   # (K, 2, F)

    # dlogodds BatchNorm1d(1) (eval mode), folded into scale/shift scalars.
    gamma, beta, rmean, rvar = 1.1, 0.2, 0.3, 1.5
    dlo_scale = gamma / jnp.sqrt(jnp.float32(rvar + eps))
    dlo_shift = beta - rmean * dlo_scale
    p["scalars"] = jnp.array([mix_b, dlo_scale, dlo_shift, b_sig, b_ctl],
                             dtype=jnp.float32)
    return p


if __name__ == "__main__":
    key = jax.random.PRNGKey(0)
    k_param, k_data = jax.random.split(key)

    # Small shapes consistent with the module: 4 input channels (one-hot RNA),
    # sequence length 128, 32 filters, 3 residual blocks, mask=4.
    # B=4 with block_batch=2 -> grid=(2,) (even, so both v7x TensorCores work).
    B, L = 4, 128
    params = init_params(k_param, filters=32, residual_blocks=3)
    x_in = jax.random.normal(k_data, (B, 4, L), jnp.float32)

    outs = rbpnet_forward(params, x_in, mask=4, block_batch=2)
    outs = jax.tree_util.tree_map(jax.block_until_ready, outs)

    x_total, x_signal, x_ctl, x_mix, d_log_odds = outs
    assert x_total.shape == (B, L)
    assert x_signal.shape == (B, L)
    assert x_ctl.shape == (B, L)
    assert x_mix.shape == (B, 1)
    assert d_log_odds.shape == (B,)
    assert all(bool(jnp.all(jnp.isfinite(o))) for o in outs)
    print("KERNEL_OK")
</pallas_src>

<mosaic_0001>
module attributes {stable_mosaic.version = 11 : i64} {
  func.func @_rbpnet_kernel(%arg0: i32, %arg1: memref<5xf32, #tpu.memory_space<smem>>, %arg2: memref<2x4x128xf32, #tpu.memory_space<vmem>>, %arg3: memref<32x48xf32, #tpu.memory_space<vmem>>, %arg4: memref<3x32x192xf32, #tpu.memory_space<vmem>>, %arg5: memref<3x32x1xf32, #tpu.memory_space<vmem>>, %arg6: memref<21x2x32xf32, #tpu.memory_space<vmem>>, %arg7: memref<32x1xf32, #tpu.memory_space<vmem>>, %arg8: memref<1x128xf32, #tpu.memory_space<vmem>>, %arg9: memref<2x8x128xf32, #tpu.memory_space<vmem>>) attributes {dimension_semantics = [#tpu.dimension_semantics<parallel>], iteration_bounds = array<i64: 2>, scalar_prefetch = 0 : i64, scratch_operands = 0 : i64, tpu.core_type = #tpu.core_type<tc>, window_params = [{transform_indices = @transform_0, window_bounds = array<i64: 5>}, {transform_indices = @transform_1, window_bounds = array<i64: 2, 4, 128>}, {pipeline_mode = #tpu.pipeline_mode<synchronous>, transform_indices = @transform_2, window_bounds = array<i64: 32, 48>}, {pipeline_mode = #tpu.pipeline_mode<synchronous>, transform_indices = @transform_3, window_bounds = array<i64: 3, 32, 192>}, {pipeline_mode = #tpu.pipeline_mode<synchronous>, transform_indices = @transform_4, window_bounds = array<i64: 3, 32, 1>}, {pipeline_mode = #tpu.pipeline_mode<synchronous>, transform_indices = @transform_5, window_bounds = array<i64: 21, 2, 32>}, {pipeline_mode = #tpu.pipeline_mode<synchronous>, transform_indices = @transform_6, window_bounds = array<i64: 32, 1>}, {pipeline_mode = #tpu.pipeline_mode<synchronous>, transform_indices = @transform_7, window_bounds = array<i64: 1, 128>}, {transform_indices = @transform_8, window_bounds = array<i64: 2, 8, 128>}]} {
    %0 = tpu.iota {dimensions = array<i32: 1>} : vector<1x128xi32>
    %c0 = arith.constant 0 : index
    %c0_0 = arith.constant 0 : index
    %1 = vector.load %arg3[%c0, %c0_0] : memref<32x48xf32, #tpu.memory_space<vmem>>, vector<32x48xf32>
    %c0_1 = arith.constant 0 : index
    %c0_2 = arith.constant 0 : index
    %2 = vector.load %arg7[%c0_1, %c0_2] : memref<32x1xf32, #tpu.memory_space<vmem>>, vector<32x1xf32>
    %c0_3 = arith.constant 0 : index
    %c0_4 = arith.constant 0 : index
    %3 = vector.load %arg8[%c0_3, %c0_4] : memref<1x128xf32, #tpu.memory_space<vmem>>, vector<1x128xf32>
    %c0_5 = arith.constant 0 : index
    %4 = memref.load %arg1[%c0_5] : memref<5xf32, #tpu.memory_space<smem>>
    %c1 = arith.constant 1 : index
    %5 = memref.load %arg1[%c1] : memref<5xf32, #tpu.memory_space<smem>>
    %c2 = arith.constant 2 : index
    %6 = memref.load %arg1[%c2] : memref<5xf32, #tpu.memory_space<smem>>
    %c3 = arith.constant 3 : index
    %7 = memref.load %arg1[%c3] : memref<5xf32, #tpu.memory_space<smem>>
    %c4 = arith.constant 4 : index
    %8 = memref.load %arg1[%c4] : memref<5xf32, #tpu.memory_space<smem>>
    %c0_6 = arith.constant 0 : index
    %c0_7 = arith.constant 0 : index
    %c0_8 = arith.constant 0 : index
    %9 = vector.load %arg2[%c0_6, %c0_7, %c0_8] : memref<2x4x128xf32, #tpu.memory_space<vmem>>, vector<1x4x128xf32>
    %10 = vector.shape_cast %9 : vector<1x4x128xf32> to vector<4x128xf32>
    %c5_i32 = arith.constant 5 : i32
    %11 = tpu.dynamic_rotate %10 by %c5_i32 dim 1 : vector<4x128xf32>, i32 -> vector<4x128xf32>
    %c5_i32_9 = arith.constant 5 : i32
    %12 = vector.broadcast %c5_i32_9 : i32 to vector<1x128xi32>
    %13 = arith.cmpi sge, %0, %12 : vector<1x128xi32>
    %14 = arith.extui %13 : vector<1x128xi1> to vector<1x128xi32>
    %15 = arith.sitofp %14 : vector<1x128xi32> to vector<1x128xf32>
    %16 = vector.broadcast %15 : vector<1x128xf32> to vector<4x128xf32>
    %17 = arith.mulf %11, %16 : vector<4x128xf32>
    %c4_i32 = arith.constant 4 : i32
    %18 = tpu.dynamic_rotate %10 by %c4_i32 dim 1 : vector<4x128xf32>, i32 -> vector<4x128xf32>
    %c4_i32_10 = arith.constant 4 : i32
    %19 = vector.broadcast %c4_i32_10 : i32 to vector<1x128xi32>
    %20 = arith.cmpi sge, %0, %19 : vector<1x128xi32>
    %21 = arith.extui %20 : vector<1x128xi1> to vector<1x128xi32>
    %22 = arith.sitofp %21 : vector<1x128xi32> to vector<1x128xf32>
    %23 = vector.broadcast %22 : vector<1x128xf32> to vector<4x128xf32>
    %24 = arith.mulf %18, %23 : vector<4x128xf32>
    %c3_i32 = arith.constant 3 : i32
    %25 = tpu.dynamic_rotate %10 by %c3_i32 dim 1 : vector<4x128xf32>, i32 -> vector<4x128xf32>
    %c3_i32_11 = arith.constant 3 : i32
    %26 = vector.broadcast %c3_i32_11 : i32 to vector<1x128xi32>
    %27 = arith.cmpi sge, %0, %26 : vector<1x128xi32>
    %28 = arith.extui %27 : vector<1x128xi1> to vector<1x128xi32>
    %29 = arith.sitofp %28 : vector<1x128xi32> to vector<1x128xf32>
    %30 = vector.broadcast %29 : vector<1x128xf32> to vector<4x128xf32>
    %31 = arith.mulf %25, %30 : vector<4x128xf32>
    %c2_i32 = arith.constant 2 : i32
    %32 = tpu.dynamic_rotate %10 by %c2_i32 dim 1 : vector<4x128xf32>, i32 -> vector<4x128xf32>
    %c2_i32_12 = arith.constant 2 : i32
    %33 = vector.broadcast %c2_i32_12 : i32 to vector<1x128xi32>
    %34 = arith.cmpi sge, %0, %33 : vector<1x128xi32>
    %35 = arith.extui %34 : vector<1x128xi1> to vector<1x128xi32>
    %36 = arith.sitofp %35 : vector<1x128xi32> to vector<1x128xf32>
    %37 = vector.broadcast %36 : vector<1x128xf32> to vector<4x128xf32>
    %38 = arith.mulf %32, %37 : vector<4x128xf32>
    %c1_i32 = arith.constant 1 : i32
    %39 = tpu.dynamic_rotate %10 by %c1_i32 dim 1 : vector<4x128xf32>, i32 -> vector<4x128xf32>
    %c1_i32_13 = arith.constant 1 : i32
    %40 = vector.broadcast %c1_i32_13 : i32 to vector<1x128xi32>
    %41 = arith.cmpi sge, %0, %40 : vector<1x128xi32>
    %42 = arith.extui %41 : vector<1x128xi1> to vector<1x128xi32>
    %43 = arith.sitofp %42 : vector<1x128xi32> to vector<1x128xf32>
    %44 = vector.broadcast %43 : vector<1x128xf32> to vector<4x128xf32>
    %45 = arith.mulf %39, %44 : vector<4x128xf32>
    %c127_i32 = arith.constant 127 : i32
    %46 = tpu.dynamic_rotate %10 by %c127_i32 dim 1 : vector<4x128xf32>, i32 -> vector<4x128xf32>
    %c127_i32_14 = arith.constant 127 : i32
    %47 = vector.broadcast %c127_i32_14 : i32 to vector<1x128xi32>
    %48 = arith.cmpi slt, %0, %47 : vector<1x128xi32>
    %49 = arith.extui %48 : vector<1x128xi1> to vector<1x128xi32>
    %50 = arith.sitofp %49 : vector<1x128xi32> to vector<1x128xf32>
    %51 = vector.broadcast %50 : vector<1x128xf32> to vector<4x128xf32>
    %52 = arith.mulf %46, %51 : vector<4x128xf32>
    %c126_i32 = arith.constant 126 : i32
    %53 = tpu.dynamic_rotate %10 by %c126_i32 dim 1 : vector<4x128xf32>, i32 -> vector<4x128xf32>
    %c126_i32_15 = arith.constant 126 : i32
    %54 = vector.broadcast %c126_i32_15 : i32 to vector<1x128xi32>
    %55 = arith.cmpi slt, %0, %54 : vector<1x128xi32>
    %56 = arith.extui %55 : vector<1x128xi1> to vector<1x128xi32>
    %57 = arith.sitofp %56 : vector<1x128xi32> to vector<1x128xf32>
    %58 = vector.broadcast %57 : vector<1x128xf32> to vector<4x128xf32>
    %59 = arith.mulf %53, %58 : vector<4x128xf32>
    %c125_i32 = arith.constant 125 : i32
    %60 = tpu.dynamic_rotate %10 by %c125_i32 dim 1 : vector<4x128xf32>, i32 -> vector<4x128xf32>
    %c125_i32_16 = arith.constant 125 : i32
    %61 = vector.broadcast %c125_i32_16 : i32 to vector<1x128xi32>
    %62 = arith.cmpi slt, %0, %61 : vector<1x128xi32>
    %63 = arith.extui %62 : vector<1x128xi1> to vector<1x128xi32>
    %64 = arith.sitofp %63 : vector<1x128xi32> to vector<1x128xf32>
    %65 = vector.broadcast %64 : vector<1x128xf32> to vector<4x128xf32>
    %66 = arith.mulf %60, %65 : vector<4x128xf32>
    %c124_i32 = arith.constant 124 : i32
    %67 = tpu.dynamic_rotate %10 by %c124_i32 dim 1 : vector<4x128xf32>, i32 -> vector<4x128xf32>
    %c124_i32_17 = arith.constant 124 : i32
    %68 = vector.broadcast %c124_i32_17 : i32 to vector<1x128xi32>
    %69 = arith.cmpi slt, %0, %68 : vector<1x128xi32>
    %70 = arith.extui %69 : vector<1x128xi1> to vector<1x128xi32>
    %71 = arith.sitofp %70 : vector<1x128xi32> to vector<1x128xf32>
    %72 = vector.broadcast %71 : vector<1x128xf32> to vector<4x128xf32>
    %73 = arith.mulf %67, %72 : vector<4x128xf32>
    %c123_i32 = arith.constant 123 : i32
    %74 = tpu.dynamic_rotate %10 by %c123_i32 dim 1 : vector<4x128xf32>, i32 -> vector<4x128xf32>
    %c123_i32_18 = arith.constant 123 : i32
    %75 = vector.broadcast %c123_i32_18 : i32 to vector<1x128xi32>
    %76 = arith.cmpi slt, %0, %75 : vector<1x128xi32>
    %77 = arith.extui %76 : vector<1x128xi1> to vector<1x128xi32>
    %78 = arith.sitofp %77 : vector<1x128xi32> to vector<1x128xf32>
    %79 = vector.broadcast %78 : vector<1x128xf32> to vector<4x128xf32>
    %80 = arith.mulf %74, %79 : vector<4x128xf32>
    %c122_i32 = arith.constant 122 : i32
    %81 = tpu.dynamic_rotate %10 by %c122_i32 dim 1 : vector<4x128xf32>, i32 -> vector<4x128xf32>
    %c122_i32_19 = arith.constant 122 : i32
    %82 = vector.broadcast %c122_i32_19 : i32 to vector<1x128xi32>
    %83 = arith.cmpi slt, %0, %82 : vector<1x128xi32>
    %84 = arith.extui %83 : vector<1x128xi1> to vector<1x128xi32>
    %85 = arith.sitofp %84 : vector<1x128xi32> to vector<1x128xf32>
    %86 = vector.broadcast %85 : vector<1x128xf32> to vector<4x128xf32>
    %87 = arith.mulf %81, %86 : vector<4x128xf32>
    %88 = tpu.concatenate %17, %24, %31, %38, %45, %10, %52, %59, %66, %73, %80, %87 in 0 : vector<4x128xf32>, vector<4x128xf32>, vector<4x128xf32>, vector<4x128xf32>, vector<4x128xf32>, vector<4x128xf32>, vector<4x128xf32>, vector<4x128xf32>, vector<4x128xf32>, vector<4x128xf32>, vector<4x128xf32>, vector<4x128xf32> -> vector<48x128xf32>
    %cst = arith.constant dense<0.000000e+00> : vector<32x128xf32>
    %89 = tpu.matmul %1, %88, %cst {dimension_numbers = #tpu.dot_dimension_numbers<[1], [0], [0], [1], [0, 0, 1, 1], [], []>} : vector<32x48xf32>, vector<48x128xf32>, vector<32x128xf32> -> vector<32x128xf32>
    %cst_20 = arith.constant 0.000000e+00 : f32
    %90 = vector.broadcast %cst_20 : f32 to vector<32x128xf32>
    %91 = arith.maximumf %89, %90 : vector<32x128xf32>
    %c0_21 = arith.constant 0 : index
    %c0_22 = arith.constant 0 : index
    %c0_23 = arith.constant 0 : index
    %92 = vector.load %arg4[%c0_21, %c0_22, %c0_23] : memref<3x32x192xf32, #tpu.memory_space<vmem>>, vector<1x32x192xf32>
    %93 = vector.shape_cast %92 : vector<1x32x192xf32> to vector<32x192xf32>
    %c0_24 = arith.constant 0 : index
    %c0_25 = arith.constant 0 : index
    %c0_26 = arith.constant 0 : index
    %94 = vector.load %arg5[%c0_24, %c0_25, %c0_26] : memref<3x32x1xf32, #tpu.memory_space<vmem>>, vector<1x32x1xf32>
    %95 = vector.shape_cast %94 : vector<1x32x1xf32> to vector<32x1xf32>
    %c5_i32_27 = arith.constant 5 : i32
    %96 = tpu.dynamic_rotate %91 by %c5_i32_27 dim 1 : vector<32x128xf32>, i32 -> vector<32x128xf32>
    %97 = vector.broadcast %15 : vector<1x128xf32> to vector<32x128xf32>
    %98 = arith.mulf %96, %97 : vector<32x128xf32>
    %c3_i32_28 = arith.constant 3 : i32
    %99 = tpu.dynamic_rotate %91 by %c3_i32_28 dim 1 : vector<32x128xf32>, i32 -> vector<32x128xf32>
    %100 = vector.broadcast %29 : vector<1x128xf32> to vector<32x128xf32>
    %101 = arith.mulf %99, %100 : vector<32x128xf32>
    %c1_i32_29 = arith.constant 1 : i32
    %102 = tpu.dynamic_rotate %91 by %c1_i32_29 dim 1 : vector<32x128xf32>, i32 -> vector<32x128xf32>
    %103 = vector.broadcast %43 : vector<1x128xf32> to vector<32x128xf32>
    %104 = arith.mulf %102, %103 : vector<32x128xf32>
    %c127_i32_30 = arith.constant 127 : i32
    %105 = tpu.dynamic_rotate %91 by %c127_i32_30 dim 1 : vector<32x128xf32>, i32 -> vector<32x128xf32>
    %106 = vector.broadcast %50 : vector<1x128xf32> to vector<32x128xf32>
    %107 = arith.mulf %105, %106 : vector<32x128xf32>
    %c125_i32_31 = arith.constant 125 : i32
    %108 = tpu.dynamic_rotate %91 by %c125_i32_31 dim 1 : vector<32x128xf32>, i32 -> vector<32x128xf32>
    %109 = vector.broadcast %64 : vector<1x128xf32> to vector<32x128xf32>
    %110 = arith.mulf %108, %109 : vector<32x128xf32>
    %c123_i32_32 = arith.constant 123 : i32
    %111 = tpu.dynamic_rotate %91 by %c123_i32_32 dim 1 : vector<32x128xf32>, i32 -> vector<32x128xf32>
    %112 = vector.broadcast %78 : vector<1x128xf32> to vector<32x128xf32>
    %113 = arith.mulf %111, %112 : vector<32x128xf32>
    %114 = tpu.concatenate %98, %101, %104, %107, %110, %113 in 0 : vector<32x128xf32>, vector<32x128xf32>, vector<32x128xf32>, vector<32x128xf32>, vector<32x128xf32>, vector<32x128xf32> -> vector<192x128xf32>
    %cst_33 = arith.constant dense<0.000000e+00> : vector<32x128xf32>
    %115 = tpu.matmul %93, %114, %cst_33 {dimension_numbers = #tpu.dot_dimension_numbers<[1], [0], [0], [1], [0, 0, 1, 1], [], []>} : vector<32x192xf32>, vector<192x128xf32>, vector<32x128xf32> -> vector<32x128xf32>
    %116 = vector.broadcast %95 : vector<32x1xf32> to vector<32x128xf32>
    %117 = arith.addf %115, %116 : vector<32x128xf32>
    %cst_34 = arith.constant 0.000000e+00 : f32
    %118 = vector.broadcast %cst_34 : f32 to vector<32x128xf32>
    %119 = arith.maximumf %117, %118 : vector<32x128xf32>
    %120 = arith.addf %119, %91 : vector<32x128xf32>
    %c1_35 = arith.constant 1 : index
    %c0_36 = arith.constant 0 : index
    %c0_37 = arith.constant 0 : index
    %121 = vector.load %arg4[%c1_35, %c0_36, %c0_37] : memref<3x32x192xf32, #tpu.memory_space<vmem>>, vector<1x32x192xf32>
    %122 = vector.shape_cast %121 : vector<1x32x192xf32> to vector<32x192xf32>
    %c1_38 = arith.constant 1 : index
    %c0_39 = arith.constant 0 : index
    %c0_40 = arith.constant 0 : index
    %123 = vector.load %arg5[%c1_38, %c0_39, %c0_40] : memref<3x32x1xf32, #tpu.memory_space<vmem>>, vector<1x32x1xf32>
    %124 = vector.shape_cast %123 : vector<1x32x1xf32> to vector<32x1xf32>
    %c10_i32 = arith.constant 10 : i32
    %125 = tpu.dynamic_rotate %120 by %c10_i32 dim 1 : vector<32x128xf32>, i32 -> vector<32x128xf32>
    %c10_i32_41 = arith.constant 10 : i32
    %126 = vector.broadcast %c10_i32_41 : i32 to vector<1x128xi32>
    %127 = arith.cmpi sge, %0, %126 : vector<1x128xi32>
    %128 = arith.extui %127 : vector<1x128xi1> to vector<1x128xi32>
    %129 = arith.sitofp %128 : vector<1x128xi32> to vector<1x128xf32>
    %130 = vector.broadcast %129 : vector<1x128xf32> to vector<32x128xf32>
    %131 = arith.mulf %125, %130 : vector<32x128xf32>
    %c6_i32 = arith.constant 6 : i32
    %132 = tpu.dynamic_rotate %120 by %c6_i32 dim 1 : vector<32x128xf32>, i32 -> vector<32x128xf32>
    %c6_i32_42 = arith.constant 6 : i32
    %133 = vector.broadcast %c6_i32_42 : i32 to vector<1x128xi32>
    %134 = arith.cmpi sge, %0, %133 : vector<1x128xi32>
    %135 = arith.extui %134 : vector<1x128xi1> to vector<1x128xi32>
    %136 = arith.sitofp %135 : vector<1x128xi32> to vector<1x128xf32>
    %137 = vector.broadcast %136 : vector<1x128xf32> to vector<32x128xf32>
    %138 = arith.mulf %132, %137 : vector<32x128xf32>
    %c2_i32_43 = arith.constant 2 : i32
    %139 = tpu.dynamic_rotate %120 by %c2_i32_43 dim 1 : vector<32x128xf32>, i32 -> vector<32x128xf32>
    %140 = vector.broadcast %36 : vector<1x128xf32> to vector<32x128xf32>
    %141 = arith.mulf %139, %140 : vector<32x128xf32>
    %c126_i32_44 = arith.constant 126 : i32
    %142 = tpu.dynamic_rotate %120 by %c126_i32_44 dim 1 : vector<32x128xf32>, i32 -> vector<32x128xf32>
    %143 = vector.broadcast %57 : vector<1x128xf32> to vector<32x128xf32>
    %144 = arith.mulf %142, %143 : vector<32x128xf32>
    %c122_i32_45 = arith.constant 122 : i32
    %145 = tpu.dynamic_rotate %120 by %c122_i32_45 dim 1 : vector<32x128xf32>, i32 -> vector<32x128xf32>
    %146 = vector.broadcast %85 : vector<1x128xf32> to vector<32x128xf32>
    %147 = arith.mulf %145, %146 : vector<32x128xf32>
    %c118_i32 = arith.constant 118 : i32
    %148 = tpu.dynamic_rotate %120 by %c118_i32 dim 1 : vector<32x128xf32>, i32 -> vector<32x128xf32>
    %c118_i32_46 = arith.constant 118 : i32
    %149 = vector.broadcast %c118_i32_46 : i32 to vector<1x128xi32>
    %150 = arith.cmpi slt, %0, %149 : vector<1x128xi32>
    %151 = arith.extui %150 : vector<1x128xi1> to vector<1x128xi32>
    %152 = arith.sitofp %151 : vector<1x128xi32> to vector<1x128xf32>
    %153 = vector.broadcast %152 : vector<1x128xf32> to vector<32x128xf32>
    %154 = arith.mulf %148, %153 : vector<32x128xf32>
    %155 = tpu.concatenate %131, %138, %141, %144, %147, %154 in 0 : vector<32x128xf32>, vector<32x128xf32>, vector<32x128xf32>, vector<32x128xf32>, vector<32x128xf32>, vector<32x128xf32> -> vector<192x128xf32>
    %cst_47 = arith.constant dense<0.000000e+00> : vector<32x128xf32>
    %156 = tpu.matmul %122, %155, %cst_47 {dimension_numbers = #tpu.dot_dimension_numbers<[1], [0], [0], [1], [0, 0, 1, 1], [], []>} : vector<32x192xf32>, vector<192x128xf32>, vector<32x128xf32> -> vector<32x128xf32>
    %157 = vector.broadcast %124 : vector<32x1xf32> to vector<32x128xf32>
    %158 = arith.addf %156, %157 : vector<32x128xf32>
    %cst_48 = arith.constant 0.000000e+00 : f32
    %159 = vector.broadcast %cst_48 : f32 to vector<32x128xf32>
    %160 = arith.maximumf %158, %159 : vector<32x128xf32>
    %161 = arith.addf %160, %120 : vector<32x128xf32>
    %c2_49 = arith.constant 2 : index
    %c0_50 = arith.constant 0 : index
    %c0_51 = arith.constant 0 : index
    %162 = vector.load %arg4[%c2_49, %c0_50, %c0_51] : memref<3x32x192xf32, #tpu.memory_space<vmem>>, vector<1x32x192xf32>
    %163 = vector.shape_cast %162 : vector<1x32x192xf32> to vector<32x192xf32>
    %c2_52 = arith.constant 2 : index
    %c0_53 = arith.constant 0 : index
    %c0_54 = arith.constant 0 : index
    %164 = vector.load %arg5[%c2_52, %c0_53, %c0_54] : memref<3x32x1xf32, #tpu.memory_space<vmem>>, vector<1x32x1xf32>
    %165 = vector.shape_cast %164 : vector<1x32x1xf32> to vector<32x1xf32>
    %c20_i32 = arith.constant 20 : i32
    %166 = tpu.dynamic_rotate %161 by %c20_i32 dim 1 : vector<32x128xf32>, i32 -> vector<32x128xf32>
    %c20_i32_55 = arith.constant 20 : i32
    %167 = vector.broadcast %c20_i32_55 : i32 to vector<1x128xi32>
    %168 = arith.cmpi sge, %0, %167 : vector<1x128xi32>
    %169 = arith.extui %168 : vector<1x128xi1> to vector<1x128xi32>
    %170 = arith.sitofp %169 : vector<1x128xi32> to vector<1x128xf32>
    %171 = vector.broadcast %170 : vector<1x128xf32> to vector<32x128xf32>
    %172 = arith.mulf %166, %171 : vector<32x128xf32>
    %c12_i32 = arith.constant 12 : i32
    %173 = tpu.dynamic_rotate %161 by %c12_i32 dim 1 : vector<32x128xf32>, i32 -> vector<32x128xf32>
    %c12_i32_56 = arith.constant 12 : i32
    %174 = vector.broadcast %c12_i32_56 : i32 to vector<1x128xi32>
    %175 = arith.cmpi sge, %0, %174 : vector<1x128xi32>
    %176 = arith.extui %175 : vector<1x128xi1> to vector<1x128xi32>
    %177 = arith.sitofp %176 : vector<1x128xi32> to vector<1x128xf32>
    %178 = vector.broadcast %177 : vector<1x128xf32> to vector<32x128xf32>
    %179 = arith.mulf %173, %178 : vector<32x128xf32>
    %c4_i32_57 = arith.constant 4 : i32
    %180 = tpu.dynamic_rotate %161 by %c4_i32_57 dim 1 : vector<32x128xf32>, i32 -> vector<32x128xf32>
    %181 = vector.broadcast %22 : vector<1x128xf32> to vector<32x128xf32>
    %182 = arith.mulf %180, %181 : vector<32x128xf32>
    %c124_i32_58 = arith.constant 124 : i32
    %183 = tpu.dynamic_rotate %161 by %c124_i32_58 dim 1 : vector<32x128xf32>, i32 -> vector<32x128xf32>
    %184 = vector.broadcast %71 : vector<1x128xf32> to vector<32x128xf32>
    %185 = arith.mulf %183, %184 : vector<32x128xf32>
    %c116_i32 = arith.constant 116 : i32
    %186 = tpu.dynamic_rotate %161 by %c116_i32 dim 1 : vector<32x128xf32>, i32 -> vector<32x128xf32>
    %c116_i32_59 = arith.constant 116 : i32
    %187 = vector.broadcast %c116_i32_59 : i32 to vector<1x128xi32>
    %188 = arith.cmpi slt, %0, %187 : vector<1x128xi32>
    %189 = arith.extui %188 : vector<1x128xi1> to vector<1x128xi32>
    %190 = arith.sitofp %189 : vector<1x128xi32> to vector<1x128xf32>
    %191 = vector.broadcast %190 : vector<1x128xf32> to vector<32x128xf32>
    %192 = arith.mulf %186, %191 : vector<32x128xf32>
    %c108_i32 = arith.constant 108 : i32
    %193 = tpu.dynamic_rotate %161 by %c108_i32 dim 1 : vector<32x128xf32>, i32 -> vector<32x128xf32>
    %c108_i32_60 = arith.constant 108 : i32
    %194 = vector.broadcast %c108_i32_60 : i32 to vector<1x128xi32>
    %195 = arith.cmpi slt, %0, %194 : vector<1x128xi32>
    %196 = arith.extui %195 : vector<1x128xi1> to vector<1x128xi32>
    %197 = arith.sitofp %196 : vector<1x128xi32> to vector<1x128xf32>
    %198 = vector.broadcast %197 : vector<1x128xf32> to vector<32x128xf32>
    %199 = arith.mulf %193, %198 : vector<32x128xf32>
    %200 = tpu.concatenate %172, %179, %182, %185, %192, %199 in 0 : vector<32x128xf32>, vector<32x128xf32>, vector<32x128xf32>, vector<32x128xf32>, vector<32x128xf32>, vector<32x128xf32> -> vector<192x128xf32>
    %cst_61 = arith.constant dense<0.000000e+00> : vector<32x128xf32>
    %201 = tpu.matmul %163, %200, %cst_61 {dimension_numbers = #tpu.dot_dimension_numbers<[1], [0], [0], [1], [0, 0, 1, 1], [], []>} : vector<32x192xf32>, vector<192x128xf32>, vector<32x128xf32> -> vector<32x128xf32>
    %202 = vector.broadcast %165 : vector<32x1xf32> to vector<32x128xf32>
    %203 = arith.addf %201, %202 : vector<32x128xf32>
    %cst_62 = arith.constant 0.000000e+00 : f32
    %204 = vector.broadcast %cst_62 : f32 to vector<32x128xf32>
    %205 = arith.maximumf %203, %204 : vector<32x128xf32>
    %206 = arith.addf %205, %161 : vector<32x128xf32>
    %207 = vector.broadcast %2 : vector<32x1xf32> to vector<32x128xf32>
    %208 = arith.mulf %207, %206 : vector<32x128xf32>
    %cst_63 = arith.constant dense<0.000000e+00> : vector<32xf32>
    %209 = vector.multi_reduction <add>, %208, %cst_63 [1] : vector<32x128xf32> to vector<32xf32>
    %210 = vector.shape_cast %209 : vector<32xf32> to vector<32x1xf32>
    %cst_64 = arith.constant dense<0.000000e+00> : vector<1xf32>
    %211 = vector.multi_reduction <add>, %210, %cst_64 [0] : vector<32x1xf32> to vector<1xf32>
    %212 = vector.shape_cast %211 : vector<1xf32> to vector<1x1xf32>
    %cst_65 = arith.constant 7.812500e-03 : f32
    %213 = vector.broadcast %cst_65 : f32 to vector<1x1xf32>
    %214 = arith.mulf %212, %213 : vector<1x1xf32>
    %215 = vector.broadcast %4 : f32 to vector<1x1xf32>
    %216 = arith.addf %214, %215 : vector<1x1xf32>
    %cst_66 = arith.constant 0.000000e+00 : f32
    %217 = vector.broadcast %cst_66 : f32 to vector<2x128xf32>
    %c0_67 = arith.constant 0 : index
    %c0_68 = arith.constant 0 : index
    %c0_69 = arith.constant 0 : index
    %218 = vector.load %arg6[%c0_67, %c0_68, %c0_69] : memref<21x2x32xf32, #tpu.memory_space<vmem>>, vector<1x2x32xf32>
    %219 = vector.shape_cast %218 : vector<1x2x32xf32> to vector<2x32xf32>
    %cst_70 = arith.constant dense<0.000000e+00> : vector<2x128xf32>
    %220 = tpu.matmul %219, %206, %cst_70 {dimension_numbers = #tpu.dot_dimension_numbers<[1], [0], [0], [1], [0, 0, 1, 1], [], []>} : vector<2x32xf32>, vector<32x128xf32>, vector<2x128xf32> -> vector<2x128xf32>
    %c10_i32_71 = arith.constant 10 : i32
    %221 = tpu.dynamic_rotate %220 by %c10_i32_71 dim 1 : vector<2x128xf32>, i32 -> vector<2x128xf32>
    %222 = vector.broadcast %129 : vector<1x128xf32> to vector<2x128xf32>
    %223 = arith.mulf %221, %222 : vector<2x128xf32>
    %224 = arith.addf %217, %223 : vector<2x128xf32>
    %c1_72 = arith.constant 1 : index
    %c0_73 = arith.constant 0 : index
    %c0_74 = arith.constant 0 : index
    %225 = vector.load %arg6[%c1_72, %c0_73, %c0_74] : memref<21x2x32xf32, #tpu.memory_space<vmem>>, vector<1x2x32xf32>
    %226 = vector.shape_cast %225 : vector<1x2x32xf32> to vector<2x32xf32>
    %cst_75 = arith.constant dense<0.000000e+00> : vector<2x128xf32>
    %227 = tpu.matmul %226, %206, %cst_75 {dimension_numbers = #tpu.dot_dimension_numbers<[1], [0], [0], [1], [0, 0, 1, 1], [], []>} : vector<2x32xf32>, vector<32x128xf32>, vector<2x128xf32> -> vector<2x128xf32>
    %c9_i32 = arith.constant 9 : i32
    %228 = tpu.dynamic_rotate %227 by %c9_i32 dim 1 : vector<2x128xf32>, i32 -> vector<2x128xf32>
    %c9_i32_76 = arith.constant 9 : i32
    %229 = vector.broadcast %c9_i32_76 : i32 to vector<1x128xi32>
    %230 = arith.cmpi sge, %0, %229 : vector<1x128xi32>
    %231 = arith.extui %230 : vector<1x128xi1> to vector<1x128xi32>
    %232 = arith.sitofp %231 : vector<1x128xi32> to vector<1x128xf32>
    %233 = vector.broadcast %232 : vector<1x128xf32> to vector<2x128xf32>
    %234 = arith.mulf %228, %233 : vector<2x128xf32>
    %235 = arith.addf %224, %234 : vector<2x128xf32>
    %c2_77 = arith.constant 2 : index
    %c0_78 = arith.constant 0 : index
    %c0_79 = arith.constant 0 : index
    %236 = vector.load %arg6[%c2_77, %c0_78, %c0_79] : memref<21x2x32xf32, #tpu.memory_space<vmem>>, vector<1x2x32xf32>
    %237 = vector.shape_cast %236 : vector<1x2x32xf32> to vector<2x32xf32>
    %cst_80 = arith.constant dense<0.000000e+00> : vector<2x128xf32>
    %238 = tpu.matmul %237, %206, %cst_80 {dimension_numbers = #tpu.dot_dimension_numbers<[1], [0], [0], [1], [0, 0, 1, 1], [], []>} : vector<2x32xf32>, vector<32x128xf32>, vector<2x128xf32> -> vector<2x128xf32>
    %c8_i32 = arith.constant 8 : i32
    %239 = tpu.dynamic_rotate %238 by %c8_i32 dim 1 : vector<2x128xf32>, i32 -> vector<2x128xf32>
    %c8_i32_81 = arith.constant 8 : i32
    %240 = vector.broadcast %c8_i32_81 : i32 to vector<1x128xi32>
    %241 = arith.cmpi sge, %0, %240 : vector<1x128xi32>
    %242 = arith.extui %241 : vector<1x128xi1> to vector<1x128xi32>
    %243 = arith.sitofp %242 : vector<1x128xi32> to vector<1x128xf32>
    %244 = vector.broadcast %243 : vector<1x128xf32> to vector<2x128xf32>
    %245 = arith.mulf %239, %244 : vector<2x128xf32>
    %246 = arith.addf %235, %245 : vector<2x128xf32>
    %c3_82 = arith.constant 3 : index
    %c0_83 = arith.constant 0 : index
    %c0_84 = arith.constant 0 : index
    %247 = vector.load %arg6[%c3_82, %c0_83, %c0_84] : memref<21x2x32xf32, #tpu.memory_space<vmem>>, vector<1x2x32xf32>
    %248 = vector.shape_cast %247 : vector<1x2x32xf32> to vector<2x32xf32>
    %cst_85 = arith.constant dense<0.000000e+00> : vector<2x128xf32>
    %249 = tpu.matmul %248, %206, %cst_85 {dimension_numbers = #tpu.dot_dimension_numbers<[1], [0], [0], [1], [0, 0, 1, 1], [], []>} : vector<2x32xf32>, vector<32x128xf32>, vector<2x128xf32> -> vector<2x128xf32>
    %c7_i32 = arith.constant 7 : i32
    %250 = tpu.dynamic_rotate %249 by %c7_i32 dim 1 : vector<2x128xf32>, i32 -> vector<2x128xf32>
    %c7_i32_86 = arith.constant 7 : i32
    %251 = vector.broadcast %c7_i32_86 : i32 to vector<1x128xi32>
    %252 = arith.cmpi sge, %0, %251 : vector<1x128xi32>
    %253 = arith.extui %252 : vector<1x128xi1> to vector<1x128xi32>
    %254 = arith.sitofp %253 : vector<1x128xi32> to vector<1x128xf32>
    %255 = vector.broadcast %254 : vector<1x128xf32> to vector<2x128xf32>
    %256 = arith.mulf %250, %255 : vector<2x128xf32>
    %257 = arith.addf %246, %256 : vector<2x128xf32>
    %c4_87 = arith.constant 4 : index
    %c0_88 = arith.constant 0 : index
    %c0_89 = arith.constant 0 : index
    %258 = vector.load %arg6[%c4_87, %c0_88, %c0_89] : memref<21x2x32xf32, #tpu.memory_space<vmem>>, vector<1x2x32xf32>
    %259 = vector.shape_cast %258 : vector<1x2x32xf32> to vector<2x32xf32>
    %cst_90 = arith.constant dense<0.000000e+00> : vector<2x128xf32>
    %260 = tpu.matmul %259, %206, %cst_90 {dimension_numbers = #tpu.dot_dimension_numbers<[1], [0], [0], [1], [0, 0, 1, 1], [], []>} : vector<2x32xf32>, vector<32x128xf32>, vector<2x128xf32> -> vector<2x128xf32>
    %c6_i32_91 = arith.constant 6 : i32
    %261 = tpu.dynamic_rotate %260 by %c6_i32_91 dim 1 : vector<2x128xf32>, i32 -> vector<2x128xf32>
    %262 = vector.broadcast %136 : vector<1x128xf32> to vector<2x128xf32>
    %263 = arith.mulf %261, %262 : vector<2x128xf32>
    %264 = arith.addf %257, %263 : vector<2x128xf32>
    %c5 = arith.constant 5 : index
    %c0_92 = arith.constant 0 : index
    %c0_93 = arith.constant 0 : index
    %265 = vector.load %arg6[%c5, %c0_92, %c0_93] : memref<21x2x32xf32, #tpu.memory_space<vmem>>, vector<1x2x32xf32>
    %266 = vector.shape_cast %265 : vector<1x2x32xf32> to vector<2x32xf32>
    %cst_94 = arith.constant dense<0.000000e+00> : vector<2x128xf32>
    %267 = tpu.matmul %266, %206, %cst_94 {dimension_numbers = #tpu.dot_dimension_numbers<[1], [0], [0], [1], [0, 0, 1, 1], [], []>} : vector<2x32xf32>, vector<32x128xf32>, vector<2x128xf32> -> vector<2x128xf32>
    %c5_i32_95 = arith.constant 5 : i32
    %268 = tpu.dynamic_rotate %267 by %c5_i32_95 dim 1 : vector<2x128xf32>, i32 -> vector<2x128xf32>
    %269 = vector.broadcast %15 : vector<1x128xf32> to vector<2x128xf32>
    %270 = arith.mulf %268, %269 : vector<2x128xf32>
    %271 = arith.addf %264, %270 : vector<2x128xf32>
    %c6 = arith.constant 6 : index
    %c0_96 = arith.constant 0 : index
    %c0_97 = arith.constant 0 : index
    %272 = vector.load %arg6[%c6, %c0_96, %c0_97] : memref<21x2x32xf32, #tpu.memory_space<vmem>>, vector<1x2x32xf32>
    %273 = vector.shape_cast %272 : vector<1x2x32xf32> to vector<2x32xf32>
    %cst_98 = arith.constant dense<0.000000e+00> : vector<2x128xf32>
    %274 = tpu.matmul %273, %206, %cst_98 {dimension_numbers = #tpu.dot_dimension_numbers<[1], [0], [0], [1], [0, 0, 1, 1], [], []>} : vector<2x32xf32>, vector<32x128xf32>, vector<2x128xf32> -> vector<2x128xf32>
    %c4_i32_99 = arith.constant 4 : i32
    %275 = tpu.dynamic_rotate %274 by %c4_i32_99 dim 1 : vector<2x128xf32>, i32 -> vector<2x128xf32>
    %276 = vector.broadcast %22 : vector<1x128xf32> to vector<2x128xf32>
    %277 = arith.mulf %275, %276 : vector<2x128xf32>
    %278 = arith.addf %271, %277 : vector<2x128xf32>
    %c7 = arith.constant 7 : index
    %c0_100 = arith.constant 0 : index
    %c0_101 = arith.constant 0 : index
    %279 = vector.load %arg6[%c7, %c0_100, %c0_101] : memref<21x2x32xf32, #tpu.memory_space<vmem>>, vector<1x2x32xf32>
    %280 = vector.shape_cast %279 : vector<1x2x32xf32> to vector<2x32xf32>
    %cst_102 = arith.constant dense<0.000000e+00> : vector<2x128xf32>
    %281 = tpu.matmul %280, %206, %cst_102 {dimension_numbers = #tpu.dot_dimension_numbers<[1], [0], [0], [1], [0, 0, 1, 1], [], []>} : vector<2x32xf32>, vector<32x128xf32>, vector<2x128xf32> -> vector<2x128xf32>
    %c3_i32_103 = arith.constant 3 : i32
    %282 = tpu.dynamic_rotate %281 by %c3_i32_103 dim 1 : vector<2x128xf32>, i32 -> vector<2x128xf32>
    %283 = vector.broadcast %29 : vector<1x128xf32> to vector<2x128xf32>
    %284 = arith.mulf %282, %283 : vector<2x128xf32>
    %285 = arith.addf %278, %284 : vector<2x128xf32>
    %c8 = arith.constant 8 : index
    %c0_104 = arith.constant 0 : index
    %c0_105 = arith.constant 0 : index
    %286 = vector.load %arg6[%c8, %c0_104, %c0_105] : memref<21x2x32xf32, #tpu.memory_space<vmem>>, vector<1x2x32xf32>
    %287 = vector.shape_cast %286 : vector<1x2x32xf32> to vector<2x32xf32>
    %cst_106 = arith.constant dense<0.000000e+00> : vector<2x128xf32>
    %288 = tpu.matmul %287, %206, %cst_106 {dimension_numbers = #tpu.dot_dimension_numbers<[1], [0], [0], [1], [0, 0, 1, 1], [], []>} : vector<2x32xf32>, vector<32x128xf32>, vector<2x128xf32> -> vector<2x128xf32>
    %c2_i32_107 = arith.constant 2 : i32
    %289 = tpu.dynamic_rotate %288 by %c2_i32_107 dim 1 : vector<2x128xf32>, i32 -> vector<2x128xf32>
    %290 = vector.broadcast %36 : vector<1x128xf32> to vector<2x128xf32>
    %291 = arith.mulf %289, %290 : vector<2x128xf32>
    %292 = arith.addf %285, %291 : vector<2x128xf32>
    %c9 = arith.constant 9 : index
    %c0_108 = arith.constant 0 : index
    %c0_109 = arith.constant 0 : index
    %293 = vector.load %arg6[%c9, %c0_108, %c0_109] : memref<21x2x32xf32, #tpu.memory_space<vmem>>, vector<1x2x32xf32>
    %294 = vector.shape_cast %293 : vector<1x2x32xf32> to vector<2x32xf32>
    %cst_110 = arith.constant dense<0.000000e+00> : vector<2x128xf32>
    %295 = tpu.matmul %294, %206, %cst_110 {dimension_numbers = #tpu.dot_dimension_numbers<[1], [0], [0], [1], [0, 0, 1, 1], [], []>} : vector<2x32xf32>, vector<32x128xf32>, vector<2x128xf32> -> vector<2x128xf32>
    %c1_i32_111 = arith.constant 1 : i32
    %296 = tpu.dynamic_rotate %295 by %c1_i32_111 dim 1 : vector<2x128xf32>, i32 -> vector<2x128xf32>
    %297 = vector.broadcast %43 : vector<1x128xf32> to vector<2x128xf32>
    %298 = arith.mulf %296, %297 : vector<2x128xf32>
    %299 = arith.addf %292, %298 : vector<2x128xf32>
    %c10 = arith.constant 10 : index
    %c0_112 = arith.constant 0 : index
    %c0_113 = arith.constant 0 : index
    %300 = vector.load %arg6[%c10, %c0_112, %c0_113] : memref<21x2x32xf32, #tpu.memory_space<vmem>>, vector<1x2x32xf32>
    %301 = vector.shape_cast %300 : vector<1x2x32xf32> to vector<2x32xf32>
    %cst_114 = arith.constant dense<0.000000e+00> : vector<2x128xf32>
    %302 = tpu.matmul %301, %206, %cst_114 {dimension_numbers = #tpu.dot_dimension_numbers<[1], [0], [0], [1], [0, 0, 1, 1], [], []>} : vector<2x32xf32>, vector<32x128xf32>, vector<2x128xf32> -> vector<2x128xf32>
    %303 = arith.addf %299, %302 : vector<2x128xf32>
    %c11 = arith.constant 11 : index
    %c0_115 = arith.constant 0 : index
    %c0_116 = arith.constant 0 : index
    %304 = vector.load %arg6[%c11, %c0_115, %c0_116] : memref<21x2x32xf32, #tpu.memory_space<vmem>>, vector<1x2x32xf32>
    %305 = vector.shape_cast %304 : vector<1x2x32xf32> to vector<2x32xf32>
    %cst_117 = arith.constant dense<0.000000e+00> : vector<2x128xf32>
    %306 = tpu.matmul %305, %206, %cst_117 {dimension_numbers = #tpu.dot_dimension_numbers<[1], [0], [0], [1], [0, 0, 1, 1], [], []>} : vector<2x32xf32>, vector<32x128xf32>, vector<2x128xf32> -> vector<2x128xf32>
    %c127_i32_118 = arith.constant 127 : i32
    %307 = tpu.dynamic_rotate %306 by %c127_i32_118 dim 1 : vector<2x128xf32>, i32 -> vector<2x128xf32>
    %308 = vector.broadcast %50 : vector<1x128xf32> to vector<2x128xf32>
    %309 = arith.mulf %307, %308 : vector<2x128xf32>
    %310 = arith.addf %303, %309 : vector<2x128xf32>
    %c12 = arith.constant 12 : index
    %c0_119 = arith.constant 0 : index
    %c0_120 = arith.constant 0 : index
    %311 = vector.load %arg6[%c12, %c0_119, %c0_120] : memref<21x2x32xf32, #tpu.memory_space<vmem>>, vector<1x2x32xf32>
    %312 = vector.shape_cast %311 : vector<1x2x32xf32> to vector<2x32xf32>
    %cst_121 = arith.constant dense<0.000000e+00> : vector<2x128xf32>
    %313 = tpu.matmul %312, %206, %cst_121 {dimension_numbers = #tpu.dot_dimension_numbers<[1], [0], [0], [1], [0, 0, 1, 1], [], []>} : vector<2x32xf32>, vector<32x128xf32>, vector<2x128xf32> -> vector<2x128xf32>
    %c126_i32_122 = arith.constant 126 : i32
    %314 = tpu.dynamic_rotate %313 by %c126_i32_122 dim 1 : vector<2x128xf32>, i32 -> vector<2x128xf32>
    %315 = vector.broadcast %57 : vector<1x128xf32> to vector<2x128xf32>
    %316 = arith.mulf %314, %315 : vector<2x128xf32>
    %317 = arith.addf %310, %316 : vector<2x128xf32>
    %c13 = arith.constant 13 : index
    %c0_123 = arith.constant 0 : index
    %c0_124 = arith.constant 0 : index
    %318 = vector.load %arg6[%c13, %c0_123, %c0_124] : memref<21x2x32xf32, #tpu.memory_space<vmem>>, vector<1x2x32xf32>
    %319 = vector.shape_cast %318 : vector<1x2x32xf32> to vector<2x32xf32>
    %cst_125 = arith.constant dense<0.000000e+00> : vector<2x128xf32>
    %320 = tpu.matmul %319, %206, %cst_125 {dimension_numbers = #tpu.dot_dimension_numbers<[1], [0], [0], [1], [0, 0, 1, 1], [], []>} : vector<2x32xf32>, vector<32x128xf32>, vector<2x128xf32> -> vector<2x128xf32>
    %c125_i32_126 = arith.constant 125 : i32
    %321 = tpu.dynamic_rotate %320 by %c125_i32_126 dim 1 : vector<2x128xf32>, i32 -> vector<2x128xf32>
    %322 = vector.broadcast %64 : vector<1x128xf32> to vector<2x128xf32>
    %323 = arith.mulf %321, %322 : vector<2x128xf32>
    %324 = arith.addf %317, %323 : vector<2x128xf32>
    %c14 = arith.constant 14 : index
    %c0_127 = arith.constant 0 : index
    %c0_128 = arith.constant 0 : index
    %325 = vector.load %arg6[%c14, %c0_127, %c0_128] : memref<21x2x32xf32, #tpu.memory_space<vmem>>, vector<1x2x32xf32>
    %326 = vector.shape_cast %325 : vector<1x2x32xf32> to vector<2x32xf32>
    %cst_129 = arith.constant dense<0.000000e+00> : vector<2x128xf32>
    %327 = tpu.matmul %326, %206, %cst_129 {dimension_numbers = #tpu.dot_dimension_numbers<[1], [0], [0], [1], [0, 0, 1, 1], [], []>} : vector<2x32xf32>, vector<32x128xf32>, vector<2x128xf32> -> vector<2x128xf32>
    %c124_i32_130 = arith.constant 124 : i32
    %328 = tpu.dynamic_rotate %327 by %c124_i32_130 dim 1 : vector<2x128xf32>, i32 -> vector<2x128xf32>
    %329 = vector.broadcast %71 : vector<1x128xf32> to vector<2x128xf32>
    %330 = arith.mulf %328, %329 : vector<2x128xf32>
    %331 = arith.addf %324, %330 : vector<2x128xf32>
    %c15 = arith.constant 15 : index
    %c0_131 = arith.constant 0 : index
    %c0_132 = arith.constant 0 : index
    %332 = vector.load %arg6[%c15, %c0_131, %c0_132] : memref<21x2x32xf32, #tpu.memory_space<vmem>>, vector<1x2x32xf32>
    %333 = vector.shape_cast %332 : vector<1x2x32xf32> to vector<2x32xf32>
    %cst_133 = arith.constant dense<0.000000e+00> : vector<2x128xf32>
    %334 = tpu.matmul %333, %206, %cst_133 {dimension_numbers = #tpu.dot_dimension_numbers<[1], [0], [0], [1], [0, 0, 1, 1], [], []>} : vector<2x32xf32>, vector<32x128xf32>, vector<2x128xf32> -> vector<2x128xf32>
    %c123_i32_134 = arith.constant 123 : i32
    %335 = tpu.dynamic_rotate %334 by %c123_i32_134 dim 1 : vector<2x128xf32>, i32 -> vector<2x128xf32>
    %336 = vector.broadcast %78 : vector<1x128xf32> to vector<2x128xf32>
    %337 = arith.mulf %335, %336 : vector<2x128xf32>
    %338 = arith.addf %331, %337 : vector<2x128xf32>
    %c16 = arith.constant 16 : index
    %c0_135 = arith.constant 0 : index
    %c0_136 = arith.constant 0 : index
    %339 = vector.load %arg6[%c16, %c0_135, %c0_136] : memref<21x2x32xf32, #tpu.memory_space<vmem>>, vector<1x2x32xf32>
    %340 = vector.shape_cast %339 : vector<1x2x32xf32> to vector<2x32xf32>
    %cst_137 = arith.constant dense<0.000000e+00> : vector<2x128xf32>
    %341 = tpu.matmul %340, %206, %cst_137 {dimension_numbers = #tpu.dot_dimension_numbers<[1], [0], [0], [1], [0, 0, 1, 1], [], []>} : vector<2x32xf32>, vector<32x128xf32>, vector<2x128xf32> -> vector<2x128xf32>
    %c122_i32_138 = arith.constant 122 : i32
    %342 = tpu.dynamic_rotate %341 by %c122_i32_138 dim 1 : vector<2x128xf32>, i32 -> vector<2x128xf32>
    %343 = vector.broadcast %85 : vector<1x128xf32> to vector<2x128xf32>
    %344 = arith.mulf %342, %343 : vector<2x128xf32>
    %345 = arith.addf %338, %344 : vector<2x128xf32>
    %c17 = arith.constant 17 : index
    %c0_139 = arith.constant 0 : index
    %c0_140 = arith.constant 0 : index
    %346 = vector.load %arg6[%c17, %c0_139, %c0_140] : memref<21x2x32xf32, #tpu.memory_space<vmem>>, vector<1x2x32xf32>
    %347 = vector.shape_cast %346 : vector<1x2x32xf32> to vector<2x32xf32>
    %cst_141 = arith.constant dense<0.000000e+00> : vector<2x128xf32>
    %348 = tpu.matmul %347, %206, %cst_141 {dimension_numbers = #tpu.dot_dimension_numbers<[1], [0], [0], [1], [0, 0, 1, 1], [], []>} : vector<2x32xf32>, vector<32x128xf32>, vector<2x128xf32> -> vector<2x128xf32>
    %c121_i32 = arith.constant 121 : i32
    %349 = tpu.dynamic_rotate %348 by %c121_i32 dim 1 : vector<2x128xf32>, i32 -> vector<2x128xf32>
    %c121_i32_142 = arith.constant 121 : i32
    %350 = vector.broadcast %c121_i32_142 : i32 to vector<1x128xi32>
    %351 = arith.cmpi slt, %0, %350 : vector<1x128xi32>
    %352 = arith.extui %351 : vector<1x128xi1> to vector<1x128xi32>
    %353 = arith.sitofp %352 : vector<1x128xi32> to vector<1x128xf32>
    %354 = vector.broadcast %353 : vector<1x128xf32> to vector<2x128xf32>
    %355 = arith.mulf %349, %354 : vector<2x128xf32>
    %356 = arith.addf %345, %355 : vector<2x128xf32>
    %c18 = arith.constant 18 : index
    %c0_143 = arith.constant 0 : index
    %c0_144 = arith.constant 0 : index
    %357 = vector.load %arg6[%c18, %c0_143, %c0_144] : memref<21x2x32xf32, #tpu.memory_space<vmem>>, vector<1x2x32xf32>
    %358 = vector.shape_cast %357 : vector<1x2x32xf32> to vector<2x32xf32>
    %cst_145 = arith.constant dense<0.000000e+00> : vector<2x128xf32>
    %359 = tpu.matmul %358, %206, %cst_145 {dimension_numbers = #tpu.dot_dimension_numbers<[1], [0], [0], [1], [0, 0, 1, 1], [], []>} : vector<2x32xf32>, vector<32x128xf32>, vector<2x128xf32> -> vector<2x128xf32>
    %c120_i32 = arith.constant 120 : i32
    %360 = tpu.dynamic_rotate %359 by %c120_i32 dim 1 : vector<2x128xf32>, i32 -> vector<2x128xf32>
    %c120_i32_146 = arith.constant 120 : i32
    %361 = vector.broadcast %c120_i32_146 : i32 to vector<1x128xi32>
    %362 = arith.cmpi slt, %0, %361 : vector<1x128xi32>
    %363 = arith.extui %362 : vector<1x128xi1> to vector<1x128xi32>
    %364 = arith.sitofp %363 : vector<1x128xi32> to vector<1x128xf32>
    %365 = vector.broadcast %364 : vector<1x128xf32> to vector<2x128xf32>
    %366 = arith.mulf %360, %365 : vector<2x128xf32>
    %367 = arith.addf %356, %366 : vector<2x128xf32>
    %c19 = arith.constant 19 : index
    %c0_147 = arith.constant 0 : index
    %c0_148 = arith.constant 0 : index
    %368 = vector.load %arg6[%c19, %c0_147, %c0_148] : memref<21x2x32xf32, #tpu.memory_space<vmem>>, vector<1x2x32xf32>
    %369 = vector.shape_cast %368 : vector<1x2x32xf32> to vector<2x32xf32>
    %cst_149 = arith.constant dense<0.000000e+00> : vector<2x128xf32>
    %370 = tpu.matmul %369, %206, %cst_149 {dimension_numbers = #tpu.dot_dimension_numbers<[1], [0], [0], [1], [0, 0, 1, 1], [], []>} : vector<2x32xf32>, vector<32x128xf32>, vector<2x128xf32> -> vector<2x128xf32>
    %c119_i32 = arith.constant 119 : i32
    %371 = tpu.dynamic_rotate %370 by %c119_i32 dim 1 : vector<2x128xf32>, i32 -> vector<2x128xf32>
    %c119_i32_150 = arith.constant 119 : i32
    %372 = vector.broadcast %c119_i32_150 : i32 to vector<1x128xi32>
    %373 = arith.cmpi slt, %0, %372 : vector<1x128xi32>
    %374 = arith.extui %373 : vector<1x128xi1> to vector<1x128xi32>
    %375 = arith.sitofp %374 : vector<1x128xi32> to vector<1x128xf32>
    %376 = vector.broadcast %375 : vector<1x128xf32> to vector<2x128xf32>
    %377 = arith.mulf %371, %376 : vector<2x128xf32>
    %378 = arith.addf %367, %377 : vector<2x128xf32>
    %c20 = arith.constant 20 : index
    %c0_151 = arith.constant 0 : index
    %c0_152 = arith.constant 0 : index
    %379 = vector.load %arg6[%c20, %c0_151, %c0_152] : memref<21x2x32xf32, #tpu.memory_space<vmem>>, vector<1x2x32xf32>
    %380 = vector.shape_cast %379 : vector<1x2x32xf32> to vector<2x32xf32>
    %cst_153 = arith.constant dense<0.000000e+00> : vector<2x128xf32>
    %381 = tpu.matmul %380, %206, %cst_153 {dimension_numbers = #tpu.dot_dimension_numbers<[1], [0], [0], [1], [0, 0, 1, 1], [], []>} : vector<2x32xf32>, vector<32x128xf32>, vector<2x128xf32> -> vector<2x128xf32>
    %c118_i32_154 = arith.constant 118 : i32
    %382 = tpu.dynamic_rotate %381 by %c118_i32_154 dim 1 : vector<2x128xf32>, i32 -> vector<2x128xf32>
    %383 = vector.broadcast %152 : vector<1x128xf32> to vector<2x128xf32>
    %384 = arith.mulf %382, %383 : vector<2x128xf32>
    %385 = arith.addf %378, %384 : vector<2x128xf32>
    %386 = vector.extract_strided_slice %385 {offsets = [0, 0], sizes = [1, 128], strides = [1, 1]} : vector<2x128xf32> to vector<1x128xf32>
    %387 = vector.broadcast %7 : f32 to vector<1x128xf32>
    %388 = arith.addf %386, %387 : vector<1x128xf32>
    %389 = vector.extract_strided_slice %385 {offsets = [1, 0], sizes = [1, 128], strides = [1, 1]} : vector<2x128xf32> to vector<1x128xf32>
    %390 = vector.broadcast %8 : f32 to vector<1x128xf32>
    %391 = arith.addf %389, %390 : vector<1x128xf32>
    %cst_155 = arith.constant dense<0xFF800000> : vector<1xf32>
    %392 = vector.multi_reduction <maximumf>, %388, %cst_155 [1] : vector<1x128xf32> to vector<1xf32>
    %393 = vector.shape_cast %392 : vector<1xf32> to vector<1x1xf32>
    %394 = vector.broadcast %393 : vector<1x1xf32> to vector<1x128xf32>
    %395 = arith.subf %388, %394 : vector<1x128xf32>
    %396 = math.exp %395 : vector<1x128xf32>
    %cst_156 = arith.constant dense<0.000000e+00> : vector<1xf32>
    %397 = vector.multi_reduction <add>, %396, %cst_156 [1] : vector<1x128xf32> to vector<1xf32>
    %398 = vector.shape_cast %397 : vector<1xf32> to vector<1x1xf32>
    %399 = math.log %398 : vector<1x1xf32>
    %400 = arith.addf %393, %399 : vector<1x1xf32>
    %cst_157 = arith.constant dense<0xFF800000> : vector<1xf32>
    %401 = vector.multi_reduction <maximumf>, %391, %cst_157 [1] : vector<1x128xf32> to vector<1xf32>
    %402 = vector.shape_cast %401 : vector<1xf32> to vector<1x1xf32>
    %403 = vector.broadcast %402 : vector<1x1xf32> to vector<1x128xf32>
    %404 = arith.subf %391, %403 : vector<1x128xf32>
    %405 = math.exp %404 : vector<1x128xf32>
    %cst_158 = arith.constant dense<0.000000e+00> : vector<1xf32>
    %406 = vector.multi_reduction <add>, %405, %cst_158 [1] : vector<1x128xf32> to vector<1xf32>
    %407 = vector.shape_cast %406 : vector<1xf32> to vector<1x1xf32>
    %408 = math.log %407 : vector<1x1xf32>
    %409 = arith.addf %402, %408 : vector<1x1xf32>
    %410 = vector.broadcast %400 : vector<1x1xf32> to vector<1x128xf32>
    %411 = arith.subf %388, %410 : vector<1x128xf32>
    %412 = vector.broadcast %216 : vector<1x1xf32> to vector<1x128xf32>
    %413 = arith.addf %412, %411 : vector<1x128xf32>
    %414 = vector.broadcast %409 : vector<1x1xf32> to vector<1x128xf32>
    %415 = arith.subf %391, %414 : vector<1x128xf32>
    %416 = arith.maximumf %413, %415 : vector<1x128xf32>
    %417 = arith.subf %413, %415 : vector<1x128xf32>
    %418 = math.absf %417 : vector<1x128xf32>
    %cst_159 = arith.constant 0.000000e+00 : f32
    %419 = vector.broadcast %cst_159 : f32 to vector<1x128xf32>
    %420 = arith.subf %419, %418 : vector<1x128xf32>
    %421 = math.exp %420 : vector<1x128xf32>
    %422 = math.log1p %421 : vector<1x128xf32>
    %423 = arith.addf %416, %422 : vector<1x128xf32>
    %424 = arith.mulf %3, %388 : vector<1x128xf32>
    %cst_160 = arith.constant dense<0.000000e+00> : vector<1xf32>
    %425 = vector.multi_reduction <add>, %424, %cst_160 [1] : vector<1x128xf32> to vector<1xf32>
    %426 = vector.shape_cast %425 : vector<1xf32> to vector<1x1xf32>
    %427 = vector.broadcast %5 : f32 to vector<1x1xf32>
    %428 = arith.mulf %426, %427 : vector<1x1xf32>
    %429 = vector.broadcast %6 : f32 to vector<1x1xf32>
    %430 = arith.addf %428, %429 : vector<1x1xf32>
    %431 = vector.shape_cast %216 : vector<1x1xf32> to vector<1x1xf32>
    %432 = vector.broadcast %431 : vector<1x1xf32> to vector<1x128xf32>
    %433 = vector.shape_cast %430 : vector<1x1xf32> to vector<1x1xf32>
    %434 = vector.broadcast %433 : vector<1x1xf32> to vector<1x128xf32>
    %cst_161 = arith.constant 0.000000e+00 : f32
    %435 = vector.broadcast %cst_161 : f32 to vector<3x128xf32>
    %436 = tpu.concatenate %423, %388, %391, %432, %434, %435 in 0 : vector<1x128xf32>, vector<1x128xf32>, vector<1x128xf32>, vector<1x128xf32>, vector<1x128xf32>, vector<3x128xf32> -> vector<8x128xf32>
    %c0_162 = arith.constant 0 : index
    %c0_163 = arith.constant 0 : index
    %c0_164 = arith.constant 0 : index
    %437 = vector.load %arg9[%c0_162, %c0_163, %c0_164] : memref<2x8x128xf32, #tpu.memory_space<vmem>>, vector<1x8x128xf32>
    %438 = vector.shape_cast %437 : vector<1x8x128xf32> to vector<8x128xf32>
    %439 = vector.shape_cast %436 : vector<8x128xf32> to vector<1x8x128xf32>
    tpu.vector_store %arg9[%c0_162, %c0_163, %c0_164], %439 {strides = array<i32>} : memref<2x8x128xf32, #tpu.memory_space<vmem>>, vector<1x8x128xf32>,
    %c1_165 = arith.constant 1 : index
    %c0_166 = arith.constant 0 : index
    %c0_167 = arith.constant 0 : index
    %440 = vector.load %arg2[%c1_165, %c0_166, %c0_167] : memref<2x4x128xf32, #tpu.memory_space<vmem>>, vector<1x4x128xf32>
    %441 = vector.shape_cast %440 : vector<1x4x128xf32> to vector<4x128xf32>
    %c5_i32_168 = arith.constant 5 : i32
    %442 = tpu.dynamic_rotate %441 by %c5_i32_168 dim 1 : vector<4x128xf32>, i32 -> vector<4x128xf32>
    %443 = vector.broadcast %15 : vector<1x128xf32> to vector<4x128xf32>
    %444 = arith.mulf %442, %443 : vector<4x128xf32>
    %c4_i32_169 = arith.constant 4 : i32
    %445 = tpu.dynamic_rotate %441 by %c4_i32_169 dim 1 : vector<4x128xf32>, i32 -> vector<4x128xf32>
    %446 = vector.broadcast %22 : vector<1x128xf32> to vector<4x128xf32>
    %447 = arith.mulf %445, %446 : vector<4x128xf32>
    %c3_i32_170 = arith.constant 3 : i32
    %448 = tpu.dynamic_rotate %441 by %c3_i32_170 dim 1 : vector<4x128xf32>, i32 -> vector<4x128xf32>
    %449 = vector.broadcast %29 : vector<1x128xf32> to vector<4x128xf32>
    %450 = arith.mulf %448, %449 : vector<4x128xf32>
    %c2_i32_171 = arith.constant 2 : i32
    %451 = tpu.dynamic_rotate %441 by %c2_i32_171 dim 1 : vector<4x128xf32>, i32 -> vector<4x128xf32>
    %452 = vector.broadcast %36 : vector<1x128xf32> to vector<4x128xf32>
    %453 = arith.mulf %451, %452 : vector<4x128xf32>
    %c1_i32_172 = arith.constant 1 : i32
    %454 = tpu.dynamic_rotate %441 by %c1_i32_172 dim 1 : vector<4x128xf32>, i32 -> vector<4x128xf32>
    %455 = vector.broadcast %43 : vector<1x128xf32> to vector<4x128xf32>
    %456 = arith.mulf %454, %455 : vector<4x128xf32>
    %c127_i32_173 = arith.constant 127 : i32
    %457 = tpu.dynamic_rotate %441 by %c127_i32_173 dim 1 : vector<4x128xf32>, i32 -> vector<4x128xf32>
    %458 = vector.broadcast %50 : vector<1x128xf32> to vector<4x128xf32>
    %459 = arith.mulf %457, %458 : vector<4x128xf32>
    %c126_i32_174 = arith.constant 126 : i32
    %460 = tpu.dynamic_rotate %441 by %c126_i32_174 dim 1 : vector<4x128xf32>, i32 -> vector<4x128xf32>
    %461 = vector.broadcast %57 : vector<1x128xf32> to vector<4x128xf32>
    %462 = arith.mulf %460, %461 : vector<4x128xf32>
    %c125_i32_175 = arith.constant 125 : i32
    %463 = tpu.dynamic_rotate %441 by %c125_i32_175 dim 1 : vector<4x128xf32>, i32 -> vector<4x128xf32>
    %464 = vector.broadcast %64 : vector<1x128xf32> to vector<4x128xf32>
    %465 = arith.mulf %463, %464 : vector<4x128xf32>
    %c124_i32_176 = arith.constant 124 : i32
    %466 = tpu.dynamic_rotate %441 by %c124_i32_176 dim 1 : vector<4x128xf32>, i32 -> vector<4x128xf32>
    %467 = vector.broadcast %71 : vector<1x128xf32> to vector<4x128xf32>
    %468 = arith.mulf %466, %467 : vector<4x128xf32>
    %c123_i32_177 = arith.constant 123 : i32
    %469 = tpu.dynamic_rotate %441 by %c123_i32_177 dim 1 : vector<4x128xf32>, i32 -> vector<4x128xf32>
    %470 = vector.broadcast %78 : vector<1x128xf32> to vector<4x128xf32>
    %471 = arith.mulf %469, %470 : vector<4x128xf32>
    %c122_i32_178 = arith.constant 122 : i32
    %472 = tpu.dynamic_rotate %441 by %c122_i32_178 dim 1 : vector<4x128xf32>, i32 -> vector<4x128xf32>
    %473 = vector.broadcast %85 : vector<1x128xf32> to vector<4x128xf32>
    %474 = arith.mulf %472, %473 : vector<4x128xf32>
    %475 = tpu.concatenate %444, %447, %450, %453, %456, %441, %459, %462, %465, %468, %471, %474 in 0 : vector<4x128xf32>, vector<4x128xf32>, vector<4x128xf32>, vector<4x128xf32>, vector<4x128xf32>, vector<4x128xf32>, vector<4x128xf32>, vector<4x128xf32>, vector<4x128xf32>, vector<4x128xf32>, vector<4x128xf32>, vector<4x128xf32> -> vector<48x128xf32>
    %cst_179 = arith.constant dense<0.000000e+00> : vector<32x128xf32>
    %476 = tpu.matmul %1, %475, %cst_179 {dimension_numbers = #tpu.dot_dimension_numbers<[1], [0], [0], [1], [0, 0, 1, 1], [], []>} : vector<32x48xf32>, vector<48x128xf32>, vector<32x128xf32> -> vector<32x128xf32>
    %cst_180 = arith.constant 0.000000e+00 : f32
    %477 = vector.broadcast %cst_180 : f32 to vector<32x128xf32>
    %478 = arith.maximumf %476, %477 : vector<32x128xf32>
    %c0_181 = arith.constant 0 : index
    %c0_182 = arith.constant 0 : index
    %c0_183 = arith.constant 0 : index
    %479 = vector.load %arg4[%c0_181, %c0_182, %c0_183] : memref<3x32x192xf32, #tpu.memory_space<vmem>>, vector<1x32x192xf32>
    %480 = vector.shape_cast %479 : vector<1x32x192xf32> to vector<32x192xf32>
    %c0_184 = arith.constant 0 : index
    %c0_185 = arith.constant 0 : index
    %c0_186 = arith.constant 0 : index
    %481 = vector.load %arg5[%c0_184, %c0_185, %c0_186] : memref<3x32x1xf32, #tpu.memory_space<vmem>>, vector<1x32x1xf32>
    %482 = vector.shape_cast %481 : vector<1x32x1xf32> to vector<32x1xf32>
    %c5_i32_187 = arith.constant 5 : i32
    %483 = tpu.dynamic_rotate %478 by %c5_i32_187 dim 1 : vector<32x128xf32>, i32 -> vector<32x128xf32>
    %484 = vector.broadcast %15 : vector<1x128xf32> to vector<32x128xf32>
    %485 = arith.mulf %483, %484 : vector<32x128xf32>
    %c3_i32_188 = arith.constant 3 : i32
    %486 = tpu.dynamic_rotate %478 by %c3_i32_188 dim 1 : vector<32x128xf32>, i32 -> vector<32x128xf32>
    %487 = vector.broadcast %29 : vector<1x128xf32> to vector<32x128xf32>
    %488 = arith.mulf %486, %487 : vector<32x128xf32>
    %c1_i32_189 = arith.constant 1 : i32
    %489 = tpu.dynamic_rotate %478 by %c1_i32_189 dim 1 : vector<32x128xf32>, i32 -> vector<32x128xf32>
    %490 = vector.broadcast %43 : vector<1x128xf32> to vector<32x128xf32>
    %491 = arith.mulf %489, %490 : vector<32x128xf32>
    %c127_i32_190 = arith.constant 127 : i32
    %492 = tpu.dynamic_rotate %478 by %c127_i32_190 dim 1 : vector<32x128xf32>, i32 -> vector<32x128xf32>
    %493 = vector.broadcast %50 : vector<1x128xf32> to vector<32x128xf32>
    %494 = arith.mulf %492, %493 : vector<32x128xf32>
    %c125_i32_191 = arith.constant 125 : i32
    %495 = tpu.dynamic_rotate %478 by %c125_i32_191 dim 1 : vector<32x128xf32>, i32 -> vector<32x128xf32>
    %496 = vector.broadcast %64 : vector<1x128xf32> to vector<32x128xf32>
    %497 = arith.mulf %495, %496 : vector<32x128xf32>
    %c123_i32_192 = arith.constant 123 : i32
    %498 = tpu.dynamic_rotate %478 by %c123_i32_192 dim 1 : vector<32x128xf32>, i32 -> vector<32x128xf32>
    %499 = vector.broadcast %78 : vector<1x128xf32> to vector<32x128xf32>
    %500 = arith.mulf %498, %499 : vector<32x128xf32>
    %501 = tpu.concatenate %485, %488, %491, %494, %497, %500 in 0 : vector<32x128xf32>, vector<32x128xf32>, vector<32x128xf32>, vector<32x128xf32>, vector<32x128xf32>, vector<32x128xf32> -> vector<192x128xf32>
    %cst_193 = arith.constant dense<0.000000e+00> : vector<32x128xf32>
    %502 = tpu.matmul %480, %501, %cst_193 {dimension_numbers = #tpu.dot_dimension_numbers<[1], [0], [0], [1], [0, 0, 1, 1], [], []>} : vector<32x192xf32>, vector<192x128xf32>, vector<32x128xf32> -> vector<32x128xf32>
    %503 = vector.broadcast %482 : vector<32x1xf32> to vector<32x128xf32>
    %504 = arith.addf %502, %503 : vector<32x128xf32>
    %cst_194 = arith.constant 0.000000e+00 : f32
    %505 = vector.broadcast %cst_194 : f32 to vector<32x128xf32>
    %506 = arith.maximumf %504, %505 : vector<32x128xf32>
    %507 = arith.addf %506, %478 : vector<32x128xf32>
    %c1_195 = arith.constant 1 : index
    %c0_196 = arith.constant 0 : index
    %c0_197 = arith.constant 0 : index
    %508 = vector.load %arg4[%c1_195, %c0_196, %c0_197] : memref<3x32x192xf32, #tpu.memory_space<vmem>>, vector<1x32x192xf32>
    %509 = vector.shape_cast %508 : vector<1x32x192xf32> to vector<32x192xf32>
    %c1_198 = arith.constant 1 : index
    %c0_199 = arith.constant 0 : index
    %c0_200 = arith.constant 0 : index
    %510 = vector.load %arg5[%c1_198, %c0_199, %c0_200] : memref<3x32x1xf32, #tpu.memory_space<vmem>>, vector<1x32x1xf32>
    %511 = vector.shape_cast %510 : vector<1x32x1xf32> to vector<32x1xf32>
    %c10_i32_201 = arith.constant 10 : i32
    %512 = tpu.dynamic_rotate %507 by %c10_i32_201 dim 1 : vector<32x128xf32>, i32 -> vector<32x128xf32>
    %513 = vector.broadcast %129 : vector<1x128xf32> to vector<32x128xf32>
    %514 = arith.mulf %512, %513 : vector<32x128xf32>
    %c6_i32_202 = arith.constant 6 : i32
    %515 = tpu.dynamic_rotate %507 by %c6_i32_202 dim 1 : vector<32x128xf32>, i32 -> vector<32x128xf32>
    %516 = vector.broadcast %136 : vector<1x128xf32> to vector<32x128xf32>
    %517 = arith.mulf %515, %516 : vector<32x128xf32>
    %c2_i32_203 = arith.constant 2 : i32
    %518 = tpu.dynamic_rotate %507 by %c2_i32_203 dim 1 : vector<32x128xf32>, i32 -> vector<32x128xf32>
    %519 = vector.broadcast %36 : vector<1x128xf32> to vector<32x128xf32>
    %520 = arith.mulf %518, %519 : vector<32x128xf32>
    %c126_i32_204 = arith.constant 126 : i32
    %521 = tpu.dynamic_rotate %507 by %c126_i32_204 dim 1 : vector<32x128xf32>, i32 -> vector<32x128xf32>
    %522 = vector.broadcast %57 : vector<1x128xf32> to vector<32x128xf32>
    %523 = arith.mulf %521, %522 : vector<32x128xf32>
    %c122_i32_205 = arith.constant 122 : i32
    %524 = tpu.dynamic_rotate %507 by %c122_i32_205 dim 1 : vector<32x128xf32>, i32 -> vector<32x128xf32>
    %525 = vector.broadcast %85 : vector<1x128xf32> to vector<32x128xf32>
    %526 = arith.mulf %524, %525 : vector<32x128xf32>
    %c118_i32_206 = arith.constant 118 : i32
    %527 = tpu.dynamic_rotate %507 by %c118_i32_206 dim 1 : vector<32x128xf32>, i32 -> vector<32x128xf32>
    %528 = vector.broadcast %152 : vector<1x128xf32> to vector<32x128xf32>
    %529 = arith.mulf %527, %528 : vector<32x128xf32>
    %530 = tpu.concatenate %514, %517, %520, %523, %526, %529 in 0 : vector<32x128xf32>, vector<32x128xf32>, vector<32x128xf32>, vector<32x128xf32>, vector<32x128xf32>, vector<32x128xf32> -> vector<192x128xf32>
    %cst_207 = arith.constant dense<0.000000e+00> : vector<32x128xf32>
    %531 = tpu.matmul %509, %530, %cst_207 {dimension_numbers = #tpu.dot_dimension_numbers<[1], [0], [0], [1], [0, 0, 1, 1], [], []>} : vector<32x192xf32>, vector<192x128xf32>, vector<32x128xf32> -> vector<32x128xf32>
    %532 = vector.broadcast %511 : vector<32x1xf32> to vector<32x128xf32>
    %533 = arith.addf %531, %532 : vector<32x128xf32>
    %cst_208 = arith.constant 0.000000e+00 : f32
    %534 = vector.broadcast %cst_208 : f32 to vector<32x128xf32>
    %535 = arith.maximumf %533, %534 : vector<32x128xf32>
    %536 = arith.addf %535, %507 : vector<32x128xf32>
    %c2_209 = arith.constant 2 : index
    %c0_210 = arith.constant 0 : index
    %c0_211 = arith.constant 0 : index
    %537 = vector.load %arg4[%c2_209, %c0_210, %c0_211] : memref<3x32x192xf32, #tpu.memory_space<vmem>>, vector<1x32x192xf32>
    %538 = vector.shape_cast %537 : vector<1x32x192xf32> to vector<32x192xf32>
    %c2_212 = arith.constant 2 : index
    %c0_213 = arith.constant 0 : index
    %c0_214 = arith.constant 0 : index
    %539 = vector.load %arg5[%c2_212, %c0_213, %c0_214] : memref<3x32x1xf32, #tpu.memory_space<vmem>>, vector<1x32x1xf32>
    %540 = vector.shape_cast %539 : vector<1x32x1xf32> to vector<32x1xf32>
    %c20_i32_215 = arith.constant 20 : i32
    %541 = tpu.dynamic_rotate %536 by %c20_i32_215 dim 1 : vector<32x128xf32>, i32 -> vector<32x128xf32>
    %542 = vector.broadcast %170 : vector<1x128xf32> to vector<32x128xf32>
    %543 = arith.mulf %541, %542 : vector<32x128xf32>
    %c12_i32_216 = arith.constant 12 : i32
    %544 = tpu.dynamic_rotate %536 by %c12_i32_216 dim 1 : vector<32x128xf32>, i32 -> vector<32x128xf32>
    %545 = vector.broadcast %177 : vector<1x128xf32> to vector<32x128xf32>
    %546 = arith.mulf %544, %545 : vector<32x128xf32>
    %c4_i32_217 = arith.constant 4 : i32
    %547 = tpu.dynamic_rotate %536 by %c4_i32_217 dim 1 : vector<32x128xf32>, i32 -> vector<32x128xf32>
    %548 = vector.broadcast %22 : vector<1x128xf32> to vector<32x128xf32>
    %549 = arith.mulf %547, %548 : vector<32x128xf32>
    %c124_i32_218 = arith.constant 124 : i32
    %550 = tpu.dynamic_rotate %536 by %c124_i32_218 dim 1 : vector<32x128xf32>, i32 -> vector<32x128xf32>
    %551 = vector.broadcast %71 : vector<1x128xf32> to vector<32x128xf32>
    %552 = arith.mulf %550, %551 : vector<32x128xf32>
    %c116_i32_219 = arith.constant 116 : i32
    %553 = tpu.dynamic_rotate %536 by %c116_i32_219 dim 1 : vector<32x128xf32>, i32 -> vector<32x128xf32>
    %554 = vector.broadcast %190 : vector<1x128xf32> to vector<32x128xf32>
    %555 = arith.mulf %553, %554 : vector<32x128xf32>
    %c108_i32_220 = arith.constant 108 : i32
    %556 = tpu.dynamic_rotate %536 by %c108_i32_220 dim 1 : vector<32x128xf32>, i32 -> vector<32x128xf32>
    %557 = vector.broadcast %197 : vector<1x128xf32> to vector<32x128xf32>
    %558 = arith.mulf %556, %557 : vector<32x128xf32>
    %559 = tpu.concatenate %543, %546, %549, %552, %555, %558 in 0 : vector<32x128xf32>, vector<32x128xf32>, vector<32x128xf32>, vector<32x128xf32>, vector<32x128xf32>, vector<32x128xf32> -> vector<192x128xf32>
    %cst_221 = arith.constant dense<0.000000e+00> : vector<32x128xf32>
    %560 = tpu.matmul %538, %559, %cst_221 {dimension_numbers = #tpu.dot_dimension_numbers<[1], [0], [0], [1], [0, 0, 1, 1], [], []>} : vector<32x192xf32>, vector<192x128xf32>, vector<32x128xf32> -> vector<32x128xf32>
    %561 = vector.broadcast %540 : vector<32x1xf32> to vector<32x128xf32>
    %562 = arith.addf %560, %561 : vector<32x128xf32>
    %cst_222 = arith.constant 0.000000e+00 : f32
    %563 = vector.broadcast %cst_222 : f32 to vector<32x128xf32>
    %564 = arith.maximumf %562, %563 : vector<32x128xf32>
    %565 = arith.addf %564, %536 : vector<32x128xf32>
    %566 = vector.broadcast %2 : vector<32x1xf32> to vector<32x128xf32>
    %567 = arith.mulf %566, %565 : vector<32x128xf32>
    %cst_223 = arith.constant dense<0.000000e+00> : vector<32xf32>
    %568 = vector.multi_reduction <add>, %567, %cst_223 [1] : vector<32x128xf32> to vector<32xf32>
    %569 = vector.shape_cast %568 : vector<32xf32> to vector<32x1xf32>
    %cst_224 = arith.constant dense<0.000000e+00> : vector<1xf32>
    %570 = vector.multi_reduction <add>, %569, %cst_224 [0] : vector<32x1xf32> to vector<1xf32>
    %571 = vector.shape_cast %570 : vector<1xf32> to vector<1x1xf32>
    %cst_225 = arith.constant 7.812500e-03 : f32
    %572 = vector.broadcast %cst_225 : f32 to vector<1x1xf32>
    %573 = arith.mulf %571, %572 : vector<1x1xf32>
    %574 = vector.broadcast %4 : f32 to vector<1x1xf32>
    %575 = arith.addf %573, %574 : vector<1x1xf32>
    %cst_226 = arith.constant 0.000000e+00 : f32
    %576 = vector.broadcast %cst_226 : f32 to vector<2x128xf32>
    %c0_227 = arith.constant 0 : index
    %c0_228 = arith.constant 0 : index
    %c0_229 = arith.constant 0 : index
    %577 = vector.load %arg6[%c0_227, %c0_228, %c0_229] : memref<21x2x32xf32, #tpu.memory_space<vmem>>, vector<1x2x32xf32>
    %578 = vector.shape_cast %577 : vector<1x2x32xf32> to vector<2x32xf32>
    %cst_230 = arith.constant dense<0.000000e+00> : vector<2x128xf32>
    %579 = tpu.matmul %578, %565, %cst_230 {dimension_numbers = #tpu.dot_dimension_numbers<[1], [0], [0], [1], [0, 0, 1, 1], [], []>} : vector<2x32xf32>, vector<32x128xf32>, vector<2x128xf32> -> vector<2x128xf32>
    %c10_i32_231 = arith.constant 10 : i32
    %580 = tpu.dynamic_rotate %579 by %c10_i32_231 dim 1 : vector<2x128xf32>, i32 -> vector<2x128xf32>
    %581 = vector.broadcast %129 : vector<1x128xf32> to vector<2x128xf32>
    %582 = arith.mulf %580, %581 : vector<2x128xf32>
    %583 = arith.addf %576, %582 : vector<2x128xf32>
    %c1_232 = arith.constant 1 : index
    %c0_233 = arith.constant 0 : index
    %c0_234 = arith.constant 0 : index
    %584 = vector.load %arg6[%c1_232, %c0_233, %c0_234] : memref<21x2x32xf32, #tpu.memory_space<vmem>>, vector<1x2x32xf32>
    %585 = vector.shape_cast %584 : vector<1x2x32xf32> to vector<2x32xf32>
    %cst_235 = arith.constant dense<0.000000e+00> : vector<2x128xf32>
    %586 = tpu.matmul %585, %565, %cst_235 {dimension_numbers = #tpu.dot_dimension_numbers<[1], [0], [0], [1], [0, 0, 1, 1], [], []>} : vector<2x32xf32>, vector<32x128xf32>, vector<2x128xf32> -> vector<2x128xf32>
    %c9_i32_236 = arith.constant 9 : i32
    %587 = tpu.dynamic_rotate %586 by %c9_i32_236 dim 1 : vector<2x128xf32>, i32 -> vector<2x128xf32>
    %588 = vector.broadcast %232 : vector<1x128xf32> to vector<2x128xf32>
    %589 = arith.mulf %587, %588 : vector<2x128xf32>
    %590 = arith.addf %583, %589 : vector<2x128xf32>
    %c2_237 = arith.constant 2 : index
    %c0_238 = arith.constant 0 : index
    %c0_239 = arith.constant 0 : index
    %591 = vector.load %arg6[%c2_237, %c0_238, %c0_239] : memref<21x2x32xf32, #tpu.memory_space<vmem>>, vector<1x2x32xf32>
    %592 = vector.shape_cast %591 : vector<1x2x32xf32> to vector<2x32xf32>
    %cst_240 = arith.constant dense<0.000000e+00> : vector<2x128xf32>
    %593 = tpu.matmul %592, %565, %cst_240 {dimension_numbers = #tpu.dot_dimension_numbers<[1], [0], [0], [1], [0, 0, 1, 1], [], []>} : vector<2x32xf32>, vector<32x128xf32>, vector<2x128xf32> -> vector<2x128xf32>
    %c8_i32_241 = arith.constant 8 : i32
    %594 = tpu.dynamic_rotate %593 by %c8_i32_241 dim 1 : vector<2x128xf32>, i32 -> vector<2x128xf32>
    %595 = vector.broadcast %243 : vector<1x128xf32> to vector<2x128xf32>
    %596 = arith.mulf %594, %595 : vector<2x128xf32>
    %597 = arith.addf %590, %596 : vector<2x128xf32>
    %c3_242 = arith.constant 3 : index
    %c0_243 = arith.constant 0 : index
    %c0_244 = arith.constant 0 : index
    %598 = vector.load %arg6[%c3_242, %c0_243, %c0_244] : memref<21x2x32xf32, #tpu.memory_space<vmem>>, vector<1x2x32xf32>
    %599 = vector.shape_cast %598 : vector<1x2x32xf32> to vector<2x32xf32>
    %cst_245 = arith.constant dense<0.000000e+00> : vector<2x128xf32>
    %600 = tpu.matmul %599, %565, %cst_245 {dimension_numbers = #tpu.dot_dimension_numbers<[1], [0], [0], [1], [0, 0, 1, 1], [], []>} : vector<2x32xf32>, vector<32x128xf32>, vector<2x128xf32> -> vector<2x128xf32>
    %c7_i32_246 = arith.constant 7 : i32
    %601 = tpu.dynamic_rotate %600 by %c7_i32_246 dim 1 : vector<2x128xf32>, i32 -> vector<2x128xf32>
    %602 = vector.broadcast %254 : vector<1x128xf32> to vector<2x128xf32>
    %603 = arith.mulf %601, %602 : vector<2x128xf32>
    %604 = arith.addf %597, %603 : vector<2x128xf32>
    %c4_247 = arith.constant 4 : index
    %c0_248 = arith.constant 0 : index
    %c0_249 = arith.constant 0 : index
    %605 = vector.load %arg6[%c4_247, %c0_248, %c0_249] : memref<21x2x32xf32, #tpu.memory_space<vmem>>, vector<1x2x32xf32>
    %606 = vector.shape_cast %605 : vector<1x2x32xf32> to vector<2x32xf32>
    %cst_250 = arith.constant dense<0.000000e+00> : vector<2x128xf32>
    %607 = tpu.matmul %606, %565, %cst_250 {dimension_numbers = #tpu.dot_dimension_numbers<[1], [0], [0], [1], [0, 0, 1, 1], [], []>} : vector<2x32xf32>, vector<32x128xf32>, vector<2x128xf32> -> vector<2x128xf32>
    %c6_i32_251 = arith.constant 6 : i32
    %608 = tpu.dynamic_rotate %607 by %c6_i32_251 dim 1 : vector<2x128xf32>, i32 -> vector<2x128xf32>
    %609 = vector.broadcast %136 : vector<1x128xf32> to vector<2x128xf32>
    %610 = arith.mulf %608, %609 : vector<2x128xf32>
    %611 = arith.addf %604, %610 : vector<2x128xf32>
    %c5_252 = arith.constant 5 : index
    %c0_253 = arith.constant 0 : index
    %c0_254 = arith.constant 0 : index
    %612 = vector.load %arg6[%c5_252, %c0_253, %c0_254] : memref<21x2x32xf32, #tpu.memory_space<vmem>>, vector<1x2x32xf32>
    %613 = vector.shape_cast %612 : vector<1x2x32xf32> to vector<2x32xf32>
    %cst_255 = arith.constant dense<0.000000e+00> : vector<2x128xf32>
    %614 = tpu.matmul %613, %565, %cst_255 {dimension_numbers = #tpu.dot_dimension_numbers<[1], [0], [0], [1], [0, 0, 1, 1], [], []>} : vector<2x32xf32>, vector<32x128xf32>, vector<2x128xf32> -> vector<2x128xf32>
    %c5_i32_256 = arith.constant 5 : i32
    %615 = tpu.dynamic_rotate %614 by %c5_i32_256 dim 1 : vector<2x128xf32>, i32 -> vector<2x128xf32>
    %616 = vector.broadcast %15 : vector<1x128xf32> to vector<2x128xf32>
    %617 = arith.mulf %615, %616 : vector<2x128xf32>
    %618 = arith.addf %611, %617 : vector<2x128xf32>
    %c6_257 = arith.constant 6 : index
    %c0_258 = arith.constant 0 : index
    %c0_259 = arith.constant 0 : index
    %619 = vector.load %arg6[%c6_257, %c0_258, %c0_259] : memref<21x2x32xf32, #tpu.memory_space<vmem>>, vector<1x2x32xf32>
    %620 = vector.shape_cast %619 : vector<1x2x32xf32> to vector<2x32xf32>
    %cst_260 = arith.constant dense<0.000000e+00> : vector<2x128xf32>
    %621 = tpu.matmul %620, %565, %cst_260 {dimension_numbers = #tpu.dot_dimension_numbers<[1], [0], [0], [1], [0, 0, 1, 1], [], []>} : vector<2x32xf32>, vector<32x128xf32>, vector<2x128xf32> -> vector<2x128xf32>
    %c4_i32_261 = arith.constant 4 : i32
    %622 = tpu.dynamic_rotate %621 by %c4_i32_261 dim 1 : vector<2x128xf32>, i32 -> vector<2x128xf32>
    %623 = vector.broadcast %22 : vector<1x128xf32> to vector<2x128xf32>
    %624 = arith.mulf %622, %623 : vector<2x128xf32>
    %625 = arith.addf %618, %624 : vector<2x128xf32>
    %c7_262 = arith.constant 7 : index
    %c0_263 = arith.constant 0 : index
    %c0_264 = arith.constant 0 : index
    %626 = vector.load %arg6[%c7_262, %c0_263, %c0_264] : memref<21x2x32xf32, #tpu.memory_space<vmem>>, vector<1x2x32xf32>
    %627 = vector.shape_cast %626 : vector<1x2x32xf32> to vector<2x32xf32>
    %cst_265 = arith.constant dense<0.000000e+00> : vector<2x128xf32>
    %628 = tpu.matmul %627, %565, %cst_265 {dimension_numbers = #tpu.dot_dimension_numbers<[1], [0], [0], [1], [0, 0, 1, 1], [], []>} : vector<2x32xf32>, vector<32x128xf32>, vector<2x128xf32> -> vector<2x128xf32>
    %c3_i32_266 = arith.constant 3 : i32
    %629 = tpu.dynamic_rotate %628 by %c3_i32_266 dim 1 : vector<2x128xf32>, i32 -> vector<2x128xf32>
    %630 = vector.broadcast %29 : vector<1x128xf32> to vector<2x128xf32>
    %631 = arith.mulf %629, %630 : vector<2x128xf32>
    %632 = arith.addf %625, %631 : vector<2x128xf32>
    %c8_267 = arith.constant 8 : index
    %c0_268 = arith.constant 0 : index
    %c0_269 = arith.constant 0 : index
    %633 = vector.load %arg6[%c8_267, %c0_268, %c0_269] : memref<21x2x32xf32, #tpu.memory_space<vmem>>, vector<1x2x32xf32>
    %634 = vector.shape_cast %633 : vector<1x2x32xf32> to vector<2x32xf32>
    %cst_270 = arith.constant dense<0.000000e+00> : vector<2x128xf32>
    %635 = tpu.matmul %634, %565, %cst_270 {dimension_numbers = #tpu.dot_dimension_numbers<[1], [0], [0], [1], [0, 0, 1, 1], [], []>} : vector<2x32xf32>, vector<32x128xf32>, vector<2x128xf32> -> vector<2x128xf32>
    %c2_i32_271 = arith.constant 2 : i32
    %636 = tpu.dynamic_rotate %635 by %c2_i32_271 dim 1 : vector<2x128xf32>, i32 -> vector<2x128xf32>
    %637 = vector.broadcast %36 : vector<1x128xf32> to vector<2x128xf32>
    %638 = arith.mulf %636, %637 : vector<2x128xf32>
    %639 = arith.addf %632, %638 : vector<2x128xf32>
    %c9_272 = arith.constant 9 : index
    %c0_273 = arith.constant 0 : index
    %c0_274 = arith.constant 0 : index
    %640 = vector.load %arg6[%c9_272, %c0_273, %c0_274] : memref<21x2x32xf32, #tpu.memory_space<vmem>>, vector<1x2x32xf32>
    %641 = vector.shape_cast %640 : vector<1x2x32xf32> to vector<2x32xf32>
    %cst_275 = arith.constant dense<0.000000e+00> : vector<2x128xf32>
    %642 = tpu.matmul %641, %565, %cst_275 {dimension_numbers = #tpu.dot_dimension_numbers<[1], [0], [0], [1], [0, 0, 1, 1], [], []>} : vector<2x32xf32>, vector<32x128xf32>, vector<2x128xf32> -> vector<2x128xf32>
    %c1_i32_276 = arith.constant 1 : i32
    %643 = tpu.dynamic_rotate %642 by %c1_i32_276 dim 1 : vector<2x128xf32>, i32 -> vector<2x128xf32>
    %644 = vector.broadcast %43 : vector<1x128xf32> to vector<2x128xf32>
    %645 = arith.mulf %643, %644 : vector<2x128xf32>
    %646 = arith.addf %639, %645 : vector<2x128xf32>
    %c10_277 = arith.constant 10 : index
    %c0_278 = arith.constant 0 : index
    %c0_279 = arith.constant 0 : index
    %647 = vector.load %arg6[%c10_277, %c0_278, %c0_279] : memref<21x2x32xf32, #tpu.memory_space<vmem>>, vector<1x2x32xf32>
    %648 = vector.shape_cast %647 : vector<1x2x32xf32> to vector<2x32xf32>
    %cst_280 = arith.constant dense<0.000000e+00> : vector<2x128xf32>
    %649 = tpu.matmul %648, %565, %cst_280 {dimension_numbers = #tpu.dot_dimension_numbers<[1], [0], [0], [1], [0, 0, 1, 1], [], []>} : vector<2x32xf32>, vector<32x128xf32>, vector<2x128xf32> -> vector<2x128xf32>
    %650 = arith.addf %646, %649 : vector<2x128xf32>
    %c11_281 = arith.constant 11 : index
    %c0_282 = arith.constant 0 : index
    %c0_283 = arith.constant 0 : index
    %651 = vector.load %arg6[%c11_281, %c0_282, %c0_283] : memref<21x2x32xf32, #tpu.memory_space<vmem>>, vector<1x2x32xf32>
    %652 = vector.shape_cast %651 : vector<1x2x32xf32> to vector<2x32xf32>
    %cst_284 = arith.constant dense<0.000000e+00> : vector<2x128xf32>
    %653 = tpu.matmul %652, %565, %cst_284 {dimension_numbers = #tpu.dot_dimension_numbers<[1], [0], [0], [1], [0, 0, 1, 1], [], []>} : vector<2x32xf32>, vector<32x128xf32>, vector<2x128xf32> -> vector<2x128xf32>
    %c127_i32_285 = arith.constant 127 : i32
    %654 = tpu.dynamic_rotate %653 by %c127_i32_285 dim 1 : vector<2x128xf32>, i32 -> vector<2x128xf32>
    %655 = vector.broadcast %50 : vector<1x128xf32> to vector<2x128xf32>
    %656 = arith.mulf %654, %655 : vector<2x128xf32>
    %657 = arith.addf %650, %656 : vector<2x128xf32>
    %c12_286 = arith.constant 12 : index
    %c0_287 = arith.constant 0 : index
    %c0_288 = arith.constant 0 : index
    %658 = vector.load %arg6[%c12_286, %c0_287, %c0_288] : memref<21x2x32xf32, #tpu.memory_space<vmem>>, vector<1x2x32xf32>
    %659 = vector.shape_cast %658 : vector<1x2x32xf32> to vector<2x32xf32>
    %cst_289 = arith.constant dense<0.000000e+00> : vector<2x128xf32>
    %660 = tpu.matmul %659, %565, %cst_289 {dimension_numbers = #tpu.dot_dimension_numbers<[1], [0], [0], [1], [0, 0, 1, 1], [], []>} : vector<2x32xf32>, vector<32x128xf32>, vector<2x128xf32> -> vector<2x128xf32>
    %c126_i32_290 = arith.constant 126 : i32
    %661 = tpu.dynamic_rotate %660 by %c126_i32_290 dim 1 : vector<2x128xf32>, i32 -> vector<2x128xf32>
    %662 = vector.broadcast %57 : vector<1x128xf32> to vector<2x128xf32>
    %663 = arith.mulf %661, %662 : vector<2x128xf32>
    %664 = arith.addf %657, %663 : vector<2x128xf32>
    %c13_291 = arith.constant 13 : index
    %c0_292 = arith.constant 0 : index
    %c0_293 = arith.constant 0 : index
    %665 = vector.load %arg6[%c13_291, %c0_292, %c0_293] : memref<21x2x32xf32, #tpu.memory_space<vmem>>, vector<1x2x32xf32>
    %666 = vector.shape_cast %665 : vector<1x2x32xf32> to vector<2x32xf32>
    %cst_294 = arith.constant dense<0.000000e+00> : vector<2x128xf32>
    %667 = tpu.matmul %666, %565, %cst_294 {dimension_numbers = #tpu.dot_dimension_numbers<[1], [0], [0], [1], [0, 0, 1, 1], [], []>} : vector<2x32xf32>, vector<32x128xf32>, vector<2x128xf32> -> vector<2x128xf32>
    %c125_i32_295 = arith.constant 125 : i32
    %668 = tpu.dynamic_rotate %667 by %c125_i32_295 dim 1 : vector<2x128xf32>, i32 -> vector<2x128xf32>
    %669 = vector.broadcast %64 : vector<1x128xf32> to vector<2x128xf32>
    %670 = arith.mulf %668, %669 : vector<2x128xf32>
    %671 = arith.addf %664, %670 : vector<2x128xf32>
    %c14_296 = arith.constant 14 : index
    %c0_297 = arith.constant 0 : index
    %c0_298 = arith.constant 0 : index
    %672 = vector.load %arg6[%c14_296, %c0_297, %c0_298] : memref<21x2x32xf32, #tpu.memory_space<vmem>>, vector<1x2x32xf32>
    %673 = vector.shape_cast %672 : vector<1x2x32xf32> to vector<2x32xf32>
    %cst_299 = arith.constant dense<0.000000e+00> : vector<2x128xf32>
    %674 = tpu.matmul %673, %565, %cst_299 {dimension_numbers = #tpu.dot_dimension_numbers<[1], [0], [0], [1], [0, 0, 1, 1], [], []>} : vector<2x32xf32>, vector<32x128xf32>, vector<2x128xf32> -> vector<2x128xf32>
    %c124_i32_300 = arith.constant 124 : i32
    %675 = tpu.dynamic_rotate %674 by %c124_i32_300 dim 1 : vector<2x128xf32>, i32 -> vector<2x128xf32>
    %676 = vector.broadcast %71 : vector<1x128xf32> to vector<2x128xf32>
    %677 = arith.mulf %675, %676 : vector<2x128xf32>
    %678 = arith.addf %671, %677 : vector<2x128xf32>
    %c15_301 = arith.constant 15 : index
    %c0_302 = arith.constant 0 : index
    %c0_303 = arith.constant 0 : index
    %679 = vector.load %arg6[%c15_301, %c0_302, %c0_303] : memref<21x2x32xf32, #tpu.memory_space<vmem>>, vector<1x2x32xf32>
    %680 = vector.shape_cast %679 : vector<1x2x32xf32> to vector<2x32xf32>
    %cst_304 = arith.constant dense<0.000000e+00> : vector<2x128xf32>
    %681 = tpu.matmul %680, %565, %cst_304 {dimension_numbers = #tpu.dot_dimension_numbers<[1], [0], [0], [1], [0, 0, 1, 1], [], []>} : vector<2x32xf32>, vector<32x128xf32>, vector<2x128xf32> -> vector<2x128xf32>
    %c123_i32_305 = arith.constant 123 : i32
    %682 = tpu.dynamic_rotate %681 by %c123_i32_305 dim 1 : vector<2x128xf32>, i32 -> vector<2x128xf32>
    %683 = vector.broadcast %78 : vector<1x128xf32> to vector<2x128xf32>
    %684 = arith.mulf %682, %683 : vector<2x128xf32>
    %685 = arith.addf %678, %684 : vector<2x128xf32>
    %c16_306 = arith.constant 16 : index
    %c0_307 = arith.constant 0 : index
    %c0_308 = arith.constant 0 : index
    %686 = vector.load %arg6[%c16_306, %c0_307, %c0_308] : memref<21x2x32xf32, #tpu.memory_space<vmem>>, vector<1x2x32xf32>
    %687 = vector.shape_cast %686 : vector<1x2x32xf32> to vector<2x32xf32>
    %cst_309 = arith.constant dense<0.000000e+00> : vector<2x128xf32>
    %688 = tpu.matmul %687, %565, %cst_309 {dimension_numbers = #tpu.dot_dimension_numbers<[1], [0], [0], [1], [0, 0, 1, 1], [], []>} : vector<2x32xf32>, vector<32x128xf32>, vector<2x128xf32> -> vector<2x128xf32>
    %c122_i32_310 = arith.constant 122 : i32
    %689 = tpu.dynamic_rotate %688 by %c122_i32_310 dim 1 : vector<2x128xf32>, i32 -> vector<2x128xf32>
    %690 = vector.broadcast %85 : vector<1x128xf32> to vector<2x128xf32>
    %691 = arith.mulf %689, %690 : vector<2x128xf32>
    %692 = arith.addf %685, %691 : vector<2x128xf32>
    %c17_311 = arith.constant 17 : index
    %c0_312 = arith.constant 0 : index
    %c0_313 = arith.constant 0 : index
    %693 = vector.load %arg6[%c17_311, %c0_312, %c0_313] : memref<21x2x32xf32, #tpu.memory_space<vmem>>, vector<1x2x32xf32>
    %694 = vector.shape_cast %693 : vector<1x2x32xf32> to vector<2x32xf32>
    %cst_314 = arith.constant dense<0.000000e+00> : vector<2x128xf32>
    %695 = tpu.matmul %694, %565, %cst_314 {dimension_numbers = #tpu.dot_dimension_numbers<[1], [0], [0], [1], [0, 0, 1, 1], [], []>} : vector<2x32xf32>, vector<32x128xf32>, vector<2x128xf32> -> vector<2x128xf32>
    %c121_i32_315 = arith.constant 121 : i32
    %696 = tpu.dynamic_rotate %695 by %c121_i32_315 dim 1 : vector<2x128xf32>, i32 -> vector<2x128xf32>
    %697 = vector.broadcast %353 : vector<1x128xf32> to vector<2x128xf32>
    %698 = arith.mulf %696, %697 : vector<2x128xf32>
    %699 = arith.addf %692, %698 : vector<2x128xf32>
    %c18_316 = arith.constant 18 : index
    %c0_317 = arith.constant 0 : index
    %c0_318 = arith.constant 0 : index
    %700 = vector.load %arg6[%c18_316, %c0_317, %c0_318] : memref<21x2x32xf32, #tpu.memory_space<vmem>>, vector<1x2x32xf32>
    %701 = vector.shape_cast %700 : vector<1x2x32xf32> to vector<2x32xf32>
    %cst_319 = arith.constant dense<0.000000e+00> : vector<2x128xf32>
    %702 = tpu.matmul %701, %565, %cst_319 {dimension_numbers = #tpu.dot_dimension_numbers<[1], [0], [0], [1], [0, 0, 1, 1], [], []>} : vector<2x32xf32>, vector<32x128xf32>, vector<2x128xf32> -> vector<2x128xf32>
    %c120_i32_320 = arith.constant 120 : i32
    %703 = tpu.dynamic_rotate %702 by %c120_i32_320 dim 1 : vector<2x128xf32>, i32 -> vector<2x128xf32>
    %704 = vector.broadcast %364 : vector<1x128xf32> to vector<2x128xf32>
    %705 = arith.mulf %703, %704 : vector<2x128xf32>
    %706 = arith.addf %699, %705 : vector<2x128xf32>
    %c19_321 = arith.constant 19 : index
    %c0_322 = arith.constant 0 : index
    %c0_323 = arith.constant 0 : index
    %707 = vector.load %arg6[%c19_321, %c0_322, %c0_323] : memref<21x2x32xf32, #tpu.memory_space<vmem>>, vector<1x2x32xf32>
    %708 = vector.shape_cast %707 : vector<1x2x32xf32> to vector<2x32xf32>
    %cst_324 = arith.constant dense<0.000000e+00> : vector<2x128xf32>
    %709 = tpu.matmul %708, %565, %cst_324 {dimension_numbers = #tpu.dot_dimension_numbers<[1], [0], [0], [1], [0, 0, 1, 1], [], []>} : vector<2x32xf32>, vector<32x128xf32>, vector<2x128xf32> -> vector<2x128xf32>
    %c119_i32_325 = arith.constant 119 : i32
    %710 = tpu.dynamic_rotate %709 by %c119_i32_325 dim 1 : vector<2x128xf32>, i32 -> vector<2x128xf32>
    %711 = vector.broadcast %375 : vector<1x128xf32> to vector<2x128xf32>
    %712 = arith.mulf %710, %711 : vector<2x128xf32>
    %713 = arith.addf %706, %712 : vector<2x128xf32>
    %c20_326 = arith.constant 20 : index
    %c0_327 = arith.constant 0 : index
    %c0_328 = arith.constant 0 : index
    %714 = vector.load %arg6[%c20_326, %c0_327, %c0_328] : memref<21x2x32xf32, #tpu.memory_space<vmem>>, vector<1x2x32xf32>
    %715 = vector.shape_cast %714 : vector<1x2x32xf32> to vector<2x32xf32>
    %cst_329 = arith.constant dense<0.000000e+00> : vector<2x128xf32>
    %716 = tpu.matmul %715, %565, %cst_329 {dimension_numbers = #tpu.dot_dimension_numbers<[1], [0], [0], [1], [0, 0, 1, 1], [], []>} : vector<2x32xf32>, vector<32x128xf32>, vector<2x128xf32> -> vector<2x128xf32>
    %c118_i32_330 = arith.constant 118 : i32
    %717 = tpu.dynamic_rotate %716 by %c118_i32_330 dim 1 : vector<2x128xf32>, i32 -> vector<2x128xf32>
    %718 = vector.broadcast %152 : vector<1x128xf32> to vector<2x128xf32>
    %719 = arith.mulf %717, %718 : vector<2x128xf32>
    %720 = arith.addf %713, %719 : vector<2x128xf32>
    %721 = vector.extract_strided_slice %720 {offsets = [0, 0], sizes = [1, 128], strides = [1, 1]} : vector<2x128xf32> to vector<1x128xf32>
    %722 = vector.broadcast %7 : f32 to vector<1x128xf32>
    %723 = arith.addf %721, %722 : vector<1x128xf32>
    %724 = vector.extract_strided_slice %720 {offsets = [1, 0], sizes = [1, 128], strides = [1, 1]} : vector<2x128xf32> to vector<1x128xf32>
    %725 = vector.broadcast %8 : f32 to vector<1x128xf32>
    %726 = arith.addf %724, %725 : vector<1x128xf32>
    %cst_331 = arith.constant dense<0xFF800000> : vector<1xf32>
    %727 = vector.multi_reduction <maximumf>, %723, %cst_331 [1] : vector<1x128xf32> to vector<1xf32>
    %728 = vector.shape_cast %727 : vector<1xf32> to vector<1x1xf32>
    %729 = vector.broadcast %728 : vector<1x1xf32> to vector<1x128xf32>
    %730 = arith.subf %723, %729 : vector<1x128xf32>
    %731 = math.exp %730 : vector<1x128xf32>
    %cst_332 = arith.constant dense<0.000000e+00> : vector<1xf32>
    %732 = vector.multi_reduction <add>, %731, %cst_332 [1] : vector<1x128xf32> to vector<1xf32>
    %733 = vector.shape_cast %732 : vector<1xf32> to vector<1x1xf32>
    %734 = math.log %733 : vector<1x1xf32>
    %735 = arith.addf %728, %734 : vector<1x1xf32>
    %cst_333 = arith.constant dense<0xFF800000> : vector<1xf32>
    %736 = vector.multi_reduction <maximumf>, %726, %cst_333 [1] : vector<1x128xf32> to vector<1xf32>
    %737 = vector.shape_cast %736 : vector<1xf32> to vector<1x1xf32>
    %738 = vector.broadcast %737 : vector<1x1xf32> to vector<1x128xf32>
    %739 = arith.subf %726, %738 : vector<1x128xf32>
    %740 = math.exp %739 : vector<1x128xf32>
    %cst_334 = arith.constant dense<0.000000e+00> : vector<1xf32>
    %741 = vector.multi_reduction <add>, %740, %cst_334 [1] : vector<1x128xf32> to vector<1xf32>
    %742 = vector.shape_cast %741 : vector<1xf32> to vector<1x1xf32>
    %743 = math.log %742 : vector<1x1xf32>
    %744 = arith.addf %737, %743 : vector<1x1xf32>
    %745 = vector.broadcast %735 : vector<1x1xf32> to vector<1x128xf32>
    %746 = arith.subf %723, %745 : vector<1x128xf32>
    %747 = vector.broadcast %575 : vector<1x1xf32> to vector<1x128xf32>
    %748 = arith.addf %747, %746 : vector<1x128xf32>
    %749 = vector.broadcast %744 : vector<1x1xf32> to vector<1x128xf32>
    %750 = arith.subf %726, %749 : vector<1x128xf32>
    %751 = arith.maximumf %748, %750 : vector<1x128xf32>
    %752 = arith.subf %748, %750 : vector<1x128xf32>
    %753 = math.absf %752 : vector<1x128xf32>
    %cst_335 = arith.constant 0.000000e+00 : f32
    %754 = vector.broadcast %cst_335 : f32 to vector<1x128xf32>
    %755 = arith.subf %754, %753 : vector<1x128xf32>
    %756 = math.exp %755 : vector<1x128xf32>
    %757 = math.log1p %756 : vector<1x128xf32>
    %758 = arith.addf %751, %757 : vector<1x128xf32>
    %759 = arith.mulf %3, %723 : vector<1x128xf32>
    %cst_336 = arith.constant dense<0.000000e+00> : vector<1xf32>
    %760 = vector.multi_reduction <add>, %759, %cst_336 [1] : vector<1x128xf32> to vector<1xf32>
    %761 = vector.shape_cast %760 : vector<1xf32> to vector<1x1xf32>
    %762 = vector.broadcast %5 : f32 to vector<1x1xf32>
    %763 = arith.mulf %761, %762 : vector<1x1xf32>
    %764 = vector.broadcast %6 : f32 to vector<1x1xf32>
    %765 = arith.addf %763, %764 : vector<1x1xf32>
    %766 = vector.shape_cast %575 : vector<1x1xf32> to vector<1x1xf32>
    %767 = vector.broadcast %766 : vector<1x1xf32> to vector<1x128xf32>
    %768 = vector.shape_cast %765 : vector<1x1xf32> to vector<1x1xf32>
    %769 = vector.broadcast %768 : vector<1x1xf32> to vector<1x128xf32>
    %cst_337 = arith.constant 0.000000e+00 : f32
    %770 = vector.broadcast %cst_337 : f32 to vector<3x128xf32>
    %771 = tpu.concatenate %758, %723, %726, %767, %769, %770 in 0 : vector<1x128xf32>, vector<1x128xf32>, vector<1x128xf32>, vector<1x128xf32>, vector<1x128xf32>, vector<3x128xf32> -> vector<8x128xf32>
    %c1_338 = arith.constant 1 : index
    %c0_339 = arith.constant 0 : index
    %c0_340 = arith.constant 0 : index
    %772 = vector.load %arg9[%c1_338, %c0_339, %c0_340] : memref<2x8x128xf32, #tpu.memory_space<vmem>>, vector<1x8x128xf32>
    %773 = vector.shape_cast %772 : vector<1x8x128xf32> to vector<8x128xf32>
    %774 = vector.shape_cast %771 : vector<8x128xf32> to vector<1x8x128xf32>
    tpu.vector_store %arg9[%c1_338, %c0_339, %c0_340], %774 {strides = array<i32>} : memref<2x8x128xf32, #tpu.memory_space<vmem>>, vector<1x8x128xf32>,
    return
  }
  func.func @transform_0(%arg0: i32) -> i32 {
    %c0_i32 = arith.constant 0 : i32
    %c0_i32_0 = arith.constant 0 : i32
    return %c0_i32 : i32
  }
  func.func @transform_1(%arg0: i32) -> (i32, i32, i32) {
    %c0_i32 = arith.constant 0 : i32
    %c0_i32_0 = arith.constant 0 : i32
    %c0_i32_1 = arith.constant 0 : i32
    return %arg0, %c0_i32, %c0_i32_0 : i32, i32, i32
  }
  func.func @transform_2(%arg0: i32) -> (i32, i32) {
    %c0_i32 = arith.constant 0 : i32
    %c0_i32_0 = arith.constant 0 : i32
    %c0_i32_1 = arith.constant 0 : i32
    return %c0_i32, %c0_i32_0 : i32, i32
  }
  func.func @transform_3(%arg0: i32) -> (i32, i32, i32) {
    %c0_i32 = arith.constant 0 : i32
    %c0_i32_0 = arith.constant 0 : i32
    %c0_i32_1 = arith.constant 0 : i32
    %c0_i32_2 = arith.constant 0 : i32
    return %c0_i32, %c0_i32_0, %c0_i32_1 : i32, i32, i32
  }
  func.func @transform_4(%arg0: i32) -> (i32, i32, i32) {
    %c0_i32 = arith.constant 0 : i32
    %c0_i32_0 = arith.constant 0 : i32
    %c0_i32_1 = arith.constant 0 : i32
    %c0_i32_2 = arith.constant 0 : i32
    return %c0_i32, %c0_i32_0, %c0_i32_1 : i32, i32, i32
  }
  func.func @transform_5(%arg0: i32) -> (i32, i32, i32) {
    %c0_i32 = arith.constant 0 : i32
    %c0_i32_0 = arith.constant 0 : i32
    %c0_i32_1 = arith.constant 0 : i32
    %c0_i32_2 = arith.constant 0 : i32
    return %c0_i32, %c0_i32_0, %c0_i32_1 : i32, i32, i32
  }
  func.func @transform_6(%arg0: i32) -> (i32, i32) {
    %c0_i32 = arith.constant 0 : i32
    %c0_i32_0 = arith.constant 0 : i32
    %c0_i32_1 = arith.constant 0 : i32
    return %c0_i32, %c0_i32_0 : i32, i32
  }
  func.func @transform_7(%arg0: i32) -> (i32, i32) {
    %c0_i32 = arith.constant 0 : i32
    %c0_i32_0 = arith.constant 0 : i32
    %c0_i32_1 = arith.constant 0 : i32
    return %c0_i32, %c0_i32_0 : i32, i32
  }
  func.func @transform_8(%arg0: i32) -> (i32, i32, i32) {
    %c0_i32 = arith.constant 0 : i32
    %c0_i32_0 = arith.constant 0 : i32
    %c0_i32_1 = arith.constant 0 : i32
    return %arg0, %c0_i32, %c0_i32_0 : i32, i32, i32
  }
}

</mosaic_0001>

<llo_original>
// kernel: tpu_custom_call.1
$region0: #{tpu_custom_call.1}
  #allocation0 [shape = 'u32[]', space=smem, size = 0x4, offset = 0x4, fixed_abs, tag = 'smem constant byte address 0x4 - core index']
  #allocation1 [shape = 'u32[144,128]{1,0:T(1,128)}', space=vmem, size = 0x12000, scoped, tag = 'internal scratch']
  %s0 = inlined_call_operand.vmem [shape: f32[5], index: 0, kind: input, shape index: {}]
  %s1 = inlined_call_operand.vmem [shape: f32[4,4,128], index: 1, kind: input, shape index: {}]
  %s2 = inlined_call_operand.vmem [shape: f32[32,48], index: 2, kind: input, shape index: {}]
  %s3 = inlined_call_operand.hbm [shape: f32[3,32,192], index: 3, kind: input, shape index: {}]
  %s4 = inlined_call_operand.vmem [shape: f32[3,32,1], index: 4, kind: input, shape index: {}]
  %s5 = inlined_call_operand.vmem [shape: f32[21,2,32], index: 5, kind: input, shape index: {}]
  %s6 = inlined_call_operand.vmem [shape: f32[32,1], index: 6, kind: input, shape index: {}]
  %s7 = inlined_call_operand.vmem [shape: f32[1,128], index: 7, kind: input, shape index: {}]
  %s8 = inlined_call_operand.hbm [shape: f32[4,8,128], index: 8, kind: output, shape index: {}]
  %s9 = sld [smem:[#allocation0]]
  $region73: #{tpu_custom_call.1} parent=0
    _
  %s11 = ssub.s32 1, %s9
  %s12 = scalar_select 0, %s11, %s9
  $region1: #{tpu_custom_call.1} parent=0
    #allocation2 [shape = 'u8[512]{0}', space=smem, size = 0x200, scoped, tag = 'input window, operand 0, single buffered']
    #allocation3 [shape = 's32[2]{0}', space=sflag, size = 0x8, scoped, tag = 'scoped memory for tpu_custom_call.1']
    #allocation4 [shape = 's32[2]{0}', space=sflag, size = 0x8, scoped, tag = 'scoped memory for tpu_custom_call.1']
    #allocation5 [shape = 's32[2]{0}', space=sflag, size = 0x8, scoped, tag = 'scoped memory for tpu_custom_call.1']
    #allocation6 [shape = 'u8[98304]{0}', space=vmem, size = 0x18000, scoped, tag = 'input window, operand 3, single buffered']
    #allocation7 [shape = 'u8[16384]{0}', space=vmem, size = 0x4000, scoped, tag = 'output window, operand 0']
    %13 = vsyncpa [#allocation5], 0
    %14 = vsyncpa [#allocation3], 0
    %15 = vsyncpa [#allocation4], 0
    %s16 = scalar_lea.sflag [#allocation4], 1
    %17 = vsyncpa %s16, 0
    loop: start=0, step=1, limit=4
    $region2: #{tpu_custom_call.1} parent=1 // loop_pre_header
      _
    $region3: #{tpu_custom_call.1} parent=1 // loop_header
      %s19 = sphi 0, %s23
      %p20 = scmp.ge.s32.totalorder %s19, 4
      %s27 = sphi 0, %s27
      %s29 = sphi 0, %s27
      %s30 = sphi 0, %s29
      %s44 = sphi 0, %s30
      %s50 = sphi 0, %s52
      %s53 = sphi 0, %s50
      %s54 = sphi 0, %s53
      %s70 = sphi 0, %s54
      %s74 = sphi 0, %s74
      %s76 = sphi 0, %s74
      %s77 = sphi 0, %s76
      %s91 = sphi 0, %s77
      %s95 = sphi 0, %s95
      %s97 = sphi 0, %s95
      %s98 = sphi 0, %s97
      %s112 = sphi 0, %s98
      %s116 = sphi 0, %s116
      %s118 = sphi 0, %s116
      %s119 = sphi 0, %s118
      %s133 = sphi 0, %s119
      %s137 = sphi 0, %s137
      %s139 = sphi 0, %s137
      %s140 = sphi 0, %s139
      %s154 = sphi 0, %s140
      %s158 = sphi 0, %s158
      %s160 = sphi 0, %s158
      %s161 = sphi 0, %s160
      %s175 = sphi 0, %s161
      %s179 = sphi 0, %s179
      %s181 = sphi 0, %s179
      %s182 = sphi 0, %s181
      %s196 = sphi 0, %s182
      %s202 = sphi 0, %s204
      %s205 = sphi 0, %s202
      %s206 = sphi 0, %s205
      %s222 = sphi 0, %s206
    $region4: #{tpu_custom_call.1} parent=1 // loop_header_branch
      %22 = sbr.rel (%p20) target = $region8
    $region5: #{tpu_custom_call.1} parent=1 // loop_body
      %s24 = ssub.s32 %s19, 1
      %s25 = ssub.s32 %s19, 2
      %s26 = sadd.s32 %s19, 1
      %s28 = sadd.s32 %s27, 1
      %p31 = scmp.eq.s32.totalorder %s19, 1
      %p32 = scmp.ne.s32.totalorder %s27, %s29
      %p33 = scmp.eq.s32.totalorder %s19, 0
      %p34 = por %p32, %p33
      %p35 = scmp.ne.s32.totalorder %s27, %s29
      %p36 = scmp.eq.s32.totalorder %s24, 1
      %p37 = por %p35, %p36
      %p38 = scmp.ne.s32.totalorder %s29, %s30
      %p39 = scmp.eq.s32.totalorder %s24, 0
      %p40 = por %p38, %p39
      %p41 = scmp.ne.s32.totalorder %s29, %s30
      %p42 = scmp.eq.s32.totalorder %s25, 1
      %p43 = por %p41, %p42
      %p45 = scmp.ne.s32.totalorder %s30, %s44
      %p46 = scmp.eq.s32.totalorder %s25, 0
      %p47 = por %p45, %p46
      %s48 = ssub.s32 %s19, %s26
      %p49 = scmp.eq.s32.totalorder %s48, 0
      %s51 = sadd.s32 %s50, 1
      %s52 = scalar_select %p49, %s50, %s51
      %p55 = pneg %p49
      %p56 = scmp.eq.s32.totalorder %s19, 1
      %p57 = por %p55, %p56
      %p58 = scmp.ne.s32.totalorder %s50, %s53
      %p59 = scmp.eq.s32.totalorder %s19, 0
      %p60 = por %p58, %p59
      %p61 = scmp.ne.s32.totalorder %s50, %s53
      %p62 = scmp.eq.s32.totalorder %s24, 1
      %p63 = por %p61, %p62
      %p64 = scmp.ne.s32.totalorder %s53, %s54
      %p65 = scmp.eq.s32.totalorder %s24, 0
      %p66 = por %p64, %p65
      %p67 = scmp.ne.s32.totalorder %s53, %s54
      %p68 = scmp.eq.s32.totalorder %s25, 1
      %p69 = por %p67, %p68
      %p71 = scmp.ne.s32.totalorder %s54, %s70
      %p72 = scmp.eq.s32.totalorder %s25, 0
      %p73 = por %p71, %p72
      %s75 = sadd.s32 %s74, 1
      %p78 = scmp.eq.s32.totalorder %s19, 1
      %p79 = scmp.ne.s32.totalorder %s74, %s76
      %p80 = scmp.eq.s32.totalorder %s19, 0
      %p81 = por %p79, %p80
      %p82 = scmp.ne.s32.totalorder %s74, %s76
      %p83 = scmp.eq.s32.totalorder %s24, 1
      %p84 = por %p82, %p83
      %p85 = scmp.ne.s32.totalorder %s76, %s77
      %p86 = scmp.eq.s32.totalorder %s24, 0
      %p87 = por %p85, %p86
      %p88 = scmp.ne.s32.totalorder %s76, %s77
      %p89 = scmp.eq.s32.totalorder %s25, 1
      %p90 = por %p88, %p89
      %p92 = scmp.ne.s32.totalorder %s77, %s91
      %p93 = scmp.eq.s32.totalorder %s25, 0
      %p94 = por %p92, %p93
      %s96 = sadd.s32 %s95, 1
      %p99 = scmp.eq.s32.totalorder %s19, 1
      %p100 = scmp.ne.s32.totalorder %s95, %s97
      %p101 = scmp.eq.s32.totalorder %s19, 0
      %p102 = por %p100, %p101
      %p103 = scmp.ne.s32.totalorder %s95, %s97
      %p104 = scmp.eq.s32.totalorder %s24, 1
      %p105 = por %p103, %p104
      %p106 = scmp.ne.s32.totalorder %s97, %s98
      %p107 = scmp.eq.s32.totalorder %s24, 0
      %p108 = por %p106, %p107
      %p109 = scmp.ne.s32.totalorder %s97, %s98
      %p110 = scmp.eq.s32.totalorder %s25, 1
      %p111 = por %p109, %p110
      %p113 = scmp.ne.s32.totalorder %s98, %s112
      %p114 = scmp.eq.s32.totalorder %s25, 0
      %p115 = por %p113, %p114
      %s117 = sadd.s32 %s116, 1
      %p120 = scmp.eq.s32.totalorder %s19, 1
      %p121 = scmp.ne.s32.totalorder %s116, %s118
      %p122 = scmp.eq.s32.totalorder %s19, 0
      %p123 = por %p121, %p122
      %p124 = scmp.ne.s32.totalorder %s116, %s118
      %p125 = scmp.eq.s32.totalorder %s24, 1
      %p126 = por %p124, %p125
      %p127 = scmp.ne.s32.totalorder %s118, %s119
      %p128 = scmp.eq.s32.totalorder %s24, 0
      %p129 = por %p127, %p128
      %p130 = scmp.ne.s32.totalorder %s118, %s119
      %p131 = scmp.eq.s32.totalorder %s25, 1
      %p132 = por %p130, %p131
      %p134 = scmp.ne.s32.totalorder %s119, %s133
      %p135 = scmp.eq.s32.totalorder %s25, 0
      %p136 = por %p134, %p135
      %s138 = sadd.s32 %s137, 1
      %p141 = scmp.eq.s32.totalorder %s19, 1
      %p142 = scmp.ne.s32.totalorder %s137, %s139
      %p143 = scmp.eq.s32.totalorder %s19, 0
      %p144 = por %p142, %p143
      %p145 = scmp.ne.s32.totalorder %s137, %s139
      %p146 = scmp.eq.s32.totalorder %s24, 1
      %p147 = por %p145, %p146
      %p148 = scmp.ne.s32.totalorder %s139, %s140
      %p149 = scmp.eq.s32.totalorder %s24, 0
      %p150 = por %p148, %p149
      %p151 = scmp.ne.s32.totalorder %s139, %s140
      %p152 = scmp.eq.s32.totalorder %s25, 1
      %p153 = por %p151, %p152
      %p155 = scmp.ne.s32.totalorder %s140, %s154
      %p156 = scmp.eq.s32.totalorder %s25, 0
      %p157 = por %p155, %p156
      %s159 = sadd.s32 %s158, 1
      %p162 = scmp.eq.s32.totalorder %s19, 1
      %p163 = scmp.ne.s32.totalorder %s158, %s160
      %p164 = scmp.eq.s32.totalorder %s19, 0
      %p165 = por %p163, %p164
      %p166 = scmp.ne.s32.totalorder %s158, %s160
      %p167 = scmp.eq.s32.totalorder %s24, 1
      %p168 = por %p166, %p167
      %p169 = scmp.ne.s32.totalorder %s160, %s161
      %p170 = scmp.eq.s32.totalorder %s24, 0
      %p171 = por %p169, %p170
      %p172 = scmp.ne.s32.totalorder %s160, %s161
      %p173 = scmp.eq.s32.totalorder %s25, 1
      %p174 = por %p172, %p173
      %p176 = scmp.ne.s32.totalorder %s161, %s175
      %p177 = scmp.eq.s32.totalorder %s25, 0
      %p178 = por %p176, %p177
      %s180 = sadd.s32 %s179, 1
      %p183 = scmp.eq.s32.totalorder %s19, 1
      %p184 = scmp.ne.s32.totalorder %s179, %s181
      %p185 = scmp.eq.s32.totalorder %s19, 0
      %p186 = por %p184, %p185
      %p187 = scmp.ne.s32.totalorder %s179, %s181
      %p188 = scmp.eq.s32.totalorder %s24, 1
      %p189 = por %p187, %p188
      %p190 = scmp.ne.s32.totalorder %s181, %s182
      %p191 = scmp.eq.s32.totalorder %s24, 0
      %p192 = por %p190, %p191
      %p193 = scmp.ne.s32.totalorder %s181, %s182
      %p194 = scmp.eq.s32.totalorder %s25, 1
      %p195 = por %p193, %p194
      %p197 = scmp.ne.s32.totalorder %s182, %s196
      %p198 = scmp.eq.s32.totalorder %s25, 0
      %p199 = por %p197, %p198
      %s200 = ssub.s32 %s19, %s26
      %p201 = scmp.eq.s32.totalorder %s200, 0
      %s203 = sadd.s32 %s202, 1
      %s204 = scalar_select %p201, %s202, %s203
      %p207 = pneg %p201
      %p208 = scmp.eq.s32.totalorder %s19, 1
      %p209 = por %p207, %p208
      %p210 = scmp.ne.s32.totalorder %s202, %s205
      %p211 = scmp.eq.s32.totalorder %s19, 0
      %p212 = por %p210, %p211
      %p213 = scmp.ne.s32.totalorder %s202, %s205
      %p214 = scmp.eq.s32.totalorder %s24, 1
      %p215 = por %p213, %p214
      %p216 = scmp.ne.s32.totalorder %s205, %s206
      %p217 = scmp.eq.s32.totalorder %s24, 0
      %p218 = por %p216, %p217
      %p219 = scmp.ne.s32.totalorder %s205, %s206
      %p220 = scmp.eq.s32.totalorder %s25, 1
      %p221 = por %p219, %p220
      %p223 = scmp.ne.s32.totalorder %s206, %s222
      %p224 = scmp.eq.s32.totalorder %s25, 0
      %p225 = por %p223, %p224
      %p226 = scmp.le.s32.totalorder 1, %s19
      %p227 = scmp.lt.s32.totalorder %s19, 3
      %p228 = pnand %p226, %p227
      %p229 = pneg %p228
      // Predicated region
      $region9: #{tpu_custom_call.1} parent=5 // pred_check
        _
      $region10: #{tpu_custom_call.1} parent=5 // pred_check_branch
        %231 = sbr.rel (%p228) target = $region12
      $region11: #{tpu_custom_call.1} parent=5 // pred_region
        %s232 = ssub.s32 %s19, 1
        // Predicated region
        $region13: #{tpu_custom_call.1} parent=11 // pred_check
          %p233 = pneg %p40
        $region14: #{tpu_custom_call.1} parent=11 // pred_check_branch
          %235 = sbr.rel (%p233) target = $region16
        $region15: #{tpu_custom_call.1} parent=11 // pred_region
          %s237 = ssub.s32 16, 16
          %238 = vsyncadd [#allocation5], %s237
          %s240 = sshll.u32 %s0, 4
          %s241 = int_to_ptr.vmem [resolvable:$true] %s240
          %243 = dma.vmem_to_smem %s241, 16, [#allocation2], [#allocation5]
        $region16: #{tpu_custom_call.1} parent=11 // pred_fallthru
          _
        // Predicated region
        $region17: #{tpu_custom_call.1} parent=11 // pred_check
          %p244 = pneg %p87
        $region18: #{tpu_custom_call.1} parent=11 // pred_check_branch
          %246 = sbr.rel (%p244) target = $region20
        $region19: #{tpu_custom_call.1} parent=11 // pred_region
          _
        $region20: #{tpu_custom_call.1} parent=11 // pred_fallthru
          _
        // Predicated region
        $region21: #{tpu_custom_call.1} parent=11 // pred_check
          %p247 = pneg %p108
        $region22: #{tpu_custom_call.1} parent=11 // pred_check_branch
          %249 = sbr.rel (%p247) target = $region24
        $region23: #{tpu_custom_call.1} parent=11 // pred_region
          %s251 = ssub.s32 3072, 3072
          %252 = vsyncadd [#allocation3], %s251
          %s253 = sshll.u32 [#allocation6], 4
          %s254 = int_to_ptr.vmem [resolvable:$true] %s253
          %259 = dma.hbm_to_vmem [thread:$0]  %s3, 3072, %s254, [#allocation3], 256, 256, 16
        $region24: #{tpu_custom_call.1} parent=11 // pred_fallthru
          _
        // Predicated region
        $region25: #{tpu_custom_call.1} parent=11 // pred_check
          %p260 = pneg %p129
        $region26: #{tpu_custom_call.1} parent=11 // pred_check_branch
          %262 = sbr.rel (%p260) target = $region28
        $region27: #{tpu_custom_call.1} parent=11 // pred_region
          _
        $region28: #{tpu_custom_call.1} parent=11 // pred_fallthru
          _
        // Predicated region
        $region29: #{tpu_custom_call.1} parent=11 // pred_check
          %p263 = pneg %p150
        $region30: #{tpu_custom_call.1} parent=11 // pred_check_branch
          %265 = sbr.rel (%p263) target = $region32
        $region31: #{tpu_custom_call.1} parent=11 // pred_region
          _
        $region32: #{tpu_custom_call.1} parent=11 // pred_fallthru
          _
        // Predicated region
        $region33: #{tpu_custom_call.1} parent=11 // pred_check
          %p266 = pneg %p171
        $region34: #{tpu_custom_call.1} parent=11 // pred_check_branch
          %268 = sbr.rel (%p266) target = $region36
        $region35: #{tpu_custom_call.1} parent=11 // pred_region
          _
        $region36: #{tpu_custom_call.1} parent=11 // pred_fallthru
          _
        // Predicated region
        $region37: #{tpu_custom_call.1} parent=11 // pred_check
          %p269 = pneg %p192
        $region38: #{tpu_custom_call.1} parent=11 // pred_check_branch
          %271 = sbr.rel (%p269) target = $region40
        $region39: #{tpu_custom_call.1} parent=11 // pred_region
          _
        $region40: #{tpu_custom_call.1} parent=11 // pred_fallthru
          _
      $region12: #{tpu_custom_call.1} parent=5 // pred_fallthru
        _
      %p272 = scmp.lt.s32.totalorder %s19, 2
      // Predicated region
      $region41: #{tpu_custom_call.1} parent=5 // pred_check
        %p273 = pneg %p272
      $region42: #{tpu_custom_call.1} parent=5 // pred_check_branch
        %275 = sbr.rel (%p273) target = $region44
      $region43: #{tpu_custom_call.1} parent=5 // pred_region
        // Predicated region
        $region45: #{tpu_custom_call.1} parent=43 // pred_check
          %p276 = pneg %p60
        $region46: #{tpu_custom_call.1} parent=43 // pred_check_branch
          %278 = sbr.rel (%p276) target = $region48
        $region47: #{tpu_custom_call.1} parent=43 // pred_region
          %s279 = smul.u32 2, %s19
          %p280 = scmp.lt.s32.totalorder %s279, 3
          %s281 = scalar_select %p280, %s279, 3
          %s282 = smul.addr %s281, 4
          %s283 = scalar_lea.vmem %s1, %s282
          %s284 = smul.u32 2, %s19
        $region48: #{tpu_custom_call.1} parent=43 // pred_fallthru
          _
      $region44: #{tpu_custom_call.1} parent=5 // pred_fallthru
        _
      %p285 = scmp.le.s32.totalorder 1, %s19
      %p286 = scmp.lt.s32.totalorder %s19, 3
      %p287 = pnand %p285, %p286
      %p288 = pneg %p287
      // Predicated region
      $region49: #{tpu_custom_call.1} parent=5 // pred_check
        _
      $region50: #{tpu_custom_call.1} parent=5 // pred_check_branch
        %290 = sbr.rel (%p287) target = $region52
      $region51: #{tpu_custom_call.1} parent=5 // pred_region
        %s291 = ssub.s32 %s19, 1
        // Predicated region
        $region53: #{tpu_custom_call.1} parent=51 // pred_check
          %p292 = pneg %p40
        $region54: #{tpu_custom_call.1} parent=51 // pred_check_branch
          %294 = sbr.rel (%p292) target = $region56
        $region55: #{tpu_custom_call.1} parent=51 // pred_region
          %295 = dma.done [#allocation5], 16
        $region56: #{tpu_custom_call.1} parent=51 // pred_fallthru
          _
        // Predicated region
        $region57: #{tpu_custom_call.1} parent=51 // pred_check
          %p296 = pneg %p108
        $region58: #{tpu_custom_call.1} parent=51 // pred_check_branch
          %298 = sbr.rel (%p296) target = $region60
        $region59: #{tpu_custom_call.1} parent=51 // pred_region
          %299 = dma.done [#allocation3], 3072
        $region60: #{tpu_custom_call.1} parent=51 // pred_fallthru
          _
        %300 = sfence
        %p301 = pneg %p40
        %p302 = pneg %p37
        %s303 = smul.u32 2, %s24
        %p304 = scmp.lt.s32.totalorder %s303, 3
        %s305 = scalar_select %p304, %s303, 3
        %s306 = smul.addr %s305, 4
        %s307 = scalar_lea.vmem %s1, %s306
        %p308 = pneg %p66
        %p309 = pneg %p63
        %p310 = pneg %p87
        %p311 = pneg %p84
        %p312 = pneg %p108
        %p313 = pneg %p105
        %p314 = pneg %p129
        %p315 = pneg %p126
        %p316 = pneg %p150
        %p317 = pneg %p147
        %p318 = pneg %p171
        %p319 = pneg %p168
        %p320 = pneg %p192
        %p321 = pneg %p189
        %p322 = pneg %p218
        %p323 = pneg %p215
        %s324 = sand.u32 %s205, 1
        %s325 = scalar_lea.sflag [#allocation4], %s324
        %s326 = sand.u32 %s205, 1
        %s327 = smul.addr %s326, 16
        %s328 = scalar_lea.vmem [#allocation7], %s327
        %s329 = smul.u32 2, %s24
        %p330 = scmp.lt.s32.totalorder %s329, 3
        %s331 = scalar_select %p330, %s329, 3
        %s332 = smul.addr %s331, 4
        %s333 = scalar_lea.vmem %s1, %s332
        %s334 = smul.u32 2, %s24
        %s335 = smul.u32 2, %s24
        %v336 = vlaneseq
        %v337 = vand.u32 %v336, 127
        %v338 = vld [vmem:[%s2] sm:$0xff]
        %v339 = vld [vmem:[%s2 + $0x8] sm:$0xff]
        %v340 = vld [vmem:[%s2 + $0x10] sm:$0xff]
        %v341 = vld [vmem:[%s2 + $0x18] sm:$0xff]
        %v342 = vld [vmem:[%s6] sm:$0xff]
        %v343 = vld [vmem:[%s6 + $0x8] sm:$0xff]
        %v344 = vld [vmem:[%s6 + $0x10] sm:$0xff]
        %v345 = vld [vmem:[%s6 + $0x18] sm:$0xff]
        %v346 = vld [vmem:[%s7] sm:$0x1]
        %s347 = sld [smem:[#allocation2]]
        %s348 = sld [smem:[#allocation2 + $0x1]]
        %s349 = sld [smem:[#allocation2 + $0x2]]
        %s350 = sld [smem:[#allocation2 + $0x3]]
        %s351 = sld [smem:[#allocation2 + $0x4]]
        %v352 = vld [vmem:[%s333] sm:$0xf]
        %353 = vrot.lane.b32.xlu0 %v352, 5
        %v354 = vpop.permute.xlu0 %353
        %vm355 = vcmp.ge.s32.totalorder %v337, 5
        %v356 = vsel %vm355, 1, 0
        %v357 = vcvt.s32.f32 %v356
        %v358 = vmul.f32 %v354, %v357
        %359 = vrot.lane.b32.xlu0 %v352, 4
        %v360 = vpop.permute.xlu0 %359
        %vm361 = vcmp.ge.s32.totalorder %v337, 4
        %v362 = vsel %vm361, 1, 0
        %v363 = vcvt.s32.f32 %v362
        %v364 = vmul.f32 %v360, %v363
        %365 = vrot.lane.b32.xlu0 %v352, 3
        %v366 = vpop.permute.xlu0 %365
        %vm367 = vcmp.ge.s32.totalorder %v337, 3
        %v368 = vsel %vm367, 1, 0
        %v369 = vcvt.s32.f32 %v368
        %v370 = vmul.f32 %v366, %v369
        %371 = vrot.lane.b32.xlu0 %v352, 2
        %v372 = vpop.permute.xlu0 %371
        %vm373 = vcmp.ge.s32.totalorder %v337, 2
        %v374 = vsel %vm373, 1, 0
        %v375 = vcvt.s32.f32 %v374
        %v376 = vmul.f32 %v372, %v375
        %377 = vrot.lane.b32.xlu0 %v352, 1
        %v378 = vpop.permute.xlu0 %377
        %vm379 = vcmp.ge.s32.totalorder %v337, 1
        %v380 = vsel %vm379, 1, 0
        %v381 = vcvt.s32.f32 %v380
        %v382 = vmul.f32 %v378, %v381
        %383 = vrot.lane.b32.xlu0 %v352, 127
        %v384 = vpop.permute.xlu0 %383
        %vm385 = vcmp.lt.s32.totalorder %v337, 127
        %v386 = vsel %vm385, 1, 0
        %v387 = vcvt.s32.f32 %v386
        %v388 = vmul.f32 %v384, %v387
        %389 = vrot.lane.b32.xlu0 %v352, 126
        %v390 = vpop.permute.xlu0 %389
        %vm391 = vcmp.lt.s32.totalorder %v337, 126
        %v392 = vsel %vm391, 1, 0
        %v393 = vcvt.s32.f32 %v392
        %v394 = vmul.f32 %v390, %v393
        %395 = vrot.lane.b32.xlu0 %v352, 125
        %v396 = vpop.permute.xlu0 %395
        %vm397 = vcmp.lt.s32.totalorder %v337, 125
        %v398 = vsel %vm397, 1, 0
        %v399 = vcvt.s32.f32 %v398
        %v400 = vmul.f32 %v396, %v399
        %401 = vrot.lane.b32.xlu0 %v352, 124
        %v402 = vpop.permute.xlu0 %401
        %vm403 = vcmp.lt.s32.totalorder %v337, 124
        %v404 = vsel %vm403, 1, 0
        %v405 = vcvt.s32.f32 %v404
        %v406 = vmul.f32 %v402, %v405
        %407 = vrot.lane.b32.xlu0 %v352, 123
        %v408 = vpop.permute.xlu0 %407
        %vm409 = vcmp.lt.s32.totalorder %v337, 123
        %v410 = vsel %vm409, 1, 0
        %v411 = vcvt.s32.f32 %v410
        %v412 = vmul.f32 %v408, %v411
        %413 = vrot.lane.b32.xlu0 %v352, 122
        %v414 = vpop.permute.xlu0 %413
        %vm415 = vcmp.lt.s32.totalorder %v337, 122
        %v416 = vsel %vm415, 1, 0
        %v417 = vcvt.s32.f32 %v416
        %v418 = vmul.f32 %v414, %v417
        %v420 = vrot.slane %v364, 4
        %v423 = vrot.slane %v376, 4
        %v426 = vrot.slane %v352, 4
        %v429 = vrot.slane %v394, 4
        %v432 = vrot.slane %v406, 4
        %v435 = vrot.slane %v418, 4
        %vm437 = vcmask 1043456
        %v438 = vsel %vm437, %v358, %v420
        %v439 = vsel %vm437, %v370, %v423
        %v440 = vsel %vm437, %v382, %v426
        %v441 = vsel %vm437, %v388, %v429
        %v442 = vsel %vm437, %v400, %v432
        %v443 = vsel %vm437, %v412, %v435
        %vm444 = vcmask 392192
        %v446 = vsel %vm444, %v338, 0
        %v449 = vsel %vm444, %v339, 0
        %v452 = vsel %vm444, %v340, 0
        %v455 = vsel %vm444, %v341, 0
        %457 = vmatprep.subr.mxu0 0.0
        %458 = vmatpush1.msra.mxu0 %v438
        %459 = vmatprep.subr.mxu0 0.0
        %460 = vmatpush1.msra.mxu0 %v439
        %461 = vmatprep.subr.mxu0 0.0
        %462 = vmatpush1.msra.mxu0 %v440
        %463 = vmatprep.subr.mxu0 0.0
        %464 = vmatpush1.msra.mxu0 %v441
        %465 = vmatprep.subr.mxu0 0.0
        %466 = vmatpush1.msra.mxu0 %v442
        %467 = vmatprep.subr.mxu0 0.0
        %468 = vmatpush1.msra.mxu0 %v443
        %469 = vmatprep.subr.mxu0 0.0
        %470 = vmatpush1.msra.mxu0 0.0
        %471 = vmatprep.subr.mxu0 0.0
        %472 = vmatpush1.msra.mxu0 0.0
        %473 = vmatprep.subr.mxu0 0.0
        %474 = vmatpush1.msra.mxu0 0.0
        %475 = vmatprep.subr.mxu0 0.0
        %476 = vmatpush1.msra.mxu0 0.0
        %477 = vmatprep.subr.mxu0 0.0
        %478 = vmatpush1.msra.mxu0 0.0
        %479 = vmatprep.subr.mxu0 0.0
        %480 = vmatpush1.msra.mxu0 0.0
        %481 = vmatprep.subr.mxu0 0.0
        %482 = vmatpush1.msra.mxu0 0.0
        %483 = vmatprep.subr.mxu0 0.0
        %484 = vmatpush1.msra.mxu0 0.0
        %485 = vmatprep.subr.mxu0 0.0
        %486 = vmatpush1.msra.mxu0 0.0
        %487 = vmatprep.subr.mxu0 0.0
        %488 = vmatpush1.msra.mxu0 0.0
        %489 = vmatprep.subr.mxu0 0.0
        %490 = vmatpush1.msra.mxu0 0.0
        %491 = vmatprep.subr.mxu0 0.0
        %492 = vmatpush1.msra.mxu0 0.0
        %493 = vmatprep.subr.mxu0 0.0
        %494 = vmatpush1.msra.mxu0 0.0
        %495 = vmatprep.subr.mxu0 0.0
        %496 = vmatpush1.msra.mxu0 0.0
        %497 = vmatprep.subr.mxu0 0.0
        %498 = vmatpush1.msra.mxu0 0.0
        %499 = vmatprep.subr.mxu0 0.0
        %500 = vmatpush1.msra.mxu0 0.0
        %501 = vmatprep.subr.mxu0 0.0
        %502 = vmatpush1.msra.mxu0 0.0
        %503 = vmatprep.subr.mxu0 0.0
        %504 = vmatpush1.msra.mxu0 0.0
        %505 = vmatprep.subr.mxu0 0.0
        %506 = vmatpush1.msra.mxu0 0.0
        %507 = vmatprep.subr.mxu0 0.0
        %508 = vmatpush1.msra.mxu0 0.0
        %509 = vmatprep.subr.mxu0 0.0
        %510 = vmatpush1.msra.mxu0 0.0
        %511 = vmatprep.subr.mxu0 0.0
        %512 = vmatpush1.msra.mxu0 0.0
        %513 = vmatprep.subr.mxu0 0.0
        %514 = vmatpush1.msra.mxu0 0.0
        %515 = vmatprep.subr.mxu0 0.0
        %516 = vmatpush1.msra.mxu0 0.0
        %517 = vmatprep.subr.mxu0 0.0
        %518 = vmatpush1.msra.mxu0 0.0
        %519 = vmatprep.subr.mxu0 0.0
        %520 = vmatpush1.msra.mxu0 0.0
        %521 = vmatprep.mubr.f32.mxu0 0.0
        %522 = vmatmul.mubr.f32.gmra.mrb[0].mxu0 %v446
        %v523 = vpop.f32.mrb[0].mxu0
        %v524 = vadd.f32 0.0, %v523
        %v525 = vpop.f32.mrb[0].mxu0
        %526 = vmatprep.mubr.f32.mxu0 0.0
        %527 = vmatmul.mubr.f32.gmra.mrb[0].mxu0 %v449
        %v528 = vpop.f32.mrb[0].mxu0
        %v529 = vadd.f32 0.0, %v528
        %v530 = vpop.f32.mrb[0].mxu0
        %531 = vmatprep.mubr.f32.mxu0 0.0
        %532 = vmatmul.mubr.f32.gmra.mrb[0].mxu0 %v452
        %v533 = vpop.f32.mrb[0].mxu0
        %v534 = vadd.f32 0.0, %v533
        %v535 = vpop.f32.mrb[0].mxu0
        %536 = vmatprep.mubr.f32.mxu0 0.0
        %537 = vmatmul.mubr.f32.gmra.mrb[0].mxu0 %v455
        %v538 = vpop.f32.mrb[0].mxu0
        %v539 = vadd.f32 0.0, %v538
        %v540 = vpop.f32.mrb[0].mxu0
        %541 = vdwg.mxu0
        %v542 = vmax.f32 %v524, 0.0
        %v543 = vmax.f32 %v529, 0.0
        %v544 = vmax.f32 %v534, 0.0
        %v545 = vmax.f32 %v539, 0.0
        %v546 = vld [vmem:[#allocation6] sm:$0xff]
        %v547 = vld [vmem:[#allocation6 + $0x8] sm:$0xff]
        %v548 = vld [vmem:[#allocation6 + $0x10] sm:$0xff]
        %v549 = vld [vmem:[#allocation6 + $0x18] sm:$0xff]
        %v550 = vld [vmem:[#allocation6 + $0x20] sm:$0xff]
        %v551 = vld [vmem:[#allocation6 + $0x28] sm:$0xff]
        %v552 = vld [vmem:[#allocation6 + $0x30] sm:$0xff]
        %v553 = vld [vmem:[#allocation6 + $0x38] sm:$0xff]
        %v554 = vld [vmem:[%s4] sm:$0xff]
        %v555 = vld [vmem:[%s4 + $0x8] sm:$0xff]
        %v556 = vld [vmem:[%s4 + $0x10] sm:$0xff]
        %v557 = vld [vmem:[%s4 + $0x18] sm:$0xff]
        %558 = vrot.lane.b32.xlu0 %v542, 5
        %v559 = vpop.permute.xlu0 %558
        %560 = vrot.lane.b32.xlu0 %v543, 5
        %v561 = vpop.permute.xlu0 %560
        %562 = vrot.lane.b32.xlu0 %v544, 5
        %v563 = vpop.permute.xlu0 %562
        %564 = vrot.lane.b32.xlu0 %v545, 5
        %v565 = vpop.permute.xlu0 %564
        %v566 = vmul.f32 %v559, %v357
        %v567 = vmul.f32 %v561, %v357
        %v568 = vmul.f32 %v563, %v357
        %v569 = vmul.f32 %v565, %v357
        %570 = vrot.lane.b32.xlu0 %v542, 3
        %v571 = vpop.permute.xlu0 %570
        %572 = vrot.lane.b32.xlu0 %v543, 3
        %v573 = vpop.permute.xlu0 %572
        %574 = vrot.lane.b32.xlu0 %v544, 3
        %v575 = vpop.permute.xlu0 %574
        %576 = vrot.lane.b32.xlu0 %v545, 3
        %v577 = vpop.permute.xlu0 %576
        %v578 = vmul.f32 %v571, %v369
        %v579 = vmul.f32 %v573, %v369
        %v580 = vmul.f32 %v575, %v369
        %v581 = vmul.f32 %v577, %v369
        %582 = vrot.lane.b32.xlu0 %v542, 1
        %v583 = vpop.permute.xlu0 %582
        %584 = vrot.lane.b32.xlu0 %v543, 1
        %v585 = vpop.permute.xlu0 %584
        %586 = vrot.lane.b32.xlu0 %v544, 1
        %v587 = vpop.permute.xlu0 %586
        %588 = vrot.lane.b32.xlu0 %v545, 1
        %v589 = vpop.permute.xlu0 %588
        %v590 = vmul.f32 %v583, %v381
        %v591 = vmul.f32 %v585, %v381
        %v592 = vmul.f32 %v587, %v381
        %v593 = vmul.f32 %v589, %v381
        %594 = vrot.lane.b32.xlu0 %v542, 127
        %v595 = vpop.permute.xlu0 %594
        %596 = vrot.lane.b32.xlu0 %v543, 127
        %v597 = vpop.permute.xlu0 %596
        %598 = vrot.lane.b32.xlu0 %v544, 127
        %v599 = vpop.permute.xlu0 %598
        %600 = vrot.lane.b32.xlu0 %v545, 127
        %v601 = vpop.permute.xlu0 %600
        %v602 = vmul.f32 %v595, %v387
        %v603 = vmul.f32 %v597, %v387
        %v604 = vmul.f32 %v599, %v387
        %v605 = vmul.f32 %v601, %v387
        %606 = vrot.lane.b32.xlu0 %v542, 125
        %v607 = vpop.permute.xlu0 %606
        %608 = vrot.lane.b32.xlu0 %v543, 125
        %v609 = vpop.permute.xlu0 %608
        %610 = vrot.lane.b32.xlu0 %v544, 125
        %v611 = vpop.permute.xlu0 %610
        %612 = vrot.lane.b32.xlu0 %v545, 125
        %v613 = vpop.permute.xlu0 %612
        %v614 = vmul.f32 %v607, %v399
        %v615 = vmul.f32 %v609, %v399
        %v616 = vmul.f32 %v611, %v399
        %v617 = vmul.f32 %v613, %v399
        %618 = vrot.lane.b32.xlu0 %v542, 123
        %v619 = vpop.permute.xlu0 %618
        %620 = vrot.lane.b32.xlu0 %v543, 123
        %v621 = vpop.permute.xlu0 %620
        %622 = vrot.lane.b32.xlu0 %v544, 123
        %v623 = vpop.permute.xlu0 %622
        %624 = vrot.lane.b32.xlu0 %v545, 123
        %v625 = vpop.permute.xlu0 %624
        %v626 = vmul.f32 %v619, %v411
        %v627 = vmul.f32 %v621, %v411
        %v628 = vmul.f32 %v623, %v411
        %v629 = vmul.f32 %v625, %v411
        %631 = vset.pattern.permute.xlu0 0
        %632 = vperm.xlu0 %631, %v554
        %v633 = vpop.permute.xlu0 %632
        %636 = vset.pattern.permute.xlu0 0
        %637 = vperm.xlu0 %636, %v555
        %v638 = vpop.permute.xlu0 %637
        %641 = vset.pattern.permute.xlu0 0
        %642 = vperm.xlu0 %641, %v556
        %v643 = vpop.permute.xlu0 %642
        %646 = vset.pattern.permute.xlu0 0
        %647 = vperm.xlu0 %646, %v557
        %v648 = vpop.permute.xlu0 %647
        %vm650 = vcmask 523264
        %v652 = vsel %vm650, %v547, 0
        %v655 = vsel %vm650, %v549, 0
        %v658 = vsel %vm650, %v551, 0
        %v661 = vsel %vm650, %v553, 0
        %663 = vmatprep.subr.mxu0 0.0
        %664 = vmatpush1.msra.mxu0 %v566
        %665 = vmatprep.subr.mxu0 0.0
        %666 = vmatpush1.msra.mxu0 %v567
        %667 = vmatprep.subr.mxu0 0.0
        %668 = vmatpush1.msra.mxu0 %v568
        %669 = vmatprep.subr.mxu0 0.0
        %670 = vmatpush1.msra.mxu0 %v569
        %671 = vmatprep.subr.mxu0 0.0
        %672 = vmatpush1.msra.mxu0 %v578
        %673 = vmatprep.subr.mxu0 0.0
        %674 = vmatpush1.msra.mxu0 %v579
        %675 = vmatprep.subr.mxu0 0.0
        %676 = vmatpush1.msra.mxu0 %v580
        %677 = vmatprep.subr.mxu0 0.0
        %678 = vmatpush1.msra.mxu0 %v581
        %679 = vmatprep.subr.mxu0 0.0
        %680 = vmatpush1.msra.mxu0 %v590
        %681 = vmatprep.subr.mxu0 0.0
        %682 = vmatpush1.msra.mxu0 %v591
        %683 = vmatprep.subr.mxu0 0.0
        %684 = vmatpush1.msra.mxu0 %v592
        %685 = vmatprep.subr.mxu0 0.0
        %686 = vmatpush1.msra.mxu0 %v593
        %687 = vmatprep.subr.mxu0 0.0
        %688 = vmatpush1.msra.mxu0 %v602
        %689 = vmatprep.subr.mxu0 0.0
        %690 = vmatpush1.msra.mxu0 %v603
        %691 = vmatprep.subr.mxu0 0.0
        %692 = vmatpush1.msra.mxu0 %v604
        %693 = vmatprep.subr.mxu0 0.0
        %694 = vmatpush1.msra.mxu0 %v605
        %695 = vmatprep.subr.mxu0 0.0
        %696 = vmatpush1.msra.mxu0 %v614
        %697 = vmatprep.subr.mxu0 0.0
        %698 = vmatpush1.msra.mxu0 %v615
        %699 = vmatprep.subr.mxu0 0.0
        %700 = vmatpush1.msra.mxu0 %v616
        %701 = vmatprep.subr.mxu0 0.0
        %702 = vmatpush1.msra.mxu0 %v617
        %703 = vmatprep.subr.mxu0 0.0
        %704 = vmatpush1.msra.mxu0 %v626
        %705 = vmatprep.subr.mxu0 0.0
        %706 = vmatpush1.msra.mxu0 %v627
        %707 = vmatprep.subr.mxu0 0.0
        %708 = vmatpush1.msra.mxu0 %v628
        %709 = vmatprep.subr.mxu0 0.0
        %710 = vmatpush1.msra.mxu0 %v629
        %711 = vmatprep.subr.mxu0 0.0
        %712 = vmatpush1.msra.mxu0 0.0
        %713 = vmatprep.subr.mxu0 0.0
        %714 = vmatpush1.msra.mxu0 0.0
        %715 = vmatprep.subr.mxu0 0.0
        %716 = vmatpush1.msra.mxu0 0.0
        %717 = vmatprep.subr.mxu0 0.0
        %718 = vmatpush1.msra.mxu0 0.0
        %719 = vmatprep.subr.mxu0 0.0
        %720 = vmatpush1.msra.mxu0 0.0
        %721 = vmatprep.subr.mxu0 0.0
        %722 = vmatpush1.msra.mxu0 0.0
        %723 = vmatprep.subr.mxu0 0.0
        %724 = vmatpush1.msra.mxu0 0.0
        %725 = vmatprep.subr.mxu0 0.0
        %726 = vmatpush1.msra.mxu0 0.0
        %727 = vmatprep.mubr.f32.mxu0 %v652
        %728 = vmatmul.mubr.f32.gmra.mrb[0].mxu0 %v546
        %v729 = vpop.f32.mrb[0].mxu0
        %v730 = vadd.f32 %v633, %v729
        %v731 = vpop.f32.mrb[0].mxu0
        %732 = vmatprep.mubr.f32.mxu0 %v655
        %733 = vmatmul.mubr.f32.gmra.mrb[0].mxu0 %v548
        %v734 = vpop.f32.mrb[0].mxu0
        %v735 = vadd.f32 %v638, %v734
        %v736 = vpop.f32.mrb[0].mxu0
        %737 = vmatprep.mubr.f32.mxu0 %v658
        %738 = vmatmul.mubr.f32.gmra.mrb[0].mxu0 %v550
        %v739 = vpop.f32.mrb[0].mxu0
        %v740 = vadd.f32 %v643, %v739
        %v741 = vpop.f32.mrb[0].mxu0
        %742 = vmatprep.mubr.f32.mxu0 %v661
        %743 = vmatmul.mubr.f32.gmra.mrb[0].mxu0 %v552
        %v744 = vpop.f32.mrb[0].mxu0
        %v745 = vadd.f32 %v648, %v744
        %v746 = vpop.f32.mrb[0].mxu0
        %747 = vdwg.mxu0
        %v748 = vmax.f32 %v730, 0.0
        %v749 = vmax.f32 %v735, 0.0
        %v750 = vmax.f32 %v740, 0.0
        %v751 = vmax.f32 %v745, 0.0
        %v752 = vadd.f32 %v748, %v542
        %v753 = vadd.f32 %v749, %v543
        %v754 = vadd.f32 %v750, %v544
        %v755 = vadd.f32 %v751, %v545
        %s756 = scalar_lea.vmem [#allocation6], 64
        %v757 = vld [vmem:[%s756] sm:$0xff]
        %v758 = vld [vmem:[%s756 + $0x8] sm:$0xff]
        %v759 = vld [vmem:[%s756 + $0x10] sm:$0xff]
        %v760 = vld [vmem:[%s756 + $0x18] sm:$0xff]
        %v761 = vld [vmem:[%s756 + $0x20] sm:$0xff]
        %v762 = vld [vmem:[%s756 + $0x28] sm:$0xff]
        %v763 = vld [vmem:[%s756 + $0x30] sm:$0xff]
        %v764 = vld [vmem:[%s756 + $0x38] sm:$0xff]
        %s765 = scalar_lea.vmem %s4, 32
        %v766 = vld [vmem:[%s765] sm:$0xff]
        %v767 = vld [vmem:[%s765 + $0x8] sm:$0xff]
        %v768 = vld [vmem:[%s765 + $0x10] sm:$0xff]
        %v769 = vld [vmem:[%s765 + $0x18] sm:$0xff]
        %770 = vrot.lane.b32.xlu0 %v752, 10
        %v771 = vpop.permute.xlu0 %770
        %772 = vrot.lane.b32.xlu0 %v753, 10
        %v773 = vpop.permute.xlu0 %772
        %774 = vrot.lane.b32.xlu0 %v754, 10
        %v775 = vpop.permute.xlu0 %774
        %776 = vrot.lane.b32.xlu0 %v755, 10
        %v777 = vpop.permute.xlu0 %776
        %vm778 = vcmp.ge.s32.totalorder %v337, 10
        %v779 = vsel %vm778, 1, 0
        %v780 = vcvt.s32.f32 %v779
        %v781 = vmul.f32 %v771, %v780
        %v782 = vmul.f32 %v773, %v780
        %v783 = vmul.f32 %v775, %v780
        %v784 = vmul.f32 %v777, %v780
        %785 = vrot.lane.b32.xlu0 %v752, 6
        %v786 = vpop.permute.xlu0 %785
        %787 = vrot.lane.b32.xlu0 %v753, 6
        %v788 = vpop.permute.xlu0 %787
        %789 = vrot.lane.b32.xlu0 %v754, 6
        %v790 = vpop.permute.xlu0 %789
        %791 = vrot.lane.b32.xlu0 %v755, 6
        %v792 = vpop.permute.xlu0 %791
        %vm793 = vcmp.ge.s32.totalorder %v337, 6
        %v794 = vsel %vm793, 1, 0
        %v795 = vcvt.s32.f32 %v794
        %v796 = vmul.f32 %v786, %v795
        %v797 = vmul.f32 %v788, %v795
        %v798 = vmul.f32 %v790, %v795
        %v799 = vmul.f32 %v792, %v795
        %800 = vrot.lane.b32.xlu0 %v752, 2
        %v801 = vpop.permute.xlu0 %800
        %802 = vrot.lane.b32.xlu0 %v753, 2
        %v803 = vpop.permute.xlu0 %802
        %804 = vrot.lane.b32.xlu0 %v754, 2
        %v805 = vpop.permute.xlu0 %804
        %806 = vrot.lane.b32.xlu0 %v755, 2
        %v807 = vpop.permute.xlu0 %806
        %v808 = vmul.f32 %v801, %v375
        %v809 = vmul.f32 %v803, %v375
        %v810 = vmul.f32 %v805, %v375
        %v811 = vmul.f32 %v807, %v375
        %812 = vrot.lane.b32.xlu0 %v752, 126
        %v813 = vpop.permute.xlu0 %812
        %814 = vrot.lane.b32.xlu0 %v753, 126
        %v815 = vpop.permute.xlu0 %814
        %816 = vrot.lane.b32.xlu0 %v754, 126
        %v817 = vpop.permute.xlu0 %816
        %818 = vrot.lane.b32.xlu0 %v755, 126
        %v819 = vpop.permute.xlu0 %818
        %v820 = vmul.f32 %v813, %v393
        %v821 = vmul.f32 %v815, %v393
        %v822 = vmul.f32 %v817, %v393
        %v823 = vmul.f32 %v819, %v393
        %824 = vrot.lane.b32.xlu0 %v752, 122
        %v825 = vpop.permute.xlu0 %824
        %826 = vrot.lane.b32.xlu0 %v753, 122
        %v827 = vpop.permute.xlu0 %826
        %828 = vrot.lane.b32.xlu0 %v754, 122
        %v829 = vpop.permute.xlu0 %828
        %830 = vrot.lane.b32.xlu0 %v755, 122
        %v831 = vpop.permute.xlu0 %830
        %v832 = vmul.f32 %v825, %v417
        %v833 = vmul.f32 %v827, %v417
        %v834 = vmul.f32 %v829, %v417
        %v835 = vmul.f32 %v831, %v417
        %836 = vrot.lane.b32.xlu0 %v752, 118
        %v837 = vpop.permute.xlu0 %836
        %838 = vrot.lane.b32.xlu0 %v753, 118
        %v839 = vpop.permute.xlu0 %838
        %840 = vrot.lane.b32.xlu0 %v754, 118
        %v841 = vpop.permute.xlu0 %840
        %842 = vrot.lane.b32.xlu0 %v755, 118
        %v843 = vpop.permute.xlu0 %842
        %vm844 = vcmp.lt.s32.totalorder %v337, 118
        %v845 = vsel %vm844, 1, 0
        %v846 = vcvt.s32.f32 %v845
        %v847 = vmul.f32 %v837, %v846
        %v848 = vmul.f32 %v839, %v846
        %v849 = vmul.f32 %v841, %v846
        %v850 = vmul.f32 %v843, %v846
        %852 = vset.pattern.permute.xlu0 0
        %853 = vperm.xlu0 %852, %v766
        %v854 = vpop.permute.xlu0 %853
        %857 = vset.pattern.permute.xlu0 0
        %858 = vperm.xlu0 %857, %v767
        %v859 = vpop.permute.xlu0 %858
        %862 = vset.pattern.permute.xlu0 0
        %863 = vperm.xlu0 %862, %v768
        %v864 = vpop.permute.xlu0 %863
        %867 = vset.pattern.permute.xlu0 0
        %868 = vperm.xlu0 %867, %v769
        %v869 = vpop.permute.xlu0 %868
        %v872 = vsel %vm650, %v758, 0
        %v875 = vsel %vm650, %v760, 0
        %v878 = vsel %vm650, %v762, 0
        %v881 = vsel %vm650, %v764, 0
        %883 = vmatprep.subr.mxu0 0.0
        %884 = vmatpush1.msra.mxu0 %v781
        %885 = vmatprep.subr.mxu0 0.0
        %886 = vmatpush1.msra.mxu0 %v782
        %887 = vmatprep.subr.mxu0 0.0
        %888 = vmatpush1.msra.mxu0 %v783
        %889 = vmatprep.subr.mxu0 0.0
        %890 = vmatpush1.msra.mxu0 %v784
        %891 = vmatprep.subr.mxu0 0.0
        %892 = vmatpush1.msra.mxu0 %v796
        %893 = vmatprep.subr.mxu0 0.0
        %894 = vmatpush1.msra.mxu0 %v797
        %895 = vmatprep.subr.mxu0 0.0
        %896 = vmatpush1.msra.mxu0 %v798
        %897 = vmatprep.subr.mxu0 0.0
        %898 = vmatpush1.msra.mxu0 %v799
        %899 = vmatprep.subr.mxu0 0.0
        %900 = vmatpush1.msra.mxu0 %v808
        %901 = vmatprep.subr.mxu0 0.0
        %902 = vmatpush1.msra.mxu0 %v809
        %903 = vmatprep.subr.mxu0 0.0
        %904 = vmatpush1.msra.mxu0 %v810
        %905 = vmatprep.subr.mxu0 0.0
        %906 = vmatpush1.msra.mxu0 %v811
        %907 = vmatprep.subr.mxu0 0.0
        %908 = vmatpush1.msra.mxu0 %v820
        %909 = vmatprep.subr.mxu0 0.0
        %910 = vmatpush1.msra.mxu0 %v821
        %911 = vmatprep.subr.mxu0 0.0
        %912 = vmatpush1.msra.mxu0 %v822
        %913 = vmatprep.subr.mxu0 0.0
        %914 = vmatpush1.msra.mxu0 %v823
        %915 = vmatprep.subr.mxu0 0.0
        %916 = vmatpush1.msra.mxu0 %v832
        %917 = vmatprep.subr.mxu0 0.0
        %918 = vmatpush1.msra.mxu0 %v833
        %919 = vmatprep.subr.mxu0 0.0
        %920 = vmatpush1.msra.mxu0 %v834
        %921 = vmatprep.subr.mxu0 0.0
        %922 = vmatpush1.msra.mxu0 %v835
        %923 = vmatprep.subr.mxu0 0.0
        %924 = vmatpush1.msra.mxu0 %v847
        %925 = vmatprep.subr.mxu0 0.0
        %926 = vmatpush1.msra.mxu0 %v848
        %927 = vmatprep.subr.mxu0 0.0
        %928 = vmatpush1.msra.mxu0 %v849
        %929 = vmatprep.subr.mxu0 0.0
        %930 = vmatpush1.msra.mxu0 %v850
        %931 = vmatprep.subr.mxu0 0.0
        %932 = vmatpush1.msra.mxu0 0.0
        %933 = vmatprep.subr.mxu0 0.0
        %934 = vmatpush1.msra.mxu0 0.0
        %935 = vmatprep.subr.mxu0 0.0
        %936 = vmatpush1.msra.mxu0 0.0
        %937 = vmatprep.subr.mxu0 0.0
        %938 = vmatpush1.msra.mxu0 0.0
        %939 = vmatprep.subr.mxu0 0.0
        %940 = vmatpush1.msra.mxu0 0.0
        %941 = vmatprep.subr.mxu0 0.0
        %942 = vmatpush1.msra.mxu0 0.0
        %943 = vmatprep.subr.mxu0 0.0
        %944 = vmatpush1.msra.mxu0 0.0
        %945 = vmatprep.subr.mxu0 0.0
        %946 = vmatpush1.msra.mxu0 0.0
        %947 = vmatprep.mubr.f32.mxu0 %v872
        %948 = vmatmul.mubr.f32.gmra.mrb[0].mxu0 %v757
        %v949 = vpop.f32.mrb[0].mxu0
        %v950 = vadd.f32 %v854, %v949
        %v951 = vpop.f32.mrb[0].mxu0
        %952 = vmatprep.mubr.f32.mxu0 %v875
        %953 = vmatmul.mubr.f32.gmra.mrb[0].mxu0 %v759
        %v954 = vpop.f32.mrb[0].mxu0
        %v955 = vadd.f32 %v859, %v954
        %v956 = vpop.f32.mrb[0].mxu0
        %957 = vmatprep.mubr.f32.mxu0 %v878
        %958 = vmatmul.mubr.f32.gmra.mrb[0].mxu0 %v761
        %v959 = vpop.f32.mrb[0].mxu0
        %v960 = vadd.f32 %v864, %v959
        %v961 = vpop.f32.mrb[0].mxu0
        %962 = vmatprep.mubr.f32.mxu0 %v881
        %963 = vmatmul.mubr.f32.gmra.mrb[0].mxu0 %v763
        %v964 = vpop.f32.mrb[0].mxu0
        %v965 = vadd.f32 %v869, %v964
        %v966 = vpop.f32.mrb[0].mxu0
        %967 = vdwg.mxu0
        %v968 = vmax.f32 %v950, 0.0
        %v969 = vmax.f32 %v955, 0.0
        %v970 = vmax.f32 %v960, 0.0
        %v971 = vmax.f32 %v965, 0.0
        %v972 = vadd.f32 %v968, %v752
        %v973 = vadd.f32 %v969, %v753
        %v974 = vadd.f32 %v970, %v754
        %v975 = vadd.f32 %v971, %v755
        %s976 = scalar_lea.vmem [#allocation6], 128
        %v977 = vld [vmem:[%s976] sm:$0xff]
        %v978 = vld [vmem:[%s976 + $0x8] sm:$0xff]
        %v979 = vld [vmem:[%s976 + $0x10] sm:$0xff]
        %v980 = vld [vmem:[%s976 + $0x18] sm:$0xff]
        %v981 = vld [vmem:[%s976 + $0x20] sm:$0xff]
        %v982 = vld [vmem:[%s976 + $0x28] sm:$0xff]
        %v983 = vld [vmem:[%s976 + $0x30] sm:$0xff]
        %v984 = vld [vmem:[%s976 + $0x38] sm:$0xff]
        %s985 = scalar_lea.vmem %s4, 64
        %v986 = vld [vmem:[%s985] sm:$0xff]
        %v987 = vld [vmem:[%s985 + $0x8] sm:$0xff]
        %v988 = vld [vmem:[%s985 + $0x10] sm:$0xff]
        %v989 = vld [vmem:[%s985 + $0x18] sm:$0xff]
        %990 = vrot.lane.b32.xlu0 %v972, 20
        %v991 = vpop.permute.xlu0 %990
        %992 = vrot.lane.b32.xlu0 %v973, 20
        %v993 = vpop.permute.xlu0 %992
        %994 = vrot.lane.b32.xlu0 %v974, 20
        %v995 = vpop.permute.xlu0 %994
        %996 = vrot.lane.b32.xlu0 %v975, 20
        %v997 = vpop.permute.xlu0 %996
        %vm998 = vcmp.ge.s32.totalorder %v337, 20
        %v999 = vsel %vm998, 1, 0
        %v1000 = vcvt.s32.f32 %v999
        %v1001 = vmul.f32 %v991, %v1000
        %v1002 = vmul.f32 %v993, %v1000
        %v1003 = vmul.f32 %v995, %v1000
        %v1004 = vmul.f32 %v997, %v1000
        %1005 = vrot.lane.b32.xlu0 %v972, 12
        %v1006 = vpop.permute.xlu0 %1005
        %1007 = vrot.lane.b32.xlu0 %v973, 12
        %v1008 = vpop.permute.xlu0 %1007
        %1009 = vrot.lane.b32.xlu0 %v974, 12
        %v1010 = vpop.permute.xlu0 %1009
        %1011 = vrot.lane.b32.xlu0 %v975, 12
        %v1012 = vpop.permute.xlu0 %1011
        %vm1013 = vcmp.ge.s32.totalorder %v337, 12
        %v1014 = vsel %vm1013, 1, 0
        %v1015 = vcvt.s32.f32 %v1014
        %v1016 = vmul.f32 %v1006, %v1015
        %v1017 = vmul.f32 %v1008, %v1015
        %v1018 = vmul.f32 %v1010, %v1015
        %v1019 = vmul.f32 %v1012, %v1015
        %1020 = vrot.lane.b32.xlu0 %v972, 4
        %v1021 = vpop.permute.xlu0 %1020
        %1022 = vrot.lane.b32.xlu0 %v973, 4
        %v1023 = vpop.permute.xlu0 %1022
        %1024 = vrot.lane.b32.xlu0 %v974, 4
        %v1025 = vpop.permute.xlu0 %1024
        %1026 = vrot.lane.b32.xlu0 %v975, 4
        %v1027 = vpop.permute.xlu0 %1026
        %v1028 = vmul.f32 %v1021, %v363
        %v1029 = vmul.f32 %v1023, %v363
        %v1030 = vmul.f32 %v1025, %v363
        %v1031 = vmul.f32 %v1027, %v363
        %1032 = vrot.lane.b32.xlu0 %v972, 124
        %v1033 = vpop.permute.xlu0 %1032
        %1034 = vrot.lane.b32.xlu0 %v973, 124
        %v1035 = vpop.permute.xlu0 %1034
        %1036 = vrot.lane.b32.xlu0 %v974, 124
        %v1037 = vpop.permute.xlu0 %1036
        %1038 = vrot.lane.b32.xlu0 %v975, 124
        %v1039 = vpop.permute.xlu0 %1038
        %v1040 = vmul.f32 %v1033, %v405
        %v1041 = vmul.f32 %v1035, %v405
        %v1042 = vmul.f32 %v1037, %v405
        %v1043 = vmul.f32 %v1039, %v405
        %1044 = vrot.lane.b32.xlu0 %v972, 116
        %v1045 = vpop.permute.xlu0 %1044
        %1046 = vrot.lane.b32.xlu0 %v973, 116
        %v1047 = vpop.permute.xlu0 %1046
        %1048 = vrot.lane.b32.xlu0 %v974, 116
        %v1049 = vpop.permute.xlu0 %1048
        %1050 = vrot.lane.b32.xlu0 %v975, 116
        %v1051 = vpop.permute.xlu0 %1050
        %vm1052 = vcmp.lt.s32.totalorder %v337, 116
        %v1053 = vsel %vm1052, 1, 0
        %v1054 = vcvt.s32.f32 %v1053
        %v1055 = vmul.f32 %v1045, %v1054
        %v1056 = vmul.f32 %v1047, %v1054
        %v1057 = vmul.f32 %v1049, %v1054
        %v1058 = vmul.f32 %v1051, %v1054
        %1059 = vrot.lane.b32.xlu0 %v972, 108
        %v1060 = vpop.permute.xlu0 %1059
        %1061 = vrot.lane.b32.xlu0 %v973, 108
        %v1062 = vpop.permute.xlu0 %1061
        %1063 = vrot.lane.b32.xlu0 %v974, 108
        %v1064 = vpop.permute.xlu0 %1063
        %1065 = vrot.lane.b32.xlu0 %v975, 108
        %v1066 = vpop.permute.xlu0 %1065
        %vm1067 = vcmp.lt.s32.totalorder %v337, 108
        %v1068 = vsel %vm1067, 1, 0
        %v1069 = vcvt.s32.f32 %v1068
        %v1070 = vmul.f32 %v1060, %v1069
        %v1071 = vmul.f32 %v1062, %v1069
        %v1072 = vmul.f32 %v1064, %v1069
        %v1073 = vmul.f32 %v1066, %v1069
        %1075 = vset.pattern.permute.xlu0 0
        %1076 = vperm.xlu0 %1075, %v986
        %v1077 = vpop.permute.xlu0 %1076
        %1080 = vset.pattern.permute.xlu0 0
        %1081 = vperm.xlu0 %1080, %v987
        %v1082 = vpop.permute.xlu0 %1081
        %1085 = vset.pattern.permute.xlu0 0
        %1086 = vperm.xlu0 %1085, %v988
        %v1087 = vpop.permute.xlu0 %1086
        %1090 = vset.pattern.permute.xlu0 0
        %1091 = vperm.xlu0 %1090, %v989
        %v1092 = vpop.permute.xlu0 %1091
        %v1095 = vsel %vm650, %v978, 0
        %v1098 = vsel %vm650, %v980, 0
        %v1101 = vsel %vm650, %v982, 0
        %v1104 = vsel %vm650, %v984, 0
        %1106 = vmatprep.subr.mxu0 0.0
        %1107 = vmatpush1.msra.mxu0 %v1001
        %1108 = vmatprep.subr.mxu0 0.0
        %1109 = vmatpush1.msra.mxu0 %v1002
        %1110 = vmatprep.subr.mxu0 0.0
        %1111 = vmatpush1.msra.mxu0 %v1003
        %1112 = vmatprep.subr.mxu0 0.0
        %1113 = vmatpush1.msra.mxu0 %v1004
        %1114 = vmatprep.subr.mxu0 0.0
        %1115 = vmatpush1.msra.mxu0 %v1016
        %1116 = vmatprep.subr.mxu0 0.0
        %1117 = vmatpush1.msra.mxu0 %v1017
        %1118 = vmatprep.subr.mxu0 0.0
        %1119 = vmatpush1.msra.mxu0 %v1018
        %1120 = vmatprep.subr.mxu0 0.0
        %1121 = vmatpush1.msra.mxu0 %v1019
        %1122 = vmatprep.subr.mxu0 0.0
        %1123 = vmatpush1.msra.mxu0 %v1028
        %1124 = vmatprep.subr.mxu0 0.0
        %1125 = vmatpush1.msra.mxu0 %v1029
        %1126 = vmatprep.subr.mxu0 0.0
        %1127 = vmatpush1.msra.mxu0 %v1030
        %1128 = vmatprep.subr.mxu0 0.0
        %1129 = vmatpush1.msra.mxu0 %v1031
        %1130 = vmatprep.subr.mxu0 0.0
        %1131 = vmatpush1.msra.mxu0 %v1040
        %1132 = vmatprep.subr.mxu0 0.0
        %1133 = vmatpush1.msra.mxu0 %v1041
        %1134 = vmatprep.subr.mxu0 0.0
        %1135 = vmatpush1.msra.mxu0 %v1042
        %1136 = vmatprep.subr.mxu0 0.0
        %1137 = vmatpush1.msra.mxu0 %v1043
        %1138 = vmatprep.subr.mxu0 0.0
        %1139 = vmatpush1.msra.mxu0 %v1055
        %1140 = vmatprep.subr.mxu0 0.0
        %1141 = vmatpush1.msra.mxu0 %v1056
        %1142 = vmatprep.subr.mxu0 0.0
        %1143 = vmatpush1.msra.mxu0 %v1057
        %1144 = vmatprep.subr.mxu0 0.0
        %1145 = vmatpush1.msra.mxu0 %v1058
        %1146 = vmatprep.subr.mxu0 0.0
        %1147 = vmatpush1.msra.mxu0 %v1070
        %1148 = vmatprep.subr.mxu0 0.0
        %1149 = vmatpush1.msra.mxu0 %v1071
        %1150 = vmatprep.subr.mxu0 0.0
        %1151 = vmatpush1.msra.mxu0 %v1072
        %1152 = vmatprep.subr.mxu0 0.0
        %1153 = vmatpush1.msra.mxu0 %v1073
        %1154 = vmatprep.subr.mxu0 0.0
        %1155 = vmatpush1.msra.mxu0 0.0
        %1156 = vmatprep.subr.mxu0 0.0
        %1157 = vmatpush1.msra.mxu0 0.0
        %1158 = vmatprep.subr.mxu0 0.0
        %1159 = vmatpush1.msra.mxu0 0.0
        %1160 = vmatprep.subr.mxu0 0.0
        %1161 = vmatpush1.msra.mxu0 0.0
        %1162 = vmatprep.subr.mxu0 0.0
        %1163 = vmatpush1.msra.mxu0 0.0
        %1164 = vmatprep.subr.mxu0 0.0
        %1165 = vmatpush1.msra.mxu0 0.0
        %1166 = vmatprep.subr.mxu0 0.0
        %1167 = vmatpush1.msra.mxu0 0.0
        %1168 = vmatprep.subr.mxu0 0.0
        %1169 = vmatpush1.msra.mxu0 0.0
        %1170 = vmatprep.mubr.f32.mxu0 %v1095
        %1171 = vmatmul.mubr.f32.gmra.mrb[0].mxu0 %v977
        %v1172 = vpop.f32.mrb[0].mxu0
        %v1173 = vadd.f32 %v1077, %v1172
        %v1174 = vpop.f32.mrb[0].mxu0
        %1175 = vmatprep.mubr.f32.mxu0 %v1098
        %1176 = vmatmul.mubr.f32.gmra.mrb[0].mxu0 %v979
        %v1177 = vpop.f32.mrb[0].mxu0
        %v1178 = vadd.f32 %v1082, %v1177
        %v1179 = vpop.f32.mrb[0].mxu0
        %1180 = vmatprep.mubr.f32.mxu0 %v1101
        %1181 = vmatmul.mubr.f32.gmra.mrb[0].mxu0 %v981
        %v1182 = vpop.f32.mrb[0].mxu0
        %v1183 = vadd.f32 %v1087, %v1182
        %v1184 = vpop.f32.mrb[0].mxu0
        %1185 = vmatprep.mubr.f32.mxu0 %v1104
        %1186 = vmatmul.mubr.f32.gmra.mrb[0].mxu0 %v983
        %v1187 = vpop.f32.mrb[0].mxu0
        %v1188 = vadd.f32 %v1092, %v1187
        %v1189 = vpop.f32.mrb[0].mxu0
        %1190 = vdwg.mxu0
        %v1191 = vmax.f32 %v1173, 0.0
        %v1192 = vmax.f32 %v1178, 0.0
        %v1193 = vmax.f32 %v1183, 0.0
        %v1194 = vmax.f32 %v1188, 0.0
        %v1195 = vadd.f32 %v1191, %v972
        %v1196 = vadd.f32 %v1192, %v973
        %v1197 = vadd.f32 %v1193, %v974
        %v1198 = vadd.f32 %v1194, %v975
        %1200 = vset.pattern.permute.xlu0 0
        %1201 = vperm.xlu0 %1200, %v342
        %v1202 = vpop.permute.xlu0 %1201
        %1205 = vset.pattern.permute.xlu0 0
        %1206 = vperm.xlu0 %1205, %v343
        %v1207 = vpop.permute.xlu0 %1206
        %1210 = vset.pattern.permute.xlu0 0
        %1211 = vperm.xlu0 %1210, %v344
        %v1212 = vpop.permute.xlu0 %1211
        %1215 = vset.pattern.permute.xlu0 0
        %1216 = vperm.xlu0 %1215, %v345
        %v1217 = vpop.permute.xlu0 %1216
        %v1219 = vmul.f32 %v1202, %v1195
        %v1220 = vmul.f32 %v1207, %v1196
        %v1221 = vmul.f32 %v1212, %v1197
        %v1222 = vmul.f32 %v1217, %v1198
        %1223 = vadd.xlane.f32.xlu0 %v1219
        %v1224 = vpop.xlane.xlu0 %1223
        %1225 = vadd.xlane.f32.xlu0 %v1220
        %v1226 = vpop.xlane.xlu0 %1225
        %1227 = vadd.xlane.f32.xlu0 %v1221
        %v1228 = vpop.xlane.xlu0 %1227
        %1229 = vadd.xlane.f32.xlu0 %v1222
        %v1230 = vpop.xlane.xlu0 %1229
        %v1231 = vadd.f32 %v1224, %v1226
        %v1232 = vadd.f32 %v1231, %v1228
        %v1233 = vadd.f32 %v1232, %v1230
        %v1234 = vrot.slane %v1233, 4
        %v1235 = vadd.f32 %v1233, %v1234
        %v1236 = vrot.slane %v1235, 2
        %v1237 = vadd.f32 %v1235, %v1236
        %v1238 = vrot.slane %v1237, 1
        %v1239 = vadd.f32 %v1237, %v1238
        %v1240 = vmul.f32 %v1239, 0.0078125
        %v1241 = vstv %s347
        %v1242 = vadd.f32 %v1240, %v1241
        %v1243 = vld [vmem:[%s5] sm:$0x3]
        %vm1244 = vcmask 261120
        %v1246 = vsel %vm1244, %v1243, 0
        %1248 = vmatprep.subr.mxu0 0.0
        %1249 = vmatpush1.msra.mxu0 %v1195
        %1250 = vmatprep.subr.mxu0 0.0
        %1251 = vmatpush1.msra.mxu0 %v1196
        %1252 = vmatprep.subr.mxu0 0.0
        %1253 = vmatpush1.msra.mxu0 %v1197
        %1254 = vmatprep.subr.mxu0 0.0
        %1255 = vmatpush1.msra.mxu0 %v1198
        %1256 = vmatprep.subr.mxu0 0.0
        %1257 = vmatpush1.msra.mxu0 0.0
        %1258 = vmatprep.subr.mxu0 0.0
        %1259 = vmatpush1.msra.mxu0 0.0
        %1260 = vmatprep.subr.mxu0 0.0
        %1261 = vmatpush1.msra.mxu0 0.0
        %1262 = vmatprep.subr.mxu0 0.0
        %1263 = vmatpush1.msra.mxu0 0.0
        %1264 = vmatprep.subr.mxu0 0.0
        %1265 = vmatpush1.msra.mxu0 0.0
        %1266 = vmatprep.subr.mxu0 0.0
        %1267 = vmatpush1.msra.mxu0 0.0
        %1268 = vmatprep.subr.mxu0 0.0
        %1269 = vmatpush1.msra.mxu0 0.0
        %1270 = vmatprep.subr.mxu0 0.0
        %1271 = vmatpush1.msra.mxu0 0.0
        %1272 = vmatprep.subr.mxu0 0.0
        %1273 = vmatpush1.msra.mxu0 0.0
        %1274 = vmatprep.subr.mxu0 0.0
        %1275 = vmatpush1.msra.mxu0 0.0
        %1276 = vmatprep.subr.mxu0 0.0
        %1277 = vmatpush1.msra.mxu0 0.0
        %1278 = vmatprep.subr.mxu0 0.0
        %1279 = vmatpush1.msra.mxu0 0.0
        %1280 = vmatprep.subr.mxu0 0.0
        %1281 = vmatpush1.msra.mxu0 0.0
        %1282 = vmatprep.subr.mxu0 0.0
        %1283 = vmatpush1.msra.mxu0 0.0
        %1284 = vmatprep.subr.mxu0 0.0
        %1285 = vmatpush1.msra.mxu0 0.0
        %1286 = vmatprep.subr.mxu0 0.0
        %1287 = vmatpush1.msra.mxu0 0.0
        %1288 = vmatprep.subr.mxu0 0.0
        %1289 = vmatpush1.msra.mxu0 0.0
        %1290 = vmatprep.subr.mxu0 0.0
        %1291 = vmatpush1.msra.mxu0 0.0
        %1292 = vmatprep.subr.mxu0 0.0
        %1293 = vmatpush1.msra.mxu0 0.0
        %1294 = vmatprep.subr.mxu0 0.0
        %1295 = vmatpush1.msra.mxu0 0.0
        %1296 = vmatprep.subr.mxu0 0.0
        %1297 = vmatpush1.msra.mxu0 0.0
        %1298 = vmatprep.subr.mxu0 0.0
        %1299 = vmatpush1.msra.mxu0 0.0
        %1300 = vmatprep.subr.mxu0 0.0
        %1301 = vmatpush1.msra.mxu0 0.0
        %1302 = vmatprep.subr.mxu0 0.0
        %1303 = vmatpush1.msra.mxu0 0.0
        %1304 = vmatprep.subr.mxu0 0.0
        %1305 = vmatpush1.msra.mxu0 0.0
        %1306 = vmatprep.subr.mxu0 0.0
        %1307 = vmatpush1.msra.mxu0 0.0
        %1308 = vmatprep.subr.mxu0 0.0
        %1309 = vmatpush1.msra.mxu0 0.0
        %1310 = vmatprep.subr.mxu0 0.0
        %1311 = vmatpush1.msra.mxu0 0.0
        %1312 = vmatprep.mubr.f32.mxu0 0.0
        %1313 = vmatmul.mubr.f32.gmra.mrb[0].mxu0 %v1246
        %v1314 = vpop.f32.mrb[0].mxu0
        %v1315 = vadd.f32 0.0, %v1314
        %v1316 = vpop.f32.mrb[0].mxu0
        %1317 = vdwg.mxu0
        %1318 = vrot.lane.b32.xlu0 %v1315, 10
        %v1319 = vpop.permute.xlu0 %1318
        %v1320 = vmul.f32 %v1319, %v780
        %v1321 = vadd.f32 %v1320, 0.0
        %s1322 = scalar_lea.vmem %s5, 2
        %v1323 = vld [vmem:[%s1322] sm:$0x3]
        %v1325 = vsel %vm1244, %v1323, 0
        %1327 = vmatprep.subr.mxu0 0.0
        %1328 = vmatpush1.msra.mxu0 %v1195
        %1329 = vmatprep.subr.mxu0 0.0
        %1330 = vmatpush1.msra.mxu0 %v1196
        %1331 = vmatprep.subr.mxu0 0.0
        %1332 = vmatpush1.msra.mxu0 %v1197
        %1333 = vmatprep.subr.mxu0 0.0
        %1334 = vmatpush1.msra.mxu0 %v1198
        %1335 = vmatprep.subr.mxu0 0.0
        %1336 = vmatpush1.msra.mxu0 0.0
        %1337 = vmatprep.subr.mxu0 0.0
        %1338 = vmatpush1.msra.mxu0 0.0
        %1339 = vmatprep.subr.mxu0 0.0
        %1340 = vmatpush1.msra.mxu0 0.0
        %1341 = vmatprep.subr.mxu0 0.0
        %1342 = vmatpush1.msra.mxu0 0.0
        %1343 = vmatprep.subr.mxu0 0.0
        %1344 = vmatpush1.msra.mxu0 0.0
        %1345 = vmatprep.subr.mxu0 0.0
        %1346 = vmatpush1.msra.mxu0 0.0
        %1347 = vmatprep.subr.mxu0 0.0
        %1348 = vmatpush1.msra.mxu0 0.0
        %1349 = vmatprep.subr.mxu0 0.0
        %1350 = vmatpush1.msra.mxu0 0.0
        %1351 = vmatprep.subr.mxu0 0.0
        %1352 = vmatpush1.msra.mxu0 0.0
        %1353 = vmatprep.subr.mxu0 0.0
        %1354 = vmatpush1.msra.mxu0 0.0
        %1355 = vmatprep.subr.mxu0 0.0
        %1356 = vmatpush1.msra.mxu0 0.0
        %1357 = vmatprep.subr.mxu0 0.0
        %1358 = vmatpush1.msra.mxu0 0.0
        %1359 = vmatprep.subr.mxu0 0.0
        %1360 = vmatpush1.msra.mxu0 0.0
        %1361 = vmatprep.subr.mxu0 0.0
        %1362 = vmatpush1.msra.mxu0 0.0
        %1363 = vmatprep.subr.mxu0 0.0
        %1364 = vmatpush1.msra.mxu0 0.0
        %1365 = vmatprep.subr.mxu0 0.0
        %1366 = vmatpush1.msra.mxu0 0.0
        %1367 = vmatprep.subr.mxu0 0.0
        %1368 = vmatpush1.msra.mxu0 0.0
        %1369 = vmatprep.subr.mxu0 0.0
        %1370 = vmatpush1.msra.mxu0 0.0
        %1371 = vmatprep.subr.mxu0 0.0
        %1372 = vmatpush1.msra.mxu0 0.0
        %1373 = vmatprep.subr.mxu0 0.0
        %1374 = vmatpush1.msra.mxu0 0.0
        %1375 = vmatprep.subr.mxu0 0.0
        %1376 = vmatpush1.msra.mxu0 0.0
        %1377 = vmatprep.subr.mxu0 0.0
        %1378 = vmatpush1.msra.mxu0 0.0
        %1379 = vmatprep.subr.mxu0 0.0
        %1380 = vmatpush1.msra.mxu0 0.0
        %1381 = vmatprep.subr.mxu0 0.0
        %1382 = vmatpush1.msra.mxu0 0.0
        %1383 = vmatprep.subr.mxu0 0.0
        %1384 = vmatpush1.msra.mxu0 0.0
        %1385 = vmatprep.subr.mxu0 0.0
        %1386 = vmatpush1.msra.mxu0 0.0
        %1387 = vmatprep.subr.mxu0 0.0
        %1388 = vmatpush1.msra.mxu0 0.0
        %1389 = vmatprep.subr.mxu0 0.0
        %1390 = vmatpush1.msra.mxu0 0.0
        %1391 = vmatprep.mubr.f32.mxu0 0.0
        %1392 = vmatmul.mubr.f32.gmra.mrb[0].mxu0 %v1325
        %v1393 = vpop.f32.mrb[0].mxu0
        %v1394 = vadd.f32 0.0, %v1393
        %v1395 = vpop.f32.mrb[0].mxu0
        %1396 = vdwg.mxu0
        %1397 = vrot.lane.b32.xlu0 %v1394, 9
        %v1398 = vpop.permute.xlu0 %1397
        %vm1399 = vcmp.ge.s32.totalorder %v337, 9
        %v1400 = vsel %vm1399, 1, 0
        %v1401 = vcvt.s32.f32 %v1400
        %v1402 = vmul.f32 %v1398, %v1401
        %v1403 = vadd.f32 %v1321, %v1402
        %s1404 = scalar_lea.vmem %s5, 4
        %v1405 = vld [vmem:[%s1404] sm:$0x3]
        %v1407 = vsel %vm1244, %v1405, 0
        %1409 = vmatprep.subr.mxu0 0.0
        %1410 = vmatpush1.msra.mxu0 %v1195
        %1411 = vmatprep.subr.mxu0 0.0
        %1412 = vmatpush1.msra.mxu0 %v1196
        %1413 = vmatprep.subr.mxu0 0.0
        %1414 = vmatpush1.msra.mxu0 %v1197
        %1415 = vmatprep.subr.mxu0 0.0
        %1416 = vmatpush1.msra.mxu0 %v1198
        %1417 = vmatprep.subr.mxu0 0.0
        %1418 = vmatpush1.msra.mxu0 0.0
        %1419 = vmatprep.subr.mxu0 0.0
        %1420 = vmatpush1.msra.mxu0 0.0
        %1421 = vmatprep.subr.mxu0 0.0
        %1422 = vmatpush1.msra.mxu0 0.0
        %1423 = vmatprep.subr.mxu0 0.0
        %1424 = vmatpush1.msra.mxu0 0.0
        %1425 = vmatprep.subr.mxu0 0.0
        %1426 = vmatpush1.msra.mxu0 0.0
        %1427 = vmatprep.subr.mxu0 0.0
        %1428 = vmatpush1.msra.mxu0 0.0
        %1429 = vmatprep.subr.mxu0 0.0
        %1430 = vmatpush1.msra.mxu0 0.0
        %1431 = vmatprep.subr.mxu0 0.0
        %1432 = vmatpush1.msra.mxu0 0.0
        %1433 = vmatprep.subr.mxu0 0.0
        %1434 = vmatpush1.msra.mxu0 0.0
        %1435 = vmatprep.subr.mxu0 0.0
        %1436 = vmatpush1.msra.mxu0 0.0
        %1437 = vmatprep.subr.mxu0 0.0
        %1438 = vmatpush1.msra.mxu0 0.0
        %1439 = vmatprep.subr.mxu0 0.0
        %1440 = vmatpush1.msra.mxu0 0.0
        %1441 = vmatprep.subr.mxu0 0.0
        %1442 = vmatpush1.msra.mxu0 0.0
        %1443 = vmatprep.subr.mxu0 0.0
        %1444 = vmatpush1.msra.mxu0 0.0
        %1445 = vmatprep.subr.mxu0 0.0
        %1446 = vmatpush1.msra.mxu0 0.0
        %1447 = vmatprep.subr.mxu0 0.0
        %1448 = vmatpush1.msra.mxu0 0.0
        %1449 = vmatprep.subr.mxu0 0.0
        %1450 = vmatpush1.msra.mxu0 0.0
        %1451 = vmatprep.subr.mxu0 0.0
        %1452 = vmatpush1.msra.mxu0 0.0
        %1453 = vmatprep.subr.mxu0 0.0
        %1454 = vmatpush1.msra.mxu0 0.0
        %1455 = vmatprep.subr.mxu0 0.0
        %1456 = vmatpush1.msra.mxu0 0.0
        %1457 = vmatprep.subr.mxu0 0.0
        %1458 = vmatpush1.msra.mxu0 0.0
        %1459 = vmatprep.subr.mxu0 0.0
        %1460 = vmatpush1.msra.mxu0 0.0
        %1461 = vmatprep.subr.mxu0 0.0
        %1462 = vmatpush1.msra.mxu0 0.0
        %1463 = vmatprep.subr.mxu0 0.0
        %1464 = vmatpush1.msra.mxu0 0.0
        %1465 = vmatprep.subr.mxu0 0.0
        %1466 = vmatpush1.msra.mxu0 0.0
        %1467 = vmatprep.subr.mxu0 0.0
        %1468 = vmatpush1.msra.mxu0 0.0
        %1469 = vmatprep.subr.mxu0 0.0
        %1470 = vmatpush1.msra.mxu0 0.0
        %1471 = vmatprep.subr.mxu0 0.0
        %1472 = vmatpush1.msra.mxu0 0.0
        %1473 = vmatprep.mubr.f32.mxu0 0.0
        %1474 = vmatmul.mubr.f32.gmra.mrb[0].mxu0 %v1407
        %v1475 = vpop.f32.mrb[0].mxu0
        %v1476 = vadd.f32 0.0, %v1475
        %v1477 = vpop.f32.mrb[0].mxu0
        %1478 = vdwg.mxu0
        %1479 = vrot.lane.b32.xlu0 %v1476, 8
        %v1480 = vpop.permute.xlu0 %1479
        %vm1481 = vcmp.ge.s32.totalorder %v337, 8
        %v1482 = vsel %vm1481, 1, 0
        %v1483 = vcvt.s32.f32 %v1482
        %v1484 = vmul.f32 %v1480, %v1483
        %v1485 = vadd.f32 %v1403, %v1484
        %s1486 = scalar_lea.vmem %s5, 6
        %v1487 = vld [vmem:[%s1486] sm:$0x3]
        %v1489 = vsel %vm1244, %v1487, 0
        %1491 = vmatprep.subr.mxu0 0.0
        %1492 = vmatpush1.msra.mxu0 %v1195
        %1493 = vmatprep.subr.mxu0 0.0
        %1494 = vmatpush1.msra.mxu0 %v1196
        %1495 = vmatprep.subr.mxu0 0.0
        %1496 = vmatpush1.msra.mxu0 %v1197
        %1497 = vmatprep.subr.mxu0 0.0
        %1498 = vmatpush1.msra.mxu0 %v1198
        %1499 = vmatprep.subr.mxu0 0.0
        %1500 = vmatpush1.msra.mxu0 0.0
        %1501 = vmatprep.subr.mxu0 0.0
        %1502 = vmatpush1.msra.mxu0 0.0
        %1503 = vmatprep.subr.mxu0 0.0
        %1504 = vmatpush1.msra.mxu0 0.0
        %1505 = vmatprep.subr.mxu0 0.0
        %1506 = vmatpush1.msra.mxu0 0.0
        %1507 = vmatprep.subr.mxu0 0.0
        %1508 = vmatpush1.msra.mxu0 0.0
        %1509 = vmatprep.subr.mxu0 0.0
        %1510 = vmatpush1.msra.mxu0 0.0
        %1511 = vmatprep.subr.mxu0 0.0
        %1512 = vmatpush1.msra.mxu0 0.0
        %1513 = vmatprep.subr.mxu0 0.0
        %1514 = vmatpush1.msra.mxu0 0.0
        %1515 = vmatprep.subr.mxu0 0.0
        %1516 = vmatpush1.msra.mxu0 0.0
        %1517 = vmatprep.subr.mxu0 0.0
        %1518 = vmatpush1.msra.mxu0 0.0
        %1519 = vmatprep.subr.mxu0 0.0
        %1520 = vmatpush1.msra.mxu0 0.0
        %1521 = vmatprep.subr.mxu0 0.0
        %1522 = vmatpush1.msra.mxu0 0.0
        %1523 = vmatprep.subr.mxu0 0.0
        %1524 = vmatpush1.msra.mxu0 0.0
        %1525 = vmatprep.subr.mxu0 0.0
        %1526 = vmatpush1.msra.mxu0 0.0
        %1527 = vmatprep.subr.mxu0 0.0
        %1528 = vmatpush1.msra.mxu0 0.0
        %1529 = vmatprep.subr.mxu0 0.0
        %1530 = vmatpush1.msra.mxu0 0.0
        %1531 = vmatprep.subr.mxu0 0.0
        %1532 = vmatpush1.msra.mxu0 0.0
        %1533 = vmatprep.subr.mxu0 0.0
        %1534 = vmatpush1.msra.mxu0 0.0
        %1535 = vmatprep.subr.mxu0 0.0
        %1536 = vmatpush1.msra.mxu0 0.0
        %1537 = vmatprep.subr.mxu0 0.0
        %1538 = vmatpush1.msra.mxu0 0.0
        %1539 = vmatprep.subr.mxu0 0.0
        %1540 = vmatpush1.msra.mxu0 0.0
        %1541 = vmatprep.subr.mxu0 0.0
        %1542 = vmatpush1.msra.mxu0 0.0
        %1543 = vmatprep.subr.mxu0 0.0
        %1544 = vmatpush1.msra.mxu0 0.0
        %1545 = vmatprep.subr.mxu0 0.0
        %1546 = vmatpush1.msra.mxu0 0.0
        %1547 = vmatprep.subr.mxu0 0.0
        %1548 = vmatpush1.msra.mxu0 0.0
        %1549 = vmatprep.subr.mxu0 0.0
        %1550 = vmatpush1.msra.mxu0 0.0
        %1551 = vmatprep.subr.mxu0 0.0
        %1552 = vmatpush1.msra.mxu0 0.0
        %1553 = vmatprep.subr.mxu0 0.0
        %1554 = vmatpush1.msra.mxu0 0.0
        %1555 = vmatprep.mubr.f32.mxu0 0.0
        %1556 = vmatmul.mubr.f32.gmra.mrb[0].mxu0 %v1489
        %v1557 = vpop.f32.mrb[0].mxu0
        %v1558 = vadd.f32 0.0, %v1557
        %v1559 = vpop.f32.mrb[0].mxu0
        %1560 = vdwg.mxu0
        %1561 = vrot.lane.b32.xlu0 %v1558, 7
        %v1562 = vpop.permute.xlu0 %1561
        %vm1563 = vcmp.ge.s32.totalorder %v337, 7
        %v1564 = vsel %vm1563, 1, 0
        %v1565 = vcvt.s32.f32 %v1564
        %v1566 = vmul.f32 %v1562, %v1565
        %v1567 = vadd.f32 %v1485, %v1566
        %s1568 = scalar_lea.vmem %s5, 8
        %v1569 = vld [vmem:[%s1568] sm:$0x3]
        %v1571 = vsel %vm1244, %v1569, 0
        %1573 = vmatprep.subr.mxu0 0.0
        %1574 = vmatpush1.msra.mxu0 %v1195
        %1575 = vmatprep.subr.mxu0 0.0
        %1576 = vmatpush1.msra.mxu0 %v1196
        %1577 = vmatprep.subr.mxu0 0.0
        %1578 = vmatpush1.msra.mxu0 %v1197
        %1579 = vmatprep.subr.mxu0 0.0
        %1580 = vmatpush1.msra.mxu0 %v1198
        %1581 = vmatprep.subr.mxu0 0.0
        %1582 = vmatpush1.msra.mxu0 0.0
        %1583 = vmatprep.subr.mxu0 0.0
        %1584 = vmatpush1.msra.mxu0 0.0
        %1585 = vmatprep.subr.mxu0 0.0
        %1586 = vmatpush1.msra.mxu0 0.0
        %1587 = vmatprep.subr.mxu0 0.0
        %1588 = vmatpush1.msra.mxu0 0.0
        %1589 = vmatprep.subr.mxu0 0.0
        %1590 = vmatpush1.msra.mxu0 0.0
        %1591 = vmatprep.subr.mxu0 0.0
        %1592 = vmatpush1.msra.mxu0 0.0
        %1593 = vmatprep.subr.mxu0 0.0
        %1594 = vmatpush1.msra.mxu0 0.0
        %1595 = vmatprep.subr.mxu0 0.0
        %1596 = vmatpush1.msra.mxu0 0.0
        %1597 = vmatprep.subr.mxu0 0.0
        %1598 = vmatpush1.msra.mxu0 0.0
        %1599 = vmatprep.subr.mxu0 0.0
        %1600 = vmatpush1.msra.mxu0 0.0
        %1601 = vmatprep.subr.mxu0 0.0
        %1602 = vmatpush1.msra.mxu0 0.0
        %1603 = vmatprep.subr.mxu0 0.0
        %1604 = vmatpush1.msra.mxu0 0.0
        %1605 = vmatprep.subr.mxu0 0.0
        %1606 = vmatpush1.msra.mxu0 0.0
        %1607 = vmatprep.subr.mxu0 0.0
        %1608 = vmatpush1.msra.mxu0 0.0
        %1609 = vmatprep.subr.mxu0 0.0
        %1610 = vmatpush1.msra.mxu0 0.0
        %1611 = vmatprep.subr.mxu0 0.0
        %1612 = vmatpush1.msra.mxu0 0.0
        %1613 = vmatprep.subr.mxu0 0.0
        %1614 = vmatpush1.msra.mxu0 0.0
        %1615 = vmatprep.subr.mxu0 0.0
        %1616 = vmatpush1.msra.mxu0 0.0
        %1617 = vmatprep.subr.mxu0 0.0
        %1618 = vmatpush1.msra.mxu0 0.0
        %1619 = vmatprep.subr.mxu0 0.0
        %1620 = vmatpush1.msra.mxu0 0.0
        %1621 = vmatprep.subr.mxu0 0.0
        %1622 = vmatpush1.msra.mxu0 0.0
        %1623 = vmatprep.subr.mxu0 0.0
        %1624 = vmatpush1.msra.mxu0 0.0
        %1625 = vmatprep.subr.mxu0 0.0
        %1626 = vmatpush1.msra.mxu0 0.0
        %1627 = vmatprep.subr.mxu0 0.0
        %1628 = vmatpush1.msra.mxu0 0.0
        %1629 = vmatprep.subr.mxu0 0.0
        %1630 = vmatpush1.msra.mxu0 0.0
        %1631 = vmatprep.subr.mxu0 0.0
        %1632 = vmatpush1.msra.mxu0 0.0
        %1633 = vmatprep.subr.mxu0 0.0
        %1634 = vmatpush1.msra.mxu0 0.0
        %1635 = vmatprep.subr.mxu0 0.0
        %1636 = vmatpush1.msra.mxu0 0.0
        %1637 = vmatprep.mubr.f32.mxu0 0.0
        %1638 = vmatmul.mubr.f32.gmra.mrb[0].mxu0 %v1571
        %v1639 = vpop.f32.mrb[0].mxu0
        %v1640 = vadd.f32 0.0, %v1639
        %v1641 = vpop.f32.mrb[0].mxu0
        %1642 = vdwg.mxu0
        %1643 = vrot.lane.b32.xlu0 %v1640, 6
        %v1644 = vpop.permute.xlu0 %1643
        %v1645 = vmul.f32 %v1644, %v795
        %v1646 = vadd.f32 %v1567, %v1645
        %s1647 = scalar_lea.vmem %s5, 10
        %v1648 = vld [vmem:[%s1647] sm:$0x3]
        %v1650 = vsel %vm1244, %v1648, 0
        %1652 = vmatprep.subr.mxu0 0.0
        %1653 = vmatpush1.msra.mxu0 %v1195
        %1654 = vmatprep.subr.mxu0 0.0
        %1655 = vmatpush1.msra.mxu0 %v1196
        %1656 = vmatprep.subr.mxu0 0.0
        %1657 = vmatpush1.msra.mxu0 %v1197
        %1658 = vmatprep.subr.mxu0 0.0
        %1659 = vmatpush1.msra.mxu0 %v1198
        %1660 = vmatprep.subr.mxu0 0.0
        %1661 = vmatpush1.msra.mxu0 0.0
        %1662 = vmatprep.subr.mxu0 0.0
        %1663 = vmatpush1.msra.mxu0 0.0
        %1664 = vmatprep.subr.mxu0 0.0
        %1665 = vmatpush1.msra.mxu0 0.0
        %1666 = vmatprep.subr.mxu0 0.0
        %1667 = vmatpush1.msra.mxu0 0.0
        %1668 = vmatprep.subr.mxu0 0.0
        %1669 = vmatpush1.msra.mxu0 0.0
        %1670 = vmatprep.subr.mxu0 0.0
        %1671 = vmatpush1.msra.mxu0 0.0
        %1672 = vmatprep.subr.mxu0 0.0
        %1673 = vmatpush1.msra.mxu0 0.0
        %1674 = vmatprep.subr.mxu0 0.0
        %1675 = vmatpush1.msra.mxu0 0.0
        %1676 = vmatprep.subr.mxu0 0.0
        %1677 = vmatpush1.msra.mxu0 0.0
        %1678 = vmatprep.subr.mxu0 0.0
        %1679 = vmatpush1.msra.mxu0 0.0
        %1680 = vmatprep.subr.mxu0 0.0
        %1681 = vmatpush1.msra.mxu0 0.0
        %1682 = vmatprep.subr.mxu0 0.0
        %1683 = vmatpush1.msra.mxu0 0.0
        %1684 = vmatprep.subr.mxu0 0.0
        %1685 = vmatpush1.msra.mxu0 0.0
        %1686 = vmatprep.subr.mxu0 0.0
        %1687 = vmatpush1.msra.mxu0 0.0
        %1688 = vmatprep.subr.mxu0 0.0
        %1689 = vmatpush1.msra.mxu0 0.0
        %1690 = vmatprep.subr.mxu0 0.0
        %1691 = vmatpush1.msra.mxu0 0.0
        %1692 = vmatprep.subr.mxu0 0.0
        %1693 = vmatpush1.msra.mxu0 0.0
        %1694 = vmatprep.subr.mxu0 0.0
        %1695 = vmatpush1.msra.mxu0 0.0
        %1696 = vmatprep.subr.mxu0 0.0
        %1697 = vmatpush1.msra.mxu0 0.0
        %1698 = vmatprep.subr.mxu0 0.0
        %1699 = vmatpush1.msra.mxu0 0.0
        %1700 = vmatprep.subr.mxu0 0.0
        %1701 = vmatpush1.msra.mxu0 0.0
        %1702 = vmatprep.subr.mxu0 0.0
        %1703 = vmatpush1.msra.mxu0 0.0
        %1704 = vmatprep.subr.mxu0 0.0
        %1705 = vmatpush1.msra.mxu0 0.0
        %1706 = vmatprep.subr.mxu0 0.0
        %1707 = vmatpush1.msra.mxu0 0.0
        %1708 = vmatprep.subr.mxu0 0.0
        %1709 = vmatpush1.msra.mxu0 0.0
        %1710 = vmatprep.subr.mxu0 0.0
        %1711 = vmatpush1.msra.mxu0 0.0
        %1712 = vmatprep.subr.mxu0 0.0
        %1713 = vmatpush1.msra.mxu0 0.0
        %1714 = vmatprep.subr.mxu0 0.0
        %1715 = vmatpush1.msra.mxu0 0.0
        %1716 = vmatprep.mubr.f32.mxu0 0.0
        %1717 = vmatmul.mubr.f32.gmra.mrb[0].mxu0 %v1650
        %v1718 = vpop.f32.mrb[0].mxu0
        %v1719 = vadd.f32 0.0, %v1718
        %v1720 = vpop.f32.mrb[0].mxu0
        %1721 = vdwg.mxu0
        %1722 = vrot.lane.b32.xlu0 %v1719, 5
        %v1723 = vpop.permute.xlu0 %1722
        %v1724 = vmul.f32 %v1723, %v357
        %v1725 = vadd.f32 %v1646, %v1724
        %s1726 = scalar_lea.vmem %s5, 12
        %v1727 = vld [vmem:[%s1726] sm:$0x3]
        %v1729 = vsel %vm1244, %v1727, 0
        %1731 = vmatprep.subr.mxu0 0.0
        %1732 = vmatpush1.msra.mxu0 %v1195
        %1733 = vmatprep.subr.mxu0 0.0
        %1734 = vmatpush1.msra.mxu0 %v1196
        %1735 = vmatprep.subr.mxu0 0.0
        %1736 = vmatpush1.msra.mxu0 %v1197
        %1737 = vmatprep.subr.mxu0 0.0
        %1738 = vmatpush1.msra.mxu0 %v1198
        %1739 = vmatprep.subr.mxu0 0.0
        %1740 = vmatpush1.msra.mxu0 0.0
        %1741 = vmatprep.subr.mxu0 0.0
        %1742 = vmatpush1.msra.mxu0 0.0
        %1743 = vmatprep.subr.mxu0 0.0
        %1744 = vmatpush1.msra.mxu0 0.0
        %1745 = vmatprep.subr.mxu0 0.0
        %1746 = vmatpush1.msra.mxu0 0.0
        %1747 = vmatprep.subr.mxu0 0.0
        %1748 = vmatpush1.msra.mxu0 0.0
        %1749 = vmatprep.subr.mxu0 0.0
        %1750 = vmatpush1.msra.mxu0 0.0
        %1751 = vmatprep.subr.mxu0 0.0
        %1752 = vmatpush1.msra.mxu0 0.0
        %1753 = vmatprep.subr.mxu0 0.0
        %1754 = vmatpush1.msra.mxu0 0.0
        %1755 = vmatprep.subr.mxu0 0.0
        %1756 = vmatpush1.msra.mxu0 0.0
        %1757 = vmatprep.subr.mxu0 0.0
        %1758 = vmatpush1.msra.mxu0 0.0
        %1759 = vmatprep.subr.mxu0 0.0
        %1760 = vmatpush1.msra.mxu0 0.0
        %1761 = vmatprep.subr.mxu0 0.0
        %1762 = vmatpush1.msra.mxu0 0.0
        %1763 = vmatprep.subr.mxu0 0.0
        %1764 = vmatpush1.msra.mxu0 0.0
        %1765 = vmatprep.subr.mxu0 0.0
        %1766 = vmatpush1.msra.mxu0 0.0
        %1767 = vmatprep.subr.mxu0 0.0
        %1768 = vmatpush1.msra.mxu0 0.0
        %1769 = vmatprep.subr.mxu0 0.0
        %1770 = vmatpush1.msra.mxu0 0.0
        %1771 = vmatprep.subr.mxu0 0.0
        %1772 = vmatpush1.msra.mxu0 0.0
        %1773 = vmatprep.subr.mxu0 0.0
        %1774 = vmatpush1.msra.mxu0 0.0
        %1775 = vmatprep.subr.mxu0 0.0
        %1776 = vmatpush1.msra.mxu0 0.0
        %1777 = vmatprep.subr.mxu0 0.0
        %1778 = vmatpush1.msra.mxu0 0.0
        %1779 = vmatprep.subr.mxu0 0.0
        %1780 = vmatpush1.msra.mxu0 0.0
        %1781 = vmatprep.subr.mxu0 0.0
        %1782 = vmatpush1.msra.mxu0 0.0
        %1783 = vmatprep.subr.mxu0 0.0
        %1784 = vmatpush1.msra.mxu0 0.0
        %1785 = vmatprep.subr.mxu0 0.0
        %1786 = vmatpush1.msra.mxu0 0.0
        %1787 = vmatprep.subr.mxu0 0.0
        %1788 = vmatpush1.msra.mxu0 0.0
        %1789 = vmatprep.subr.mxu0 0.0
        %1790 = vmatpush1.msra.mxu0 0.0
        %1791 = vmatprep.subr.mxu0 0.0
        %1792 = vmatpush1.msra.mxu0 0.0
        %1793 = vmatprep.subr.mxu0 0.0
        %1794 = vmatpush1.msra.mxu0 0.0
        %1795 = vmatprep.mubr.f32.mxu0 0.0
        %1796 = vmatmul.mubr.f32.gmra.mrb[0].mxu0 %v1729
        %v1797 = vpop.f32.mrb[0].mxu0
        %v1798 = vadd.f32 0.0, %v1797
        %v1799 = vpop.f32.mrb[0].mxu0
        %1800 = vdwg.mxu0
        %1801 = vrot.lane.b32.xlu0 %v1798, 4
        %v1802 = vpop.permute.xlu0 %1801
        %v1803 = vmul.f32 %v1802, %v363
        %v1804 = vadd.f32 %v1725, %v1803
        %s1805 = scalar_lea.vmem %s5, 14
        %v1806 = vld [vmem:[%s1805] sm:$0x3]
        %v1808 = vsel %vm1244, %v1806, 0
        %1810 = vmatprep.subr.mxu0 0.0
        %1811 = vmatpush1.msra.mxu0 %v1195
        %1812 = vmatprep.subr.mxu0 0.0
        %1813 = vmatpush1.msra.mxu0 %v1196
        %1814 = vmatprep.subr.mxu0 0.0
        %1815 = vmatpush1.msra.mxu0 %v1197
        %1816 = vmatprep.subr.mxu0 0.0
        %1817 = vmatpush1.msra.mxu0 %v1198
        %1818 = vmatprep.subr.mxu0 0.0
        %1819 = vmatpush1.msra.mxu0 0.0
        %1820 = vmatprep.subr.mxu0 0.0
        %1821 = vmatpush1.msra.mxu0 0.0
        %1822 = vmatprep.subr.mxu0 0.0
        %1823 = vmatpush1.msra.mxu0 0.0
        %1824 = vmatprep.subr.mxu0 0.0
        %1825 = vmatpush1.msra.mxu0 0.0
        %1826 = vmatprep.subr.mxu0 0.0
        %1827 = vmatpush1.msra.mxu0 0.0
        %1828 = vmatprep.subr.mxu0 0.0
        %1829 = vmatpush1.msra.mxu0 0.0
        %1830 = vmatprep.subr.mxu0 0.0
        %1831 = vmatpush1.msra.mxu0 0.0
        %1832 = vmatprep.subr.mxu0 0.0
        %1833 = vmatpush1.msra.mxu0 0.0
        %1834 = vmatprep.subr.mxu0 0.0
        %1835 = vmatpush1.msra.mxu0 0.0
        %1836 = vmatprep.subr.mxu0 0.0
        %1837 = vmatpush1.msra.mxu0 0.0
        %1838 = vmatprep.subr.mxu0 0.0
        %1839 = vmatpush1.msra.mxu0 0.0
        %1840 = vmatprep.subr.mxu0 0.0
        %1841 = vmatpush1.msra.mxu0 0.0
        %1842 = vmatprep.subr.mxu0 0.0
        %1843 = vmatpush1.msra.mxu0 0.0
        %1844 = vmatprep.subr.mxu0 0.0
        %1845 = vmatpush1.msra.mxu0 0.0
        %1846 = vmatprep.subr.mxu0 0.0
        %1847 = vmatpush1.msra.mxu0 0.0
        %1848 = vmatprep.subr.mxu0 0.0
        %1849 = vmatpush1.msra.mxu0 0.0
        %1850 = vmatprep.subr.mxu0 0.0
        %1851 = vmatpush1.msra.mxu0 0.0
        %1852 = vmatprep.subr.mxu0 0.0
        %1853 = vmatpush1.msra.mxu0 0.0
        %1854 = vmatprep.subr.mxu0 0.0
        %1855 = vmatpush1.msra.mxu0 0.0
        %1856 = vmatprep.subr.mxu0 0.0
        %1857 = vmatpush1.msra.mxu0 0.0
        %1858 = vmatprep.subr.mxu0 0.0
        %1859 = vmatpush1.msra.mxu0 0.0
        %1860 = vmatprep.subr.mxu0 0.0
        %1861 = vmatpush1.msra.mxu0 0.0
        %1862 = vmatprep.subr.mxu0 0.0
        %1863 = vmatpush1.msra.mxu0 0.0
        %1864 = vmatprep.subr.mxu0 0.0
        %1865 = vmatpush1.msra.mxu0 0.0
        %1866 = vmatprep.subr.mxu0 0.0
        %1867 = vmatpush1.msra.mxu0 0.0
        %1868 = vmatprep.subr.mxu0 0.0
        %1869 = vmatpush1.msra.mxu0 0.0
        %1870 = vmatprep.subr.mxu0 0.0
        %1871 = vmatpush1.msra.mxu0 0.0
        %1872 = vmatprep.subr.mxu0 0.0
        %1873 = vmatpush1.msra.mxu0 0.0
        %1874 = vmatprep.mubr.f32.mxu0 0.0
        %1875 = vmatmul.mubr.f32.gmra.mrb[0].mxu0 %v1808
        %v1876 = vpop.f32.mrb[0].mxu0
        %v1877 = vadd.f32 0.0, %v1876
        %v1878 = vpop.f32.mrb[0].mxu0
        %1879 = vdwg.mxu0
        %1880 = vrot.lane.b32.xlu0 %v1877, 3
        %v1881 = vpop.permute.xlu0 %1880
        %v1882 = vmul.f32 %v1881, %v369
        %v1883 = vadd.f32 %v1804, %v1882
        %s1884 = scalar_lea.vmem %s5, 16
        %v1885 = vld [vmem:[%s1884] sm:$0x3]
        %v1887 = vsel %vm1244, %v1885, 0
        %1889 = vmatprep.subr.mxu0 0.0
        %1890 = vmatpush1.msra.mxu0 %v1195
        %1891 = vmatprep.subr.mxu0 0.0
        %1892 = vmatpush1.msra.mxu0 %v1196
        %1893 = vmatprep.subr.mxu0 0.0
        %1894 = vmatpush1.msra.mxu0 %v1197
        %1895 = vmatprep.subr.mxu0 0.0
        %1896 = vmatpush1.msra.mxu0 %v1198
        %1897 = vmatprep.subr.mxu0 0.0
        %1898 = vmatpush1.msra.mxu0 0.0
        %1899 = vmatprep.subr.mxu0 0.0
        %1900 = vmatpush1.msra.mxu0 0.0
        %1901 = vmatprep.subr.mxu0 0.0
        %1902 = vmatpush1.msra.mxu0 0.0
        %1903 = vmatprep.subr.mxu0 0.0
        %1904 = vmatpush1.msra.mxu0 0.0
        %1905 = vmatprep.subr.mxu0 0.0
        %1906 = vmatpush1.msra.mxu0 0.0
        %1907 = vmatprep.subr.mxu0 0.0
        %1908 = vmatpush1.msra.mxu0 0.0
        %1909 = vmatprep.subr.mxu0 0.0
        %1910 = vmatpush1.msra.mxu0 0.0
        %1911 = vmatprep.subr.mxu0 0.0
        %1912 = vmatpush1.msra.mxu0 0.0
        %1913 = vmatprep.subr.mxu0 0.0
        %1914 = vmatpush1.msra.mxu0 0.0
        %1915 = vmatprep.subr.mxu0 0.0
        %1916 = vmatpush1.msra.mxu0 0.0
        %1917 = vmatprep.subr.mxu0 0.0
        %1918 = vmatpush1.msra.mxu0 0.0
        %1919 = vmatprep.subr.mxu0 0.0
        %1920 = vmatpush1.msra.mxu0 0.0
        %1921 = vmatprep.subr.mxu0 0.0
        %1922 = vmatpush1.msra.mxu0 0.0
        %1923 = vmatprep.subr.mxu0 0.0
        %1924 = vmatpush1.msra.mxu0 0.0
        %1925 = vmatprep.subr.mxu0 0.0
        %1926 = vmatpush1.msra.mxu0 0.0
        %1927 = vmatprep.subr.mxu0 0.0
        %1928 = vmatpush1.msra.mxu0 0.0
        %1929 = vmatprep.subr.mxu0 0.0
        %1930 = vmatpush1.msra.mxu0 0.0
        %1931 = vmatprep.subr.mxu0 0.0
        %1932 = vmatpush1.msra.mxu0 0.0
        %1933 = vmatprep.subr.mxu0 0.0
        %1934 = vmatpush1.msra.mxu0 0.0
        %1935 = vmatprep.subr.mxu0 0.0
        %1936 = vmatpush1.msra.mxu0 0.0
        %1937 = vmatprep.subr.mxu0 0.0
        %1938 = vmatpush1.msra.mxu0 0.0
        %1939 = vmatprep.subr.mxu0 0.0
        %1940 = vmatpush1.msra.mxu0 0.0
        %1941 = vmatprep.subr.mxu0 0.0
        %1942 = vmatpush1.msra.mxu0 0.0
        %1943 = vmatprep.subr.mxu0 0.0
        %1944 = vmatpush1.msra.mxu0 0.0
        %1945 = vmatprep.subr.mxu0 0.0
        %1946 = vmatpush1.msra.mxu0 0.0
        %1947 = vmatprep.subr.mxu0 0.0
        %1948 = vmatpush1.msra.mxu0 0.0
        %1949 = vmatprep.subr.mxu0 0.0
        %1950 = vmatpush1.msra.mxu0 0.0
        %1951 = vmatprep.subr.mxu0 0.0
        %1952 = vmatpush1.msra.mxu0 0.0
        %1953 = vmatprep.mubr.f32.mxu0 0.0
        %1954 = vmatmul.mubr.f32.gmra.mrb[0].mxu0 %v1887
        %v1955 = vpop.f32.mrb[0].mxu0
        %v1956 = vadd.f32 0.0, %v1955
        %v1957 = vpop.f32.mrb[0].mxu0
        %1958 = vdwg.mxu0
        %1959 = vrot.lane.b32.xlu0 %v1956, 2
        %v1960 = vpop.permute.xlu0 %1959
        %v1961 = vmul.f32 %v1960, %v375
        %v1962 = vadd.f32 %v1883, %v1961
        %s1963 = scalar_lea.vmem %s5, 18
        %v1964 = vld [vmem:[%s1963] sm:$0x3]
        %v1966 = vsel %vm1244, %v1964, 0
        %1968 = vmatprep.subr.mxu0 0.0
        %1969 = vmatpush1.msra.mxu0 %v1195
        %1970 = vmatprep.subr.mxu0 0.0
        %1971 = vmatpush1.msra.mxu0 %v1196
        %1972 = vmatprep.subr.mxu0 0.0
        %1973 = vmatpush1.msra.mxu0 %v1197
        %1974 = vmatprep.subr.mxu0 0.0
        %1975 = vmatpush1.msra.mxu0 %v1198
        %1976 = vmatprep.subr.mxu0 0.0
        %1977 = vmatpush1.msra.mxu0 0.0
        %1978 = vmatprep.subr.mxu0 0.0
        %1979 = vmatpush1.msra.mxu0 0.0
        %1980 = vmatprep.subr.mxu0 0.0
        %1981 = vmatpush1.msra.mxu0 0.0
        %1982 = vmatprep.subr.mxu0 0.0
        %1983 = vmatpush1.msra.mxu0 0.0
        %1984 = vmatprep.subr.mxu0 0.0
        %1985 = vmatpush1.msra.mxu0 0.0
        %1986 = vmatprep.subr.mxu0 0.0
        %1987 = vmatpush1.msra.mxu0 0.0
        %1988 = vmatprep.subr.mxu0 0.0
        %1989 = vmatpush1.msra.mxu0 0.0
        %1990 = vmatprep.subr.mxu0 0.0
        %1991 = vmatpush1.msra.mxu0 0.0
        %1992 = vmatprep.subr.mxu0 0.0
        %1993 = vmatpush1.msra.mxu0 0.0
        %1994 = vmatprep.subr.mxu0 0.0
        %1995 = vmatpush1.msra.mxu0 0.0
        %1996 = vmatprep.subr.mxu0 0.0
        %1997 = vmatpush1.msra.mxu0 0.0
        %1998 = vmatprep.subr.mxu0 0.0
        %1999 = vmatpush1.msra.mxu0 0.0
        %2000 = vmatprep.subr.mxu0 0.0
        %2001 = vmatpush1.msra.mxu0 0.0
        %2002 = vmatprep.subr.mxu0 0.0
        %2003 = vmatpush1.msra.mxu0 0.0
        %2004 = vmatprep.subr.mxu0 0.0
        %2005 = vmatpush1.msra.mxu0 0.0
        %2006 = vmatprep.subr.mxu0 0.0
        %2007 = vmatpush1.msra.mxu0 0.0
        %2008 = vmatprep.subr.mxu0 0.0
        %2009 = vmatpush1.msra.mxu0 0.0
        %2010 = vmatprep.subr.mxu0 0.0
        %2011 = vmatpush1.msra.mxu0 0.0
        %2012 = vmatprep.subr.mxu0 0.0
        %2013 = vmatpush1.msra.mxu0 0.0
        %2014 = vmatprep.subr.mxu0 0.0
        %2015 = vmatpush1.msra.mxu0 0.0
        %2016 = vmatprep.subr.mxu0 0.0
        %2017 = vmatpush1.msra.mxu0 0.0
        %2018 = vmatprep.subr.mxu0 0.0
        %2019 = vmatpush1.msra.mxu0 0.0
        %2020 = vmatprep.subr.mxu0 0.0
        %2021 = vmatpush1.msra.mxu0 0.0
        %2022 = vmatprep.subr.mxu0 0.0
        %2023 = vmatpush1.msra.mxu0 0.0
        %2024 = vmatprep.subr.mxu0 0.0
        %2025 = vmatpush1.msra.mxu0 0.0
        %2026 = vmatprep.subr.mxu0 0.0
        %2027 = vmatpush1.msra.mxu0 0.0
        %2028 = vmatprep.subr.mxu0 0.0
        %2029 = vmatpush1.msra.mxu0 0.0
        %2030 = vmatprep.subr.mxu0 0.0
        %2031 = vmatpush1.msra.mxu0 0.0
        %2032 = vmatprep.mubr.f32.mxu0 0.0
        %2033 = vmatmul.mubr.f32.gmra.mrb[0].mxu0 %v1966
        %v2034 = vpop.f32.mrb[0].mxu0
        %v2035 = vadd.f32 0.0, %v2034
        %v2036 = vpop.f32.mrb[0].mxu0
        %2037 = vdwg.mxu0
        %2038 = vrot.lane.b32.xlu0 %v2035, 1
        %v2039 = vpop.permute.xlu0 %2038
        %v2040 = vmul.f32 %v2039, %v381
        %v2041 = vadd.f32 %v1962, %v2040
        %s2042 = scalar_lea.vmem %s5, 20
        %v2043 = vld [vmem:[%s2042] sm:$0x3]
        %v2045 = vsel %vm1244, %v2043, 0
        %2047 = vmatprep.subr.mxu0 0.0
        %2048 = vmatpush1.msra.mxu0 %v1195
        %2049 = vmatprep.subr.mxu0 0.0
        %2050 = vmatpush1.msra.mxu0 %v1196
        %2051 = vmatprep.subr.mxu0 0.0
        %2052 = vmatpush1.msra.mxu0 %v1197
        %2053 = vmatprep.subr.mxu0 0.0
        %2054 = vmatpush1.msra.mxu0 %v1198
        %2055 = vmatprep.subr.mxu0 0.0
        %2056 = vmatpush1.msra.mxu0 0.0
        %2057 = vmatprep.subr.mxu0 0.0
        %2058 = vmatpush1.msra.mxu0 0.0
        %2059 = vmatprep.subr.mxu0 0.0
        %2060 = vmatpush1.msra.mxu0 0.0
        %2061 = vmatprep.subr.mxu0 0.0
        %2062 = vmatpush1.msra.mxu0 0.0
        %2063 = vmatprep.subr.mxu0 0.0
        %2064 = vmatpush1.msra.mxu0 0.0
        %2065 = vmatprep.subr.mxu0 0.0
        %2066 = vmatpush1.msra.mxu0 0.0
        %2067 = vmatprep.subr.mxu0 0.0
        %2068 = vmatpush1.msra.mxu0 0.0
        %2069 = vmatprep.subr.mxu0 0.0
        %2070 = vmatpush1.msra.mxu0 0.0
        %2071 = vmatprep.subr.mxu0 0.0
        %2072 = vmatpush1.msra.mxu0 0.0
        %2073 = vmatprep.subr.mxu0 0.0
        %2074 = vmatpush1.msra.mxu0 0.0
        %2075 = vmatprep.subr.mxu0 0.0
        %2076 = vmatpush1.msra.mxu0 0.0
        %2077 = vmatprep.subr.mxu0 0.0
        %2078 = vmatpush1.msra.mxu0 0.0
        %2079 = vmatprep.subr.mxu0 0.0
        %2080 = vmatpush1.msra.mxu0 0.0
        %2081 = vmatprep.subr.mxu0 0.0
        %2082 = vmatpush1.msra.mxu0 0.0
        %2083 = vmatprep.subr.mxu0 0.0
        %2084 = vmatpush1.msra.mxu0 0.0
        %2085 = vmatprep.subr.mxu0 0.0
        %2086 = vmatpush1.msra.mxu0 0.0
        %2087 = vmatprep.subr.mxu0 0.0
        %2088 = vmatpush1.msra.mxu0 0.0
        %2089 = vmatprep.subr.mxu0 0.0
        %2090 = vmatpush1.msra.mxu0 0.0
        %2091 = vmatprep.subr.mxu0 0.0
        %2092 = vmatpush1.msra.mxu0 0.0
        %2093 = vmatprep.subr.mxu0 0.0
        %2094 = vmatpush1.msra.mxu0 0.0
        %2095 = vmatprep.subr.mxu0 0.0
        %2096 = vmatpush1.msra.mxu0 0.0
        %2097 = vmatprep.subr.mxu0 0.0
        %2098 = vmatpush1.msra.mxu0 0.0
        %2099 = vmatprep.subr.mxu0 0.0
        %2100 = vmatpush1.msra.mxu0 0.0
        %2101 = vmatprep.subr.mxu0 0.0
        %2102 = vmatpush1.msra.mxu0 0.0
        %2103 = vmatprep.subr.mxu0 0.0
        %2104 = vmatpush1.msra.mxu0 0.0
        %2105 = vmatprep.subr.mxu0 0.0
        %2106 = vmatpush1.msra.mxu0 0.0
        %2107 = vmatprep.subr.mxu0 0.0
        %2108 = vmatpush1.msra.mxu0 0.0
        %2109 = vmatprep.subr.mxu0 0.0
        %2110 = vmatpush1.msra.mxu0 0.0
        %2111 = vmatprep.mubr.f32.mxu0 0.0
        %2112 = vmatmul.mubr.f32.gmra.mrb[0].mxu0 %v2045
        %v2113 = vpop.f32.mrb[0].mxu0
        %v2114 = vadd.f32 0.0, %v2113
        %v2115 = vpop.f32.mrb[0].mxu0
        %2116 = vdwg.mxu0
        %v2117 = vadd.f32 %v2041, %v2114
        %s2118 = scalar_lea.vmem %s5, 22
        %v2119 = vld [vmem:[%s2118] sm:$0x3]
        %v2121 = vsel %vm1244, %v2119, 0
        %2123 = vmatprep.subr.mxu0 0.0
        %2124 = vmatpush1.msra.mxu0 %v1195
        %2125 = vmatprep.subr.mxu0 0.0
        %2126 = vmatpush1.msra.mxu0 %v1196
        %2127 = vmatprep.subr.mxu0 0.0
        %2128 = vmatpush1.msra.mxu0 %v1197
        %2129 = vmatprep.subr.mxu0 0.0
        %2130 = vmatpush1.msra.mxu0 %v1198
        %2131 = vmatprep.subr.mxu0 0.0
        %2132 = vmatpush1.msra.mxu0 0.0
        %2133 = vmatprep.subr.mxu0 0.0
        %2134 = vmatpush1.msra.mxu0 0.0
        %2135 = vmatprep.subr.mxu0 0.0
        %2136 = vmatpush1.msra.mxu0 0.0
        %2137 = vmatprep.subr.mxu0 0.0
        %2138 = vmatpush1.msra.mxu0 0.0
        %2139 = vmatprep.subr.mxu0 0.0
        %2140 = vmatpush1.msra.mxu0 0.0
        %2141 = vmatprep.subr.mxu0 0.0
        %2142 = vmatpush1.msra.mxu0 0.0
        %2143 = vmatprep.subr.mxu0 0.0
        %2144 = vmatpush1.msra.mxu0 0.0
        %2145 = vmatprep.subr.mxu0 0.0
        %2146 = vmatpush1.msra.mxu0 0.0
        %2147 = vmatprep.subr.mxu0 0.0
        %2148 = vmatpush1.msra.mxu0 0.0
        %2149 = vmatprep.subr.mxu0 0.0
        %2150 = vmatpush1.msra.mxu0 0.0
        %2151 = vmatprep.subr.mxu0 0.0
        %2152 = vmatpush1.msra.mxu0 0.0
        %2153 = vmatprep.subr.mxu0 0.0
        %2154 = vmatpush1.msra.mxu0 0.0
        %2155 = vmatprep.subr.mxu0 0.0
        %2156 = vmatpush1.msra.mxu0 0.0
        %2157 = vmatprep.subr.mxu0 0.0
        %2158 = vmatpush1.msra.mxu0 0.0
        %2159 = vmatprep.subr.mxu0 0.0
        %2160 = vmatpush1.msra.mxu0 0.0
        %2161 = vmatprep.subr.mxu0 0.0
        %2162 = vmatpush1.msra.mxu0 0.0
        %2163 = vmatprep.subr.mxu0 0.0
        %2164 = vmatpush1.msra.mxu0 0.0
        %2165 = vmatprep.subr.mxu0 0.0
        %2166 = vmatpush1.msra.mxu0 0.0
        %2167 = vmatprep.subr.mxu0 0.0
        %2168 = vmatpush1.msra.mxu0 0.0
        %2169 = vmatprep.subr.mxu0 0.0
        %2170 = vmatpush1.msra.mxu0 0.0
        %2171 = vmatprep.subr.mxu0 0.0
        %2172 = vmatpush1.msra.mxu0 0.0
        %2173 = vmatprep.subr.mxu0 0.0
        %2174 = vmatpush1.msra.mxu0 0.0
        %2175 = vmatprep.subr.mxu0 0.0
        %2176 = vmatpush1.msra.mxu0 0.0
        %2177 = vmatprep.subr.mxu0 0.0
        %2178 = vmatpush1.msra.mxu0 0.0
        %2179 = vmatprep.subr.mxu0 0.0
        %2180 = vmatpush1.msra.mxu0 0.0
        %2181 = vmatprep.subr.mxu0 0.0
        %2182 = vmatpush1.msra.mxu0 0.0
        %2183 = vmatprep.subr.mxu0 0.0
        %2184 = vmatpush1.msra.mxu0 0.0
        %2185 = vmatprep.subr.mxu0 0.0
        %2186 = vmatpush1.msra.mxu0 0.0
        %2187 = vmatprep.mubr.f32.mxu0 0.0
        %2188 = vmatmul.mubr.f32.gmra.mrb[0].mxu0 %v2121
        %v2189 = vpop.f32.mrb[0].mxu0
        %v2190 = vadd.f32 0.0, %v2189
        %v2191 = vpop.f32.mrb[0].mxu0
        %2192 = vdwg.mxu0
        %2193 = vrot.lane.b32.xlu0 %v2190, 127
        %v2194 = vpop.permute.xlu0 %2193
        %v2195 = vmul.f32 %v2194, %v387
        %v2196 = vadd.f32 %v2117, %v2195
        %s2197 = scalar_lea.vmem %s5, 24
        %v2198 = vld [vmem:[%s2197] sm:$0x3]
        %v2200 = vsel %vm1244, %v2198, 0
        %2202 = vmatprep.subr.mxu0 0.0
        %2203 = vmatpush1.msra.mxu0 %v1195
        %2204 = vmatprep.subr.mxu0 0.0
        %2205 = vmatpush1.msra.mxu0 %v1196
        %2206 = vmatprep.subr.mxu0 0.0
        %2207 = vmatpush1.msra.mxu0 %v1197
        %2208 = vmatprep.subr.mxu0 0.0
        %2209 = vmatpush1.msra.mxu0 %v1198
        %2210 = vmatprep.subr.mxu0 0.0
        %2211 = vmatpush1.msra.mxu0 0.0
        %2212 = vmatprep.subr.mxu0 0.0
        %2213 = vmatpush1.msra.mxu0 0.0
        %2214 = vmatprep.subr.mxu0 0.0
        %2215 = vmatpush1.msra.mxu0 0.0
        %2216 = vmatprep.subr.mxu0 0.0
        %2217 = vmatpush1.msra.mxu0 0.0
        %2218 = vmatprep.subr.mxu0 0.0
        %2219 = vmatpush1.msra.mxu0 0.0
        %2220 = vmatprep.subr.mxu0 0.0
        %2221 = vmatpush1.msra.mxu0 0.0
        %2222 = vmatprep.subr.mxu0 0.0
        %2223 = vmatpush1.msra.mxu0 0.0
        %2224 = vmatprep.subr.mxu0 0.0
        %2225 = vmatpush1.msra.mxu0 0.0
        %2226 = vmatprep.subr.mxu0 0.0
        %2227 = vmatpush1.msra.mxu0 0.0
        %2228 = vmatprep.subr.mxu0 0.0
        %2229 = vmatpush1.msra.mxu0 0.0
        %2230 = vmatprep.subr.mxu0 0.0
        %2231 = vmatpush1.msra.mxu0 0.0
        %2232 = vmatprep.subr.mxu0 0.0
        %2233 = vmatpush1.msra.mxu0 0.0
        %2234 = vmatprep.subr.mxu0 0.0
        %2235 = vmatpush1.msra.mxu0 0.0
        %2236 = vmatprep.subr.mxu0 0.0
        %2237 = vmatpush1.msra.mxu0 0.0
        %2238 = vmatprep.subr.mxu0 0.0
        %2239 = vmatpush1.msra.mxu0 0.0
        %2240 = vmatprep.subr.mxu0 0.0
        %2241 = vmatpush1.msra.mxu0 0.0
        %2242 = vmatprep.subr.mxu0 0.0
        %2243 = vmatpush1.msra.mxu0 0.0
        %2244 = vmatprep.subr.mxu0 0.0
        %2245 = vmatpush1.msra.mxu0 0.0
        %2246 = vmatprep.subr.mxu0 0.0
        %2247 = vmatpush1.msra.mxu0 0.0
        %2248 = vmatprep.subr.mxu0 0.0
        %2249 = vmatpush1.msra.mxu0 0.0
        %2250 = vmatprep.subr.mxu0 0.0
        %2251 = vmatpush1.msra.mxu0 0.0
        %2252 = vmatprep.subr.mxu0 0.0
        %2253 = vmatpush1.msra.mxu0 0.0
        %2254 = vmatprep.subr.mxu0 0.0
        %2255 = vmatpush1.msra.mxu0 0.0
        %2256 = vmatprep.subr.mxu0 0.0
        %2257 = vmatpush1.msra.mxu0 0.0
        %2258 = vmatprep.subr.mxu0 0.0
        %2259 = vmatpush1.msra.mxu0 0.0
        %2260 = vmatprep.subr.mxu0 0.0
        %2261 = vmatpush1.msra.mxu0 0.0
        %2262 = vmatprep.subr.mxu0 0.0
        %2263 = vmatpush1.msra.mxu0 0.0
        %2264 = vmatprep.subr.mxu0 0.0
        %2265 = vmatpush1.msra.mxu0 0.0
        %2266 = vmatprep.mubr.f32.mxu0 0.0
        %2267 = vmatmul.mubr.f32.gmra.mrb[0].mxu0 %v2200
        %v2268 = vpop.f32.mrb[0].mxu0
        %v2269 = vadd.f32 0.0, %v2268
        %v2270 = vpop.f32.mrb[0].mxu0
        %2271 = vdwg.mxu0
        %2272 = vrot.lane.b32.xlu0 %v2269, 126
        %v2273 = vpop.permute.xlu0 %2272
        %v2274 = vmul.f32 %v2273, %v393
        %v2275 = vadd.f32 %v2196, %v2274
        %s2276 = scalar_lea.vmem %s5, 26
        %v2277 = vld [vmem:[%s2276] sm:$0x3]
        %v2279 = vsel %vm1244, %v2277, 0
        %2281 = vmatprep.subr.mxu0 0.0
        %2282 = vmatpush1.msra.mxu0 %v1195
        %2283 = vmatprep.subr.mxu0 0.0
        %2284 = vmatpush1.msra.mxu0 %v1196
        %2285 = vmatprep.subr.mxu0 0.0
        %2286 = vmatpush1.msra.mxu0 %v1197
        %2287 = vmatprep.subr.mxu0 0.0
        %2288 = vmatpush1.msra.mxu0 %v1198
        %2289 = vmatprep.subr.mxu0 0.0
        %2290 = vmatpush1.msra.mxu0 0.0
        %2291 = vmatprep.subr.mxu0 0.0
        %2292 = vmatpush1.msra.mxu0 0.0
        %2293 = vmatprep.subr.mxu0 0.0
        %2294 = vmatpush1.msra.mxu0 0.0
        %2295 = vmatprep.subr.mxu0 0.0
        %2296 = vmatpush1.msra.mxu0 0.0
        %2297 = vmatprep.subr.mxu0 0.0
        %2298 = vmatpush1.msra.mxu0 0.0
        %2299 = vmatprep.subr.mxu0 0.0
        %2300 = vmatpush1.msra.mxu0 0.0
        %2301 = vmatprep.subr.mxu0 0.0
        %2302 = vmatpush1.msra.mxu0 0.0
        %2303 = vmatprep.subr.mxu0 0.0
        %2304 = vmatpush1.msra.mxu0 0.0
        %2305 = vmatprep.subr.mxu0 0.0
        %2306 = vmatpush1.msra.mxu0 0.0
        %2307 = vmatprep.subr.mxu0 0.0
        %2308 = vmatpush1.msra.mxu0 0.0
        %2309 = vmatprep.subr.mxu0 0.0
        %2310 = vmatpush1.msra.mxu0 0.0
        %2311 = vmatprep.subr.mxu0 0.0
        %2312 = vmatpush1.msra.mxu0 0.0
        %2313 = vmatprep.subr.mxu0 0.0
        %2314 = vmatpush1.msra.mxu0 0.0
        %2315 = vmatprep.subr.mxu0 0.0
        %2316 = vmatpush1.msra.mxu0 0.0
        %2317 = vmatprep.subr.mxu0 0.0
        %2318 = vmatpush1.msra.mxu0 0.0
        %2319 = vmatprep.subr.mxu0 0.0
        %2320 = vmatpush1.msra.mxu0 0.0
        %2321 = vmatprep.subr.mxu0 0.0
        %2322 = vmatpush1.msra.mxu0 0.0
        %2323 = vmatprep.subr.mxu0 0.0
        %2324 = vmatpush1.msra.mxu0 0.0
        %2325 = vmatprep.subr.mxu0 0.0
        %2326 = vmatpush1.msra.mxu0 0.0
        %2327 = vmatprep.subr.mxu0 0.0
        %2328 = vmatpush1.msra.mxu0 0.0
        %2329 = vmatprep.subr.mxu0 0.0
        %2330 = vmatpush1.msra.mxu0 0.0
        %2331 = vmatprep.subr.mxu0 0.0
        %2332 = vmatpush1.msra.mxu0 0.0
        %2333 = vmatprep.subr.mxu0 0.0
        %2334 = vmatpush1.msra.mxu0 0.0
        %2335 = vmatprep.subr.mxu0 0.0
        %2336 = vmatpush1.msra.mxu0 0.0
        %2337 = vmatprep.subr.mxu0 0.0
        %2338 = vmatpush1.msra.mxu0 0.0
        %2339 = vmatprep.subr.mxu0 0.0
        %2340 = vmatpush1.msra.mxu0 0.0
        %2341 = vmatprep.subr.mxu0 0.0
        %2342 = vmatpush1.msra.mxu0 0.0
        %2343 = vmatprep.subr.mxu0 0.0
        %2344 = vmatpush1.msra.mxu0 0.0
        %2345 = vmatprep.mubr.f32.mxu0 0.0
        %2346 = vmatmul.mubr.f32.gmra.mrb[0].mxu0 %v2279
        %v2347 = vpop.f32.mrb[0].mxu0
        %v2348 = vadd.f32 0.0, %v2347
        %v2349 = vpop.f32.mrb[0].mxu0
        %2350 = vdwg.mxu0
        %2351 = vrot.lane.b32.xlu0 %v2348, 125
        %v2352 = vpop.permute.xlu0 %2351
        %v2353 = vmul.f32 %v2352, %v399
        %v2354 = vadd.f32 %v2275, %v2353
        %s2355 = scalar_lea.vmem %s5, 28
        %v2356 = vld [vmem:[%s2355] sm:$0x3]
        %v2358 = vsel %vm1244, %v2356, 0
        %2360 = vmatprep.subr.mxu0 0.0
        %2361 = vmatpush1.msra.mxu0 %v1195
        %2362 = vmatprep.subr.mxu0 0.0
        %2363 = vmatpush1.msra.mxu0 %v1196
        %2364 = vmatprep.subr.mxu0 0.0
        %2365 = vmatpush1.msra.mxu0 %v1197
        %2366 = vmatprep.subr.mxu0 0.0
        %2367 = vmatpush1.msra.mxu0 %v1198
        %2368 = vmatprep.subr.mxu0 0.0
        %2369 = vmatpush1.msra.mxu0 0.0
        %2370 = vmatprep.subr.mxu0 0.0
        %2371 = vmatpush1.msra.mxu0 0.0
        %2372 = vmatprep.subr.mxu0 0.0
        %2373 = vmatpush1.msra.mxu0 0.0
        %2374 = vmatprep.subr.mxu0 0.0
        %2375 = vmatpush1.msra.mxu0 0.0
        %2376 = vmatprep.subr.mxu0 0.0
        %2377 = vmatpush1.msra.mxu0 0.0
        %2378 = vmatprep.subr.mxu0 0.0
        %2379 = vmatpush1.msra.mxu0 0.0
        %2380 = vmatprep.subr.mxu0 0.0
        %2381 = vmatpush1.msra.mxu0 0.0
        %2382 = vmatprep.subr.mxu0 0.0
        %2383 = vmatpush1.msra.mxu0 0.0
        %2384 = vmatprep.subr.mxu0 0.0
        %2385 = vmatpush1.msra.mxu0 0.0
        %2386 = vmatprep.subr.mxu0 0.0
        %2387 = vmatpush1.msra.mxu0 0.0
        %2388 = vmatprep.subr.mxu0 0.0
        %2389 = vmatpush1.msra.mxu0 0.0
        %2390 = vmatprep.subr.mxu0 0.0
        %2391 = vmatpush1.msra.mxu0 0.0
        %2392 = vmatprep.subr.mxu0 0.0
        %2393 = vmatpush1.msra.mxu0 0.0
        %2394 = vmatprep.subr.mxu0 0.0
        %2395 = vmatpush1.msra.mxu0 0.0
        %2396 = vmatprep.subr.mxu0 0.0
        %2397 = vmatpush1.msra.mxu0 0.0
        %2398 = vmatprep.subr.mxu0 0.0
        %2399 = vmatpush1.msra.mxu0 0.0
        %2400 = vmatprep.subr.mxu0 0.0
        %2401 = vmatpush1.msra.mxu0 0.0
        %2402 = vmatprep.subr.mxu0 0.0
        %2403 = vmatpush1.msra.mxu0 0.0
        %2404 = vmatprep.subr.mxu0 0.0
        %2405 = vmatpush1.msra.mxu0 0.0
        %2406 = vmatprep.subr.mxu0 0.0
        %2407 = vmatpush1.msra.mxu0 0.0
        %2408 = vmatprep.subr.mxu0 0.0
        %2409 = vmatpush1.msra.mxu0 0.0
        %2410 = vmatprep.subr.mxu0 0.0
        %2411 = vmatpush1.msra.mxu0 0.0
        %2412 = vmatprep.subr.mxu0 0.0
        %2413 = vmatpush1.msra.mxu0 0.0
        %2414 = vmatprep.subr.mxu0 0.0
        %2415 = vmatpush1.msra.mxu0 0.0
        %2416 = vmatprep.subr.mxu0 0.0
        %2417 = vmatpush1.msra.mxu0 0.0
        %2418 = vmatprep.subr.mxu0 0.0
        %2419 = vmatpush1.msra.mxu0 0.0
        %2420 = vmatprep.subr.mxu0 0.0
        %2421 = vmatpush1.msra.mxu0 0.0
        %2422 = vmatprep.subr.mxu0 0.0
        %2423 = vmatpush1.msra.mxu0 0.0
        %2424 = vmatprep.mubr.f32.mxu0 0.0
        %2425 = vmatmul.mubr.f32.gmra.mrb[0].mxu0 %v2358
        %v2426 = vpop.f32.mrb[0].mxu0
        %v2427 = vadd.f32 0.0, %v2426
        %v2428 = vpop.f32.mrb[0].mxu0
        %2429 = vdwg.mxu0
        %2430 = vrot.lane.b32.xlu0 %v2427, 124
        %v2431 = vpop.permute.xlu0 %2430
        %v2432 = vmul.f32 %v2431, %v405
        %v2433 = vadd.f32 %v2354, %v2432
        %s2434 = scalar_lea.vmem %s5, 30
        %v2435 = vld [vmem:[%s2434] sm:$0x3]
        %v2437 = vsel %vm1244, %v2435, 0
        %2439 = vmatprep.subr.mxu0 0.0
        %2440 = vmatpush1.msra.mxu0 %v1195
        %2441 = vmatprep.subr.mxu0 0.0
        %2442 = vmatpush1.msra.mxu0 %v1196
        %2443 = vmatprep.subr.mxu0 0.0
        %2444 = vmatpush1.msra.mxu0 %v1197
        %2445 = vmatprep.subr.mxu0 0.0
        %2446 = vmatpush1.msra.mxu0 %v1198
        %2447 = vmatprep.subr.mxu0 0.0
        %2448 = vmatpush1.msra.mxu0 0.0
        %2449 = vmatprep.subr.mxu0 0.0
        %2450 = vmatpush1.msra.mxu0 0.0
        %2451 = vmatprep.subr.mxu0 0.0
        %2452 = vmatpush1.msra.mxu0 0.0
        %2453 = vmatprep.subr.mxu0 0.0
        %2454 = vmatpush1.msra.mxu0 0.0
        %2455 = vmatprep.subr.mxu0 0.0
        %2456 = vmatpush1.msra.mxu0 0.0
        %2457 = vmatprep.subr.mxu0 0.0
        %2458 = vmatpush1.msra.mxu0 0.0
        %2459 = vmatprep.subr.mxu0 0.0
        %2460 = vmatpush1.msra.mxu0 0.0
        %2461 = vmatprep.subr.mxu0 0.0
        %2462 = vmatpush1.msra.mxu0 0.0
        %2463 = vmatprep.subr.mxu0 0.0
        %2464 = vmatpush1.msra.mxu0 0.0
        %2465 = vmatprep.subr.mxu0 0.0
        %2466 = vmatpush1.msra.mxu0 0.0
        %2467 = vmatprep.subr.mxu0 0.0
        %2468 = vmatpush1.msra.mxu0 0.0
        %2469 = vmatprep.subr.mxu0 0.0
        %2470 = vmatpush1.msra.mxu0 0.0
        %2471 = vmatprep.subr.mxu0 0.0
        %2472 = vmatpush1.msra.mxu0 0.0
        %2473 = vmatprep.subr.mxu0 0.0
        %2474 = vmatpush1.msra.mxu0 0.0
        %2475 = vmatprep.subr.mxu0 0.0
        %2476 = vmatpush1.msra.mxu0 0.0
        %2477 = vmatprep.subr.mxu0 0.0
        %2478 = vmatpush1.msra.mxu0 0.0
        %2479 = vmatprep.subr.mxu0 0.0
        %2480 = vmatpush1.msra.mxu0 0.0
        %2481 = vmatprep.subr.mxu0 0.0
        %2482 = vmatpush1.msra.mxu0 0.0
        %2483 = vmatprep.subr.mxu0 0.0
        %2484 = vmatpush1.msra.mxu0 0.0
        %2485 = vmatprep.subr.mxu0 0.0
        %2486 = vmatpush1.msra.mxu0 0.0
        %2487 = vmatprep.subr.mxu0 0.0
        %2488 = vmatpush1.msra.mxu0 0.0
        %2489 = vmatprep.subr.mxu0 0.0
        %2490 = vmatpush1.msra.mxu0 0.0
        %2491 = vmatprep.subr.mxu0 0.0
        %2492 = vmatpush1.msra.mxu0 0.0
        %2493 = vmatprep.subr.mxu0 0.0
        %2494 = vmatpush1.msra.mxu0 0.0
        %2495 = vmatprep.subr.mxu0 0.0
        %2496 = vmatpush1.msra.mxu0 0.0
        %2497 = vmatprep.subr.mxu0 0.0
        %2498 = vmatpush1.msra.mxu0 0.0
        %2499 = vmatprep.subr.mxu0 0.0
        %2500 = vmatpush1.msra.mxu0 0.0
        %2501 = vmatprep.subr.mxu0 0.0
        %2502 = vmatpush1.msra.mxu0 0.0
        %2503 = vmatprep.mubr.f32.mxu0 0.0
        %2504 = vmatmul.mubr.f32.gmra.mrb[0].mxu0 %v2437
        %v2505 = vpop.f32.mrb[0].mxu0
        %v2506 = vadd.f32 0.0, %v2505
        %v2507 = vpop.f32.mrb[0].mxu0
        %2508 = vdwg.mxu0
        %2509 = vrot.lane.b32.xlu0 %v2506, 123
        %v2510 = vpop.permute.xlu0 %2509
        %v2511 = vmul.f32 %v2510, %v411
        %v2512 = vadd.f32 %v2433, %v2511
        %s2513 = scalar_lea.vmem %s5, 32
        %v2514 = vld [vmem:[%s2513] sm:$0x3]
        %v2516 = vsel %vm1244, %v2514, 0
        %2518 = vmatprep.subr.mxu0 0.0
        %2519 = vmatpush1.msra.mxu0 %v1195
        %2520 = vmatprep.subr.mxu0 0.0
        %2521 = vmatpush1.msra.mxu0 %v1196
        %2522 = vmatprep.subr.mxu0 0.0
        %2523 = vmatpush1.msra.mxu0 %v1197
        %2524 = vmatprep.subr.mxu0 0.0
        %2525 = vmatpush1.msra.mxu0 %v1198
        %2526 = vmatprep.subr.mxu0 0.0
        %2527 = vmatpush1.msra.mxu0 0.0
        %2528 = vmatprep.subr.mxu0 0.0
        %2529 = vmatpush1.msra.mxu0 0.0
        %2530 = vmatprep.subr.mxu0 0.0
        %2531 = vmatpush1.msra.mxu0 0.0
        %2532 = vmatprep.subr.mxu0 0.0
        %2533 = vmatpush1.msra.mxu0 0.0
        %2534 = vmatprep.subr.mxu0 0.0
        %2535 = vmatpush1.msra.mxu0 0.0
        %2536 = vmatprep.subr.mxu0 0.0
        %2537 = vmatpush1.msra.mxu0 0.0
        %2538 = vmatprep.subr.mxu0 0.0
        %2539 = vmatpush1.msra.mxu0 0.0
        %2540 = vmatprep.subr.mxu0 0.0
        %2541 = vmatpush1.msra.mxu0 0.0
        %2542 = vmatprep.subr.mxu0 0.0
        %2543 = vmatpush1.msra.mxu0 0.0
        %2544 = vmatprep.subr.mxu0 0.0
        %2545 = vmatpush1.msra.mxu0 0.0
        %2546 = vmatprep.subr.mxu0 0.0
        %2547 = vmatpush1.msra.mxu0 0.0
        %2548 = vmatprep.subr.mxu0 0.0
        %2549 = vmatpush1.msra.mxu0 0.0
        %2550 = vmatprep.subr.mxu0 0.0
        %2551 = vmatpush1.msra.mxu0 0.0
        %2552 = vmatprep.subr.mxu0 0.0
        %2553 = vmatpush1.msra.mxu0 0.0
        %2554 = vmatprep.subr.mxu0 0.0
        %2555 = vmatpush1.msra.mxu0 0.0
        %2556 = vmatprep.subr.mxu0 0.0
        %2557 = vmatpush1.msra.mxu0 0.0
        %2558 = vmatprep.subr.mxu0 0.0
        %2559 = vmatpush1.msra.mxu0 0.0
        %2560 = vmatprep.subr.mxu0 0.0
        %2561 = vmatpush1.msra.mxu0 0.0
        %2562 = vmatprep.subr.mxu0 0.0
        %2563 = vmatpush1.msra.mxu0 0.0
        %2564 = vmatprep.subr.mxu0 0.0
        %2565 = vmatpush1.msra.mxu0 0.0
        %2566 = vmatprep.subr.mxu0 0.0
        %2567 = vmatpush1.msra.mxu0 0.0
        %2568 = vmatprep.subr.mxu0 0.0
        %2569 = vmatpush1.msra.mxu0 0.0
        %2570 = vmatprep.subr.mxu0 0.0
        %2571 = vmatpush1.msra.mxu0 0.0
        %2572 = vmatprep.subr.mxu0 0.0
        %2573 = vmatpush1.msra.mxu0 0.0
        %2574 = vmatprep.subr.mxu0 0.0
        %2575 = vmatpush1.msra.mxu0 0.0
        %2576 = vmatprep.subr.mxu0 0.0
        %2577 = vmatpush1.msra.mxu0 0.0
        %2578 = vmatprep.subr.mxu0 0.0
        %2579 = vmatpush1.msra.mxu0 0.0
        %2580 = vmatprep.subr.mxu0 0.0
        %2581 = vmatpush1.msra.mxu0 0.0
        %2582 = vmatprep.mubr.f32.mxu0 0.0
        %2583 = vmatmul.mubr.f32.gmra.mrb[0].mxu0 %v2516
        %v2584 = vpop.f32.mrb[0].mxu0
        %v2585 = vadd.f32 0.0, %v2584
        %v2586 = vpop.f32.mrb[0].mxu0
        %2587 = vdwg.mxu0
        %2588 = vrot.lane.b32.xlu0 %v2585, 122
        %v2589 = vpop.permute.xlu0 %2588
        %v2590 = vmul.f32 %v2589, %v417
        %v2591 = vadd.f32 %v2512, %v2590
        %s2592 = scalar_lea.vmem %s5, 34
        %v2593 = vld [vmem:[%s2592] sm:$0x3]
        %v2595 = vsel %vm1244, %v2593, 0
        %2597 = vmatprep.subr.mxu0 0.0
        %2598 = vmatpush1.msra.mxu0 %v1195
        %2599 = vmatprep.subr.mxu0 0.0
        %2600 = vmatpush1.msra.mxu0 %v1196
        %2601 = vmatprep.subr.mxu0 0.0
        %2602 = vmatpush1.msra.mxu0 %v1197
        %2603 = vmatprep.subr.mxu0 0.0
        %2604 = vmatpush1.msra.mxu0 %v1198
        %2605 = vmatprep.subr.mxu0 0.0
        %2606 = vmatpush1.msra.mxu0 0.0
        %2607 = vmatprep.subr.mxu0 0.0
        %2608 = vmatpush1.msra.mxu0 0.0
        %2609 = vmatprep.subr.mxu0 0.0
        %2610 = vmatpush1.msra.mxu0 0.0
        %2611 = vmatprep.subr.mxu0 0.0
        %2612 = vmatpush1.msra.mxu0 0.0
        %2613 = vmatprep.subr.mxu0 0.0
        %2614 = vmatpush1.msra.mxu0 0.0
        %2615 = vmatprep.subr.mxu0 0.0
        %2616 = vmatpush1.msra.mxu0 0.0
        %2617 = vmatprep.subr.mxu0 0.0
        %2618 = vmatpush1.msra.mxu0 0.0
        %2619 = vmatprep.subr.mxu0 0.0
        %2620 = vmatpush1.msra.mxu0 0.0
        %2621 = vmatprep.subr.mxu0 0.0
        %2622 = vmatpush1.msra.mxu0 0.0
        %2623 = vmatprep.subr.mxu0 0.0
        %2624 = vmatpush1.msra.mxu0 0.0
        %2625 = vmatprep.subr.mxu0 0.0
        %2626 = vmatpush1.msra.mxu0 0.0
        %2627 = vmatprep.subr.mxu0 0.0
        %2628 = vmatpush1.msra.mxu0 0.0
        %2629 = vmatprep.subr.mxu0 0.0
        %2630 = vmatpush1.msra.mxu0 0.0
        %2631 = vmatprep.subr.mxu0 0.0
        %2632 = vmatpush1.msra.mxu0 0.0
        %2633 = vmatprep.subr.mxu0 0.0
        %2634 = vmatpush1.msra.mxu0 0.0
        %2635 = vmatprep.subr.mxu0 0.0
        %2636 = vmatpush1.msra.mxu0 0.0
        %2637 = vmatprep.subr.mxu0 0.0
        %2638 = vmatpush1.msra.mxu0 0.0
        %2639 = vmatprep.subr.mxu0 0.0
        %2640 = vmatpush1.msra.mxu0 0.0
        %2641 = vmatprep.subr.mxu0 0.0
        %2642 = vmatpush1.msra.mxu0 0.0
        %2643 = vmatprep.subr.mxu0 0.0
        %2644 = vmatpush1.msra.mxu0 0.0
        %2645 = vmatprep.subr.mxu0 0.0
        %2646 = vmatpush1.msra.mxu0 0.0
        %2647 = vmatprep.subr.mxu0 0.0
        %2648 = vmatpush1.msra.mxu0 0.0
        %2649 = vmatprep.subr.mxu0 0.0
        %2650 = vmatpush1.msra.mxu0 0.0
        %2651 = vmatprep.subr.mxu0 0.0
        %2652 = vmatpush1.msra.mxu0 0.0
        %2653 = vmatprep.subr.mxu0 0.0
        %2654 = vmatpush1.msra.mxu0 0.0
        %2655 = vmatprep.subr.mxu0 0.0
        %2656 = vmatpush1.msra.mxu0 0.0
        %2657 = vmatprep.subr.mxu0 0.0
        %2658 = vmatpush1.msra.mxu0 0.0
        %2659 = vmatprep.subr.mxu0 0.0
        %2660 = vmatpush1.msra.mxu0 0.0
        %2661 = vmatprep.mubr.f32.mxu0 0.0
        %2662 = vmatmul.mubr.f32.gmra.mrb[0].mxu0 %v2595
        %v2663 = vpop.f32.mrb[0].mxu0
        %v2664 = vadd.f32 0.0, %v2663
        %v2665 = vpop.f32.mrb[0].mxu0
        %2666 = vdwg.mxu0
        %2667 = vrot.lane.b32.xlu0 %v2664, 121
        %v2668 = vpop.permute.xlu0 %2667
        %vm2669 = vcmp.lt.s32.totalorder %v337, 121
        %v2670 = vsel %vm2669, 1, 0
        %v2671 = vcvt.s32.f32 %v2670
        %v2672 = vmul.f32 %v2668, %v2671
        %v2673 = vadd.f32 %v2591, %v2672
        %s2674 = scalar_lea.vmem %s5, 36
        %v2675 = vld [vmem:[%s2674] sm:$0x3]
        %v2677 = vsel %vm1244, %v2675, 0
        %2679 = vmatprep.subr.mxu0 0.0
        %2680 = vmatpush1.msra.mxu0 %v1195
        %2681 = vmatprep.subr.mxu0 0.0
        %2682 = vmatpush1.msra.mxu0 %v1196
        %2683 = vmatprep.subr.mxu0 0.0
        %2684 = vmatpush1.msra.mxu0 %v1197
        %2685 = vmatprep.subr.mxu0 0.0
        %2686 = vmatpush1.msra.mxu0 %v1198
        %2687 = vmatprep.subr.mxu0 0.0
        %2688 = vmatpush1.msra.mxu0 0.0
        %2689 = vmatprep.subr.mxu0 0.0
        %2690 = vmatpush1.msra.mxu0 0.0
        %2691 = vmatprep.subr.mxu0 0.0
        %2692 = vmatpush1.msra.mxu0 0.0
        %2693 = vmatprep.subr.mxu0 0.0
        %2694 = vmatpush1.msra.mxu0 0.0
        %2695 = vmatprep.subr.mxu0 0.0
        %2696 = vmatpush1.msra.mxu0 0.0
        %2697 = vmatprep.subr.mxu0 0.0
        %2698 = vmatpush1.msra.mxu0 0.0
        %2699 = vmatprep.subr.mxu0 0.0
        %2700 = vmatpush1.msra.mxu0 0.0
        %2701 = vmatprep.subr.mxu0 0.0
        %2702 = vmatpush1.msra.mxu0 0.0
        %2703 = vmatprep.subr.mxu0 0.0
        %2704 = vmatpush1.msra.mxu0 0.0
        %2705 = vmatprep.subr.mxu0 0.0
        %2706 = vmatpush1.msra.mxu0 0.0
        %2707 = vmatprep.subr.mxu0 0.0
        %2708 = vmatpush1.msra.mxu0 0.0
        %2709 = vmatprep.subr.mxu0 0.0
        %2710 = vmatpush1.msra.mxu0 0.0
        %2711 = vmatprep.subr.mxu0 0.0
        %2712 = vmatpush1.msra.mxu0 0.0
        %2713 = vmatprep.subr.mxu0 0.0
        %2714 = vmatpush1.msra.mxu0 0.0
        %2715 = vmatprep.subr.mxu0 0.0
        %2716 = vmatpush1.msra.mxu0 0.0
        %2717 = vmatprep.subr.mxu0 0.0
        %2718 = vmatpush1.msra.mxu0 0.0
        %2719 = vmatprep.subr.mxu0 0.0
        %2720 = vmatpush1.msra.mxu0 0.0
        %2721 = vmatprep.subr.mxu0 0.0
        %2722 = vmatpush1.msra.mxu0 0.0
        %2723 = vmatprep.subr.mxu0 0.0
        %2724 = vmatpush1.msra.mxu0 0.0
        %2725 = vmatprep.subr.mxu0 0.0
        %2726 = vmatpush1.msra.mxu0 0.0
        %2727 = vmatprep.subr.mxu0 0.0
        %2728 = vmatpush1.msra.mxu0 0.0
        %2729 = vmatprep.subr.mxu0 0.0
        %2730 = vmatpush1.msra.mxu0 0.0
        %2731 = vmatprep.subr.mxu0 0.0
        %2732 = vmatpush1.msra.mxu0 0.0
        %2733 = vmatprep.subr.mxu0 0.0
        %2734 = vmatpush1.msra.mxu0 0.0
        %2735 = vmatprep.subr.mxu0 0.0
        %2736 = vmatpush1.msra.mxu0 0.0
        %2737 = vmatprep.subr.mxu0 0.0
        %2738 = vmatpush1.msra.mxu0 0.0
        %2739 = vmatprep.subr.mxu0 0.0
        %2740 = vmatpush1.msra.mxu0 0.0
        %2741 = vmatprep.subr.mxu0 0.0
        %2742 = vmatpush1.msra.mxu0 0.0
        %2743 = vmatprep.mubr.f32.mxu0 0.0
        %2744 = vmatmul.mubr.f32.gmra.mrb[0].mxu0 %v2677
        %v2745 = vpop.f32.mrb[0].mxu0
        %v2746 = vadd.f32 0.0, %v2745
        %v2747 = vpop.f32.mrb[0].mxu0
        %2748 = vdwg.mxu0
        %2749 = vrot.lane.b32.xlu0 %v2746, 120
        %v2750 = vpop.permute.xlu0 %2749
        %vm2751 = vcmp.lt.s32.totalorder %v337, 120
        %v2752 = vsel %vm2751, 1, 0
        %v2753 = vcvt.s32.f32 %v2752
        %v2754 = vmul.f32 %v2750, %v2753
        %v2755 = vadd.f32 %v2673, %v2754
        %s2756 = scalar_lea.vmem %s5, 38
        %v2757 = vld [vmem:[%s2756] sm:$0x3]
        %v2759 = vsel %vm1244, %v2757, 0
        %2761 = vmatprep.subr.mxu0 0.0
        %2762 = vmatpush1.msra.mxu0 %v1195
        %2763 = vmatprep.subr.mxu0 0.0
        %2764 = vmatpush1.msra.mxu0 %v1196
        %2765 = vmatprep.subr.mxu0 0.0
        %2766 = vmatpush1.msra.mxu0 %v1197
        %2767 = vmatprep.subr.mxu0 0.0
        %2768 = vmatpush1.msra.mxu0 %v1198
        %2769 = vmatprep.subr.mxu0 0.0
        %2770 = vmatpush1.msra.mxu0 0.0
        %2771 = vmatprep.subr.mxu0 0.0
        %2772 = vmatpush1.msra.mxu0 0.0
        %2773 = vmatprep.subr.mxu0 0.0
        %2774 = vmatpush1.msra.mxu0 0.0
        %2775 = vmatprep.subr.mxu0 0.0
        %2776 = vmatpush1.msra.mxu0 0.0
        %2777 = vmatprep.subr.mxu0 0.0
        %2778 = vmatpush1.msra.mxu0 0.0
        %2779 = vmatprep.subr.mxu0 0.0
        %2780 = vmatpush1.msra.mxu0 0.0
        %2781 = vmatprep.subr.mxu0 0.0
        %2782 = vmatpush1.msra.mxu0 0.0
        %2783 = vmatprep.subr.mxu0 0.0
        %2784 = vmatpush1.msra.mxu0 0.0
        %2785 = vmatprep.subr.mxu0 0.0
        %2786 = vmatpush1.msra.mxu0 0.0
        %2787 = vmatprep.subr.mxu0 0.0
        %2788 = vmatpush1.msra.mxu0 0.0
        %2789 = vmatprep.subr.mxu0 0.0
        %2790 = vmatpush1.msra.mxu0 0.0
        %2791 = vmatprep.subr.mxu0 0.0
        %2792 = vmatpush1.msra.mxu0 0.0
        %2793 = vmatprep.subr.mxu0 0.0
        %2794 = vmatpush1.msra.mxu0 0.0
        %2795 = vmatprep.subr.mxu0 0.0
        %2796 = vmatpush1.msra.mxu0 0.0
        %2797 = vmatprep.subr.mxu0 0.0
        %2798 = vmatpush1.msra.mxu0 0.0
        %2799 = vmatprep.subr.mxu0 0.0
        %2800 = vmatpush1.msra.mxu0 0.0
        %2801 = vmatprep.subr.mxu0 0.0
        %2802 = vmatpush1.msra.mxu0 0.0
        %2803 = vmatprep.subr.mxu0 0.0
        %2804 = vmatpush1.msra.mxu0 0.0
        %2805 = vmatprep.subr.mxu0 0.0
        %2806 = vmatpush1.msra.mxu0 0.0
        %2807 = vmatprep.subr.mxu0 0.0
        %2808 = vmatpush1.msra.mxu0 0.0
        %2809 = vmatprep.subr.mxu0 0.0
        %2810 = vmatpush1.msra.mxu0 0.0
        %2811 = vmatprep.subr.mxu0 0.0
        %2812 = vmatpush1.msra.mxu0 0.0
        %2813 = vmatprep.subr.mxu0 0.0
        %2814 = vmatpush1.msra.mxu0 0.0
        %2815 = vmatprep.subr.mxu0 0.0
        %2816 = vmatpush1.msra.mxu0 0.0
        %2817 = vmatprep.subr.mxu0 0.0
        %2818 = vmatpush1.msra.mxu0 0.0
        %2819 = vmatprep.subr.mxu0 0.0
        %2820 = vmatpush1.msra.mxu0 0.0
        %2821 = vmatprep.subr.mxu0 0.0
        %2822 = vmatpush1.msra.mxu0 0.0
        %2823 = vmatprep.subr.mxu0 0.0
        %2824 = vmatpush1.msra.mxu0 0.0
        %2825 = vmatprep.mubr.f32.mxu0 0.0
        %2826 = vmatmul.mubr.f32.gmra.mrb[0].mxu0 %v2759
        %v2827 = vpop.f32.mrb[0].mxu0
        %v2828 = vadd.f32 0.0, %v2827
        %v2829 = vpop.f32.mrb[0].mxu0
        %2830 = vdwg.mxu0
        %2831 = vrot.lane.b32.xlu0 %v2828, 119
        %v2832 = vpop.permute.xlu0 %2831
        %vm2833 = vcmp.lt.s32.totalorder %v337, 119
        %v2834 = vsel %vm2833, 1, 0
        %v2835 = vcvt.s32.f32 %v2834
        %v2836 = vmul.f32 %v2832, %v2835
        %v2837 = vadd.f32 %v2755, %v2836
        %s2838 = scalar_lea.vmem %s5, 40
        %v2839 = vld [vmem:[%s2838] sm:$0x3]
        %v2841 = vsel %vm1244, %v2839, 0
        %2843 = vmatprep.subr.mxu0 0.0
        %2844 = vmatpush1.msra.mxu0 %v1195
        %2845 = vmatprep.subr.mxu0 0.0
        %2846 = vmatpush1.msra.mxu0 %v1196
        %2847 = vmatprep.subr.mxu0 0.0
        %2848 = vmatpush1.msra.mxu0 %v1197
        %2849 = vmatprep.subr.mxu0 0.0
        %2850 = vmatpush1.msra.mxu0 %v1198
        %2851 = vmatprep.subr.mxu0 0.0
        %2852 = vmatpush1.msra.mxu0 0.0
        %2853 = vmatprep.subr.mxu0 0.0
        %2854 = vmatpush1.msra.mxu0 0.0
        %2855 = vmatprep.subr.mxu0 0.0
        %2856 = vmatpush1.msra.mxu0 0.0
        %2857 = vmatprep.subr.mxu0 0.0
        %2858 = vmatpush1.msra.mxu0 0.0
        %2859 = vmatprep.subr.mxu0 0.0
        %2860 = vmatpush1.msra.mxu0 0.0
        %2861 = vmatprep.subr.mxu0 0.0
        %2862 = vmatpush1.msra.mxu0 0.0
        %2863 = vmatprep.subr.mxu0 0.0
        %2864 = vmatpush1.msra.mxu0 0.0
        %2865 = vmatprep.subr.mxu0 0.0
        %2866 = vmatpush1.msra.mxu0 0.0
        %2867 = vmatprep.subr.mxu0 0.0
        %2868 = vmatpush1.msra.mxu0 0.0
        %2869 = vmatprep.subr.mxu0 0.0
        %2870 = vmatpush1.msra.mxu0 0.0
        %2871 = vmatprep.subr.mxu0 0.0
        %2872 = vmatpush1.msra.mxu0 0.0
        %2873 = vmatprep.subr.mxu0 0.0
        %2874 = vmatpush1.msra.mxu0 0.0
        %2875 = vmatprep.subr.mxu0 0.0
        %2876 = vmatpush1.msra.mxu0 0.0
        %2877 = vmatprep.subr.mxu0 0.0
        %2878 = vmatpush1.msra.mxu0 0.0
        %2879 = vmatprep.subr.mxu0 0.0
        %2880 = vmatpush1.msra.mxu0 0.0
        %2881 = vmatprep.subr.mxu0 0.0
        %2882 = vmatpush1.msra.mxu0 0.0
        %2883 = vmatprep.subr.mxu0 0.0
        %2884 = vmatpush1.msra.mxu0 0.0
        %2885 = vmatprep.subr.mxu0 0.0
        %2886 = vmatpush1.msra.mxu0 0.0
        %2887 = vmatprep.subr.mxu0 0.0
        %2888 = vmatpush1.msra.mxu0 0.0
        %2889 = vmatprep.subr.mxu0 0.0
        %2890 = vmatpush1.msra.mxu0 0.0
        %2891 = vmatprep.subr.mxu0 0.0
        %2892 = vmatpush1.msra.mxu0 0.0
        %2893 = vmatprep.subr.mxu0 0.0
        %2894 = vmatpush1.msra.mxu0 0.0
        %2895 = vmatprep.subr.mxu0 0.0
        %2896 = vmatpush1.msra.mxu0 0.0
        %2897 = vmatprep.subr.mxu0 0.0
        %2898 = vmatpush1.msra.mxu0 0.0
        %2899 = vmatprep.subr.mxu0 0.0
        %2900 = vmatpush1.msra.mxu0 0.0
        %2901 = vmatprep.subr.mxu0 0.0
        %2902 = vmatpush1.msra.mxu0 0.0
        %2903 = vmatprep.subr.mxu0 0.0
        %2904 = vmatpush1.msra.mxu0 0.0
        %2905 = vmatprep.subr.mxu0 0.0
        %2906 = vmatpush1.msra.mxu0 0.0
        %2907 = vmatprep.mubr.f32.mxu0 0.0
        %2908 = vmatmul.mubr.f32.gmra.mrb[0].mxu0 %v2841
        %v2909 = vpop.f32.mrb[0].mxu0
        %v2910 = vadd.f32 0.0, %v2909
        %v2911 = vpop.f32.mrb[0].mxu0
        %2912 = vdwg.mxu0
        %2913 = vrot.lane.b32.xlu0 %v2910, 118
        %v2914 = vpop.permute.xlu0 %2913
        %v2915 = vmul.f32 %v2914, %v846
        %v2916 = vadd.f32 %v2837, %v2915
        %v2917 = vstv %s350
        %v2918 = vadd.f32 %v2916, %v2917
        %v2919 = vstv %s351
        %v2920 = vadd.f32 %v2916, %v2919
        %vm2921 = vcmask 1040384
        %v2922 = vsel %vm2921, %v2918, -inf
        %2923 = vmax.xlane.f32.xlu0 %v2922
        %v2924 = vpop.xlane.xlu0 %2923
        %v2925 = vsub.f32 %v2918, %v2924
        %v2926 = vmul.f32 %v2925, 1.442695
        %v2927 = vpow.pop %v2926
        %v2928 = vsel %vm2921, %v2927, 0.0
        %2929 = vadd.xlane.f32.xlu0 %v2928
        %v2930 = vpop.xlane.xlu0 %2929
        %v2931 = vlog2.pop %v2930
        %v2932 = vmul.f32 %v2931, 0.6931472
        %v2933 = vadd.f32 %v2924, %v2932
        %vm2934 = vcmask 1041409
        %v2935 = vsel %vm2934, %v2920, -inf
        %2936 = vmax.xlane.f32.xlu0 %v2935
        %v2937 = vpop.xlane.xlu0 %2936
        %v2938 = vsub.f32 %v2920, %v2937
        %v2939 = vmul.f32 %v2938, 1.442695
        %v2940 = vpow.pop %v2939
        %v2941 = vsel %vm2934, %v2940, 0.0
        %2942 = vadd.xlane.f32.xlu0 %v2941
        %v2943 = vpop.xlane.xlu0 %2942
        %v2944 = vlog2.pop %v2943
        %v2945 = vmul.f32 %v2944, 0.6931472
        %v2946 = vadd.f32 %v2937, %v2945
        %v2947 = vsub.f32 %v2918, %v2933
        %v2948 = vadd.f32 %v1242, %v2947
        %v2949 = vsub.f32 %v2920, %v2946
        %v2951 = vrot.slane %v2949, 1
        %v2953 = vmax.f32 %v2948, %v2951
        %v2954 = vsub.f32 %v2948, %v2951
        %v2955 = vand.u32 2147483647, %v2954
        %v2956 = vsub.f32 0.0, %v2955
        %v2957 = vmul.f32 %v2956, 1.442695
        %v2958 = vpow.pop %v2957
        %v2959 = vadd.f32 %v2958, 1.0
        %v2960 = vlog2.pop %v2959
        %v2961 = vmul.f32 %v2960, 0.6931472
        %v2962 = vmul.f32 -0.5, %v2958
        %v2963 = vadd.f32 %v2962, 1.0
        %v2964 = vmul.f32 %v2963, %v2958
        %v2965 = vand.u32 2147483647, %v2958
        %vm2966 = vcmp.lt.f32.partialorder %v2965, 0.0004427343
        %v2967 = vsel %vm2966, %v2964, %v2961
        %v2968 = vadd.f32 %v2953, %v2967
        %v2969 = vmul.f32 %v346, %v2918
        %v2970 = vsel %vm2921, %v2969, 0.0
        %2971 = vadd.xlane.f32.xlu0 %v2970
        %v2972 = vpop.xlane.xlu0 %2971
        %v2973 = vstv %s348
        %v2974 = vmul.f32 %v2972, %v2973
        %v2975 = vstv %s349
        %v2976 = vadd.f32 %v2974, %v2975
        %v2978 = vrot.slane %v2918, 7
        %v2981 = vrot.slane %v2920, 7
        %v2984 = vrot.slane %v2976, 4
        %v2986 = vsel %vm2921, %v2968, %v2978
        %vm2987 = vcmask 1041408
        %v2988 = vsel %vm2987, %v2986, %v2981
        %vm2989 = vcmask 1042432
        %v2990 = vsel %vm2989, %v2988, %v1242
        %v2991 = vsel %vm437, %v2990, %v2984
        %vm2992 = vcmask 1044480
        %v2993 = vsel %vm2992, %v2991, 0.0
        %2994 = vst [vmem:[%s328] sm:$0xff] %v2993
        %s2995 = scalar_lea.vmem %s333, 4
        %v2996 = vld [vmem:[%s2995] sm:$0xf]
        %2997 = vrot.lane.b32.xlu0 %v2996, 5
        %v2998 = vpop.permute.xlu0 %2997
        %v2999 = vmul.f32 %v2998, %v357
        %3000 = vrot.lane.b32.xlu0 %v2996, 4
        %v3001 = vpop.permute.xlu0 %3000
        %v3002 = vmul.f32 %v3001, %v363
        %3003 = vrot.lane.b32.xlu0 %v2996, 3
        %v3004 = vpop.permute.xlu0 %3003
        %v3005 = vmul.f32 %v3004, %v369
        %3006 = vrot.lane.b32.xlu0 %v2996, 2
        %v3007 = vpop.permute.xlu0 %3006
        %v3008 = vmul.f32 %v3007, %v375
        %3009 = vrot.lane.b32.xlu0 %v2996, 1
        %v3010 = vpop.permute.xlu0 %3009
        %v3011 = vmul.f32 %v3010, %v381
        %3012 = vrot.lane.b32.xlu0 %v2996, 127
        %v3013 = vpop.permute.xlu0 %3012
        %v3014 = vmul.f32 %v3013, %v387
        %3015 = vrot.lane.b32.xlu0 %v2996, 126
        %v3016 = vpop.permute.xlu0 %3015
        %v3017 = vmul.f32 %v3016, %v393
        %3018 = vrot.lane.b32.xlu0 %v2996, 125
        %v3019 = vpop.permute.xlu0 %3018
        %v3020 = vmul.f32 %v3019, %v399
        %3021 = vrot.lane.b32.xlu0 %v2996, 124
        %v3022 = vpop.permute.xlu0 %3021
        %v3023 = vmul.f32 %v3022, %v405
        %3024 = vrot.lane.b32.xlu0 %v2996, 123
        %v3025 = vpop.permute.xlu0 %3024
        %v3026 = vmul.f32 %v3025, %v411
        %3027 = vrot.lane.b32.xlu0 %v2996, 122
        %v3028 = vpop.permute.xlu0 %3027
        %v3029 = vmul.f32 %v3028, %v417
        %v3031 = vrot.slane %v3002, 4
        %v3034 = vrot.slane %v3008, 4
        %v3037 = vrot.slane %v2996, 4
        %v3040 = vrot.slane %v3017, 4
        %v3043 = vrot.slane %v3023, 4
        %v3046 = vrot.slane %v3029, 4
        %v3048 = vsel %vm437, %v2999, %v3031
        %v3049 = vsel %vm437, %v3005, %v3034
        %v3050 = vsel %vm437, %v3011, %v3037
        %v3051 = vsel %vm437, %v3014, %v3040
        %v3052 = vsel %vm437, %v3020, %v3043
        %v3053 = vsel %vm437, %v3026, %v3046
        %3054 = vmatprep.subr.mxu0 0.0
        %3055 = vmatpush1.msra.mxu0 %v3048
        %3056 = vmatprep.subr.mxu0 0.0
        %3057 = vmatpush1.msra.mxu0 %v3049
        %3058 = vmatprep.subr.mxu0 0.0
        %3059 = vmatpush1.msra.mxu0 %v3050
        %3060 = vmatprep.subr.mxu0 0.0
        %3061 = vmatpush1.msra.mxu0 %v3051
        %3062 = vmatprep.subr.mxu0 0.0
        %3063 = vmatpush1.msra.mxu0 %v3052
        %3064 = vmatprep.subr.mxu0 0.0
        %3065 = vmatpush1.msra.mxu0 %v3053
        %3066 = vmatprep.subr.mxu0 0.0
        %3067 = vmatpush1.msra.mxu0 0.0
        %3068 = vmatprep.subr.mxu0 0.0
        %3069 = vmatpush1.msra.mxu0 0.0
        %3070 = vmatprep.subr.mxu0 0.0
        %3071 = vmatpush1.msra.mxu0 0.0
        %3072 = vmatprep.subr.mxu0 0.0
        %3073 = vmatpush1.msra.mxu0 0.0
        %3074 = vmatprep.subr.mxu0 0.0
        %3075 = vmatpush1.msra.mxu0 0.0
        %3076 = vmatprep.subr.mxu0 0.0
        %3077 = vmatpush1.msra.mxu0 0.0
        %3078 = vmatprep.subr.mxu0 0.0
        %3079 = vmatpush1.msra.mxu0 0.0
        %3080 = vmatprep.subr.mxu0 0.0
        %3081 = vmatpush1.msra.mxu0 0.0
        %3082 = vmatprep.subr.mxu0 0.0
        %3083 = vmatpush1.msra.mxu0 0.0
        %3084 = vmatprep.subr.mxu0 0.0
        %3085 = vmatpush1.msra.mxu0 0.0
        %3086 = vmatprep.subr.mxu0 0.0
        %3087 = vmatpush1.msra.mxu0 0.0
        %3088 = vmatprep.subr.mxu0 0.0
        %3089 = vmatpush1.msra.mxu0 0.0
        %3090 = vmatprep.subr.mxu0 0.0
        %3091 = vmatpush1.msra.mxu0 0.0
        %3092 = vmatprep.subr.mxu0 0.0
        %3093 = vmatpush1.msra.mxu0 0.0
        %3094 = vmatprep.subr.mxu0 0.0
        %3095 = vmatpush1.msra.mxu0 0.0
        %3096 = vmatprep.subr.mxu0 0.0
        %3097 = vmatpush1.msra.mxu0 0.0
        %3098 = vmatprep.subr.mxu0 0.0
        %3099 = vmatpush1.msra.mxu0 0.0
        %3100 = vmatprep.subr.mxu0 0.0
        %3101 = vmatpush1.msra.mxu0 0.0
        %3102 = vmatprep.subr.mxu0 0.0
        %3103 = vmatpush1.msra.mxu0 0.0
        %3104 = vmatprep.subr.mxu0 0.0
        %3105 = vmatpush1.msra.mxu0 0.0
        %3106 = vmatprep.subr.mxu0 0.0
        %3107 = vmatpush1.msra.mxu0 0.0
        %3108 = vmatprep.subr.mxu0 0.0
        %3109 = vmatpush1.msra.mxu0 0.0
        %3110 = vmatprep.subr.mxu0 0.0
        %3111 = vmatpush1.msra.mxu0 0.0
        %3112 = vmatprep.subr.mxu0 0.0
        %3113 = vmatpush1.msra.mxu0 0.0
        %3114 = vmatprep.subr.mxu0 0.0
        %3115 = vmatpush1.msra.mxu0 0.0
        %3116 = vmatprep.subr.mxu0 0.0
        %3117 = vmatpush1.msra.mxu0 0.0
        %3118 = vmatprep.mubr.f32.mxu0 0.0
        %3119 = vmatmul.mubr.f32.gmra.mrb[0].mxu0 %v446
        %v3120 = vpop.f32.mrb[0].mxu0
        %v3121 = vadd.f32 0.0, %v3120
        %v3122 = vpop.f32.mrb[0].mxu0
        %3123 = vmatprep.mubr.f32.mxu0 0.0
        %3124 = vmatmul.mubr.f32.gmra.mrb[0].mxu0 %v449
        %v3125 = vpop.f32.mrb[0].mxu0
        %v3126 = vadd.f32 0.0, %v3125
        %v3127 = vpop.f32.mrb[0].mxu0
        %3128 = vmatprep.mubr.f32.mxu0 0.0
        %3129 = vmatmul.mubr.f32.gmra.mrb[0].mxu0 %v452
        %v3130 = vpop.f32.mrb[0].mxu0
        %v3131 = vadd.f32 0.0, %v3130
        %v3132 = vpop.f32.mrb[0].mxu0
        %3133 = vmatprep.mubr.f32.mxu0 0.0
        %3134 = vmatmul.mubr.f32.gmra.mrb[0].mxu0 %v455
        %v3135 = vpop.f32.mrb[0].mxu0
        %v3136 = vadd.f32 0.0, %v3135
        %v3137 = vpop.f32.mrb[0].mxu0
        %3138 = vdwg.mxu0
        %v3139 = vmax.f32 %v3121, 0.0
        %v3140 = vmax.f32 %v3126, 0.0
        %v3141 = vmax.f32 %v3131, 0.0
        %v3142 = vmax.f32 %v3136, 0.0
        %v3143 = vld [vmem:[#allocation6] sm:$0xff]
        %v3144 = vld [vmem:[#allocation6 + $0x8] sm:$0xff]
        %v3145 = vld [vmem:[#allocation6 + $0x10] sm:$0xff]
        %v3146 = vld [vmem:[#allocation6 + $0x18] sm:$0xff]
        %v3147 = vld [vmem:[#allocation6 + $0x20] sm:$0xff]
        %v3148 = vld [vmem:[#allocation6 + $0x28] sm:$0xff]
        %v3149 = vld [vmem:[#allocation6 + $0x30] sm:$0xff]
        %v3150 = vld [vmem:[#allocation6 + $0x38] sm:$0xff]
        %v3151 = vld [vmem:[%s4] sm:$0xff]
        %v3152 = vld [vmem:[%s4 + $0x8] sm:$0xff]
        %v3153 = vld [vmem:[%s4 + $0x10] sm:$0xff]
        %v3154 = vld [vmem:[%s4 + $0x18] sm:$0xff]
        %3155 = vrot.lane.b32.xlu0 %v3139, 5
        %v3156 = vpop.permute.xlu0 %3155
        %3157 = vrot.lane.b32.xlu0 %v3140, 5
        %v3158 = vpop.permute.xlu0 %3157
        %3159 = vrot.lane.b32.xlu0 %v3141, 5
        %v3160 = vpop.permute.xlu0 %3159
        %3161 = vrot.lane.b32.xlu0 %v3142, 5
        %v3162 = vpop.permute.xlu0 %3161
        %v3163 = vmul.f32 %v3156, %v357
        %v3164 = vmul.f32 %v3158, %v357
        %v3165 = vmul.f32 %v3160, %v357
        %v3166 = vmul.f32 %v3162, %v357
        %3167 = vrot.lane.b32.xlu0 %v3139, 3
        %v3168 = vpop.permute.xlu0 %3167
        %3169 = vrot.lane.b32.xlu0 %v3140, 3
        %v3170 = vpop.permute.xlu0 %3169
        %3171 = vrot.lane.b32.xlu0 %v3141, 3
        %v3172 = vpop.permute.xlu0 %3171
        %3173 = vrot.lane.b32.xlu0 %v3142, 3
        %v3174 = vpop.permute.xlu0 %3173
        %v3175 = vmul.f32 %v3168, %v369
        %v3176 = vmul.f32 %v3170, %v369
        %v3177 = vmul.f32 %v3172, %v369
        %v3178 = vmul.f32 %v3174, %v369
        %3179 = vrot.lane.b32.xlu0 %v3139, 1
        %v3180 = vpop.permute.xlu0 %3179
        %3181 = vrot.lane.b32.xlu0 %v3140, 1
        %v3182 = vpop.permute.xlu0 %3181
        %3183 = vrot.lane.b32.xlu0 %v3141, 1
        %v3184 = vpop.permute.xlu0 %3183
        %3185 = vrot.lane.b32.xlu0 %v3142, 1
        %v3186 = vpop.permute.xlu0 %3185
        %v3187 = vmul.f32 %v3180, %v381
        %v3188 = vmul.f32 %v3182, %v381
        %v3189 = vmul.f32 %v3184, %v381
        %v3190 = vmul.f32 %v3186, %v381
        %3191 = vrot.lane.b32.xlu0 %v3139, 127
        %v3192 = vpop.permute.xlu0 %3191
        %3193 = vrot.lane.b32.xlu0 %v3140, 127
        %v3194 = vpop.permute.xlu0 %3193
        %3195 = vrot.lane.b32.xlu0 %v3141, 127
        %v3196 = vpop.permute.xlu0 %3195
        %3197 = vrot.lane.b32.xlu0 %v3142, 127
        %v3198 = vpop.permute.xlu0 %3197
        %v3199 = vmul.f32 %v3192, %v387
        %v3200 = vmul.f32 %v3194, %v387
        %v3201 = vmul.f32 %v3196, %v387
        %v3202 = vmul.f32 %v3198, %v387
        %3203 = vrot.lane.b32.xlu0 %v3139, 125
        %v3204 = vpop.permute.xlu0 %3203
        %3205 = vrot.lane.b32.xlu0 %v3140, 125
        %v3206 = vpop.permute.xlu0 %3205
        %3207 = vrot.lane.b32.xlu0 %v3141, 125
        %v3208 = vpop.permute.xlu0 %3207
        %3209 = vrot.lane.b32.xlu0 %v3142, 125
        %v3210 = vpop.permute.xlu0 %3209
        %v3211 = vmul.f32 %v3204, %v399
        %v3212 = vmul.f32 %v3206, %v399
        %v3213 = vmul.f32 %v3208, %v399
        %v3214 = vmul.f32 %v3210, %v399
        %3215 = vrot.lane.b32.xlu0 %v3139, 123
        %v3216 = vpop.permute.xlu0 %3215
        %3217 = vrot.lane.b32.xlu0 %v3140, 123
        %v3218 = vpop.permute.xlu0 %3217
        %3219 = vrot.lane.b32.xlu0 %v3141, 123
        %v3220 = vpop.permute.xlu0 %3219
        %3221 = vrot.lane.b32.xlu0 %v3142, 123
        %v3222 = vpop.permute.xlu0 %3221
        %v3223 = vmul.f32 %v3216, %v411
        %v3224 = vmul.f32 %v3218, %v411
        %v3225 = vmul.f32 %v3220, %v411
        %v3226 = vmul.f32 %v3222, %v411
        %3228 = vset.pattern.permute.xlu0 0
        %3229 = vperm.xlu0 %3228, %v3151
        %v3230 = vpop.permute.xlu0 %3229
        %3233 = vset.pattern.permute.xlu0 0
        %3234 = vperm.xlu0 %3233, %v3152
        %v3235 = vpop.permute.xlu0 %3234
        %3238 = vset.pattern.permute.xlu0 0
        %3239 = vperm.xlu0 %3238, %v3153
        %v3240 = vpop.permute.xlu0 %3239
        %3243 = vset.pattern.permute.xlu0 0
        %3244 = vperm.xlu0 %3243, %v3154
        %v3245 = vpop.permute.xlu0 %3244
        %v3248 = vsel %vm650, %v3144, 0
        %v3251 = vsel %vm650, %v3146, 0
        %v3254 = vsel %vm650, %v3148, 0
        %v3257 = vsel %vm650, %v3150, 0
        %3259 = vmatprep.subr.mxu0 0.0
        %3260 = vmatpush1.msra.mxu0 %v3163
        %3261 = vmatprep.subr.mxu0 0.0
        %3262 = vmatpush1.msra.mxu0 %v3164
        %3263 = vmatprep.subr.mxu0 0.0
        %3264 = vmatpush1.msra.mxu0 %v3165
        %3265 = vmatprep.subr.mxu0 0.0
        %3266 = vmatpush1.msra.mxu0 %v3166
        %3267 = vmatprep.subr.mxu0 0.0
        %3268 = vmatpush1.msra.mxu0 %v3175
        %3269 = vmatprep.subr.mxu0 0.0
        %3270 = vmatpush1.msra.mxu0 %v3176
        %3271 = vmatprep.subr.mxu0 0.0
        %3272 = vmatpush1.msra.mxu0 %v3177
        %3273 = vmatprep.subr.mxu0 0.0
        %3274 = vmatpush1.msra.mxu0 %v3178
        %3275 = vmatprep.subr.mxu0 0.0
        %3276 = vmatpush1.msra.mxu0 %v3187
        %3277 = vmatprep.subr.mxu0 0.0
        %3278 = vmatpush1.msra.mxu0 %v3188
        %3279 = vmatprep.subr.mxu0 0.0
        %3280 = vmatpush1.msra.mxu0 %v3189
        %3281 = vmatprep.subr.mxu0 0.0
        %3282 = vmatpush1.msra.mxu0 %v3190
        %3283 = vmatprep.subr.mxu0 0.0
        %3284 = vmatpush1.msra.mxu0 %v3199
        %3285 = vmatprep.subr.mxu0 0.0
        %3286 = vmatpush1.msra.mxu0 %v3200
        %3287 = vmatprep.subr.mxu0 0.0
        %3288 = vmatpush1.msra.mxu0 %v3201
        %3289 = vmatprep.subr.mxu0 0.0
        %3290 = vmatpush1.msra.mxu0 %v3202
        %3291 = vmatprep.subr.mxu0 0.0
        %3292 = vmatpush1.msra.mxu0 %v3211
        %3293 = vmatprep.subr.mxu0 0.0
        %3294 = vmatpush1.msra.mxu0 %v3212
        %3295 = vmatprep.subr.mxu0 0.0
        %3296 = vmatpush1.msra.mxu0 %v3213
        %3297 = vmatprep.subr.mxu0 0.0
        %3298 = vmatpush1.msra.mxu0 %v3214
        %3299 = vmatprep.subr.mxu0 0.0
        %3300 = vmatpush1.msra.mxu0 %v3223
        %3301 = vmatprep.subr.mxu0 0.0
        %3302 = vmatpush1.msra.mxu0 %v3224
        %3303 = vmatprep.subr.mxu0 0.0
        %3304 = vmatpush1.msra.mxu0 %v3225
        %3305 = vmatprep.subr.mxu0 0.0
        %3306 = vmatpush1.msra.mxu0 %v3226
        %3307 = vmatprep.subr.mxu0 0.0
        %3308 = vmatpush1.msra.mxu0 0.0
        %3309 = vmatprep.subr.mxu0 0.0
        %3310 = vmatpush1.msra.mxu0 0.0
        %3311 = vmatprep.subr.mxu0 0.0
        %3312 = vmatpush1.msra.mxu0 0.0
        %3313 = vmatprep.subr.mxu0 0.0
        %3314 = vmatpush1.msra.mxu0 0.0
        %3315 = vmatprep.subr.mxu0 0.0
        %3316 = vmatpush1.msra.mxu0 0.0
        %3317 = vmatprep.subr.mxu0 0.0
        %3318 = vmatpush1.msra.mxu0 0.0
        %3319 = vmatprep.subr.mxu0 0.0
        %3320 = vmatpush1.msra.mxu0 0.0
        %3321 = vmatprep.subr.mxu0 0.0
        %3322 = vmatpush1.msra.mxu0 0.0
        %3323 = vmatprep.mubr.f32.mxu0 %v3248
        %3324 = vmatmul.mubr.f32.gmra.mrb[0].mxu0 %v3143
        %v3325 = vpop.f32.mrb[0].mxu0
        %v3326 = vadd.f32 %v3230, %v3325
        %v3327 = vpop.f32.mrb[0].mxu0
        %3328 = vmatprep.mubr.f32.mxu0 %v3251
        %3329 = vmatmul.mubr.f32.gmra.mrb[0].mxu0 %v3145
        %v3330 = vpop.f32.mrb[0].mxu0
        %v3331 = vadd.f32 %v3235, %v3330
        %v3332 = vpop.f32.mrb[0].mxu0
        %3333 = vmatprep.mubr.f32.mxu0 %v3254
        %3334 = vmatmul.mubr.f32.gmra.mrb[0].mxu0 %v3147
        %v3335 = vpop.f32.mrb[0].mxu0
        %v3336 = vadd.f32 %v3240, %v3335
        %v3337 = vpop.f32.mrb[0].mxu0
        %3338 = vmatprep.mubr.f32.mxu0 %v3257
        %3339 = vmatmul.mubr.f32.gmra.mrb[0].mxu0 %v3149
        %v3340 = vpop.f32.mrb[0].mxu0
        %v3341 = vadd.f32 %v3245, %v3340
        %v3342 = vpop.f32.mrb[0].mxu0
        %3343 = vdwg.mxu0
        %v3344 = vmax.f32 %v3326, 0.0
        %v3345 = vmax.f32 %v3331, 0.0
        %v3346 = vmax.f32 %v3336, 0.0
        %v3347 = vmax.f32 %v3341, 0.0
        %v3348 = vadd.f32 %v3344, %v3139
        %v3349 = vadd.f32 %v3345, %v3140
        %v3350 = vadd.f32 %v3346, %v3141
        %v3351 = vadd.f32 %v3347, %v3142
        %v3352 = vld [vmem:[%s756] sm:$0xff]
        %v3353 = vld [vmem:[%s756 + $0x8] sm:$0xff]
        %v3354 = vld [vmem:[%s756 + $0x10] sm:$0xff]
        %v3355 = vld [vmem:[%s756 + $0x18] sm:$0xff]
        %v3356 = vld [vmem:[%s756 + $0x20] sm:$0xff]
        %v3357 = vld [vmem:[%s756 + $0x28] sm:$0xff]
        %v3358 = vld [vmem:[%s756 + $0x30] sm:$0xff]
        %v3359 = vld [vmem:[%s756 + $0x38] sm:$0xff]
        %v3360 = vld [vmem:[%s765] sm:$0xff]
        %v3361 = vld [vmem:[%s765 + $0x8] sm:$0xff]
        %v3362 = vld [vmem:[%s765 + $0x10] sm:$0xff]
        %v3363 = vld [vmem:[%s765 + $0x18] sm:$0xff]
        %3364 = vrot.lane.b32.xlu0 %v3348, 10
        %v3365 = vpop.permute.xlu0 %3364
        %3366 = vrot.lane.b32.xlu0 %v3349, 10
        %v3367 = vpop.permute.xlu0 %3366
        %3368 = vrot.lane.b32.xlu0 %v3350, 10
        %v3369 = vpop.permute.xlu0 %3368
        %3370 = vrot.lane.b32.xlu0 %v3351, 10
        %v3371 = vpop.permute.xlu0 %3370
        %v3372 = vmul.f32 %v3365, %v780
        %v3373 = vmul.f32 %v3367, %v780
        %v3374 = vmul.f32 %v3369, %v780
        %v3375 = vmul.f32 %v3371, %v780
        %3376 = vrot.lane.b32.xlu0 %v3348, 6
        %v3377 = vpop.permute.xlu0 %3376
        %3378 = vrot.lane.b32.xlu0 %v3349, 6
        %v3379 = vpop.permute.xlu0 %3378
        %3380 = vrot.lane.b32.xlu0 %v3350, 6
        %v3381 = vpop.permute.xlu0 %3380
        %3382 = vrot.lane.b32.xlu0 %v3351, 6
        %v3383 = vpop.permute.xlu0 %3382
        %v3384 = vmul.f32 %v3377, %v795
        %v3385 = vmul.f32 %v3379, %v795
        %v3386 = vmul.f32 %v3381, %v795
        %v3387 = vmul.f32 %v3383, %v795
        %3388 = vrot.lane.b32.xlu0 %v3348, 2
        %v3389 = vpop.permute.xlu0 %3388
        %3390 = vrot.lane.b32.xlu0 %v3349, 2
        %v3391 = vpop.permute.xlu0 %3390
        %3392 = vrot.lane.b32.xlu0 %v3350, 2
        %v3393 = vpop.permute.xlu0 %3392
        %3394 = vrot.lane.b32.xlu0 %v3351, 2
        %v3395 = vpop.permute.xlu0 %3394
        %v3396 = vmul.f32 %v3389, %v375
        %v3397 = vmul.f32 %v3391, %v375
        %v3398 = vmul.f32 %v3393, %v375
        %v3399 = vmul.f32 %v3395, %v375
        %3400 = vrot.lane.b32.xlu0 %v3348, 126
        %v3401 = vpop.permute.xlu0 %3400
        %3402 = vrot.lane.b32.xlu0 %v3349, 126
        %v3403 = vpop.permute.xlu0 %3402
        %3404 = vrot.lane.b32.xlu0 %v3350, 126
        %v3405 = vpop.permute.xlu0 %3404
        %3406 = vrot.lane.b32.xlu0 %v3351, 126
        %v3407 = vpop.permute.xlu0 %3406
        %v3408 = vmul.f32 %v3401, %v393
        %v3409 = vmul.f32 %v3403, %v393
        %v3410 = vmul.f32 %v3405, %v393
        %v3411 = vmul.f32 %v3407, %v393
        %3412 = vrot.lane.b32.xlu0 %v3348, 122
        %v3413 = vpop.permute.xlu0 %3412
        %3414 = vrot.lane.b32.xlu0 %v3349, 122
        %v3415 = vpop.permute.xlu0 %3414
        %3416 = vrot.lane.b32.xlu0 %v3350, 122
        %v3417 = vpop.permute.xlu0 %3416
        %3418 = vrot.lane.b32.xlu0 %v3351, 122
        %v3419 = vpop.permute.xlu0 %3418
        %v3420 = vmul.f32 %v3413, %v417
        %v3421 = vmul.f32 %v3415, %v417
        %v3422 = vmul.f32 %v3417, %v417
        %v3423 = vmul.f32 %v3419, %v417
        %3424 = vrot.lane.b32.xlu0 %v3348, 118
        %v3425 = vpop.permute.xlu0 %3424
        %3426 = vrot.lane.b32.xlu0 %v3349, 118
        %v3427 = vpop.permute.xlu0 %3426
        %3428 = vrot.lane.b32.xlu0 %v3350, 118
        %v3429 = vpop.permute.xlu0 %3428
        %3430 = vrot.lane.b32.xlu0 %v3351, 118
        %v3431 = vpop.permute.xlu0 %3430
        %v3432 = vmul.f32 %v3425, %v846
        %v3433 = vmul.f32 %v3427, %v846
        %v3434 = vmul.f32 %v3429, %v846
        %v3435 = vmul.f32 %v3431, %v846
        %3437 = vset.pattern.permute.xlu0 0
        %3438 = vperm.xlu0 %3437, %v3360
        %v3439 = vpop.permute.xlu0 %3438
        %3442 = vset.pattern.permute.xlu0 0
        %3443 = vperm.xlu0 %3442, %v3361
        %v3444 = vpop.permute.xlu0 %3443
        %3447 = vset.pattern.permute.xlu0 0
        %3448 = vperm.xlu0 %3447, %v3362
        %v3449 = vpop.permute.xlu0 %3448
        %3452 = vset.pattern.permute.xlu0 0
        %3453 = vperm.xlu0 %3452, %v3363
        %v3454 = vpop.permute.xlu0 %3453
        %v3457 = vsel %vm650, %v3353, 0
        %v3460 = vsel %vm650, %v3355, 0
        %v3463 = vsel %vm650, %v3357, 0
        %v3466 = vsel %vm650, %v3359, 0
        %3468 = vmatprep.subr.mxu0 0.0
        %3469 = vmatpush1.msra.mxu0 %v3372
        %3470 = vmatprep.subr.mxu0 0.0
        %3471 = vmatpush1.msra.mxu0 %v3373
        %3472 = vmatprep.subr.mxu0 0.0
        %3473 = vmatpush1.msra.mxu0 %v3374
        %3474 = vmatprep.subr.mxu0 0.0
        %3475 = vmatpush1.msra.mxu0 %v3375
        %3476 = vmatprep.subr.mxu0 0.0
        %3477 = vmatpush1.msra.mxu0 %v3384
        %3478 = vmatprep.subr.mxu0 0.0
        %3479 = vmatpush1.msra.mxu0 %v3385
        %3480 = vmatprep.subr.mxu0 0.0
        %3481 = vmatpush1.msra.mxu0 %v3386
        %3482 = vmatprep.subr.mxu0 0.0
        %3483 = vmatpush1.msra.mxu0 %v3387
        %3484 = vmatprep.subr.mxu0 0.0
        %3485 = vmatpush1.msra.mxu0 %v3396
        %3486 = vmatprep.subr.mxu0 0.0
        %3487 = vmatpush1.msra.mxu0 %v3397
        %3488 = vmatprep.subr.mxu0 0.0
        %3489 = vmatpush1.msra.mxu0 %v3398
        %3490 = vmatprep.subr.mxu0 0.0
        %3491 = vmatpush1.msra.mxu0 %v3399
        %3492 = vmatprep.subr.mxu0 0.0
        %3493 = vmatpush1.msra.mxu0 %v3408
        %3494 = vmatprep.subr.mxu0 0.0
        %3495 = vmatpush1.msra.mxu0 %v3409
        %3496 = vmatprep.subr.mxu0 0.0
        %3497 = vmatpush1.msra.mxu0 %v3410
        %3498 = vmatprep.subr.mxu0 0.0
        %3499 = vmatpush1.msra.mxu0 %v3411
        %3500 = vmatprep.subr.mxu0 0.0
        %3501 = vmatpush1.msra.mxu0 %v3420
        %3502 = vmatprep.subr.mxu0 0.0
        %3503 = vmatpush1.msra.mxu0 %v3421
        %3504 = vmatprep.subr.mxu0 0.0
        %3505 = vmatpush1.msra.mxu0 %v3422
        %3506 = vmatprep.subr.mxu0 0.0
        %3507 = vmatpush1.msra.mxu0 %v3423
        %3508 = vmatprep.subr.mxu0 0.0
        %3509 = vmatpush1.msra.mxu0 %v3432
        %3510 = vmatprep.subr.mxu0 0.0
        %3511 = vmatpush1.msra.mxu0 %v3433
        %3512 = vmatprep.subr.mxu0 0.0
        %3513 = vmatpush1.msra.mxu0 %v3434
        %3514 = vmatprep.subr.mxu0 0.0
        %3515 = vmatpush1.msra.mxu0 %v3435
        %3516 = vmatprep.subr.mxu0 0.0
        %3517 = vmatpush1.msra.mxu0 0.0
        %3518 = vmatprep.subr.mxu0 0.0
        %3519 = vmatpush1.msra.mxu0 0.0
        %3520 = vmatprep.subr.mxu0 0.0
        %3521 = vmatpush1.msra.mxu0 0.0
        %3522 = vmatprep.subr.mxu0 0.0
        %3523 = vmatpush1.msra.mxu0 0.0
        %3524 = vmatprep.subr.mxu0 0.0
        %3525 = vmatpush1.msra.mxu0 0.0
        %3526 = vmatprep.subr.mxu0 0.0
        %3527 = vmatpush1.msra.mxu0 0.0
        %3528 = vmatprep.subr.mxu0 0.0
        %3529 = vmatpush1.msra.mxu0 0.0
        %3530 = vmatprep.subr.mxu0 0.0
        %3531 = vmatpush1.msra.mxu0 0.0
        %3532 = vmatprep.mubr.f32.mxu0 %v3457
        %3533 = vmatmul.mubr.f32.gmra.mrb[0].mxu0 %v3352
        %v3534 = vpop.f32.mrb[0].mxu0
        %v3535 = vadd.f32 %v3439, %v3534
        %v3536 = vpop.f32.mrb[0].mxu0
        %3537 = vmatprep.mubr.f32.mxu0 %v3460
        %3538 = vmatmul.mubr.f32.gmra.mrb[0].mxu0 %v3354
        %v3539 = vpop.f32.mrb[0].mxu0
        %v3540 = vadd.f32 %v3444, %v3539
        %v3541 = vpop.f32.mrb[0].mxu0
        %3542 = vmatprep.mubr.f32.mxu0 %v3463
        %3543 = vmatmul.mubr.f32.gmra.mrb[0].mxu0 %v3356
        %v3544 = vpop.f32.mrb[0].mxu0
        %v3545 = vadd.f32 %v3449, %v3544
        %v3546 = vpop.f32.mrb[0].mxu0
        %3547 = vmatprep.mubr.f32.mxu0 %v3466
        %3548 = vmatmul.mubr.f32.gmra.mrb[0].mxu0 %v3358
        %v3549 = vpop.f32.mrb[0].mxu0
        %v3550 = vadd.f32 %v3454, %v3549
        %v3551 = vpop.f32.mrb[0].mxu0
        %3552 = vdwg.mxu0
        %v3553 = vmax.f32 %v3535, 0.0
        %v3554 = vmax.f32 %v3540, 0.0
        %v3555 = vmax.f32 %v3545, 0.0
        %v3556 = vmax.f32 %v3550, 0.0
        %v3557 = vadd.f32 %v3553, %v3348
        %v3558 = vadd.f32 %v3554, %v3349
        %v3559 = vadd.f32 %v3555, %v3350
        %v3560 = vadd.f32 %v3556, %v3351
        %v3561 = vld [vmem:[%s976] sm:$0xff]
        %v3562 = vld [vmem:[%s976 + $0x8] sm:$0xff]
        %v3563 = vld [vmem:[%s976 + $0x10] sm:$0xff]
        %v3564 = vld [vmem:[%s976 + $0x18] sm:$0xff]
        %v3565 = vld [vmem:[%s976 + $0x20] sm:$0xff]
        %v3566 = vld [vmem:[%s976 + $0x28] sm:$0xff]
        %v3567 = vld [vmem:[%s976 + $0x30] sm:$0xff]
        %v3568 = vld [vmem:[%s976 + $0x38] sm:$0xff]
        %v3569 = vld [vmem:[%s985] sm:$0xff]
        %v3570 = vld [vmem:[%s985 + $0x8] sm:$0xff]
        %v3571 = vld [vmem:[%s985 + $0x10] sm:$0xff]
        %v3572 = vld [vmem:[%s985 + $0x18] sm:$0xff]
        %3573 = vrot.lane.b32.xlu0 %v3557, 20
        %v3574 = vpop.permute.xlu0 %3573
        %3575 = vrot.lane.b32.xlu0 %v3558, 20
        %v3576 = vpop.permute.xlu0 %3575
        %3577 = vrot.lane.b32.xlu0 %v3559, 20
        %v3578 = vpop.permute.xlu0 %3577
        %3579 = vrot.lane.b32.xlu0 %v3560, 20
        %v3580 = vpop.permute.xlu0 %3579
        %v3581 = vmul.f32 %v3574, %v1000
        %v3582 = vmul.f32 %v3576, %v1000
        %v3583 = vmul.f32 %v3578, %v1000
        %v3584 = vmul.f32 %v3580, %v1000
        %3585 = vrot.lane.b32.xlu0 %v3557, 12
        %v3586 = vpop.permute.xlu0 %3585
        %3587 = vrot.lane.b32.xlu0 %v3558, 12
        %v3588 = vpop.permute.xlu0 %3587
        %3589 = vrot.lane.b32.xlu0 %v3559, 12
        %v3590 = vpop.permute.xlu0 %3589
        %3591 = vrot.lane.b32.xlu0 %v3560, 12
        %v3592 = vpop.permute.xlu0 %3591
        %v3593 = vmul.f32 %v3586, %v1015
        %v3594 = vmul.f32 %v3588, %v1015
        %v3595 = vmul.f32 %v3590, %v1015
        %v3596 = vmul.f32 %v3592, %v1015
        %3597 = vrot.lane.b32.xlu0 %v3557, 4
        %v3598 = vpop.permute.xlu0 %3597
        %3599 = vrot.lane.b32.xlu0 %v3558, 4
        %v3600 = vpop.permute.xlu0 %3599
        %3601 = vrot.lane.b32.xlu0 %v3559, 4
        %v3602 = vpop.permute.xlu0 %3601
        %3603 = vrot.lane.b32.xlu0 %v3560, 4
        %v3604 = vpop.permute.xlu0 %3603
        %v3605 = vmul.f32 %v3598, %v363
        %v3606 = vmul.f32 %v3600, %v363
        %v3607 = vmul.f32 %v3602, %v363
        %v3608 = vmul.f32 %v3604, %v363
        %3609 = vrot.lane.b32.xlu0 %v3557, 124
        %v3610 = vpop.permute.xlu0 %3609
        %3611 = vrot.lane.b32.xlu0 %v3558, 124
        %v3612 = vpop.permute.xlu0 %3611
        %3613 = vrot.lane.b32.xlu0 %v3559, 124
        %v3614 = vpop.permute.xlu0 %3613
        %3615 = vrot.lane.b32.xlu0 %v3560, 124
        %v3616 = vpop.permute.xlu0 %3615
        %v3617 = vmul.f32 %v3610, %v405
        %v3618 = vmul.f32 %v3612, %v405
        %v3619 = vmul.f32 %v3614, %v405
        %v3620 = vmul.f32 %v3616, %v405
        %3621 = vrot.lane.b32.xlu0 %v3557, 116
        %v3622 = vpop.permute.xlu0 %3621
        %3623 = vrot.lane.b32.xlu0 %v3558, 116
        %v3624 = vpop.permute.xlu0 %3623
        %3625 = vrot.lane.b32.xlu0 %v3559, 116
        %v3626 = vpop.permute.xlu0 %3625
        %3627 = vrot.lane.b32.xlu0 %v3560, 116
        %v3628 = vpop.permute.xlu0 %3627
        %v3629 = vmul.f32 %v3622, %v1054
        %v3630 = vmul.f32 %v3624, %v1054
        %v3631 = vmul.f32 %v3626, %v1054
        %v3632 = vmul.f32 %v3628, %v1054
        %3633 = vrot.lane.b32.xlu0 %v3557, 108
        %v3634 = vpop.permute.xlu0 %3633
        %3635 = vrot.lane.b32.xlu0 %v3558, 108
        %v3636 = vpop.permute.xlu0 %3635
        %3637 = vrot.lane.b32.xlu0 %v3559, 108
        %v3638 = vpop.permute.xlu0 %3637
        %3639 = vrot.lane.b32.xlu0 %v3560, 108
        %v3640 = vpop.permute.xlu0 %3639
        %v3641 = vmul.f32 %v3634, %v1069
        %v3642 = vmul.f32 %v3636, %v1069
        %v3643 = vmul.f32 %v3638, %v1069
        %v3644 = vmul.f32 %v3640, %v1069
        %3646 = vset.pattern.permute.xlu0 0
        %3647 = vperm.xlu0 %3646, %v3569
        %v3648 = vpop.permute.xlu0 %3647
        %3651 = vset.pattern.permute.xlu0 0
        %3652 = vperm.xlu0 %3651, %v3570
        %v3653 = vpop.permute.xlu0 %3652
        %3656 = vset.pattern.permute.xlu0 0
        %3657 = vperm.xlu0 %3656, %v3571
        %v3658 = vpop.permute.xlu0 %3657
        %3661 = vset.pattern.permute.xlu0 0
        %3662 = vperm.xlu0 %3661, %v3572
        %v3663 = vpop.permute.xlu0 %3662
        %v3666 = vsel %vm650, %v3562, 0
        %v3669 = vsel %vm650, %v3564, 0
        %v3672 = vsel %vm650, %v3566, 0
        %v3675 = vsel %vm650, %v3568, 0
        %3677 = vmatprep.subr.mxu0 0.0
        %3678 = vmatpush1.msra.mxu0 %v3581
        %3679 = vmatprep.subr.mxu0 0.0
        %3680 = vmatpush1.msra.mxu0 %v3582
        %3681 = vmatprep.subr.mxu0 0.0
        %3682 = vmatpush1.msra.mxu0 %v3583
        %3683 = vmatprep.subr.mxu0 0.0
        %3684 = vmatpush1.msra.mxu0 %v3584
        %3685 = vmatprep.subr.mxu0 0.0
        %3686 = vmatpush1.msra.mxu0 %v3593
        %3687 = vmatprep.subr.mxu0 0.0
        %3688 = vmatpush1.msra.mxu0 %v3594
        %3689 = vmatprep.subr.mxu0 0.0
        %3690 = vmatpush1.msra.mxu0 %v3595
        %3691 = vmatprep.subr.mxu0 0.0
        %3692 = vmatpush1.msra.mxu0 %v3596
        %3693 = vmatprep.subr.mxu0 0.0
        %3694 = vmatpush1.msra.mxu0 %v3605
        %3695 = vmatprep.subr.mxu0 0.0
        %3696 = vmatpush1.msra.mxu0 %v3606
        %3697 = vmatprep.subr.mxu0 0.0
        %3698 = vmatpush1.msra.mxu0 %v3607
        %3699 = vmatprep.subr.mxu0 0.0
        %3700 = vmatpush1.msra.mxu0 %v3608
        %3701 = vmatprep.subr.mxu0 0.0
        %3702 = vmatpush1.msra.mxu0 %v3617
        %3703 = vmatprep.subr.mxu0 0.0
        %3704 = vmatpush1.msra.mxu0 %v3618
        %3705 = vmatprep.subr.mxu0 0.0
        %3706 = vmatpush1.msra.mxu0 %v3619
        %3707 = vmatprep.subr.mxu0 0.0
        %3708 = vmatpush1.msra.mxu0 %v3620
        %3709 = vmatprep.subr.mxu0 0.0
        %3710 = vmatpush1.msra.mxu0 %v3629
        %3711 = vmatprep.subr.mxu0 0.0
        %3712 = vmatpush1.msra.mxu0 %v3630
        %3713 = vmatprep.subr.mxu0 0.0
        %3714 = vmatpush1.msra.mxu0 %v3631
        %3715 = vmatprep.subr.mxu0 0.0
        %3716 = vmatpush1.msra.mxu0 %v3632
        %3717 = vmatprep.subr.mxu0 0.0
        %3718 = vmatpush1.msra.mxu0 %v3641
        %3719 = vmatprep.subr.mxu0 0.0
        %3720 = vmatpush1.msra.mxu0 %v3642
        %3721 = vmatprep.subr.mxu0 0.0
        %3722 = vmatpush1.msra.mxu0 %v3643
        %3723 = vmatprep.subr.mxu0 0.0
        %3724 = vmatpush1.msra.mxu0 %v3644
        %3725 = vmatprep.subr.mxu0 0.0
        %3726 = vmatpush1.msra.mxu0 0.0
        %3727 = vmatprep.subr.mxu0 0.0
        %3728 = vmatpush1.msra.mxu0 0.0
        %3729 = vmatprep.subr.mxu0 0.0
        %3730 = vmatpush1.msra.mxu0 0.0
        %3731 = vmatprep.subr.mxu0 0.0
        %3732 = vmatpush1.msra.mxu0 0.0
        %3733 = vmatprep.subr.mxu0 0.0
        %3734 = vmatpush1.msra.mxu0 0.0
        %3735 = vmatprep.subr.mxu0 0.0
        %3736 = vmatpush1.msra.mxu0 0.0
        %3737 = vmatprep.subr.mxu0 0.0
        %3738 = vmatpush1.msra.mxu0 0.0
        %3739 = vmatprep.subr.mxu0 0.0
        %3740 = vmatpush1.msra.mxu0 0.0
        %3741 = vmatprep.mubr.f32.mxu0 %v3666
        %3742 = vmatmul.mubr.f32.gmra.mrb[0].mxu0 %v3561
        %v3743 = vpop.f32.mrb[0].mxu0
        %v3744 = vadd.f32 %v3648, %v3743
        %v3745 = vpop.f32.mrb[0].mxu0
        %3746 = vmatprep.mubr.f32.mxu0 %v3669
        %3747 = vmatmul.mubr.f32.gmra.mrb[0].mxu0 %v3563
        %v3748 = vpop.f32.mrb[0].mxu0
        %v3749 = vadd.f32 %v3653, %v3748
        %v3750 = vpop.f32.mrb[0].mxu0
        %3751 = vmatprep.mubr.f32.mxu0 %v3672
        %3752 = vmatmul.mubr.f32.gmra.mrb[0].mxu0 %v3565
        %v3753 = vpop.f32.mrb[0].mxu0
        %v3754 = vadd.f32 %v3658, %v3753
        %v3755 = vpop.f32.mrb[0].mxu0
        %3756 = vmatprep.mubr.f32.mxu0 %v3675
        %3757 = vmatmul.mubr.f32.gmra.mrb[0].mxu0 %v3567
        %v3758 = vpop.f32.mrb[0].mxu0
        %v3759 = vadd.f32 %v3663, %v3758
        %v3760 = vpop.f32.mrb[0].mxu0
        %3761 = vdwg.mxu0
        %v3762 = vmax.f32 %v3744, 0.0
        %v3763 = vmax.f32 %v3749, 0.0
        %v3764 = vmax.f32 %v3754, 0.0
        %v3765 = vmax.f32 %v3759, 0.0
        %v3766 = vadd.f32 %v3762, %v3557
        %v3767 = vadd.f32 %v3763, %v3558
        %v3768 = vadd.f32 %v3764, %v3559
        %v3769 = vadd.f32 %v3765, %v3560
        %v3770 = vmul.f32 %v1202, %v3766
        %v3771 = vmul.f32 %v1207, %v3767
        %v3772 = vmul.f32 %v1212, %v3768
        %v3773 = vmul.f32 %v1217, %v3769
        %3774 = vadd.xlane.f32.xlu0 %v3770
        %v3775 = vpop.xlane.xlu0 %3774
        %3776 = vadd.xlane.f32.xlu0 %v3771
        %v3777 = vpop.xlane.xlu0 %3776
        %3778 = vadd.xlane.f32.xlu0 %v3772
        %v3779 = vpop.xlane.xlu0 %3778
        %3780 = vadd.xlane.f32.xlu0 %v3773
        %v3781 = vpop.xlane.xlu0 %3780
        %v3782 = vadd.f32 %v3775, %v3777
        %v3783 = vadd.f32 %v3782, %v3779
        %v3784 = vadd.f32 %v3783, %v3781
        %v3785 = vrot.slane %v3784, 4
        %v3786 = vadd.f32 %v3784, %v3785
        %v3787 = vrot.slane %v3786, 2
        %v3788 = vadd.f32 %v3786, %v3787
        %v3789 = vrot.slane %v3788, 1
        %v3790 = vadd.f32 %v3788, %v3789
        %v3791 = vmul.f32 %v3790, 0.0078125
        %v3792 = vadd.f32 %v3791, %v1241
        %v3793 = vld [vmem:[%s5] sm:$0x3]
        %v3795 = vsel %vm1244, %v3793, 0
        %3797 = vmatprep.subr.mxu0 0.0
        %3798 = vmatpush1.msra.mxu0 %v3766
        %3799 = vmatprep.subr.mxu0 0.0
        %3800 = vmatpush1.msra.mxu0 %v3767
        %3801 = vmatprep.subr.mxu0 0.0
        %3802 = vmatpush1.msra.mxu0 %v3768
        %3803 = vmatprep.subr.mxu0 0.0
        %3804 = vmatpush1.msra.mxu0 %v3769
        %3805 = vmatprep.subr.mxu0 0.0
        %3806 = vmatpush1.msra.mxu0 0.0
        %3807 = vmatprep.subr.mxu0 0.0
        %3808 = vmatpush1.msra.mxu0 0.0
        %3809 = vmatprep.subr.mxu0 0.0
        %3810 = vmatpush1.msra.mxu0 0.0
        %3811 = vmatprep.subr.mxu0 0.0
        %3812 = vmatpush1.msra.mxu0 0.0
        %3813 = vmatprep.subr.mxu0 0.0
        %3814 = vmatpush1.msra.mxu0 0.0
        %3815 = vmatprep.subr.mxu0 0.0
        %3816 = vmatpush1.msra.mxu0 0.0
        %3817 = vmatprep.subr.mxu0 0.0
        %3818 = vmatpush1.msra.mxu0 0.0
        %3819 = vmatprep.subr.mxu0 0.0
        %3820 = vmatpush1.msra.mxu0 0.0
        %3821 = vmatprep.subr.mxu0 0.0
        %3822 = vmatpush1.msra.mxu0 0.0
        %3823 = vmatprep.subr.mxu0 0.0
        %3824 = vmatpush1.msra.mxu0 0.0
        %3825 = vmatprep.subr.mxu0 0.0
        %3826 = vmatpush1.msra.mxu0 0.0
        %3827 = vmatprep.subr.mxu0 0.0
        %3828 = vmatpush1.msra.mxu0 0.0
        %3829 = vmatprep.subr.mxu0 0.0
        %3830 = vmatpush1.msra.mxu0 0.0
        %3831 = vmatprep.subr.mxu0 0.0
        %3832 = vmatpush1.msra.mxu0 0.0
        %3833 = vmatprep.subr.mxu0 0.0
        %3834 = vmatpush1.msra.mxu0 0.0
        %3835 = vmatprep.subr.mxu0 0.0
        %3836 = vmatpush1.msra.mxu0 0.0
        %3837 = vmatprep.subr.mxu0 0.0
        %3838 = vmatpush1.msra.mxu0 0.0
        %3839 = vmatprep.subr.mxu0 0.0
        %3840 = vmatpush1.msra.mxu0 0.0
        %3841 = vmatprep.subr.mxu0 0.0
        %3842 = vmatpush1.msra.mxu0 0.0
        %3843 = vmatprep.subr.mxu0 0.0
        %3844 = vmatpush1.msra.mxu0 0.0
        %3845 = vmatprep.subr.mxu0 0.0
        %3846 = vmatpush1.msra.mxu0 0.0
        %3847 = vmatprep.subr.mxu0 0.0
        %3848 = vmatpush1.msra.mxu0 0.0
        %3849 = vmatprep.subr.mxu0 0.0
        %3850 = vmatpush1.msra.mxu0 0.0
        %3851 = vmatprep.subr.mxu0 0.0
        %3852 = vmatpush1.msra.mxu0 0.0
        %3853 = vmatprep.subr.mxu0 0.0
        %3854 = vmatpush1.msra.mxu0 0.0
        %3855 = vmatprep.subr.mxu0 0.0
        %3856 = vmatpush1.msra.mxu0 0.0
        %3857 = vmatprep.subr.mxu0 0.0
        %3858 = vmatpush1.msra.mxu0 0.0
        %3859 = vmatprep.subr.mxu0 0.0
        %3860 = vmatpush1.msra.mxu0 0.0
        %3861 = vmatprep.mubr.f32.mxu0 0.0
        %3862 = vmatmul.mubr.f32.gmra.mrb[0].mxu0 %v3795
        %v3863 = vpop.f32.mrb[0].mxu0
        %v3864 = vadd.f32 0.0, %v3863
        %v3865 = vpop.f32.mrb[0].mxu0
        %3866 = vdwg.mxu0
        %3867 = vrot.lane.b32.xlu0 %v3864, 10
        %v3868 = vpop.permute.xlu0 %3867
        %v3869 = vmul.f32 %v3868, %v780
        %v3870 = vadd.f32 %v3869, 0.0
        %v3871 = vld [vmem:[%s1322] sm:$0x3]
        %v3873 = vsel %vm1244, %v3871, 0
        %3875 = vmatprep.subr.mxu0 0.0
        %3876 = vmatpush1.msra.mxu0 %v3766
        %3877 = vmatprep.subr.mxu0 0.0
        %3878 = vmatpush1.msra.mxu0 %v3767
        %3879 = vmatprep.subr.mxu0 0.0
        %3880 = vmatpush1.msra.mxu0 %v3768
        %3881 = vmatprep.subr.mxu0 0.0
        %3882 = vmatpush1.msra.mxu0 %v3769
        %3883 = vmatprep.subr.mxu0 0.0
        %3884 = vmatpush1.msra.mxu0 0.0
        %3885 = vmatprep.subr.mxu0 0.0
        %3886 = vmatpush1.msra.mxu0 0.0
        %3887 = vmatprep.subr.mxu0 0.0
        %3888 = vmatpush1.msra.mxu0 0.0
        %3889 = vmatprep.subr.mxu0 0.0
        %3890 = vmatpush1.msra.mxu0 0.0
        %3891 = vmatprep.subr.mxu0 0.0
        %3892 = vmatpush1.msra.mxu0 0.0
        %3893 = vmatprep.subr.mxu0 0.0
        %3894 = vmatpush1.msra.mxu0 0.0
        %3895 = vmatprep.subr.mxu0 0.0
        %3896 = vmatpush1.msra.mxu0 0.0
        %3897 = vmatprep.subr.mxu0 0.0
        %3898 = vmatpush1.msra.mxu0 0.0
        %3899 = vmatprep.subr.mxu0 0.0
        %3900 = vmatpush1.msra.mxu0 0.0
        %3901 = vmatprep.subr.mxu0 0.0
        %3902 = vmatpush1.msra.mxu0 0.0
        %3903 = vmatprep.subr.mxu0 0.0
        %3904 = vmatpush1.msra.mxu0 0.0
        %3905 = vmatprep.subr.mxu0 0.0
        %3906 = vmatpush1.msra.mxu0 0.0
        %3907 = vmatprep.subr.mxu0 0.0
        %3908 = vmatpush1.msra.mxu0 0.0
        %3909 = vmatprep.subr.mxu0 0.0
        %3910 = vmatpush1.msra.mxu0 0.0
        %3911 = vmatprep.subr.mxu0 0.0
        %3912 = vmatpush1.msra.mxu0 0.0
        %3913 = vmatprep.subr.mxu0 0.0
        %3914 = vmatpush1.msra.mxu0 0.0
        %3915 = vmatprep.subr.mxu0 0.0
        %3916 = vmatpush1.msra.mxu0 0.0
        %3917 = vmatprep.subr.mxu0 0.0
        %3918 = vmatpush1.msra.mxu0 0.0
        %3919 = vmatprep.subr.mxu0 0.0
        %3920 = vmatpush1.msra.mxu0 0.0
        %3921 = vmatprep.subr.mxu0 0.0
        %3922 = vmatpush1.msra.mxu0 0.0
        %3923 = vmatprep.subr.mxu0 0.0
        %3924 = vmatpush1.msra.mxu0 0.0
        %3925 = vmatprep.subr.mxu0 0.0
        %3926 = vmatpush1.msra.mxu0 0.0
        %3927 = vmatprep.subr.mxu0 0.0
        %3928 = vmatpush1.msra.mxu0 0.0
        %3929 = vmatprep.subr.mxu0 0.0
        %3930 = vmatpush1.msra.mxu0 0.0
        %3931 = vmatprep.subr.mxu0 0.0
        %3932 = vmatpush1.msra.mxu0 0.0
        %3933 = vmatprep.subr.mxu0 0.0
        %3934 = vmatpush1.msra.mxu0 0.0
        %3935 = vmatprep.subr.mxu0 0.0
        %3936 = vmatpush1.msra.mxu0 0.0
        %3937 = vmatprep.subr.mxu0 0.0
        %3938 = vmatpush1.msra.mxu0 0.0
        %3939 = vmatprep.mubr.f32.mxu0 0.0
        %3940 = vmatmul.mubr.f32.gmra.mrb[0].mxu0 %v3873
        %v3941 = vpop.f32.mrb[0].mxu0
        %v3942 = vadd.f32 0.0, %v3941
        %v3943 = vpop.f32.mrb[0].mxu0
        %3944 = vdwg.mxu0
        %3945 = vrot.lane.b32.xlu0 %v3942, 9
        %v3946 = vpop.permute.xlu0 %3945
        %v3947 = vmul.f32 %v3946, %v1401
        %v3948 = vadd.f32 %v3870, %v3947
        %v3949 = vld [vmem:[%s1404] sm:$0x3]
        %v3951 = vsel %vm1244, %v3949, 0
        %3953 = vmatprep.subr.mxu0 0.0
        %3954 = vmatpush1.msra.mxu0 %v3766
        %3955 = vmatprep.subr.mxu0 0.0
        %3956 = vmatpush1.msra.mxu0 %v3767
        %3957 = vmatprep.subr.mxu0 0.0
        %3958 = vmatpush1.msra.mxu0 %v3768
        %3959 = vmatprep.subr.mxu0 0.0
        %3960 = vmatpush1.msra.mxu0 %v3769
        %3961 = vmatprep.subr.mxu0 0.0
        %3962 = vmatpush1.msra.mxu0 0.0
        %3963 = vmatprep.subr.mxu0 0.0
        %3964 = vmatpush1.msra.mxu0 0.0
        %3965 = vmatprep.subr.mxu0 0.0
        %3966 = vmatpush1.msra.mxu0 0.0
        %3967 = vmatprep.subr.mxu0 0.0
        %3968 = vmatpush1.msra.mxu0 0.0
        %3969 = vmatprep.subr.mxu0 0.0
        %3970 = vmatpush1.msra.mxu0 0.0
        %3971 = vmatprep.subr.mxu0 0.0
        %3972 = vmatpush1.msra.mxu0 0.0
        %3973 = vmatprep.subr.mxu0 0.0
        %3974 = vmatpush1.msra.mxu0 0.0
        %3975 = vmatprep.subr.mxu0 0.0
        %3976 = vmatpush1.msra.mxu0 0.0
        %3977 = vmatprep.subr.mxu0 0.0
        %3978 = vmatpush1.msra.mxu0 0.0
        %3979 = vmatprep.subr.mxu0 0.0
        %3980 = vmatpush1.msra.mxu0 0.0
        %3981 = vmatprep.subr.mxu0 0.0
        %3982 = vmatpush1.msra.mxu0 0.0
        %3983 = vmatprep.subr.mxu0 0.0
        %3984 = vmatpush1.msra.mxu0 0.0
        %3985 = vmatprep.subr.mxu0 0.0
        %3986 = vmatpush1.msra.mxu0 0.0
        %3987 = vmatprep.subr.mxu0 0.0
        %3988 = vmatpush1.msra.mxu0 0.0
        %3989 = vmatprep.subr.mxu0 0.0
        %3990 = vmatpush1.msra.mxu0 0.0
        %3991 = vmatprep.subr.mxu0 0.0
        %3992 = vmatpush1.msra.mxu0 0.0
        %3993 = vmatprep.subr.mxu0 0.0
        %3994 = vmatpush1.msra.mxu0 0.0
        %3995 = vmatprep.subr.mxu0 0.0
        %3996 = vmatpush1.msra.mxu0 0.0
        %3997 = vmatprep.subr.mxu0 0.0
        %3998 = vmatpush1.msra.mxu0 0.0
        %3999 = vmatprep.subr.mxu0 0.0
        %4000 = vmatpush1.msra.mxu0 0.0
        %4001 = vmatprep.subr.mxu0 0.0
        %4002 = vmatpush1.msra.mxu0 0.0
        %4003 = vmatprep.subr.mxu0 0.0
        %4004 = vmatpush1.msra.mxu0 0.0
        %4005 = vmatprep.subr.mxu0 0.0
        %4006 = vmatpush1.msra.mxu0 0.0
        %4007 = vmatprep.subr.mxu0 0.0
        %4008 = vmatpush1.msra.mxu0 0.0
        %4009 = vmatprep.subr.mxu0 0.0
        %4010 = vmatpush1.msra.mxu0 0.0
        %4011 = vmatprep.subr.mxu0 0.0
        %4012 = vmatpush1.msra.mxu0 0.0
        %4013 = vmatprep.subr.mxu0 0.0
        %4014 = vmatpush1.msra.mxu0 0.0
        %4015 = vmatprep.subr.mxu0 0.0
        %4016 = vmatpush1.msra.mxu0 0.0
        %4017 = vmatprep.mubr.f32.mxu0 0.0
        %4018 = vmatmul.mubr.f32.gmra.mrb[0].mxu0 %v3951
        %v4019 = vpop.f32.mrb[0].mxu0
        %v4020 = vadd.f32 0.0, %v4019
        %v4021 = vpop.f32.mrb[0].mxu0
        %4022 = vdwg.mxu0
        %4023 = vrot.lane.b32.xlu0 %v4020, 8
        %v4024 = vpop.permute.xlu0 %4023
        %v4025 = vmul.f32 %v4024, %v1483
        %v4026 = vadd.f32 %v3948, %v4025
        %v4027 = vld [vmem:[%s1486] sm:$0x3]
        %v4029 = vsel %vm1244, %v4027, 0
        %4031 = vmatprep.subr.mxu0 0.0
        %4032 = vmatpush1.msra.mxu0 %v3766
        %4033 = vmatprep.subr.mxu0 0.0
        %4034 = vmatpush1.msra.mxu0 %v3767
        %4035 = vmatprep.subr.mxu0 0.0
        %4036 = vmatpush1.msra.mxu0 %v3768
        %4037 = vmatprep.subr.mxu0 0.0
        %4038 = vmatpush1.msra.mxu0 %v3769
        %4039 = vmatprep.subr.mxu0 0.0
        %4040 = vmatpush1.msra.mxu0 0.0
        %4041 = vmatprep.subr.mxu0 0.0
        %4042 = vmatpush1.msra.mxu0 0.0
        %4043 = vmatprep.subr.mxu0 0.0
        %4044 = vmatpush1.msra.mxu0 0.0
        %4045 = vmatprep.subr.mxu0 0.0
        %4046 = vmatpush1.msra.mxu0 0.0
        %4047 = vmatprep.subr.mxu0 0.0
        %4048 = vmatpush1.msra.mxu0 0.0
        %4049 = vmatprep.subr.mxu0 0.0
        %4050 = vmatpush1.msra.mxu0 0.0
        %4051 = vmatprep.subr.mxu0 0.0
        %4052 = vmatpush1.msra.mxu0 0.0
        %4053 = vmatprep.subr.mxu0 0.0
        %4054 = vmatpush1.msra.mxu0 0.0
        %4055 = vmatprep.subr.mxu0 0.0
        %4056 = vmatpush1.msra.mxu0 0.0
        %4057 = vmatprep.subr.mxu0 0.0
        %4058 = vmatpush1.msra.mxu0 0.0
        %4059 = vmatprep.subr.mxu0 0.0
        %4060 = vmatpush1.msra.mxu0 0.0
        %4061 = vmatprep.subr.mxu0 0.0
        %4062 = vmatpush1.msra.mxu0 0.0
        %4063 = vmatprep.subr.mxu0 0.0
        %4064 = vmatpush1.msra.mxu0 0.0
        %4065 = vmatprep.subr.mxu0 0.0
        %4066 = vmatpush1.msra.mxu0 0.0
        %4067 = vmatprep.subr.mxu0 0.0
        %4068 = vmatpush1.msra.mxu0 0.0
        %4069 = vmatprep.subr.mxu0 0.0
        %4070 = vmatpush1.msra.mxu0 0.0
        %4071 = vmatprep.subr.mxu0 0.0
        %4072 = vmatpush1.msra.mxu0 0.0
        %4073 = vmatprep.subr.mxu0 0.0
        %4074 = vmatpush1.msra.mxu0 0.0
        %4075 = vmatprep.subr.mxu0 0.0
        %4076 = vmatpush1.msra.mxu0 0.0
        %4077 = vmatprep.subr.mxu0 0.0
        %4078 = vmatpush1.msra.mxu0 0.0
        %4079 = vmatprep.subr.mxu0 0.0
        %4080 = vmatpush1.msra.mxu0 0.0
        %4081 = vmatprep.subr.mxu0 0.0
        %4082 = vmatpush1.msra.mxu0 0.0
        %4083 = vmatprep.subr.mxu0 0.0
        %4084 = vmatpush1.msra.mxu0 0.0
        %4085 = vmatprep.subr.mxu0 0.0
        %4086 = vmatpush1.msra.mxu0 0.0
        %4087 = vmatprep.subr.mxu0 0.0
        %4088 = vmatpush1.msra.mxu0 0.0
        %4089 = vmatprep.subr.mxu0 0.0
        %4090 = vmatpush1.msra.mxu0 0.0
        %4091 = vmatprep.subr.mxu0 0.0
        %4092 = vmatpush1.msra.mxu0 0.0
        %4093 = vmatprep.subr.mxu0 0.0
        %4094 = vmatpush1.msra.mxu0 0.0
        %4095 = vmatprep.mubr.f32.mxu0 0.0
        %4096 = vmatmul.mubr.f32.gmra.mrb[0].mxu0 %v4029
        %v4097 = vpop.f32.mrb[0].mxu0
        %v4098 = vadd.f32 0.0, %v4097
        %v4099 = vpop.f32.mrb[0].mxu0
        %4100 = vdwg.mxu0
        %4101 = vrot.lane.b32.xlu0 %v4098, 7
        %v4102 = vpop.permute.xlu0 %4101
        %v4103 = vmul.f32 %v4102, %v1565
        %v4104 = vadd.f32 %v4026, %v4103
        %v4105 = vld [vmem:[%s1568] sm:$0x3]
        %v4107 = vsel %vm1244, %v4105, 0
        %4109 = vmatprep.subr.mxu0 0.0
        %4110 = vmatpush1.msra.mxu0 %v3766
        %4111 = vmatprep.subr.mxu0 0.0
        %4112 = vmatpush1.msra.mxu0 %v3767
        %4113 = vmatprep.subr.mxu0 0.0
        %4114 = vmatpush1.msra.mxu0 %v3768
        %4115 = vmatprep.subr.mxu0 0.0
        %4116 = vmatpush1.msra.mxu0 %v3769
        %4117 = vmatprep.subr.mxu0 0.0
        %4118 = vmatpush1.msra.mxu0 0.0
        %4119 = vmatprep.subr.mxu0 0.0
        %4120 = vmatpush1.msra.mxu0 0.0
        %4121 = vmatprep.subr.mxu0 0.0
        %4122 = vmatpush1.msra.mxu0 0.0
        %4123 = vmatprep.subr.mxu0 0.0
        %4124 = vmatpush1.msra.mxu0 0.0
        %4125 = vmatprep.subr.mxu0 0.0
        %4126 = vmatpush1.msra.mxu0 0.0
        %4127 = vmatprep.subr.mxu0 0.0
        %4128 = vmatpush1.msra.mxu0 0.0
        %4129 = vmatprep.subr.mxu0 0.0
        %4130 = vmatpush1.msra.mxu0 0.0
        %4131 = vmatprep.subr.mxu0 0.0
        %4132 = vmatpush1.msra.mxu0 0.0
        %4133 = vmatprep.subr.mxu0 0.0
        %4134 = vmatpush1.msra.mxu0 0.0
        %4135 = vmatprep.subr.mxu0 0.0
        %4136 = vmatpush1.msra.mxu0 0.0
        %4137 = vmatprep.subr.mxu0 0.0
        %4138 = vmatpush1.msra.mxu0 0.0
        %4139 = vmatprep.subr.mxu0 0.0
        %4140 = vmatpush1.msra.mxu0 0.0
        %4141 = vmatprep.subr.mxu0 0.0
        %4142 = vmatpush1.msra.mxu0 0.0
        %4143 = vmatprep.subr.mxu0 0.0
        %4144 = vmatpush1.msra.mxu0 0.0
        %4145 = vmatprep.subr.mxu0 0.0
        %4146 = vmatpush1.msra.mxu0 0.0
        %4147 = vmatprep.subr.mxu0 0.0
        %4148 = vmatpush1.msra.mxu0 0.0
        %4149 = vmatprep.subr.mxu0 0.0
        %4150 = vmatpush1.msra.mxu0 0.0
        %4151 = vmatprep.subr.mxu0 0.0
        %4152 = vmatpush1.msra.mxu0 0.0
        %4153 = vmatprep.subr.mxu0 0.0
        %4154 = vmatpush1.msra.mxu0 0.0
        %4155 = vmatprep.subr.mxu0 0.0
        %4156 = vmatpush1.msra.mxu0 0.0
        %4157 = vmatprep.subr.mxu0 0.0
        %4158 = vmatpush1.msra.mxu0 0.0
        %4159 = vmatprep.subr.mxu0 0.0
        %4160 = vmatpush1.msra.mxu0 0.0
        %4161 = vmatprep.subr.mxu0 0.0
        %4162 = vmatpush1.msra.mxu0 0.0
        %4163 = vmatprep.subr.mxu0 0.0
        %4164 = vmatpush1.msra.mxu0 0.0
        %4165 = vmatprep.subr.mxu0 0.0
        %4166 = vmatpush1.msra.mxu0 0.0
        %4167 = vmatprep.subr.mxu0 0.0
        %4168 = vmatpush1.msra.mxu0 0.0
        %4169 = vmatprep.subr.mxu0 0.0
        %4170 = vmatpush1.msra.mxu0 0.0
        %4171 = vmatprep.subr.mxu0 0.0
        %4172 = vmatpush1.msra.mxu0 0.0
        %4173 = vmatprep.mubr.f32.mxu0 0.0
        %4174 = vmatmul.mubr.f32.gmra.mrb[0].mxu0 %v4107
        %v4175 = vpop.f32.mrb[0].mxu0
        %v4176 = vadd.f32 0.0, %v4175
        %v4177 = vpop.f32.mrb[0].mxu0
        %4178 = vdwg.mxu0
        %4179 = vrot.lane.b32.xlu0 %v4176, 6
        %v4180 = vpop.permute.xlu0 %4179
        %v4181 = vmul.f32 %v4180, %v795
        %v4182 = vadd.f32 %v4104, %v4181
        %v4183 = vld [vmem:[%s1647] sm:$0x3]
        %v4185 = vsel %vm1244, %v4183, 0
        %4187 = vmatprep.subr.mxu0 0.0
        %4188 = vmatpush1.msra.mxu0 %v3766
        %4189 = vmatprep.subr.mxu0 0.0
        %4190 = vmatpush1.msra.mxu0 %v3767
        %4191 = vmatprep.subr.mxu0 0.0
        %4192 = vmatpush1.msra.mxu0 %v3768
        %4193 = vmatprep.subr.mxu0 0.0
        %4194 = vmatpush1.msra.mxu0 %v3769
        %4195 = vmatprep.subr.mxu0 0.0
        %4196 = vmatpush1.msra.mxu0 0.0
        %4197 = vmatprep.subr.mxu0 0.0
        %4198 = vmatpush1.msra.mxu0 0.0
        %4199 = vmatprep.subr.mxu0 0.0
        %4200 = vmatpush1.msra.mxu0 0.0
        %4201 = vmatprep.subr.mxu0 0.0
        %4202 = vmatpush1.msra.mxu0 0.0
        %4203 = vmatprep.subr.mxu0 0.0
        %4204 = vmatpush1.msra.mxu0 0.0
        %4205 = vmatprep.subr.mxu0 0.0
        %4206 = vmatpush1.msra.mxu0 0.0
        %4207 = vmatprep.subr.mxu0 0.0
        %4208 = vmatpush1.msra.mxu0 0.0
        %4209 = vmatprep.subr.mxu0 0.0
        %4210 = vmatpush1.msra.mxu0 0.0
        %4211 = vmatprep.subr.mxu0 0.0
        %4212 = vmatpush1.msra.mxu0 0.0
        %4213 = vmatprep.subr.mxu0 0.0
        %4214 = vmatpush1.msra.mxu0 0.0
        %4215 = vmatprep.subr.mxu0 0.0
        %4216 = vmatpush1.msra.mxu0 0.0
        %4217 = vmatprep.subr.mxu0 0.0
        %4218 = vmatpush1.msra.mxu0 0.0
        %4219 = vmatprep.subr.mxu0 0.0
        %4220 = vmatpush1.msra.mxu0 0.0
        %4221 = vmatprep.subr.mxu0 0.0
        %4222 = vmatpush1.msra.mxu0 0.0
        %4223 = vmatprep.subr.mxu0 0.0
        %4224 = vmatpush1.msra.mxu0 0.0
        %4225 = vmatprep.subr.mxu0 0.0
        %4226 = vmatpush1.msra.mxu0 0.0
        %4227 = vmatprep.subr.mxu0 0.0
        %4228 = vmatpush1.msra.mxu0 0.0
        %4229 = vmatprep.subr.mxu0 0.0
        %4230 = vmatpush1.msra.mxu0 0.0
        %4231 = vmatprep.subr.mxu0 0.0
        %4232 = vmatpush1.msra.mxu0 0.0
        %4233 = vmatprep.subr.mxu0 0.0
        %4234 = vmatpush1.msra.mxu0 0.0
        %4235 = vmatprep.subr.mxu0 0.0
        %4236 = vmatpush1.msra.mxu0 0.0
        %4237 = vmatprep.subr.mxu0 0.0
        %4238 = vmatpush1.msra.mxu0 0.0
        %4239 = vmatprep.subr.mxu0 0.0
        %4240 = vmatpush1.msra.mxu0 0.0
        %4241 = vmatprep.subr.mxu0 0.0
        %4242 = vmatpush1.msra.mxu0 0.0
        %4243 = vmatprep.subr.mxu0 0.0
        %4244 = vmatpush1.msra.mxu0 0.0
        %4245 = vmatprep.subr.mxu0 0.0
        %4246 = vmatpush1.msra.mxu0 0.0
        %4247 = vmatprep.subr.mxu0 0.0
        %4248 = vmatpush1.msra.mxu0 0.0
        %4249 = vmatprep.subr.mxu0 0.0
        %4250 = vmatpush1.msra.mxu0 0.0
        %4251 = vmatprep.mubr.f32.mxu0 0.0
        %4252 = vmatmul.mubr.f32.gmra.mrb[0].mxu0 %v4185
        %v4253 = vpop.f32.mrb[0].mxu0
        %v4254 = vadd.f32 0.0, %v4253
        %v4255 = vpop.f32.mrb[0].mxu0
        %4256 = vdwg.mxu0
        %4257 = vrot.lane.b32.xlu0 %v4254, 5
        %v4258 = vpop.permute.xlu0 %4257
        %v4259 = vmul.f32 %v4258, %v357
        %v4260 = vadd.f32 %v4182, %v4259
        %v4261 = vld [vmem:[%s1726] sm:$0x3]
        %v4263 = vsel %vm1244, %v4261, 0
        %4265 = vmatprep.subr.mxu0 0.0
        %4266 = vmatpush1.msra.mxu0 %v3766
        %4267 = vmatprep.subr.mxu0 0.0
        %4268 = vmatpush1.msra.mxu0 %v3767
        %4269 = vmatprep.subr.mxu0 0.0
        %4270 = vmatpush1.msra.mxu0 %v3768
        %4271 = vmatprep.subr.mxu0 0.0
        %4272 = vmatpush1.msra.mxu0 %v3769
        %4273 = vmatprep.subr.mxu0 0.0
        %4274 = vmatpush1.msra.mxu0 0.0
        %4275 = vmatprep.subr.mxu0 0.0
        %4276 = vmatpush1.msra.mxu0 0.0
        %4277 = vmatprep.subr.mxu0 0.0
        %4278 = vmatpush1.msra.mxu0 0.0
        %4279 = vmatprep.subr.mxu0 0.0
        %4280 = vmatpush1.msra.mxu0 0.0
        %4281 = vmatprep.subr.mxu0 0.0
        %4282 = vmatpush1.msra.mxu0 0.0
        %4283 = vmatprep.subr.mxu0 0.0
        %4284 = vmatpush1.msra.mxu0 0.0
        %4285 = vmatprep.subr.mxu0 0.0
        %4286 = vmatpush1.msra.mxu0 0.0
        %4287 = vmatprep.subr.mxu0 0.0
        %4288 = vmatpush1.msra.mxu0 0.0
        %4289 = vmatprep.subr.mxu0 0.0
        %4290 = vmatpush1.msra.mxu0 0.0
        %4291 = vmatprep.subr.mxu0 0.0
        %4292 = vmatpush1.msra.mxu0 0.0
        %4293 = vmatprep.subr.mxu0 0.0
        %4294 = vmatpush1.msra.mxu0 0.0
        %4295 = vmatprep.subr.mxu0 0.0
        %4296 = vmatpush1.msra.mxu0 0.0
        %4297 = vmatprep.subr.mxu0 0.0
        %4298 = vmatpush1.msra.mxu0 0.0
        %4299 = vmatprep.subr.mxu0 0.0
        %4300 = vmatpush1.msra.mxu0 0.0
        %4301 = vmatprep.subr.mxu0 0.0
        %4302 = vmatpush1.msra.mxu0 0.0
        %4303 = vmatprep.subr.mxu0 0.0
        %4304 = vmatpush1.msra.mxu0 0.0
        %4305 = vmatprep.subr.mxu0 0.0
        %4306 = vmatpush1.msra.mxu0 0.0
        %4307 = vmatprep.subr.mxu0 0.0
        %4308 = vmatpush1.msra.mxu0 0.0
        %4309 = vmatprep.subr.mxu0 0.0
        %4310 = vmatpush1.msra.mxu0 0.0
        %4311 = vmatprep.subr.mxu0 0.0
        %4312 = vmatpush1.msra.mxu0 0.0
        %4313 = vmatprep.subr.mxu0 0.0
        %4314 = vmatpush1.msra.mxu0 0.0
        %4315 = vmatprep.subr.mxu0 0.0
        %4316 = vmatpush1.msra.mxu0 0.0
        %4317 = vmatprep.subr.mxu0 0.0
        %4318 = vmatpush1.msra.mxu0 0.0
        %4319 = vmatprep.subr.mxu0 0.0
        %4320 = vmatpush1.msra.mxu0 0.0
        %4321 = vmatprep.subr.mxu0 0.0
        %4322 = vmatpush1.msra.mxu0 0.0
        %4323 = vmatprep.subr.mxu0 0.0
        %4324 = vmatpush1.msra.mxu0 0.0
        %4325 = vmatprep.subr.mxu0 0.0
        %4326 = vmatpush1.msra.mxu0 0.0
        %4327 = vmatprep.subr.mxu0 0.0
        %4328 = vmatpush1.msra.mxu0 0.0
        %4329 = vmatprep.mubr.f32.mxu0 0.0
        %4330 = vmatmul.mubr.f32.gmra.mrb[0].mxu0 %v4263
        %v4331 = vpop.f32.mrb[0].mxu0
        %v4332 = vadd.f32 0.0, %v4331
        %v4333 = vpop.f32.mrb[0].mxu0
        %4334 = vdwg.mxu0
        %4335 = vrot.lane.b32.xlu0 %v4332, 4
        %v4336 = vpop.permute.xlu0 %4335
        %v4337 = vmul.f32 %v4336, %v363
        %v4338 = vadd.f32 %v4260, %v4337
        %v4339 = vld [vmem:[%s1805] sm:$0x3]
        %v4341 = vsel %vm1244, %v4339, 0
        %4343 = vmatprep.subr.mxu0 0.0
        %4344 = vmatpush1.msra.mxu0 %v3766
        %4345 = vmatprep.subr.mxu0 0.0
        %4346 = vmatpush1.msra.mxu0 %v3767
        %4347 = vmatprep.subr.mxu0 0.0
        %4348 = vmatpush1.msra.mxu0 %v3768
        %4349 = vmatprep.subr.mxu0 0.0
        %4350 = vmatpush1.msra.mxu0 %v3769
        %4351 = vmatprep.subr.mxu0 0.0
        %4352 = vmatpush1.msra.mxu0 0.0
        %4353 = vmatprep.subr.mxu0 0.0
        %4354 = vmatpush1.msra.mxu0 0.0
        %4355 = vmatprep.subr.mxu0 0.0
        %4356 = vmatpush1.msra.mxu0 0.0
        %4357 = vmatprep.subr.mxu0 0.0
        %4358 = vmatpush1.msra.mxu0 0.0
        %4359 = vmatprep.subr.mxu0 0.0
        %4360 = vmatpush1.msra.mxu0 0.0
        %4361 = vmatprep.subr.mxu0 0.0
        %4362 = vmatpush1.msra.mxu0 0.0
        %4363 = vmatprep.subr.mxu0 0.0
        %4364 = vmatpush1.msra.mxu0 0.0
        %4365 = vmatprep.subr.mxu0 0.0
        %4366 = vmatpush1.msra.mxu0 0.0
        %4367 = vmatprep.subr.mxu0 0.0
        %4368 = vmatpush1.msra.mxu0 0.0
        %4369 = vmatprep.subr.mxu0 0.0
        %4370 = vmatpush1.msra.mxu0 0.0
        %4371 = vmatprep.subr.mxu0 0.0
        %4372 = vmatpush1.msra.mxu0 0.0
        %4373 = vmatprep.subr.mxu0 0.0
        %4374 = vmatpush1.msra.mxu0 0.0
        %4375 = vmatprep.subr.mxu0 0.0
        %4376 = vmatpush1.msra.mxu0 0.0
        %4377 = vmatprep.subr.mxu0 0.0
        %4378 = vmatpush1.msra.mxu0 0.0
        %4379 = vmatprep.subr.mxu0 0.0
        %4380 = vmatpush1.msra.mxu0 0.0
        %4381 = vmatprep.subr.mxu0 0.0
        %4382 = vmatpush1.msra.mxu0 0.0
        %4383 = vmatprep.subr.mxu0 0.0
        %4384 = vmatpush1.msra.mxu0 0.0
        %4385 = vmatprep.subr.mxu0 0.0
        %4386 = vmatpush1.msra.mxu0 0.0
        %4387 = vmatprep.subr.mxu0 0.0
        %4388 = vmatpush1.msra.mxu0 0.0
        %4389 = vmatprep.subr.mxu0 0.0
        %4390 = vmatpush1.msra.mxu0 0.0
        %4391 = vmatprep.subr.mxu0 0.0
        %4392 = vmatpush1.msra.mxu0 0.0
        %4393 = vmatprep.subr.mxu0 0.0
        %4394 = vmatpush1.msra.mxu0 0.0
        %4395 = vmatprep.subr.mxu0 0.0
        %4396 = vmatpush1.msra.mxu0 0.0
        %4397 = vmatprep.subr.mxu0 0.0
        %4398 = vmatpush1.msra.mxu0 0.0
        %4399 = vmatprep.subr.mxu0 0.0
        %4400 = vmatpush1.msra.mxu0 0.0
        %4401 = vmatprep.subr.mxu0 0.0
        %4402 = vmatpush1.msra.mxu0 0.0
        %4403 = vmatprep.subr.mxu0 0.0
        %4404 = vmatpush1.msra.mxu0 0.0
        %4405 = vmatprep.subr.mxu0 0.0
        %4406 = vmatpush1.msra.mxu0 0.0
        %4407 = vmatprep.mubr.f32.mxu0 0.0
        %4408 = vmatmul.mubr.f32.gmra.mrb[0].mxu0 %v4341
        %v4409 = vpop.f32.mrb[0].mxu0
        %v4410 = vadd.f32 0.0, %v4409
        %v4411 = vpop.f32.mrb[0].mxu0
        %4412 = vdwg.mxu0
        %4413 = vrot.lane.b32.xlu0 %v4410, 3
        %v4414 = vpop.permute.xlu0 %4413
        %v4415 = vmul.f32 %v4414, %v369
        %v4416 = vadd.f32 %v4338, %v4415
        %v4417 = vld [vmem:[%s1884] sm:$0x3]
        %v4419 = vsel %vm1244, %v4417, 0
        %4421 = vmatprep.subr.mxu0 0.0
        %4422 = vmatpush1.msra.mxu0 %v3766
        %4423 = vmatprep.subr.mxu0 0.0
        %4424 = vmatpush1.msra.mxu0 %v3767
        %4425 = vmatprep.subr.mxu0 0.0
        %4426 = vmatpush1.msra.mxu0 %v3768
        %4427 = vmatprep.subr.mxu0 0.0
        %4428 = vmatpush1.msra.mxu0 %v3769
        %4429 = vmatprep.subr.mxu0 0.0
        %4430 = vmatpush1.msra.mxu0 0.0
        %4431 = vmatprep.subr.mxu0 0.0
        %4432 = vmatpush1.msra.mxu0 0.0
        %4433 = vmatprep.subr.mxu0 0.0
        %4434 = vmatpush1.msra.mxu0 0.0
        %4435 = vmatprep.subr.mxu0 0.0
        %4436 = vmatpush1.msra.mxu0 0.0
        %4437 = vmatprep.subr.mxu0 0.0
        %4438 = vmatpush1.msra.mxu0 0.0
        %4439 = vmatprep.subr.mxu0 0.0
        %4440 = vmatpush1.msra.mxu0 0.0
        %4441 = vmatprep.subr.mxu0 0.0
        %4442 = vmatpush1.msra.mxu0 0.0
        %4443 = vmatprep.subr.mxu0 0.0
        %4444 = vmatpush1.msra.mxu0 0.0
        %4445 = vmatprep.subr.mxu0 0.0
        %4446 = vmatpush1.msra.mxu0 0.0
        %4447 = vmatprep.subr.mxu0 0.0
        %4448 = vmatpush1.msra.mxu0 0.0
        %4449 = vmatprep.subr.mxu0 0.0
        %4450 = vmatpush1.msra.mxu0 0.0
        %4451 = vmatprep.subr.mxu0 0.0
        %4452 = vmatpush1.msra.mxu0 0.0
        %4453 = vmatprep.subr.mxu0 0.0
        %4454 = vmatpush1.msra.mxu0 0.0
        %4455 = vmatprep.subr.mxu0 0.0
        %4456 = vmatpush1.msra.mxu0 0.0
        %4457 = vmatprep.subr.mxu0 0.0
        %4458 = vmatpush1.msra.mxu0 0.0
        %4459 = vmatprep.subr.mxu0 0.0
        %4460 = vmatpush1.msra.mxu0 0.0
        %4461 = vmatprep.subr.mxu0 0.0
        %4462 = vmatpush1.msra.mxu0 0.0
        %4463 = vmatprep.subr.mxu0 0.0
        %4464 = vmatpush1.msra.mxu0 0.0
        %4465 = vmatprep.subr.mxu0 0.0
        %4466 = vmatpush1.msra.mxu0 0.0
        %4467 = vmatprep.subr.mxu0 0.0
        %4468 = vmatpush1.msra.mxu0 0.0
        %4469 = vmatprep.subr.mxu0 0.0
        %4470 = vmatpush1.msra.mxu0 0.0
        %4471 = vmatprep.subr.mxu0 0.0
        %4472 = vmatpush1.msra.mxu0 0.0
        %4473 = vmatprep.subr.mxu0 0.0
        %4474 = vmatpush1.msra.mxu0 0.0
        %4475 = vmatprep.subr.mxu0 0.0
        %4476 = vmatpush1.msra.mxu0 0.0
        %4477 = vmatprep.subr.mxu0 0.0
        %4478 = vmatpush1.msra.mxu0 0.0
        %4479 = vmatprep.subr.mxu0 0.0
        %4480 = vmatpush1.msra.mxu0 0.0
        %4481 = vmatprep.subr.mxu0 0.0
        %4482 = vmatpush1.msra.mxu0 0.0
        %4483 = vmatprep.subr.mxu0 0.0
        %4484 = vmatpush1.msra.mxu0 0.0
        %4485 = vmatprep.mubr.f32.mxu0 0.0
        %4486 = vmatmul.mubr.f32.gmra.mrb[0].mxu0 %v4419
        %v4487 = vpop.f32.mrb[0].mxu0
        %v4488 = vadd.f32 0.0, %v4487
        %v4489 = vpop.f32.mrb[0].mxu0
        %4490 = vdwg.mxu0
        %4491 = vrot.lane.b32.xlu0 %v4488, 2
        %v4492 = vpop.permute.xlu0 %4491
        %v4493 = vmul.f32 %v4492, %v375
        %v4494 = vadd.f32 %v4416, %v4493
        %v4495 = vld [vmem:[%s1963] sm:$0x3]
        %v4497 = vsel %vm1244, %v4495, 0
        %4499 = vmatprep.subr.mxu0 0.0
        %4500 = vmatpush1.msra.mxu0 %v3766
        %4501 = vmatprep.subr.mxu0 0.0
        %4502 = vmatpush1.msra.mxu0 %v3767
        %4503 = vmatprep.subr.mxu0 0.0
        %4504 = vmatpush1.msra.mxu0 %v3768
        %4505 = vmatprep.subr.mxu0 0.0
        %4506 = vmatpush1.msra.mxu0 %v3769
        %4507 = vmatprep.subr.mxu0 0.0
        %4508 = vmatpush1.msra.mxu0 0.0
        %4509 = vmatprep.subr.mxu0 0.0
        %4510 = vmatpush1.msra.mxu0 0.0
        %4511 = vmatprep.subr.mxu0 0.0
        %4512 = vmatpush1.msra.mxu0 0.0
        %4513 = vmatprep.subr.mxu0 0.0
        %4514 = vmatpush1.msra.mxu0 0.0
        %4515 = vmatprep.subr.mxu0 0.0
        %4516 = vmatpush1.msra.mxu0 0.0
        %4517 = vmatprep.subr.mxu0 0.0
        %4518 = vmatpush1.msra.mxu0 0.0
        %4519 = vmatprep.subr.mxu0 0.0
        %4520 = vmatpush1.msra.mxu0 0.0
        %4521 = vmatprep.subr.mxu0 0.0
        %4522 = vmatpush1.msra.mxu0 0.0
        %4523 = vmatprep.subr.mxu0 0.0
        %4524 = vmatpush1.msra.mxu0 0.0
        %4525 = vmatprep.subr.mxu0 0.0
        %4526 = vmatpush1.msra.mxu0 0.0
        %4527 = vmatprep.subr.mxu0 0.0
        %4528 = vmatpush1.msra.mxu0 0.0
        %4529 = vmatprep.subr.mxu0 0.0
        %4530 = vmatpush1.msra.mxu0 0.0
        %4531 = vmatprep.subr.mxu0 0.0
        %4532 = vmatpush1.msra.mxu0 0.0
        %4533 = vmatprep.subr.mxu0 0.0
        %4534 = vmatpush1.msra.mxu0 0.0
        %4535 = vmatprep.subr.mxu0 0.0
        %4536 = vmatpush1.msra.mxu0 0.0
        %4537 = vmatprep.subr.mxu0 0.0
        %4538 = vmatpush1.msra.mxu0 0.0
        %4539 = vmatprep.subr.mxu0 0.0
        %4540 = vmatpush1.msra.mxu0 0.0
        %4541 = vmatprep.subr.mxu0 0.0
        %4542 = vmatpush1.msra.mxu0 0.0
        %4543 = vmatprep.subr.mxu0 0.0
        %4544 = vmatpush1.msra.mxu0 0.0
        %4545 = vmatprep.subr.mxu0 0.0
        %4546 = vmatpush1.msra.mxu0 0.0
        %4547 = vmatprep.subr.mxu0 0.0
        %4548 = vmatpush1.msra.mxu0 0.0
        %4549 = vmatprep.subr.mxu0 0.0
        %4550 = vmatpush1.msra.mxu0 0.0
        %4551 = vmatprep.subr.mxu0 0.0
        %4552 = vmatpush1.msra.mxu0 0.0
        %4553 = vmatprep.subr.mxu0 0.0
        %4554 = vmatpush1.msra.mxu0 0.0
        %4555 = vmatprep.subr.mxu0 0.0
        %4556 = vmatpush1.msra.mxu0 0.0
        %4557 = vmatprep.subr.mxu0 0.0
        %4558 = vmatpush1.msra.mxu0 0.0
        %4559 = vmatprep.subr.mxu0 0.0
        %4560 = vmatpush1.msra.mxu0 0.0
        %4561 = vmatprep.subr.mxu0 0.0
        %4562 = vmatpush1.msra.mxu0 0.0
        %4563 = vmatprep.mubr.f32.mxu0 0.0
        %4564 = vmatmul.mubr.f32.gmra.mrb[0].mxu0 %v4497
        %v4565 = vpop.f32.mrb[0].mxu0
        %v4566 = vadd.f32 0.0, %v4565
        %v4567 = vpop.f32.mrb[0].mxu0
        %4568 = vdwg.mxu0
        %4569 = vrot.lane.b32.xlu0 %v4566, 1
        %v4570 = vpop.permute.xlu0 %4569
        %v4571 = vmul.f32 %v4570, %v381
        %v4572 = vadd.f32 %v4494, %v4571
        %v4573 = vld [vmem:[%s2042] sm:$0x3]
        %v4575 = vsel %vm1244, %v4573, 0
        %4577 = vmatprep.subr.mxu0 0.0
        %4578 = vmatpush1.msra.mxu0 %v3766
        %4579 = vmatprep.subr.mxu0 0.0
        %4580 = vmatpush1.msra.mxu0 %v3767
        %4581 = vmatprep.subr.mxu0 0.0
        %4582 = vmatpush1.msra.mxu0 %v3768
        %4583 = vmatprep.subr.mxu0 0.0
        %4584 = vmatpush1.msra.mxu0 %v3769
        %4585 = vmatprep.subr.mxu0 0.0
        %4586 = vmatpush1.msra.mxu0 0.0
        %4587 = vmatprep.subr.mxu0 0.0
        %4588 = vmatpush1.msra.mxu0 0.0
        %4589 = vmatprep.subr.mxu0 0.0
        %4590 = vmatpush1.msra.mxu0 0.0
        %4591 = vmatprep.subr.mxu0 0.0
        %4592 = vmatpush1.msra.mxu0 0.0
        %4593 = vmatprep.subr.mxu0 0.0
        %4594 = vmatpush1.msra.mxu0 0.0
        %4595 = vmatprep.subr.mxu0 0.0
        %4596 = vmatpush1.msra.mxu0 0.0
        %4597 = vmatprep.subr.mxu0 0.0
        %4598 = vmatpush1.msra.mxu0 0.0
        %4599 = vmatprep.subr.mxu0 0.0
        %4600 = vmatpush1.msra.mxu0 0.0
        %4601 = vmatprep.subr.mxu0 0.0
        %4602 = vmatpush1.msra.mxu0 0.0
        %4603 = vmatprep.subr.mxu0 0.0
        %4604 = vmatpush1.msra.mxu0 0.0
        %4605 = vmatprep.subr.mxu0 0.0
        %4606 = vmatpush1.msra.mxu0 0.0
        %4607 = vmatprep.subr.mxu0 0.0
        %4608 = vmatpush1.msra.mxu0 0.0
        %4609 = vmatprep.subr.mxu0 0.0
        %4610 = vmatpush1.msra.mxu0 0.0
        %4611 = vmatprep.subr.mxu0 0.0
        %4612 = vmatpush1.msra.mxu0 0.0
        %4613 = vmatprep.subr.mxu0 0.0
        %4614 = vmatpush1.msra.mxu0 0.0
        %4615 = vmatprep.subr.mxu0 0.0
        %4616 = vmatpush1.msra.mxu0 0.0
        %4617 = vmatprep.subr.mxu0 0.0
        %4618 = vmatpush1.msra.mxu0 0.0
        %4619 = vmatprep.subr.mxu0 0.0
        %4620 = vmatpush1.msra.mxu0 0.0
        %4621 = vmatprep.subr.mxu0 0.0
        %4622 = vmatpush1.msra.mxu0 0.0
        %4623 = vmatprep.subr.mxu0 0.0
        %4624 = vmatpush1.msra.mxu0 0.0
        %4625 = vmatprep.subr.mxu0 0.0
        %4626 = vmatpush1.msra.mxu0 0.0
        %4627 = vmatprep.subr.mxu0 0.0
        %4628 = vmatpush1.msra.mxu0 0.0
        %4629 = vmatprep.subr.mxu0 0.0
        %4630 = vmatpush1.msra.mxu0 0.0
        %4631 = vmatprep.subr.mxu0 0.0
        %4632 = vmatpush1.msra.mxu0 0.0
        %4633 = vmatprep.subr.mxu0 0.0
        %4634 = vmatpush1.msra.mxu0 0.0
        %4635 = vmatprep.subr.mxu0 0.0
        %4636 = vmatpush1.msra.mxu0 0.0
        %4637 = vmatprep.subr.mxu0 0.0
        %4638 = vmatpush1.msra.mxu0 0.0
        %4639 = vmatprep.subr.mxu0 0.0
        %4640 = vmatpush1.msra.mxu0 0.0
        %4641 = vmatprep.mubr.f32.mxu0 0.0
        %4642 = vmatmul.mubr.f32.gmra.mrb[0].mxu0 %v4575
        %v4643 = vpop.f32.mrb[0].mxu0
        %v4644 = vadd.f32 0.0, %v4643
        %v4645 = vpop.f32.mrb[0].mxu0
        %4646 = vdwg.mxu0
        %v4647 = vadd.f32 %v4572, %v4644
        %v4648 = vld [vmem:[%s2118] sm:$0x3]
        %v4650 = vsel %vm1244, %v4648, 0
        %4652 = vmatprep.subr.mxu0 0.0
        %4653 = vmatpush1.msra.mxu0 %v3766
        %4654 = vmatprep.subr.mxu0 0.0
        %4655 = vmatpush1.msra.mxu0 %v3767
        %4656 = vmatprep.subr.mxu0 0.0
        %4657 = vmatpush1.msra.mxu0 %v3768
        %4658 = vmatprep.subr.mxu0 0.0
        %4659 = vmatpush1.msra.mxu0 %v3769
        %4660 = vmatprep.subr.mxu0 0.0
        %4661 = vmatpush1.msra.mxu0 0.0
        %4662 = vmatprep.subr.mxu0 0.0
        %4663 = vmatpush1.msra.mxu0 0.0
        %4664 = vmatprep.subr.mxu0 0.0
        %4665 = vmatpush1.msra.mxu0 0.0
        %4666 = vmatprep.subr.mxu0 0.0
        %4667 = vmatpush1.msra.mxu0 0.0
        %4668 = vmatprep.subr.mxu0 0.0
        %4669 = vmatpush1.msra.mxu0 0.0
        %4670 = vmatprep.subr.mxu0 0.0
        %4671 = vmatpush1.msra.mxu0 0.0
        %4672 = vmatprep.subr.mxu0 0.0
        %4673 = vmatpush1.msra.mxu0 0.0
        %4674 = vmatprep.subr.mxu0 0.0
        %4675 = vmatpush1.msra.mxu0 0.0
        %4676 = vmatprep.subr.mxu0 0.0
        %4677 = vmatpush1.msra.mxu0 0.0
        %4678 = vmatprep.subr.mxu0 0.0
        %4679 = vmatpush1.msra.mxu0 0.0
        %4680 = vmatprep.subr.mxu0 0.0
        %4681 = vmatpush1.msra.mxu0 0.0
        %4682 = vmatprep.subr.mxu0 0.0
        %4683 = vmatpush1.msra.mxu0 0.0
        %4684 = vmatprep.subr.mxu0 0.0
        %4685 = vmatpush1.msra.mxu0 0.0
        %4686 = vmatprep.subr.mxu0 0.0
        %4687 = vmatpush1.msra.mxu0 0.0
        %4688 = vmatprep.subr.mxu0 0.0
        %4689 = vmatpush1.msra.mxu0 0.0
        %4690 = vmatprep.subr.mxu0 0.0
        %4691 = vmatpush1.msra.mxu0 0.0
        %4692 = vmatprep.subr.mxu0 0.0
        %4693 = vmatpush1.msra.mxu0 0.0
        %4694 = vmatprep.subr.mxu0 0.0
        %4695 = vmatpush1.msra.mxu0 0.0
        %4696 = vmatprep.subr.mxu0 0.0
        %4697 = vmatpush1.msra.mxu0 0.0
        %4698 = vmatprep.subr.mxu0 0.0
        %4699 = vmatpush1.msra.mxu0 0.0
        %4700 = vmatprep.subr.mxu0 0.0
        %4701 = vmatpush1.msra.mxu0 0.0
        %4702 = vmatprep.subr.mxu0 0.0
        %4703 = vmatpush1.msra.mxu0 0.0
        %4704 = vmatprep.subr.mxu0 0.0
        %4705 = vmatpush1.msra.mxu0 0.0
        %4706 = vmatprep.subr.mxu0 0.0
        %4707 = vmatpush1.msra.mxu0 0.0
        %4708 = vmatprep.subr.mxu0 0.0
        %4709 = vmatpush1.msra.mxu0 0.0
        %4710 = vmatprep.subr.mxu0 0.0
        %4711 = vmatpush1.msra.mxu0 0.0
        %4712 = vmatprep.subr.mxu0 0.0
        %4713 = vmatpush1.msra.mxu0 0.0
        %4714 = vmatprep.subr.mxu0 0.0
        %4715 = vmatpush1.msra.mxu0 0.0
        %4716 = vmatprep.mubr.f32.mxu0 0.0
        %4717 = vmatmul.mubr.f32.gmra.mrb[0].mxu0 %v4650
        %v4718 = vpop.f32.mrb[0].mxu0
        %v4719 = vadd.f32 0.0, %v4718
        %v4720 = vpop.f32.mrb[0].mxu0
        %4721 = vdwg.mxu0
        %4722 = vrot.lane.b32.xlu0 %v4719, 127
        %v4723 = vpop.permute.xlu0 %4722
        %v4724 = vmul.f32 %v4723, %v387
        %v4725 = vadd.f32 %v4647, %v4724
        %v4726 = vld [vmem:[%s2197] sm:$0x3]
        %v4728 = vsel %vm1244, %v4726, 0
        %4730 = vmatprep.subr.mxu0 0.0
        %4731 = vmatpush1.msra.mxu0 %v3766
        %4732 = vmatprep.subr.mxu0 0.0
        %4733 = vmatpush1.msra.mxu0 %v3767
        %4734 = vmatprep.subr.mxu0 0.0
        %4735 = vmatpush1.msra.mxu0 %v3768
        %4736 = vmatprep.subr.mxu0 0.0
        %4737 = vmatpush1.msra.mxu0 %v3769
        %4738 = vmatprep.subr.mxu0 0.0
        %4739 = vmatpush1.msra.mxu0 0.0
        %4740 = vmatprep.subr.mxu0 0.0
        %4741 = vmatpush1.msra.mxu0 0.0
        %4742 = vmatprep.subr.mxu0 0.0
        %4743 = vmatpush1.msra.mxu0 0.0
        %4744 = vmatprep.subr.mxu0 0.0
        %4745 = vmatpush1.msra.mxu0 0.0
        %4746 = vmatprep.subr.mxu0 0.0
        %4747 = vmatpush1.msra.mxu0 0.0
        %4748 = vmatprep.subr.mxu0 0.0
        %4749 = vmatpush1.msra.mxu0 0.0
        %4750 = vmatprep.subr.mxu0 0.0
        %4751 = vmatpush1.msra.mxu0 0.0
        %4752 = vmatprep.subr.mxu0 0.0
        %4753 = vmatpush1.msra.mxu0 0.0
        %4754 = vmatprep.subr.mxu0 0.0
        %4755 = vmatpush1.msra.mxu0 0.0
        %4756 = vmatprep.subr.mxu0 0.0
        %4757 = vmatpush1.msra.mxu0 0.0
        %4758 = vmatprep.subr.mxu0 0.0
        %4759 = vmatpush1.msra.mxu0 0.0
        %4760 = vmatprep.subr.mxu0 0.0
        %4761 = vmatpush1.msra.mxu0 0.0
        %4762 = vmatprep.subr.mxu0 0.0
        %4763 = vmatpush1.msra.mxu0 0.0
        %4764 = vmatprep.subr.mxu0 0.0
        %4765 = vmatpush1.msra.mxu0 0.0
        %4766 = vmatprep.subr.mxu0 0.0
        %4767 = vmatpush1.msra.mxu0 0.0
        %4768 = vmatprep.subr.mxu0 0.0
        %4769 = vmatpush1.msra.mxu0 0.0
        %4770 = vmatprep.subr.mxu0 0.0
        %4771 = vmatpush1.msra.mxu0 0.0
        %4772 = vmatprep.subr.mxu0 0.0
        %4773 = vmatpush1.msra.mxu0 0.0
        %4774 = vmatprep.subr.mxu0 0.0
        %4775 = vmatpush1.msra.mxu0 0.0
        %4776 = vmatprep.subr.mxu0 0.0
        %4777 = vmatpush1.msra.mxu0 0.0
        %4778 = vmatprep.subr.mxu0 0.0
        %4779 = vmatpush1.msra.mxu0 0.0
        %4780 = vmatprep.subr.mxu0 0.0
        %4781 = vmatpush1.msra.mxu0 0.0
        %4782 = vmatprep.subr.mxu0 0.0
        %4783 = vmatpush1.msra.mxu0 0.0
        %4784 = vmatprep.subr.mxu0 0.0
        %4785 = vmatpush1.msra.mxu0 0.0
        %4786 = vmatprep.subr.mxu0 0.0
        %4787 = vmatpush1.msra.mxu0 0.0
        %4788 = vmatprep.subr.mxu0 0.0
        %4789 = vmatpush1.msra.mxu0 0.0
        %4790 = vmatprep.subr.mxu0 0.0
        %4791 = vmatpush1.msra.mxu0 0.0
        %4792 = vmatprep.subr.mxu0 0.0
        %4793 = vmatpush1.msra.mxu0 0.0
        %4794 = vmatprep.mubr.f32.mxu0 0.0
        %4795 = vmatmul.mubr.f32.gmra.mrb[0].mxu0 %v4728
        %v4796 = vpop.f32.mrb[0].mxu0
        %v4797 = vadd.f32 0.0, %v4796
        %v4798 = vpop.f32.mrb[0].mxu0
        %4799 = vdwg.mxu0
        %4800 = vrot.lane.b32.xlu0 %v4797, 126
        %v4801 = vpop.permute.xlu0 %4800
        %v4802 = vmul.f32 %v4801, %v393
        %v4803 = vadd.f32 %v4725, %v4802
        %v4804 = vld [vmem:[%s2276] sm:$0x3]
        %v4806 = vsel %vm1244, %v4804, 0
        %4808 = vmatprep.subr.mxu0 0.0
        %4809 = vmatpush1.msra.mxu0 %v3766
        %4810 = vmatprep.subr.mxu0 0.0
        %4811 = vmatpush1.msra.mxu0 %v3767
        %4812 = vmatprep.subr.mxu0 0.0
        %4813 = vmatpush1.msra.mxu0 %v3768
        %4814 = vmatprep.subr.mxu0 0.0
        %4815 = vmatpush1.msra.mxu0 %v3769
        %4816 = vmatprep.subr.mxu0 0.0
        %4817 = vmatpush1.msra.mxu0 0.0
        %4818 = vmatprep.subr.mxu0 0.0
        %4819 = vmatpush1.msra.mxu0 0.0
        %4820 = vmatprep.subr.mxu0 0.0
        %4821 = vmatpush1.msra.mxu0 0.0
        %4822 = vmatprep.subr.mxu0 0.0
        %4823 = vmatpush1.msra.mxu0 0.0
        %4824 = vmatprep.subr.mxu0 0.0
        %4825 = vmatpush1.msra.mxu0 0.0
        %4826 = vmatprep.subr.mxu0 0.0
        %4827 = vmatpush1.msra.mxu0 0.0
        %4828 = vmatprep.subr.mxu0 0.0
        %4829 = vmatpush1.msra.mxu0 0.0
        %4830 = vmatprep.subr.mxu0 0.0
        %4831 = vmatpush1.msra.mxu0 0.0
        %4832 = vmatprep.subr.mxu0 0.0
        %4833 = vmatpush1.msra.mxu0 0.0
        %4834 = vmatprep.subr.mxu0 0.0
        %4835 = vmatpush1.msra.mxu0 0.0
        %4836 = vmatprep.subr.mxu0 0.0
        %4837 = vmatpush1.msra.mxu0 0.0
        %4838 = vmatprep.subr.mxu0 0.0
        %4839 = vmatpush1.msra.mxu0 0.0
        %4840 = vmatprep.subr.mxu0 0.0
        %4841 = vmatpush1.msra.mxu0 0.0
        %4842 = vmatprep.subr.mxu0 0.0
        %4843 = vmatpush1.msra.mxu0 0.0
        %4844 = vmatprep.subr.mxu0 0.0
        %4845 = vmatpush1.msra.mxu0 0.0
        %4846 = vmatprep.subr.mxu0 0.0
        %4847 = vmatpush1.msra.mxu0 0.0
        %4848 = vmatprep.subr.mxu0 0.0
        %4849 = vmatpush1.msra.mxu0 0.0
        %4850 = vmatprep.subr.mxu0 0.0
        %4851 = vmatpush1.msra.mxu0 0.0
        %4852 = vmatprep.subr.mxu0 0.0
        %4853 = vmatpush1.msra.mxu0 0.0
        %4854 = vmatprep.subr.mxu0 0.0
        %4855 = vmatpush1.msra.mxu0 0.0
        %4856 = vmatprep.subr.mxu0 0.0
        %4857 = vmatpush1.msra.mxu0 0.0
        %4858 = vmatprep.subr.mxu0 0.0
        %4859 = vmatpush1.msra.mxu0 0.0
        %4860 = vmatprep.subr.mxu0 0.0
        %4861 = vmatpush1.msra.mxu0 0.0
        %4862 = vmatprep.subr.mxu0 0.0
        %4863 = vmatpush1.msra.mxu0 0.0
        %4864 = vmatprep.subr.mxu0 0.0
        %4865 = vmatpush1.msra.mxu0 0.0
        %4866 = vmatprep.subr.mxu0 0.0
        %4867 = vmatpush1.msra.mxu0 0.0
        %4868 = vmatprep.subr.mxu0 0.0
        %4869 = vmatpush1.msra.mxu0 0.0
        %4870 = vmatprep.subr.mxu0 0.0
        %4871 = vmatpush1.msra.mxu0 0.0
        %4872 = vmatprep.mubr.f32.mxu0 0.0
        %4873 = vmatmul.mubr.f32.gmra.mrb[0].mxu0 %v4806
        %v4874 = vpop.f32.mrb[0].mxu0
        %v4875 = vadd.f32 0.0, %v4874
        %v4876 = vpop.f32.mrb[0].mxu0
        %4877 = vdwg.mxu0
        %4878 = vrot.lane.b32.xlu0 %v4875, 125
        %v4879 = vpop.permute.xlu0 %4878
        %v4880 = vmul.f32 %v4879, %v399
        %v4881 = vadd.f32 %v4803, %v4880
        %v4882 = vld [vmem:[%s2355] sm:$0x3]
        %v4884 = vsel %vm1244, %v4882, 0
        %4886 = vmatprep.subr.mxu0 0.0
        %4887 = vmatpush1.msra.mxu0 %v3766
        %4888 = vmatprep.subr.mxu0 0.0
        %4889 = vmatpush1.msra.mxu0 %v3767
        %4890 = vmatprep.subr.mxu0 0.0
        %4891 = vmatpush1.msra.mxu0 %v3768
        %4892 = vmatprep.subr.mxu0 0.0
        %4893 = vmatpush1.msra.mxu0 %v3769
        %4894 = vmatprep.subr.mxu0 0.0
        %4895 = vmatpush1.msra.mxu0 0.0
        %4896 = vmatprep.subr.mxu0 0.0
        %4897 = vmatpush1.msra.mxu0 0.0
        %4898 = vmatprep.subr.mxu0 0.0
        %4899 = vmatpush1.msra.mxu0 0.0
        %4900 = vmatprep.subr.mxu0 0.0
        %4901 = vmatpush1.msra.mxu0 0.0
        %4902 = vmatprep.subr.mxu0 0.0
        %4903 = vmatpush1.msra.mxu0 0.0
        %4904 = vmatprep.subr.mxu0 0.0
        %4905 = vmatpush1.msra.mxu0 0.0
        %4906 = vmatprep.subr.mxu0 0.0
        %4907 = vmatpush1.msra.mxu0 0.0
        %4908 = vmatprep.subr.mxu0 0.0
        %4909 = vmatpush1.msra.mxu0 0.0
        %4910 = vmatprep.subr.mxu0 0.0
        %4911 = vmatpush1.msra.mxu0 0.0
        %4912 = vmatprep.subr.mxu0 0.0
        %4913 = vmatpush1.msra.mxu0 0.0
        %4914 = vmatprep.subr.mxu0 0.0
        %4915 = vmatpush1.msra.mxu0 0.0
        %4916 = vmatprep.subr.mxu0 0.0
        %4917 = vmatpush1.msra.mxu0 0.0
        %4918 = vmatprep.subr.mxu0 0.0
        %4919 = vmatpush1.msra.mxu0 0.0
        %4920 = vmatprep.subr.mxu0 0.0
        %4921 = vmatpush1.msra.mxu0 0.0
        %4922 = vmatprep.subr.mxu0 0.0
        %4923 = vmatpush1.msra.mxu0 0.0
        %4924 = vmatprep.subr.mxu0 0.0
        %4925 = vmatpush1.msra.mxu0 0.0
        %4926 = vmatprep.subr.mxu0 0.0
        %4927 = vmatpush1.msra.mxu0 0.0
        %4928 = vmatprep.subr.mxu0 0.0
        %4929 = vmatpush1.msra.mxu0 0.0
        %4930 = vmatprep.subr.mxu0 0.0
        %4931 = vmatpush1.msra.mxu0 0.0
        %4932 = vmatprep.subr.mxu0 0.0
        %4933 = vmatpush1.msra.mxu0 0.0
        %4934 = vmatprep.subr.mxu0 0.0
        %4935 = vmatpush1.msra.mxu0 0.0
        %4936 = vmatprep.subr.mxu0 0.0
        %4937 = vmatpush1.msra.mxu0 0.0
        %4938 = vmatprep.subr.mxu0 0.0
        %4939 = vmatpush1.msra.mxu0 0.0
        %4940 = vmatprep.subr.mxu0 0.0
        %4941 = vmatpush1.msra.mxu0 0.0
        %4942 = vmatprep.subr.mxu0 0.0
        %4943 = vmatpush1.msra.mxu0 0.0
        %4944 = vmatprep.subr.mxu0 0.0
        %4945 = vmatpush1.msra.mxu0 0.0
        %4946 = vmatprep.subr.mxu0 0.0
        %4947 = vmatpush1.msra.mxu0 0.0
        %4948 = vmatprep.subr.mxu0 0.0
        %4949 = vmatpush1.msra.mxu0 0.0
        %4950 = vmatprep.mubr.f32.mxu0 0.0
        %4951 = vmatmul.mubr.f32.gmra.mrb[0].mxu0 %v4884
        %v4952 = vpop.f32.mrb[0].mxu0
        %v4953 = vadd.f32 0.0, %v4952
        %v4954 = vpop.f32.mrb[0].mxu0
        %4955 = vdwg.mxu0
        %4956 = vrot.lane.b32.xlu0 %v4953, 124
        %v4957 = vpop.permute.xlu0 %4956
        %v4958 = vmul.f32 %v4957, %v405
        %v4959 = vadd.f32 %v4881, %v4958
        %v4960 = vld [vmem:[%s2434] sm:$0x3]
        %v4962 = vsel %vm1244, %v4960, 0
        %4964 = vmatprep.subr.mxu0 0.0
        %4965 = vmatpush1.msra.mxu0 %v3766
        %4966 = vmatprep.subr.mxu0 0.0
        %4967 = vmatpush1.msra.mxu0 %v3767
        %4968 = vmatprep.subr.mxu0 0.0
        %4969 = vmatpush1.msra.mxu0 %v3768
        %4970 = vmatprep.subr.mxu0 0.0
        %4971 = vmatpush1.msra.mxu0 %v3769
        %4972 = vmatprep.subr.mxu0 0.0
        %4973 = vmatpush1.msra.mxu0 0.0
        %4974 = vmatprep.subr.mxu0 0.0
        %4975 = vmatpush1.msra.mxu0 0.0
        %4976 = vmatprep.subr.mxu0 0.0
        %4977 = vmatpush1.msra.mxu0 0.0
        %4978 = vmatprep.subr.mxu0 0.0
        %4979 = vmatpush1.msra.mxu0 0.0
        %4980 = vmatprep.subr.mxu0 0.0
        %4981 = vmatpush1.msra.mxu0 0.0
        %4982 = vmatprep.subr.mxu0 0.0
        %4983 = vmatpush1.msra.mxu0 0.0
        %4984 = vmatprep.subr.mxu0 0.0
        %4985 = vmatpush1.msra.mxu0 0.0
        %4986 = vmatprep.subr.mxu0 0.0
        %4987 = vmatpush1.msra.mxu0 0.0
        %4988 = vmatprep.subr.mxu0 0.0
        %4989 = vmatpush1.msra.mxu0 0.0
        %4990 = vmatprep.subr.mxu0 0.0
        %4991 = vmatpush1.msra.mxu0 0.0
        %4992 = vmatprep.subr.mxu0 0.0
        %4993 = vmatpush1.msra.mxu0 0.0
        %4994 = vmatprep.subr.mxu0 0.0
        %4995 = vmatpush1.msra.mxu0 0.0
        %4996 = vmatprep.subr.mxu0 0.0
        %4997 = vmatpush1.msra.mxu0 0.0
        %4998 = vmatprep.subr.mxu0 0.0
        %4999 = vmatpush1.msra.mxu0 0.0
        %5000 = vmatprep.subr.mxu0 0.0
        %5001 = vmatpush1.msra.mxu0 0.0
        %5002 = vmatprep.subr.mxu0 0.0
        %5003 = vmatpush1.msra.mxu0 0.0
        %5004 = vmatprep.subr.mxu0 0.0
        %5005 = vmatpush1.msra.mxu0 0.0
        %5006 = vmatprep.subr.mxu0 0.0
        %5007 = vmatpush1.msra.mxu0 0.0
        %5008 = vmatprep.subr.mxu0 0.0
        %5009 = vmatpush1.msra.mxu0 0.0
        %5010 = vmatprep.subr.mxu0 0.0
        %5011 = vmatpush1.msra.mxu0 0.0
        %5012 = vmatprep.subr.mxu0 0.0
        %5013 = vmatpush1.msra.mxu0 0.0
        %5014 = vmatprep.subr.mxu0 0.0
        %5015 = vmatpush1.msra.mxu0 0.0
        %5016 = vmatprep.subr.mxu0 0.0
        %5017 = vmatpush1.msra.mxu0 0.0
        %5018 = vmatprep.subr.mxu0 0.0
        %5019 = vmatpush1.msra.mxu0 0.0
        %5020 = vmatprep.subr.mxu0 0.0
        %5021 = vmatpush1.msra.mxu0 0.0
        %5022 = vmatprep.subr.mxu0 0.0
        %5023 = vmatpush1.msra.mxu0 0.0
        %5024 = vmatprep.subr.mxu0 0.0
        %5025 = vmatpush1.msra.mxu0 0.0
        %5026 = vmatprep.subr.mxu0 0.0
        %5027 = vmatpush1.msra.mxu0 0.0
        %5028 = vmatprep.mubr.f32.mxu0 0.0
        %5029 = vmatmul.mubr.f32.gmra.mrb[0].mxu0 %v4962
        %v5030 = vpop.f32.mrb[0].mxu0
        %v5031 = vadd.f32 0.0, %v5030
        %v5032 = vpop.f32.mrb[0].mxu0
        %5033 = vdwg.mxu0
        %5034 = vrot.lane.b32.xlu0 %v5031, 123
        %v5035 = vpop.permute.xlu0 %5034
        %v5036 = vmul.f32 %v5035, %v411
        %v5037 = vadd.f32 %v4959, %v5036
        %v5038 = vld [vmem:[%s2513] sm:$0x3]
        %v5040 = vsel %vm1244, %v5038, 0
        %5042 = vmatprep.subr.mxu0 0.0
        %5043 = vmatpush1.msra.mxu0 %v3766
        %5044 = vmatprep.subr.mxu0 0.0
        %5045 = vmatpush1.msra.mxu0 %v3767
        %5046 = vmatprep.subr.mxu0 0.0
        %5047 = vmatpush1.msra.mxu0 %v3768
        %5048 = vmatprep.subr.mxu0 0.0
        %5049 = vmatpush1.msra.mxu0 %v3769
        %5050 = vmatprep.subr.mxu0 0.0
        %5051 = vmatpush1.msra.mxu0 0.0
        %5052 = vmatprep.subr.mxu0 0.0
        %5053 = vmatpush1.msra.mxu0 0.0
        %5054 = vmatprep.subr.mxu0 0.0
        %5055 = vmatpush1.msra.mxu0 0.0
        %5056 = vmatprep.subr.mxu0 0.0
        %5057 = vmatpush1.msra.mxu0 0.0
        %5058 = vmatprep.subr.mxu0 0.0
        %5059 = vmatpush1.msra.mxu0 0.0
        %5060 = vmatprep.subr.mxu0 0.0
        %5061 = vmatpush1.msra.mxu0 0.0
        %5062 = vmatprep.subr.mxu0 0.0
        %5063 = vmatpush1.msra.mxu0 0.0
        %5064 = vmatprep.subr.mxu0 0.0
        %5065 = vmatpush1.msra.mxu0 0.0
        %5066 = vmatprep.subr.mxu0 0.0
        %5067 = vmatpush1.msra.mxu0 0.0
        %5068 = vmatprep.subr.mxu0 0.0
        %5069 = vmatpush1.msra.mxu0 0.0
        %5070 = vmatprep.subr.mxu0 0.0
        %5071 = vmatpush1.msra.mxu0 0.0
        %5072 = vmatprep.subr.mxu0 0.0
        %5073 = vmatpush1.msra.mxu0 0.0
        %5074 = vmatprep.subr.mxu0 0.0
        %5075 = vmatpush1.msra.mxu0 0.0
        %5076 = vmatprep.subr.mxu0 0.0
        %5077 = vmatpush1.msra.mxu0 0.0
        %5078 = vmatprep.subr.mxu0 0.0
        %5079 = vmatpush1.msra.mxu0 0.0
        %5080 = vmatprep.subr.mxu0 0.0
        %5081 = vmatpush1.msra.mxu0 0.0
        %5082 = vmatprep.subr.mxu0 0.0
        %5083 = vmatpush1.msra.mxu0 0.0
        %5084 = vmatprep.subr.mxu0 0.0
        %5085 = vmatpush1.msra.mxu0 0.0
        %5086 = vmatprep.subr.mxu0 0.0
        %5087 = vmatpush1.msra.mxu0 0.0
        %5088 = vmatprep.subr.mxu0 0.0
        %5089 = vmatpush1.msra.mxu0 0.0
        %5090 = vmatprep.subr.mxu0 0.0
        %5091 = vmatpush1.msra.mxu0 0.0
        %5092 = vmatprep.subr.mxu0 0.0
        %5093 = vmatpush1.msra.mxu0 0.0
        %5094 = vmatprep.subr.mxu0 0.0
        %5095 = vmatpush1.msra.mxu0 0.0
        %5096 = vmatprep.subr.mxu0 0.0
        %5097 = vmatpush1.msra.mxu0 0.0
        %5098 = vmatprep.subr.mxu0 0.0
        %5099 = vmatpush1.msra.mxu0 0.0
        %5100 = vmatprep.subr.mxu0 0.0
        %5101 = vmatpush1.msra.mxu0 0.0
        %5102 = vmatprep.subr.mxu0 0.0
        %5103 = vmatpush1.msra.mxu0 0.0
        %5104 = vmatprep.subr.mxu0 0.0
        %5105 = vmatpush1.msra.mxu0 0.0
        %5106 = vmatprep.mubr.f32.mxu0 0.0
        %5107 = vmatmul.mubr.f32.gmra.mrb[0].mxu0 %v5040
        %v5108 = vpop.f32.mrb[0].mxu0
        %v5109 = vadd.f32 0.0, %v5108
        %v5110 = vpop.f32.mrb[0].mxu0
        %5111 = vdwg.mxu0
        %5112 = vrot.lane.b32.xlu0 %v5109, 122
        %v5113 = vpop.permute.xlu0 %5112
        %v5114 = vmul.f32 %v5113, %v417
        %v5115 = vadd.f32 %v5037, %v5114
        %v5116 = vld [vmem:[%s2592] sm:$0x3]
        %v5118 = vsel %vm1244, %v5116, 0
        %5120 = vmatprep.subr.mxu0 0.0
        %5121 = vmatpush1.msra.mxu0 %v3766
        %5122 = vmatprep.subr.mxu0 0.0
        %5123 = vmatpush1.msra.mxu0 %v3767
        %5124 = vmatprep.subr.mxu0 0.0
        %5125 = vmatpush1.msra.mxu0 %v3768
        %5126 = vmatprep.subr.mxu0 0.0
        %5127 = vmatpush1.msra.mxu0 %v3769
        %5128 = vmatprep.subr.mxu0 0.0
        %5129 = vmatpush1.msra.mxu0 0.0
        %5130 = vmatprep.subr.mxu0 0.0
        %5131 = vmatpush1.msra.mxu0 0.0
        %5132 = vmatprep.subr.mxu0 0.0
        %5133 = vmatpush1.msra.mxu0 0.0
        %5134 = vmatprep.subr.mxu0 0.0
        %5135 = vmatpush1.msra.mxu0 0.0
        %5136 = vmatprep.subr.mxu0 0.0
        %5137 = vmatpush1.msra.mxu0 0.0
        %5138 = vmatprep.subr.mxu0 0.0
        %5139 = vmatpush1.msra.mxu0 0.0
        %5140 = vmatprep.subr.mxu0 0.0
        %5141 = vmatpush1.msra.mxu0 0.0
        %5142 = vmatprep.subr.mxu0 0.0
        %5143 = vmatpush1.msra.mxu0 0.0
        %5144 = vmatprep.subr.mxu0 0.0
        %5145 = vmatpush1.msra.mxu0 0.0
        %5146 = vmatprep.subr.mxu0 0.0
        %5147 = vmatpush1.msra.mxu0 0.0
        %5148 = vmatprep.subr.mxu0 0.0
        %5149 = vmatpush1.msra.mxu0 0.0
        %5150 = vmatprep.subr.mxu0 0.0
        %5151 = vmatpush1.msra.mxu0 0.0
        %5152 = vmatprep.subr.mxu0 0.0
        %5153 = vmatpush1.msra.mxu0 0.0
        %5154 = vmatprep.subr.mxu0 0.0
        %5155 = vmatpush1.msra.mxu0 0.0
        %5156 = vmatprep.subr.mxu0 0.0
        %5157 = vmatpush1.msra.mxu0 0.0
        %5158 = vmatprep.subr.mxu0 0.0
        %5159 = vmatpush1.msra.mxu0 0.0
        %5160 = vmatprep.subr.mxu0 0.0
        %5161 = vmatpush1.msra.mxu0 0.0
        %5162 = vmatprep.subr.mxu0 0.0
        %5163 = vmatpush1.msra.mxu0 0.0
        %5164 = vmatprep.subr.mxu0 0.0
        %5165 = vmatpush1.msra.mxu0 0.0
        %5166 = vmatprep.subr.mxu0 0.0
        %5167 = vmatpush1.msra.mxu0 0.0
        %5168 = vmatprep.subr.mxu0 0.0
        %5169 = vmatpush1.msra.mxu0 0.0
        %5170 = vmatprep.subr.mxu0 0.0
        %5171 = vmatpush1.msra.mxu0 0.0
        %5172 = vmatprep.subr.mxu0 0.0
        %5173 = vmatpush1.msra.mxu0 0.0
        %5174 = vmatprep.subr.mxu0 0.0
        %5175 = vmatpush1.msra.mxu0 0.0
        %5176 = vmatprep.subr.mxu0 0.0
        %5177 = vmatpush1.msra.mxu0 0.0
        %5178 = vmatprep.subr.mxu0 0.0
        %5179 = vmatpush1.msra.mxu0 0.0
        %5180 = vmatprep.subr.mxu0 0.0
        %5181 = vmatpush1.msra.mxu0 0.0
        %5182 = vmatprep.subr.mxu0 0.0
        %5183 = vmatpush1.msra.mxu0 0.0
        %5184 = vmatprep.mubr.f32.mxu0 0.0
        %5185 = vmatmul.mubr.f32.gmra.mrb[0].mxu0 %v5118
        %v5186 = vpop.f32.mrb[0].mxu0
        %v5187 = vadd.f32 0.0, %v5186
        %v5188 = vpop.f32.mrb[0].mxu0
        %5189 = vdwg.mxu0
        %5190 = vrot.lane.b32.xlu0 %v5187, 121
        %v5191 = vpop.permute.xlu0 %5190
        %v5192 = vmul.f32 %v5191, %v2671
        %v5193 = vadd.f32 %v5115, %v5192
        %v5194 = vld [vmem:[%s2674] sm:$0x3]
        %v5196 = vsel %vm1244, %v5194, 0
        %5198 = vmatprep.subr.mxu0 0.0
        %5199 = vmatpush1.msra.mxu0 %v3766
        %5200 = vmatprep.subr.mxu0 0.0
        %5201 = vmatpush1.msra.mxu0 %v3767
        %5202 = vmatprep.subr.mxu0 0.0
        %5203 = vmatpush1.msra.mxu0 %v3768
        %5204 = vmatprep.subr.mxu0 0.0
        %5205 = vmatpush1.msra.mxu0 %v3769
        %5206 = vmatprep.subr.mxu0 0.0
        %5207 = vmatpush1.msra.mxu0 0.0
        %5208 = vmatprep.subr.mxu0 0.0
        %5209 = vmatpush1.msra.mxu0 0.0
        %5210 = vmatprep.subr.mxu0 0.0
        %5211 = vmatpush1.msra.mxu0 0.0
        %5212 = vmatprep.subr.mxu0 0.0
        %5213 = vmatpush1.msra.mxu0 0.0
        %5214 = vmatprep.subr.mxu0 0.0
        %5215 = vmatpush1.msra.mxu0 0.0
        %5216 = vmatprep.subr.mxu0 0.0
        %5217 = vmatpush1.msra.mxu0 0.0
        %5218 = vmatprep.subr.mxu0 0.0
        %5219 = vmatpush1.msra.mxu0 0.0
        %5220 = vmatprep.subr.mxu0 0.0
        %5221 = vmatpush1.msra.mxu0 0.0
        %5222 = vmatprep.subr.mxu0 0.0
        %5223 = vmatpush1.msra.mxu0 0.0
        %5224 = vmatprep.subr.mxu0 0.0
        %5225 = vmatpush1.msra.mxu0 0.0
        %5226 = vmatprep.subr.mxu0 0.0
        %5227 = vmatpush1.msra.mxu0 0.0
        %5228 = vmatprep.subr.mxu0 0.0
        %5229 = vmatpush1.msra.mxu0 0.0
        %5230 = vmatprep.subr.mxu0 0.0
        %5231 = vmatpush1.msra.mxu0 0.0
        %5232 = vmatprep.subr.mxu0 0.0
        %5233 = vmatpush1.msra.mxu0 0.0
        %5234 = vmatprep.subr.mxu0 0.0
        %5235 = vmatpush1.msra.mxu0 0.0
        %5236 = vmatprep.subr.mxu0 0.0
        %5237 = vmatpush1.msra.mxu0 0.0
        %5238 = vmatprep.subr.mxu0 0.0
        %5239 = vmatpush1.msra.mxu0 0.0
        %5240 = vmatprep.subr.mxu0 0.0
        %5241 = vmatpush1.msra.mxu0 0.0
        %5242 = vmatprep.subr.mxu0 0.0
        %5243 = vmatpush1.msra.mxu0 0.0
        %5244 = vmatprep.subr.mxu0 0.0
        %5245 = vmatpush1.msra.mxu0 0.0
        %5246 = vmatprep.subr.mxu0 0.0
        %5247 = vmatpush1.msra.mxu0 0.0
        %5248 = vmatprep.subr.mxu0 0.0
        %5249 = vmatpush1.msra.mxu0 0.0
        %5250 = vmatprep.subr.mxu0 0.0
        %5251 = vmatpush1.msra.mxu0 0.0
        %5252 = vmatprep.subr.mxu0 0.0
        %5253 = vmatpush1.msra.mxu0 0.0
        %5254 = vmatprep.subr.mxu0 0.0
        %5255 = vmatpush1.msra.mxu0 0.0
        %5256 = vmatprep.subr.mxu0 0.0
        %5257 = vmatpush1.msra.mxu0 0.0
        %5258 = vmatprep.subr.mxu0 0.0
        %5259 = vmatpush1.msra.mxu0 0.0
        %5260 = vmatprep.subr.mxu0 0.0
        %5261 = vmatpush1.msra.mxu0 0.0
        %5262 = vmatprep.mubr.f32.mxu0 0.0
        %5263 = vmatmul.mubr.f32.gmra.mrb[0].mxu0 %v5196
        %v5264 = vpop.f32.mrb[0].mxu0
        %v5265 = vadd.f32 0.0, %v5264
        %v5266 = vpop.f32.mrb[0].mxu0
        %5267 = vdwg.mxu0
        %5268 = vrot.lane.b32.xlu0 %v5265, 120
        %v5269 = vpop.permute.xlu0 %5268
        %v5270 = vmul.f32 %v5269, %v2753
        %v5271 = vadd.f32 %v5193, %v5270
        %v5272 = vld [vmem:[%s2756] sm:$0x3]
        %v5274 = vsel %vm1244, %v5272, 0
        %5276 = vmatprep.subr.mxu0 0.0
        %5277 = vmatpush1.msra.mxu0 %v3766
        %5278 = vmatprep.subr.mxu0 0.0
        %5279 = vmatpush1.msra.mxu0 %v3767
        %5280 = vmatprep.subr.mxu0 0.0
        %5281 = vmatpush1.msra.mxu0 %v3768
        %5282 = vmatprep.subr.mxu0 0.0
        %5283 = vmatpush1.msra.mxu0 %v3769
        %5284 = vmatprep.subr.mxu0 0.0
        %5285 = vmatpush1.msra.mxu0 0.0
        %5286 = vmatprep.subr.mxu0 0.0
        %5287 = vmatpush1.msra.mxu0 0.0
        %5288 = vmatprep.subr.mxu0 0.0
        %5289 = vmatpush1.msra.mxu0 0.0
        %5290 = vmatprep.subr.mxu0 0.0
        %5291 = vmatpush1.msra.mxu0 0.0
        %5292 = vmatprep.subr.mxu0 0.0
        %5293 = vmatpush1.msra.mxu0 0.0
        %5294 = vmatprep.subr.mxu0 0.0
        %5295 = vmatpush1.msra.mxu0 0.0
        %5296 = vmatprep.subr.mxu0 0.0
        %5297 = vmatpush1.msra.mxu0 0.0
        %5298 = vmatprep.subr.mxu0 0.0
        %5299 = vmatpush1.msra.mxu0 0.0
        %5300 = vmatprep.subr.mxu0 0.0
        %5301 = vmatpush1.msra.mxu0 0.0
        %5302 = vmatprep.subr.mxu0 0.0
        %5303 = vmatpush1.msra.mxu0 0.0
        %5304 = vmatprep.subr.mxu0 0.0
        %5305 = vmatpush1.msra.mxu0 0.0
        %5306 = vmatprep.subr.mxu0 0.0
        %5307 = vmatpush1.msra.mxu0 0.0
        %5308 = vmatprep.subr.mxu0 0.0
        %5309 = vmatpush1.msra.mxu0 0.0
        %5310 = vmatprep.subr.mxu0 0.0
        %5311 = vmatpush1.msra.mxu0 0.0
        %5312 = vmatprep.subr.mxu0 0.0
        %5313 = vmatpush1.msra.mxu0 0.0
        %5314 = vmatprep.subr.mxu0 0.0
        %5315 = vmatpush1.msra.mxu0 0.0
        %5316 = vmatprep.subr.mxu0 0.0
        %5317 = vmatpush1.msra.mxu0 0.0
        %5318 = vmatprep.subr.mxu0 0.0
        %5319 = vmatpush1.msra.mxu0 0.0
        %5320 = vmatprep.subr.mxu0 0.0
        %5321 = vmatpush1.msra.mxu0 0.0
        %5322 = vmatprep.subr.mxu0 0.0
        %5323 = vmatpush1.msra.mxu0 0.0
        %5324 = vmatprep.subr.mxu0 0.0
        %5325 = vmatpush1.msra.mxu0 0.0
        %5326 = vmatprep.subr.mxu0 0.0
        %5327 = vmatpush1.msra.mxu0 0.0
        %5328 = vmatprep.subr.mxu0 0.0
        %5329 = vmatpush1.msra.mxu0 0.0
        %5330 = vmatprep.subr.mxu0 0.0
        %5331 = vmatpush1.msra.mxu0 0.0
        %5332 = vmatprep.subr.mxu0 0.0
        %5333 = vmatpush1.msra.mxu0 0.0
        %5334 = vmatprep.subr.mxu0 0.0
        %5335 = vmatpush1.msra.mxu0 0.0
        %5336 = vmatprep.subr.mxu0 0.0
        %5337 = vmatpush1.msra.mxu0 0.0
        %5338 = vmatprep.subr.mxu0 0.0
        %5339 = vmatpush1.msra.mxu0 0.0
        %5340 = vmatprep.mubr.f32.mxu0 0.0
        %5341 = vmatmul.mubr.f32.gmra.mrb[0].mxu0 %v5274
        %v5342 = vpop.f32.mrb[0].mxu0
        %v5343 = vadd.f32 0.0, %v5342
        %v5344 = vpop.f32.mrb[0].mxu0
        %5345 = vdwg.mxu0
        %5346 = vrot.lane.b32.xlu0 %v5343, 119
        %v5347 = vpop.permute.xlu0 %5346
        %v5348 = vmul.f32 %v5347, %v2835
        %v5349 = vadd.f32 %v5271, %v5348
        %v5350 = vld [vmem:[%s2838] sm:$0x3]
        %v5352 = vsel %vm1244, %v5350, 0
        %5354 = vmatprep.subr.mxu0 0.0
        %5355 = vmatpush1.msra.mxu0 %v3766
        %5356 = vmatprep.subr.mxu0 0.0
        %5357 = vmatpush1.msra.mxu0 %v3767
        %5358 = vmatprep.subr.mxu0 0.0
        %5359 = vmatpush1.msra.mxu0 %v3768
        %5360 = vmatprep.subr.mxu0 0.0
        %5361 = vmatpush1.msra.mxu0 %v3769
        %5362 = vmatprep.subr.mxu0 0.0
        %5363 = vmatpush1.msra.mxu0 0.0
        %5364 = vmatprep.subr.mxu0 0.0
        %5365 = vmatpush1.msra.mxu0 0.0
        %5366 = vmatprep.subr.mxu0 0.0
        %5367 = vmatpush1.msra.mxu0 0.0
        %5368 = vmatprep.subr.mxu0 0.0
        %5369 = vmatpush1.msra.mxu0 0.0
        %5370 = vmatprep.subr.mxu0 0.0
        %5371 = vmatpush1.msra.mxu0 0.0
        %5372 = vmatprep.subr.mxu0 0.0
        %5373 = vmatpush1.msra.mxu0 0.0
        %5374 = vmatprep.subr.mxu0 0.0
        %5375 = vmatpush1.msra.mxu0 0.0
        %5376 = vmatprep.subr.mxu0 0.0
        %5377 = vmatpush1.msra.mxu0 0.0
        %5378 = vmatprep.subr.mxu0 0.0
        %5379 = vmatpush1.msra.mxu0 0.0
        %5380 = vmatprep.subr.mxu0 0.0
        %5381 = vmatpush1.msra.mxu0 0.0
        %5382 = vmatprep.subr.mxu0 0.0
        %5383 = vmatpush1.msra.mxu0 0.0
        %5384 = vmatprep.subr.mxu0 0.0
        %5385 = vmatpush1.msra.mxu0 0.0
        %5386 = vmatprep.subr.mxu0 0.0
        %5387 = vmatpush1.msra.mxu0 0.0
        %5388 = vmatprep.subr.mxu0 0.0
        %5389 = vmatpush1.msra.mxu0 0.0
        %5390 = vmatprep.subr.mxu0 0.0
        %5391 = vmatpush1.msra.mxu0 0.0
        %5392 = vmatprep.subr.mxu0 0.0
        %5393 = vmatpush1.msra.mxu0 0.0
        %5394 = vmatprep.subr.mxu0 0.0
        %5395 = vmatpush1.msra.mxu0 0.0
        %5396 = vmatprep.subr.mxu0 0.0
        %5397 = vmatpush1.msra.mxu0 0.0
        %5398 = vmatprep.subr.mxu0 0.0
        %5399 = vmatpush1.msra.mxu0 0.0
        %5400 = vmatprep.subr.mxu0 0.0
        %5401 = vmatpush1.msra.mxu0 0.0
        %5402 = vmatprep.subr.mxu0 0.0
        %5403 = vmatpush1.msra.mxu0 0.0
        %5404 = vmatprep.subr.mxu0 0.0
        %5405 = vmatpush1.msra.mxu0 0.0
        %5406 = vmatprep.subr.mxu0 0.0
        %5407 = vmatpush1.msra.mxu0 0.0
        %5408 = vmatprep.subr.mxu0 0.0
        %5409 = vmatpush1.msra.mxu0 0.0
        %5410 = vmatprep.subr.mxu0 0.0
        %5411 = vmatpush1.msra.mxu0 0.0
        %5412 = vmatprep.subr.mxu0 0.0
        %5413 = vmatpush1.msra.mxu0 0.0
        %5414 = vmatprep.subr.mxu0 0.0
        %5415 = vmatpush1.msra.mxu0 0.0
        %5416 = vmatprep.subr.mxu0 0.0
        %5417 = vmatpush1.msra.mxu0 0.0
        %5418 = vmatprep.mubr.f32.mxu0 0.0
        %5419 = vmatmul.mubr.f32.gmra.mrb[0].mxu0 %v5352
        %v5420 = vpop.f32.mrb[0].mxu0
        %v5421 = vadd.f32 0.0, %v5420
        %v5422 = vpop.f32.mrb[0].mxu0
        %5423 = vdwg.mxu0
        %5424 = vrot.lane.b32.xlu0 %v5421, 118
        %v5425 = vpop.permute.xlu0 %5424
        %v5426 = vmul.f32 %v5425, %v846
        %v5427 = vadd.f32 %v5349, %v5426
        %v5428 = vadd.f32 %v5427, %v2917
        %v5429 = vadd.f32 %v5427, %v2919
        %v5430 = vsel %vm2921, %v5428, -inf
        %5431 = vmax.xlane.f32.xlu0 %v5430
        %v5432 = vpop.xlane.xlu0 %5431
        %v5433 = vsub.f32 %v5428, %v5432
        %v5434 = vmul.f32 %v5433, 1.442695
        %v5435 = vpow.pop %v5434
        %v5436 = vsel %vm2921, %v5435, 0.0
        %5437 = vadd.xlane.f32.xlu0 %v5436
        %v5438 = vpop.xlane.xlu0 %5437
        %v5439 = vlog2.pop %v5438
        %v5440 = vmul.f32 %v5439, 0.6931472
        %v5441 = vadd.f32 %v5432, %v5440
        %v5442 = vsel %vm2934, %v5429, -inf
        %5443 = vmax.xlane.f32.xlu0 %v5442
        %v5444 = vpop.xlane.xlu0 %5443
        %v5445 = vsub.f32 %v5429, %v5444
        %v5446 = vmul.f32 %v5445, 1.442695
        %v5447 = vpow.pop %v5446
        %v5448 = vsel %vm2934, %v5447, 0.0
        %5449 = vadd.xlane.f32.xlu0 %v5448
        %v5450 = vpop.xlane.xlu0 %5449
        %v5451 = vlog2.pop %v5450
        %v5452 = vmul.f32 %v5451, 0.6931472
        %v5453 = vadd.f32 %v5444, %v5452
        %v5454 = vsub.f32 %v5428, %v5441
        %v5455 = vadd.f32 %v3792, %v5454
        %v5456 = vsub.f32 %v5429, %v5453
        %v5458 = vrot.slane %v5456, 1
        %v5460 = vmax.f32 %v5455, %v5458
        %v5461 = vsub.f32 %v5455, %v5458
        %v5462 = vand.u32 2147483647, %v5461
        %v5463 = vsub.f32 0.0, %v5462
        %v5464 = vmul.f32 %v5463, 1.442695
        %v5465 = vpow.pop %v5464
        %v5466 = vadd.f32 %v5465, 1.0
        %v5467 = vlog2.pop %v5466
        %v5468 = vmul.f32 %v5467, 0.6931472
        %v5469 = vmul.f32 -0.5, %v5465
        %v5470 = vadd.f32 %v5469, 1.0
        %v5471 = vmul.f32 %v5470, %v5465
        %v5472 = vand.u32 2147483647, %v5465
        %vm5473 = vcmp.lt.f32.partialorder %v5472, 0.0004427343
        %v5474 = vsel %vm5473, %v5471, %v5468
        %v5475 = vadd.f32 %v5460, %v5474
        %v5476 = vmul.f32 %v346, %v5428
        %v5477 = vsel %vm2921, %v5476, 0.0
        %5478 = vadd.xlane.f32.xlu0 %v5477
        %v5479 = vpop.xlane.xlu0 %5478
        %v5480 = vmul.f32 %v5479, %v2973
        %v5481 = vadd.f32 %v5480, %v2975
        %v5483 = vrot.slane %v5428, 7
        %v5486 = vrot.slane %v5429, 7
        %v5489 = vrot.slane %v5481, 4
        %v5491 = vsel %vm2921, %v5475, %v5483
        %v5492 = vsel %vm2987, %v5491, %v5486
        %v5493 = vsel %vm2989, %v5492, %v3792
        %v5494 = vsel %vm437, %v5493, %v5489
        %v5495 = vsel %vm2992, %v5494, 0.0
        %s5496 = scalar_lea.vmem %s328, 8 [#allocation7]
        %5497 = vst [vmem:[%s5496] sm:$0xff] %v5495
        %s5498 = sand.u32 %s205, 1
        %s5499 = scalar_lea.sflag [#allocation4], %s5498
        %s5500 = sand.u32 %s205, 1
        %s5501 = smul.addr %s5500, 16
        %s5502 = scalar_lea.vmem [#allocation7], %s5501
        // Predicated region
        $region61: #{tpu_custom_call.1} parent=51 // pred_check
          %p5503 = pneg %p215
        $region62: #{tpu_custom_call.1} parent=51 // pred_check_branch
          %5505 = sbr.rel (%p5503) target = $region64
        $region63: #{tpu_custom_call.1} parent=51 // pred_region
          %s5506 = smul.u32 2, %s24
          %s5508 = ssub.s32 256, 256
          %5509 = vsyncadd %s5499, %s5508
          %s5510 = smul.addr %s5506, 128
          %s5511 = scalar_lea.hbm %s8, %s5510
          %s5512 = sshll.u32 %s5502, 4
          %s5513 = int_to_ptr.vmem [resolvable:$true] %s5512
          %5518 = dma.vmem_to_hbm [thread:$0]  %s5513, 256, %s5511, %s5499, 128, 128, 8
        $region64: #{tpu_custom_call.1} parent=51 // pred_fallthru
          _
      $region52: #{tpu_custom_call.1} parent=5 // pred_fallthru
        _
      %p5519 = scmp.le.s32.totalorder 2, %s19
      // Predicated region
      $region65: #{tpu_custom_call.1} parent=5 // pred_check
        %p5520 = pneg %p5519
      $region66: #{tpu_custom_call.1} parent=5 // pred_check_branch
        %5522 = sbr.rel (%p5520) target = $region68
      $region67: #{tpu_custom_call.1} parent=5 // pred_region
        %s5523 = ssub.s32 %s19, 2
        // Predicated region
        $region69: #{tpu_custom_call.1} parent=67 // pred_check
          %p5524 = pneg %p221
        $region70: #{tpu_custom_call.1} parent=67 // pred_check_branch
          %5526 = sbr.rel (%p5524) target = $region72
        $region71: #{tpu_custom_call.1} parent=67 // pred_region
          %s5527 = sand.u32 %s206, 1
          %s5528 = scalar_lea.sflag [#allocation4], %s5527
          %s5529 = sand.u32 %s206, 1
          %s5530 = smul.addr %s5529, 16
          %s5531 = scalar_lea.vmem [#allocation7], %s5530
          %5532 = dma.done %s5528, 256
        $region72: #{tpu_custom_call.1} parent=67 // pred_fallthru
          _
      $region68: #{tpu_custom_call.1} parent=5 // pred_fallthru
        _
    $region6: #{tpu_custom_call.1} parent=1 // loop_footer
      %s23 = sadd.s32 1, %s19
    $region7: #{tpu_custom_call.1} parent=1 // loop_footer_branch
      %18 = sbr.rel target = $region3
    $region8: #{tpu_custom_call.1} parent=1 // loop_exit
      _
    %5533 = vsyncpa [#allocation3], 1
    %s5534 = scalar_lea.sflag [#allocation3], 1
    %5535 = vsyncpa %s5534, 1
    %5536 = vsyncpa [#allocation4], 1
    %s5537 = scalar_lea.sflag [#allocation4], 1
    %5538 = vsyncpa %s5537, 1
    %5539 = vsyncpa [#allocation5], 1
    %s5540 = scalar_lea.sflag [#allocation5], 1
    %5541 = vsyncpa %s5540, 1

</llo_original>
